<compile_context>
chip_gen: v7x
topology: tpu7x:2x2x1
jax: 0.10.0
libtpu: 0.0.40
codegen_flags: <defaults>
</compile_context>

<pallas_src>
import jax
import jax.numpy as jnp
from jax import lax
from jax.experimental import pallas as pl
from jax.experimental.pallas import tpu as pltpu


# ----------------------------------------------------------------------------
# Conv(3x3, stride 1, 'same', bias=False) + folded BatchNorm + SiLU
# (operates on stride-(W+2) flat tiles, optional fused residual add)
# ----------------------------------------------------------------------------
def conv3x3_bn_silu_flat(xp_flat, w, bn, H, W, residual=None, eps=1e-5):
    """xp_flat: (B, (H+2)*(W+2)+2, Cin) zero-padded flat image.
    w: (Cout, Cin, 3, 3).  residual: optional (B, H*(W+2), Cout).
    Returns (B, H*(W+2), Cout) with the two junk columns per row zeroed."""
    B, P2e, Cin = xp_flat.shape
    Cout = w.shape[0]
    W2 = W + 2
    Np = H * W2
    K = 9 * Cin
    assert P2e == (H + 2) * W2 + 2

    # Fold BN (inference) into per-channel scale/bias; 3x3 weights as one
    # (9*Cin, Cout) bf16 matrix so the whole conv is a single MXU matmul.
    wk = jnp.transpose(w, (2, 3, 1, 0)).reshape(K, Cout).astype(jnp.bfloat16)
    inv = bn["gamma"] * lax.rsqrt(bn["var"] + eps)
    scale = inv.reshape(1, Cout)
    bias = (bn["beta"] - bn["mean"] * inv).reshape(1, Cout)

    offs = tuple(kh * W2 + kw for kh in range(3) for kw in range(3))

    def body(x_ref, w_ref, s_ref, b_ref, o_ref, r_ref):
        xp = x_ref[0]                                             # (P2e, Cin)
        taps = [xp[o:o + Np, :] for o in offs]                    # 9 shifted VMEM views
        t = jnp.concatenate(taps, axis=1).astype(jnp.bfloat16)    # (Np, 9*Cin)
        acc = jnp.dot(t, w_ref[...], preferred_element_type=jnp.float32)
        y = acc * s_ref[...] + b_ref[...]                         # folded BatchNorm
        y = y * jax.nn.sigmoid(y)                                 # SiLU
        # Zero the two junk columns (w in {W, W+1}) so they can serve as the
        # left/right zero padding of the next 3x3 conv.
        row = lax.broadcasted_iota(jnp.int32, (Np, Cout), 0)
        y = jnp.where(row % W2 < W, y, 0.0)
        if r_ref is not None:
            y = y + r_ref[0]                                      # fused residual add
        o_ref[0] = y

    if residual is None:
        def kernel(x_ref, w_ref, s_ref, b_ref, o_ref):
            body(x_ref, w_ref, s_ref, b_ref, o_ref, None)
    else:
        def kernel(x_ref, w_ref, s_ref, b_ref, r_ref, o_ref):
            body(x_ref, w_ref, s_ref, b_ref, o_ref, r_ref)

    in_specs = [
        pl.BlockSpec((1, P2e, Cin), lambda b: (b, 0, 0)),
        pl.BlockSpec((K, Cout), lambda b: (0, 0)),
        pl.BlockSpec((1, Cout), lambda b: (0, 0)),
        pl.BlockSpec((1, Cout), lambda b: (0, 0)),
    ]
    args = [xp_flat, wk, scale, bias]
    if residual is not None:
        in_specs.append(pl.BlockSpec((1, Np, Cout), lambda b: (b, 0, 0)))
        args.append(residual)

    # TODO(synk): for large H*W / Cin add an HW-tile grid axis (1-row halo) so
    # the per-step block stays within v7x's 64 MiB VMEM; unnecessary at these sizes.
    return pl.pallas_call(
        kernel,
        out_shape=jax.ShapeDtypeStruct((B, Np, Cout), jnp.float32),
        grid_spec=pltpu.PrefetchScalarGridSpec(
            num_scalar_prefetch=0,
            grid=(B,),
            in_specs=in_specs,
            out_specs=pl.BlockSpec((1, Np, Cout), lambda b: (b, 0, 0)),
        ),
        compiler_params=pltpu.CompilerParams(dimension_semantics=("parallel",)),
    )(*args)


# ----------------------------------------------------------------------------
# SCSA attention (spatial gates + windowed channel self-attention)
# (operates on stride-(W+2) flat tiles, channels on lanes)
# ----------------------------------------------------------------------------
def scsa_flat(x_flat, p, H, W, window_size=7, eps=1e-5):
    B, Np, C = x_flat.shape
    W2 = W + 2
    assert Np == H * W2
    assert C % 4 == 0, "SCSA dim must be divisible by 4"
    assert H % window_size == 0 and W % window_size == 0
    gc = C // 4
    head_num = C // 64 if C // 64 > 0 else 1
    head_dim = C // head_num
    assert head_num * head_dim == C
    scaler = float(head_dim) ** -0.5
    ws = window_size
    ph_n, pw_n = H // ws, W // ws
    L = ph_n * pw_n

    # Constant one-hot selection matrices (junk columns carry zero weight).
    p_idx = jnp.arange(Np)
    h_of = p_idx // W2
    w_of = p_idx % W2
    valid = w_of < W
    one_h = (valid[:, None] & (h_of[:, None] == jnp.arange(H)[None, :])).astype(jnp.float32)  # (Np,H)
    one_w = (valid[:, None] & (w_of[:, None] == jnp.arange(W)[None, :])).astype(jnp.float32)  # (Np,W)
    tok = (h_of // ws) * pw_n + (w_of // ws)
    one_p = (valid[:, None] & (tok[:, None] == jnp.arange(L)[None, :])).astype(jnp.float32)   # (Np,L)
    eh_t, ew_t, ep_t = one_h.T, one_w.T, one_p.T

    # Merge the 4 grouped depthwise 1-D convs (k=3,5,7,9, 'same') into a single
    # k=9 'same' depthwise conv with per-channel taps (zero-padded per group).
    wd = jnp.zeros((9, C), jnp.float32)
    bd = jnp.zeros((1, C), jnp.float32)
    for gi, k in enumerate((3, 5, 7, 9)):
        off = 4 - k // 2
        wd = wd.at[off:off + k, gi * gc:(gi + 1) * gc].set(jnp.transpose(p[f"w{k}"]))
        bd = bd.at[:, gi * gc:(gi + 1) * gc].set(p[f"b{k}"].reshape(1, gc))

    row = lambda a: a.reshape(1, C)
    params = [eh_t, ew_t, one_h, one_w, ep_t, wd, bd,
              row(p["gnh_g"]), row(p["gnh_b"]),
              row(p["gnw_g"]), row(p["gnw_b"]),
              row(p["gn_g"]), row(p["gn_b"]),
              row(p["wq"]), row(p["wk"]), row(p["wv"])]

    def kernel(x_ref, eht_ref, ewt_ref, eh_ref, ew_ref, ept_ref, wd_ref, bd_ref,
               ghg, ghb, gwg, gwb, gng, gnb, wq_r, wk_r, wv_r, o_ref):
        x = x_ref[0]                                                      # (Np, C)
        wd_v, bd_v = wd_ref[...], bd_ref[...]

        # Spatial means via one-hot reduction matmuls (MXU, junk rows excluded).
        x_h = jnp.dot(eht_ref[...], x, preferred_element_type=jnp.float32) * (1.0 / W)   # (H, C)
        x_w = jnp.dot(ewt_ref[...], x, preferred_element_type=jnp.float32) * (1.0 / H)   # (W, C)

        def dwc9(xm):                              # merged depthwise conv, k=9, 'same'
            ln = xm.shape[0]
            z = jnp.zeros((4, C), jnp.float32)
            xpad = jnp.concatenate([z, xm, z], axis=0)
            acc = jnp.zeros((ln, C), jnp.float32)
            for j in range(9):
                acc = acc + xpad[j:j + ln, :] * wd_v[j:j + 1, :]
            return acc + bd_v

        def gn4(xlc, g, b):                        # GroupNorm(4, C), channels on lanes
            mus, vs = [], []
            for gi in range(4):
                xs = xlc[:, gi * gc:(gi + 1) * gc]
                mu = jnp.mean(xs, keepdims=True)
                var = jnp.mean((xs - mu) ** 2, keepdims=True)
                mus.append(jnp.broadcast_to(mu, (1, gc)))
                vs.append(jnp.broadcast_to(var, (1, gc)))
            mu_v = jnp.concatenate(mus, axis=1)
            var_v = jnp.concatenate(vs, axis=1)
            return (xlc - mu_v) * lax.rsqrt(var_v + eps) * g + b

        a_h = jax.nn.sigmoid(gn4(dwc9(x_h), ghg[...], ghb[...]))          # (H, C)
        a_w = jax.nn.sigmoid(gn4(dwc9(x_w), gwg[...], gwb[...]))          # (W, C)

        # x = x * x_h_attn * x_w_attn  (single broadcasted multiply; gates are
        # expanded back to the flat layout with one-hot matmuls -> junk rows = 0).
        a_h_full = jnp.dot(eh_ref[...], a_h, preferred_element_type=jnp.float32)   # (Np, C)
        a_w_full = jnp.dot(ew_ref[...], a_w, preferred_element_type=jnp.float32)   # (Np, C)
        xg = x * a_h_full * a_w_full

        # AvgPool2d(ws, ws) as one pooling matmul -> (L, C) tokens.
        y = jnp.dot(ept_ref[...], xg, preferred_element_type=jnp.float32) * (1.0 / (ws * ws))

        # GroupNorm(1, C).
        mu = jnp.mean(y, keepdims=True)
        var = jnp.mean((y - mu) ** 2, keepdims=True)
        y = (y - mu) * lax.rsqrt(var + eps) * gng[...] + gnb[...]

        # Depthwise 1x1 q/k/v (per-channel scales), windowed channel attention.
        q = y * wq_r[...]
        k_ = y * wk_r[...]
        v = y * wv_r[...]
        # mean_L(att @ v) == att @ mean_L(v): only the token-mean of v is needed.
        v_mean = jnp.mean(v, axis=0, keepdims=True)                       # (1, C)

        ca_parts = []
        for hd in range(head_num):
            s0 = hd * head_dim
            qh = q[:, s0:s0 + head_dim]                                   # (L, d)
            kh = k_[:, s0:s0 + head_dim]                                  # (L, d)
            att = lax.dot_general(qh, kh, (((0,), (0,)), ((), ())),
                                  preferred_element_type=jnp.float32) * scaler   # (d, d)
            att = att - jnp.max(att, axis=-1, keepdims=True)
            att = jnp.exp(att)
            att = att * pl.reciprocal(jnp.sum(att, axis=-1, keepdims=True), approx=True)
            vmh = v_mean[:, s0:s0 + head_dim]                             # (1, d)
            ca_parts.append(lax.dot_general(vmh, att, (((1,), (1,)), ((), ())),
                                            preferred_element_type=jnp.float32))  # (1, d)
        ca = ca_parts[0] if head_num == 1 else jnp.concatenate(ca_parts, axis=1)
        ca = jax.nn.sigmoid(ca)                                           # (1, C)

        o_ref[0] = xg * ca

    in_specs = [pl.BlockSpec((1, Np, C), lambda b: (b, 0, 0))] + [
        pl.BlockSpec(tuple(a.shape), lambda b, _nd=a.ndim: (0,) * _nd) for a in params
    ]

    return pl.pallas_call(
        kernel,
        out_shape=jax.ShapeDtypeStruct((B, Np, C), jnp.float32),
        grid_spec=pltpu.PrefetchScalarGridSpec(
            num_scalar_prefetch=0,
            grid=(B,),
            in_specs=in_specs,
            out_specs=pl.BlockSpec((1, Np, C), lambda b: (b, 0, 0)),
        ),
        compiler_params=pltpu.CompilerParams(dimension_semantics=("parallel",)),
    )(x_flat, *params)


# ----------------------------------------------------------------------------
# Bottleneck_2
# ----------------------------------------------------------------------------
def bottleneck2_forward(x, p, shortcut=True):
    """x: (B, C1, H, W) NCHW float32.  Returns (B, C2, H, W)."""
    B, C1, H, W = x.shape
    C2 = p["cv2_w"].shape[0]
    add = shortcut and (C1 == C2)
    W2 = W + 2
    Np = H * W2
    P2e = (H + 2) * W2 + 2

    # One-time layout glue: NCHW -> zero-padded stride-W2 flat (channels on lanes).
    x_nhwc = jnp.transpose(x, (0, 2, 3, 1))                                    # (B,H,W,C1)
    xp1 = jnp.pad(x_nhwc, ((0, 0), (1, 1), (1, 1), (0, 0)))                    # (B,H+2,W+2,C1)
    xp1_flat = jnp.pad(xp1.reshape(B, (H + 2) * W2, C1), ((0, 0), (0, 2), (0, 0)))

    y1 = conv3x3_bn_silu_flat(xp1_flat, p["cv1_w"], p["cv1_bn"], H, W)         # (B,Np,C_)

    if add:
        mid = scsa_flat(y1, p["scsa"], H, W)                                   # (B,Np,C_)
    else:
        mid = y1      # PyTorch skips SCSA on the non-residual branch

    # Re-padding for the second conv is a pure pad: shifting by W2+1 rows turns
    # the zeroed junk columns into the conv's left/right zero padding.
    xp2_flat = jnp.pad(mid, ((0, 0), (W2 + 1, W2 + 1), (0, 0)))                # (B,P2e,C_)

    residual = None
    if add:
        residual = jnp.pad(x_nhwc, ((0, 0), (0, 0), (0, 2), (0, 0))).reshape(B, Np, C1)

    y3 = conv3x3_bn_silu_flat(xp2_flat, p["cv2_w"], p["cv2_bn"], H, W,
                              residual=residual)                               # (B,Np,C2)

    # Back to NCHW, dropping the junk columns.
    out = y3.reshape(B, H, W2, C2)[:, :, :W, :]
    return jnp.transpose(out, (0, 3, 1, 2))


def init_bottleneck2_params(key, c1, c2, e=0.5):
    c_ = int(c2 * e)
    gc = c_ // 4
    keys = iter(jax.random.split(key, 32))

    def nrm(shape, s=0.1):
        return s * jax.random.normal(next(keys), shape, jnp.float32)

    def bn(ch):
        return dict(gamma=1.0 + nrm((ch,)), beta=nrm((ch,)),
                    mean=nrm((ch,)), var=0.5 + jnp.abs(nrm((ch,))))

    return dict(
        cv1_w=nrm((c_, c1, 3, 3), 0.2), cv1_bn=bn(c_),
        cv2_w=nrm((c2, c_, 3, 3), 0.2), cv2_bn=bn(c2),
        scsa=dict(
            w3=nrm((gc, 3), 0.3), b3=nrm((gc,)),
            w5=nrm((gc, 5), 0.3), b5=nrm((gc,)),
            w7=nrm((gc, 7), 0.3), b7=nrm((gc,)),
            w9=nrm((gc, 9), 0.3), b9=nrm((gc,)),
            gnh_g=1.0 + nrm((c_,)), gnh_b=nrm((c_,)),
            gnw_g=1.0 + nrm((c_,)), gnw_b=nrm((c_,)),
            gn_g=1.0 + nrm((c_,)), gn_b=nrm((c_,)),
            wq=1.0 + nrm((c_,)), wk=1.0 + nrm((c_,)), wv=1.0 + nrm((c_,)),
        ),
    )


if __name__ == "__main__":
    key = jax.random.PRNGKey(0)
    kx, kp = jax.random.split(key)
    # c1 == c2 so the residual (+ SCSA) path is exercised; H, W multiples of 7.
    B, C, H, W = 2, 16, 14, 14
    x = jax.random.normal(kx, (B, C, H, W), jnp.float32)
    params = init_bottleneck2_params(kp, C, C)

    out = jax.jit(bottleneck2_forward)(x, params)
    jax.block_until_ready(out)
    assert out.shape == (B, C, H, W) and out.dtype == jnp.float32
    assert bool(jnp.all(jnp.isfinite(out)))
    print("KERNEL_OK")
</pallas_src>

<mosaic_0001>
module attributes {stable_mosaic.version = 11 : i64} {
  func.func @kernel(%arg0: i32, %arg1: memref<1x258x16xf32, #tpu.memory_space<vmem>>, %arg2: memref<144x8xbf16, #tpu.memory_space<vmem>>, %arg3: memref<1x8xf32, #tpu.memory_space<vmem>>, %arg4: memref<1x8xf32, #tpu.memory_space<vmem>>, %arg5: memref<1x224x8xf32, #tpu.memory_space<vmem>>) attributes {dimension_semantics = [#tpu.dimension_semantics<parallel>], iteration_bounds = array<i64: 2>, scalar_prefetch = 0 : i64, scratch_operands = 0 : i64, tpu.core_type = #tpu.core_type<tc>, window_params = [{transform_indices = @transform_0, window_bounds = array<i64: 1, 258, 16>}, {pipeline_mode = #tpu.pipeline_mode<synchronous>, transform_indices = @transform_1, window_bounds = array<i64: 144, 8>}, {pipeline_mode = #tpu.pipeline_mode<synchronous>, transform_indices = @transform_2, window_bounds = array<i64: 1, 8>}, {pipeline_mode = #tpu.pipeline_mode<synchronous>, transform_indices = @transform_3, window_bounds = array<i64: 1, 8>}, {transform_indices = @transform_4, window_bounds = array<i64: 1, 224, 8>}]} {
    %c0 = arith.constant 0 : index
    %c0_0 = arith.constant 0 : index
    %c0_1 = arith.constant 0 : index
    %0 = vector.load %arg1[%c0, %c0_0, %c0_1] : memref<1x258x16xf32, #tpu.memory_space<vmem>>, vector<1x258x16xf32>
    %1 = vector.shape_cast %0 : vector<1x258x16xf32> to vector<258x16xf32>
    %2 = vector.extract_strided_slice %1 {offsets = [0, 0], sizes = [224, 16], strides = [1, 1]} : vector<258x16xf32> to vector<224x16xf32>
    %3 = vector.extract_strided_slice %1 {offsets = [1, 0], sizes = [224, 16], strides = [1, 1]} : vector<258x16xf32> to vector<224x16xf32>
    %4 = vector.extract_strided_slice %1 {offsets = [2, 0], sizes = [224, 16], strides = [1, 1]} : vector<258x16xf32> to vector<224x16xf32>
    %5 = vector.extract_strided_slice %1 {offsets = [16, 0], sizes = [224, 16], strides = [1, 1]} : vector<258x16xf32> to vector<224x16xf32>
    %6 = vector.extract_strided_slice %1 {offsets = [17, 0], sizes = [224, 16], strides = [1, 1]} : vector<258x16xf32> to vector<224x16xf32>
    %7 = vector.extract_strided_slice %1 {offsets = [18, 0], sizes = [224, 16], strides = [1, 1]} : vector<258x16xf32> to vector<224x16xf32>
    %8 = vector.extract_strided_slice %1 {offsets = [32, 0], sizes = [224, 16], strides = [1, 1]} : vector<258x16xf32> to vector<224x16xf32>
    %9 = vector.extract_strided_slice %1 {offsets = [33, 0], sizes = [224, 16], strides = [1, 1]} : vector<258x16xf32> to vector<224x16xf32>
    %10 = vector.extract_strided_slice %1 {offsets = [34, 0], sizes = [224, 16], strides = [1, 1]} : vector<258x16xf32> to vector<224x16xf32>
    %11 = tpu.concatenate %2, %3, %4, %5, %6, %7, %8, %9, %10 in 1 : vector<224x16xf32>, vector<224x16xf32>, vector<224x16xf32>, vector<224x16xf32>, vector<224x16xf32>, vector<224x16xf32>, vector<224x16xf32>, vector<224x16xf32>, vector<224x16xf32> -> vector<224x144xf32>
    %12 = arith.truncf %11 : vector<224x144xf32> to vector<224x144xbf16>
    %c0_2 = arith.constant 0 : index
    %c0_3 = arith.constant 0 : index
    %13 = vector.load %arg2[%c0_2, %c0_3] : memref<144x8xbf16, #tpu.memory_space<vmem>>, vector<144x8xbf16>
    %cst = arith.constant dense<0.000000e+00> : vector<224x8xf32>
    %14 = tpu.matmul %12, %13, %cst {dimension_numbers = #tpu.dot_dimension_numbers<[1], [0], [0], [1], [0, 0, 1, 1], [], []>} : vector<224x144xbf16>, vector<144x8xbf16>, vector<224x8xf32> -> vector<224x8xf32>
    %c0_4 = arith.constant 0 : index
    %c0_5 = arith.constant 0 : index
    %15 = vector.load %arg3[%c0_4, %c0_5] : memref<1x8xf32, #tpu.memory_space<vmem>>, vector<1x8xf32>
    %16 = vector.broadcast %15 : vector<1x8xf32> to vector<224x8xf32>
    %17 = arith.mulf %14, %16 : vector<224x8xf32>
    %c0_6 = arith.constant 0 : index
    %c0_7 = arith.constant 0 : index
    %18 = vector.load %arg4[%c0_6, %c0_7] : memref<1x8xf32, #tpu.memory_space<vmem>>, vector<1x8xf32>
    %19 = vector.broadcast %18 : vector<1x8xf32> to vector<224x8xf32>
    %20 = arith.addf %17, %19 : vector<224x8xf32>
    %21 = arith.negf %20 : vector<224x8xf32>
    %22 = math.exp %21 : vector<224x8xf32>
    %cst_8 = arith.constant 1.000000e+00 : f32
    %23 = vector.broadcast %cst_8 : f32 to vector<224x8xf32>
    %24 = arith.addf %23, %22 : vector<224x8xf32>
    %25 = arith.divf %23, %24 : vector<224x8xf32>
    %26 = arith.mulf %20, %25 : vector<224x8xf32>
    %27 = tpu.iota {dimensions = array<i32: 0>} : vector<224x8xi32>
    %c16_i32 = arith.constant 16 : i32
    %c0_i32 = arith.constant 0 : i32
    %28 = arith.cmpi eq, %c16_i32, %c0_i32 : i32
    %c1_i32 = arith.constant 1 : i32
    %29 = arith.select %28, %c1_i32, %c16_i32 : i32
    %30 = vector.broadcast %29 : i32 to vector<224x8xi32>
    %31 = arith.remsi %27, %30 : vector<224x8xi32>
    %c0_i32_9 = arith.constant 0 : i32
    %32 = vector.broadcast %c0_i32_9 : i32 to vector<224x8xi32>
    %33 = arith.cmpi ne, %31, %32 : vector<224x8xi32>
    %c0_i32_10 = arith.constant 0 : i32
    %34 = vector.broadcast %c0_i32_10 : i32 to vector<224x8xi32>
    %35 = arith.cmpi slt, %31, %34 : vector<224x8xi32>
    %c0_i32_11 = arith.constant 0 : i32
    %36 = arith.cmpi slt, %29, %c0_i32_11 : i32
    %37 = vector.broadcast %36 : i1 to vector<224x8xi1>
    %38 = vector.broadcast %37 : vector<224x8xi1> to vector<224x8xi1>
    %39 = arith.xori %35, %38 : vector<224x8xi1>
    %40 = arith.andi %39, %33 : vector<224x8xi1>
    %41 = vector.broadcast %29 : i32 to vector<224x8xi32>
    %42 = arith.addi %31, %41 : vector<224x8xi32>
    %43 = arith.select %40, %42, %31 : vector<224x8xi1>, vector<224x8xi32>
    %c14_i32 = arith.constant 14 : i32
    %44 = vector.broadcast %c14_i32 : i32 to vector<224x8xi32>
    %45 = arith.cmpi slt, %43, %44 : vector<224x8xi32>
    %cst_12 = arith.constant 0.000000e+00 : f32
    %46 = vector.broadcast %cst_12 : f32 to vector<224x8xf32>
    %47 = arith.select %45, %26, %46 : vector<224x8xi1>, vector<224x8xf32>
    %c0_13 = arith.constant 0 : index
    %c0_14 = arith.constant 0 : index
    %c0_15 = arith.constant 0 : index
    %48 = vector.load %arg5[%c0_13, %c0_14, %c0_15] : memref<1x224x8xf32, #tpu.memory_space<vmem>>, vector<1x224x8xf32>
    %49 = vector.shape_cast %48 : vector<1x224x8xf32> to vector<224x8xf32>
    %50 = vector.shape_cast %47 : vector<224x8xf32> to vector<1x224x8xf32>
    tpu.vector_store %arg5[%c0_13, %c0_14, %c0_15], %50 {strides = array<i32>} : memref<1x224x8xf32, #tpu.memory_space<vmem>>, vector<1x224x8xf32>,
    return
  }
  func.func @transform_0(%arg0: i32) -> (i32, i32, i32) {
    %c0_i32 = arith.constant 0 : i32
    %c0_i32_0 = arith.constant 0 : i32
    %c0_i32_1 = arith.constant 0 : i32
    return %arg0, %c0_i32, %c0_i32_0 : i32, i32, i32
  }
  func.func @transform_1(%arg0: i32) -> (i32, i32) {
    %c0_i32 = arith.constant 0 : i32
    %c0_i32_0 = arith.constant 0 : i32
    %c0_i32_1 = arith.constant 0 : i32
    return %c0_i32, %c0_i32_0 : i32, i32
  }
  func.func @transform_2(%arg0: i32) -> (i32, i32) {
    %c0_i32 = arith.constant 0 : i32
    %c0_i32_0 = arith.constant 0 : i32
    %c0_i32_1 = arith.constant 0 : i32
    return %c0_i32, %c0_i32_0 : i32, i32
  }
  func.func @transform_3(%arg0: i32) -> (i32, i32) {
    %c0_i32 = arith.constant 0 : i32
    %c0_i32_0 = arith.constant 0 : i32
    %c0_i32_1 = arith.constant 0 : i32
    return %c0_i32, %c0_i32_0 : i32, i32
  }
  func.func @transform_4(%arg0: i32) -> (i32, i32, i32) {
    %c0_i32 = arith.constant 0 : i32
    %c0_i32_0 = arith.constant 0 : i32
    %c0_i32_1 = arith.constant 0 : i32
    return %arg0, %c0_i32, %c0_i32_0 : i32, i32, i32
  }
}

module attributes {stable_mosaic.version = 11 : i64} {
  func.func @kernel(%arg0: i32, %arg1: memref<1x224x8xf32, #tpu.memory_space<vmem>>, %arg2: memref<14x224xf32, #tpu.memory_space<vmem>>, %arg3: memref<14x224xf32, #tpu.memory_space<vmem>>, %arg4: memref<224x14xf32, #tpu.memory_space<vmem>>, %arg5: memref<224x14xf32, #tpu.memory_space<vmem>>, %arg6: memref<4x224xf32, #tpu.memory_space<vmem>>, %arg7: memref<9x8xf32, #tpu.memory_space<vmem>>, %arg8: memref<1x8xf32, #tpu.memory_space<vmem>>, %arg9: memref<1x8xf32, #tpu.memory_space<vmem>>, %arg10: memref<1x8xf32, #tpu.memory_space<vmem>>, %arg11: memref<1x8xf32, #tpu.memory_space<vmem>>, %arg12: memref<1x8xf32, #tpu.memory_space<vmem>>, %arg13: memref<1x8xf32, #tpu.memory_space<vmem>>, %arg14: memref<1x8xf32, #tpu.memory_space<vmem>>, %arg15: memref<1x8xf32, #tpu.memory_space<vmem>>, %arg16: memref<1x8xf32, #tpu.memory_space<vmem>>, %arg17: memref<1x8xf32, #tpu.memory_space<vmem>>, %arg18: memref<1x224x8xf32, #tpu.memory_space<vmem>>) attributes {dimension_semantics = [#tpu.dimension_semantics<parallel>], iteration_bounds = array<i64: 2>, scalar_prefetch = 0 : i64, scratch_operands = 0 : i64, tpu.core_type = #tpu.core_type<tc>, window_params = [{transform_indices = @transform_0, window_bounds = array<i64: 1, 224, 8>}, {pipeline_mode = #tpu.pipeline_mode<synchronous>, transform_indices = @transform_1, window_bounds = array<i64: 14, 224>}, {pipeline_mode = #tpu.pipeline_mode<synchronous>, transform_indices = @transform_2, window_bounds = array<i64: 14, 224>}, {pipeline_mode = #tpu.pipeline_mode<synchronous>, transform_indices = @transform_3, window_bounds = array<i64: 224, 14>}, {pipeline_mode = #tpu.pipeline_mode<synchronous>, transform_indices = @transform_4, window_bounds = array<i64: 224, 14>}, {pipeline_mode = #tpu.pipeline_mode<synchronous>, transform_indices = @transform_5, window_bounds = array<i64: 4, 224>}, {pipeline_mode = #tpu.pipeline_mode<synchronous>, transform_indices = @transform_6, window_bounds = array<i64: 9, 8>}, {pipeline_mode = #tpu.pipeline_mode<synchronous>, transform_indices = @transform_7, window_bounds = array<i64: 1, 8>}, {pipeline_mode = #tpu.pipeline_mode<synchronous>, transform_indices = @transform_8, window_bounds = array<i64: 1, 8>}, {pipeline_mode = #tpu.pipeline_mode<synchronous>, transform_indices = @transform_9, window_bounds = array<i64: 1, 8>}, {pipeline_mode = #tpu.pipeline_mode<synchronous>, transform_indices = @transform_10, window_bounds = array<i64: 1, 8>}, {pipeline_mode = #tpu.pipeline_mode<synchronous>, transform_indices = @transform_11, window_bounds = array<i64: 1, 8>}, {pipeline_mode = #tpu.pipeline_mode<synchronous>, transform_indices = @transform_12, window_bounds = array<i64: 1, 8>}, {pipeline_mode = #tpu.pipeline_mode<synchronous>, transform_indices = @transform_13, window_bounds = array<i64: 1, 8>}, {pipeline_mode = #tpu.pipeline_mode<synchronous>, transform_indices = @transform_14, window_bounds = array<i64: 1, 8>}, {pipeline_mode = #tpu.pipeline_mode<synchronous>, transform_indices = @transform_15, window_bounds = array<i64: 1, 8>}, {pipeline_mode = #tpu.pipeline_mode<synchronous>, transform_indices = @transform_16, window_bounds = array<i64: 1, 8>}, {transform_indices = @transform_17, window_bounds = array<i64: 1, 224, 8>}]} {
    %c0 = arith.constant 0 : index
    %c0_0 = arith.constant 0 : index
    %c0_1 = arith.constant 0 : index
    %0 = vector.load %arg1[%c0, %c0_0, %c0_1] : memref<1x224x8xf32, #tpu.memory_space<vmem>>, vector<1x224x8xf32>
    %1 = vector.shape_cast %0 : vector<1x224x8xf32> to vector<224x8xf32>
    %c0_2 = arith.constant 0 : index
    %c0_3 = arith.constant 0 : index
    %2 = vector.load %arg7[%c0_2, %c0_3] : memref<9x8xf32, #tpu.memory_space<vmem>>, vector<9x8xf32>
    %c0_4 = arith.constant 0 : index
    %c0_5 = arith.constant 0 : index
    %3 = vector.load %arg8[%c0_4, %c0_5] : memref<1x8xf32, #tpu.memory_space<vmem>>, vector<1x8xf32>
    %c0_6 = arith.constant 0 : index
    %c0_7 = arith.constant 0 : index
    %4 = vector.load %arg2[%c0_6, %c0_7] : memref<14x224xf32, #tpu.memory_space<vmem>>, vector<14x224xf32>
    %cst = arith.constant dense<0.000000e+00> : vector<14x8xf32>
    %5 = tpu.matmul %4, %1, %cst {dimension_numbers = #tpu.dot_dimension_numbers<[1], [0], [0], [1], [0, 0, 1, 1], [], []>} : vector<14x224xf32>, vector<224x8xf32>, vector<14x8xf32> -> vector<14x8xf32>
    %cst_8 = arith.constant 0.0714285746 : f32
    %6 = vector.broadcast %cst_8 : f32 to vector<14x8xf32>
    %7 = arith.mulf %5, %6 : vector<14x8xf32>
    %c0_9 = arith.constant 0 : index
    %c0_10 = arith.constant 0 : index
    %8 = vector.load %arg3[%c0_9, %c0_10] : memref<14x224xf32, #tpu.memory_space<vmem>>, vector<14x224xf32>
    %cst_11 = arith.constant dense<0.000000e+00> : vector<14x8xf32>
    %9 = tpu.matmul %8, %1, %cst_11 {dimension_numbers = #tpu.dot_dimension_numbers<[1], [0], [0], [1], [0, 0, 1, 1], [], []>} : vector<14x224xf32>, vector<224x8xf32>, vector<14x8xf32> -> vector<14x8xf32>
    %cst_12 = arith.constant 0.0714285746 : f32
    %10 = vector.broadcast %cst_12 : f32 to vector<14x8xf32>
    %11 = arith.mulf %9, %10 : vector<14x8xf32>
    %cst_13 = arith.constant 0.000000e+00 : f32
    %12 = vector.broadcast %cst_13 : f32 to vector<4x8xf32>
    %13 = tpu.concatenate %12, %7, %12 in 0 : vector<4x8xf32>, vector<14x8xf32>, vector<4x8xf32> -> vector<22x8xf32>
    %cst_14 = arith.constant 0.000000e+00 : f32
    %14 = vector.broadcast %cst_14 : f32 to vector<14x8xf32>
    %15 = vector.extract_strided_slice %13 {offsets = [0, 0], sizes = [14, 8], strides = [1, 1]} : vector<22x8xf32> to vector<14x8xf32>
    %16 = vector.extract_strided_slice %2 {offsets = [0, 0], sizes = [1, 8], strides = [1, 1]} : vector<9x8xf32> to vector<1x8xf32>
    %17 = vector.broadcast %16 : vector<1x8xf32> to vector<14x8xf32>
    %18 = arith.mulf %15, %17 : vector<14x8xf32>
    %19 = arith.addf %14, %18 : vector<14x8xf32>
    %20 = vector.extract_strided_slice %13 {offsets = [1, 0], sizes = [14, 8], strides = [1, 1]} : vector<22x8xf32> to vector<14x8xf32>
    %21 = vector.extract_strided_slice %2 {offsets = [1, 0], sizes = [1, 8], strides = [1, 1]} : vector<9x8xf32> to vector<1x8xf32>
    %22 = vector.broadcast %21 : vector<1x8xf32> to vector<14x8xf32>
    %23 = arith.mulf %20, %22 : vector<14x8xf32>
    %24 = arith.addf %19, %23 : vector<14x8xf32>
    %25 = vector.extract_strided_slice %13 {offsets = [2, 0], sizes = [14, 8], strides = [1, 1]} : vector<22x8xf32> to vector<14x8xf32>
    %26 = vector.extract_strided_slice %2 {offsets = [2, 0], sizes = [1, 8], strides = [1, 1]} : vector<9x8xf32> to vector<1x8xf32>
    %27 = vector.broadcast %26 : vector<1x8xf32> to vector<14x8xf32>
    %28 = arith.mulf %25, %27 : vector<14x8xf32>
    %29 = arith.addf %24, %28 : vector<14x8xf32>
    %30 = vector.extract_strided_slice %13 {offsets = [3, 0], sizes = [14, 8], strides = [1, 1]} : vector<22x8xf32> to vector<14x8xf32>
    %31 = vector.extract_strided_slice %2 {offsets = [3, 0], sizes = [1, 8], strides = [1, 1]} : vector<9x8xf32> to vector<1x8xf32>
    %32 = vector.broadcast %31 : vector<1x8xf32> to vector<14x8xf32>
    %33 = arith.mulf %30, %32 : vector<14x8xf32>
    %34 = arith.addf %29, %33 : vector<14x8xf32>
    %35 = vector.extract_strided_slice %13 {offsets = [4, 0], sizes = [14, 8], strides = [1, 1]} : vector<22x8xf32> to vector<14x8xf32>
    %36 = vector.extract_strided_slice %2 {offsets = [4, 0], sizes = [1, 8], strides = [1, 1]} : vector<9x8xf32> to vector<1x8xf32>
    %37 = vector.broadcast %36 : vector<1x8xf32> to vector<14x8xf32>
    %38 = arith.mulf %35, %37 : vector<14x8xf32>
    %39 = arith.addf %34, %38 : vector<14x8xf32>
    %40 = vector.extract_strided_slice %13 {offsets = [5, 0], sizes = [14, 8], strides = [1, 1]} : vector<22x8xf32> to vector<14x8xf32>
    %41 = vector.extract_strided_slice %2 {offsets = [5, 0], sizes = [1, 8], strides = [1, 1]} : vector<9x8xf32> to vector<1x8xf32>
    %42 = vector.broadcast %41 : vector<1x8xf32> to vector<14x8xf32>
    %43 = arith.mulf %40, %42 : vector<14x8xf32>
    %44 = arith.addf %39, %43 : vector<14x8xf32>
    %45 = vector.extract_strided_slice %13 {offsets = [6, 0], sizes = [14, 8], strides = [1, 1]} : vector<22x8xf32> to vector<14x8xf32>
    %46 = vector.extract_strided_slice %2 {offsets = [6, 0], sizes = [1, 8], strides = [1, 1]} : vector<9x8xf32> to vector<1x8xf32>
    %47 = vector.broadcast %46 : vector<1x8xf32> to vector<14x8xf32>
    %48 = arith.mulf %45, %47 : vector<14x8xf32>
    %49 = arith.addf %44, %48 : vector<14x8xf32>
    %50 = vector.extract_strided_slice %13 {offsets = [7, 0], sizes = [14, 8], strides = [1, 1]} : vector<22x8xf32> to vector<14x8xf32>
    %51 = vector.extract_strided_slice %2 {offsets = [7, 0], sizes = [1, 8], strides = [1, 1]} : vector<9x8xf32> to vector<1x8xf32>
    %52 = vector.broadcast %51 : vector<1x8xf32> to vector<14x8xf32>
    %53 = arith.mulf %50, %52 : vector<14x8xf32>
    %54 = arith.addf %49, %53 : vector<14x8xf32>
    %55 = vector.extract_strided_slice %13 {offsets = [8, 0], sizes = [14, 8], strides = [1, 1]} : vector<22x8xf32> to vector<14x8xf32>
    %56 = vector.extract_strided_slice %2 {offsets = [8, 0], sizes = [1, 8], strides = [1, 1]} : vector<9x8xf32> to vector<1x8xf32>
    %57 = vector.broadcast %56 : vector<1x8xf32> to vector<14x8xf32>
    %58 = arith.mulf %55, %57 : vector<14x8xf32>
    %59 = arith.addf %54, %58 : vector<14x8xf32>
    %60 = vector.broadcast %3 : vector<1x8xf32> to vector<14x8xf32>
    %61 = arith.addf %59, %60 : vector<14x8xf32>
    %c0_15 = arith.constant 0 : index
    %c0_16 = arith.constant 0 : index
    %62 = vector.load %arg9[%c0_15, %c0_16] : memref<1x8xf32, #tpu.memory_space<vmem>>, vector<1x8xf32>
    %c0_17 = arith.constant 0 : index
    %c0_18 = arith.constant 0 : index
    %63 = vector.load %arg10[%c0_17, %c0_18] : memref<1x8xf32, #tpu.memory_space<vmem>>, vector<1x8xf32>
    %64 = vector.extract_strided_slice %61 {offsets = [0, 0], sizes = [14, 2], strides = [1, 1]} : vector<14x8xf32> to vector<14x2xf32>
    %65 = vector.shape_cast %64 : vector<14x2xf32> to vector<1x14x2xf32>
    %cst_19 = arith.constant dense<0.000000e+00> : vector<1xf32>
    %66 = vector.multi_reduction <add>, %65, %cst_19 [1, 2] : vector<1x14x2xf32> to vector<1xf32>
    %67 = vector.shape_cast %66 : vector<1xf32> to vector<1x1x1xf32>
    %68 = vector.extract %67[0, 0, 0] : f32 from vector<1x1x1xf32>
    %69 = vector.broadcast %68 : f32 to vector<1x1xf32>
    %cst_20 = arith.constant 2.800000e+01 : f32
    %70 = vector.broadcast %cst_20 : f32 to vector<1x1xf32>
    %71 = arith.divf %69, %70 : vector<1x1xf32>
    %72 = vector.broadcast %71 : vector<1x1xf32> to vector<14x2xf32>
    %73 = arith.subf %64, %72 : vector<14x2xf32>
    %74 = arith.mulf %73, %73 : vector<14x2xf32>
    %75 = vector.shape_cast %74 : vector<14x2xf32> to vector<1x14x2xf32>
    %cst_21 = arith.constant dense<0.000000e+00> : vector<1xf32>
    %76 = vector.multi_reduction <add>, %75, %cst_21 [1, 2] : vector<1x14x2xf32> to vector<1xf32>
    %77 = vector.shape_cast %76 : vector<1xf32> to vector<1x1x1xf32>
    %78 = vector.extract %77[0, 0, 0] : f32 from vector<1x1x1xf32>
    %79 = vector.broadcast %78 : f32 to vector<1x1xf32>
    %cst_22 = arith.constant 2.800000e+01 : f32
    %80 = vector.broadcast %cst_22 : f32 to vector<1x1xf32>
    %81 = arith.divf %79, %80 : vector<1x1xf32>
    %82 = vector.shape_cast %71 : vector<1x1xf32> to vector<1x1xf32>
    %83 = vector.broadcast %82 : vector<1x1xf32> to vector<1x2xf32>
    %84 = vector.shape_cast %81 : vector<1x1xf32> to vector<1x1xf32>
    %85 = vector.broadcast %84 : vector<1x1xf32> to vector<1x2xf32>
    %86 = vector.extract_strided_slice %61 {offsets = [0, 2], sizes = [14, 2], strides = [1, 1]} : vector<14x8xf32> to vector<14x2xf32>
    %87 = vector.shape_cast %86 : vector<14x2xf32> to vector<1x14x2xf32>
    %cst_23 = arith.constant dense<0.000000e+00> : vector<1xf32>
    %88 = vector.multi_reduction <add>, %87, %cst_23 [1, 2] : vector<1x14x2xf32> to vector<1xf32>
    %89 = vector.shape_cast %88 : vector<1xf32> to vector<1x1x1xf32>
    %90 = vector.extract %89[0, 0, 0] : f32 from vector<1x1x1xf32>
    %91 = vector.broadcast %90 : f32 to vector<1x1xf32>
    %cst_24 = arith.constant 2.800000e+01 : f32
    %92 = vector.broadcast %cst_24 : f32 to vector<1x1xf32>
    %93 = arith.divf %91, %92 : vector<1x1xf32>
    %94 = vector.broadcast %93 : vector<1x1xf32> to vector<14x2xf32>
    %95 = arith.subf %86, %94 : vector<14x2xf32>
    %96 = arith.mulf %95, %95 : vector<14x2xf32>
    %97 = vector.shape_cast %96 : vector<14x2xf32> to vector<1x14x2xf32>
    %cst_25 = arith.constant dense<0.000000e+00> : vector<1xf32>
    %98 = vector.multi_reduction <add>, %97, %cst_25 [1, 2] : vector<1x14x2xf32> to vector<1xf32>
    %99 = vector.shape_cast %98 : vector<1xf32> to vector<1x1x1xf32>
    %100 = vector.extract %99[0, 0, 0] : f32 from vector<1x1x1xf32>
    %101 = vector.broadcast %100 : f32 to vector<1x1xf32>
    %cst_26 = arith.constant 2.800000e+01 : f32
    %102 = vector.broadcast %cst_26 : f32 to vector<1x1xf32>
    %103 = arith.divf %101, %102 : vector<1x1xf32>
    %104 = vector.shape_cast %93 : vector<1x1xf32> to vector<1x1xf32>
    %105 = vector.broadcast %104 : vector<1x1xf32> to vector<1x2xf32>
    %106 = vector.shape_cast %103 : vector<1x1xf32> to vector<1x1xf32>
    %107 = vector.broadcast %106 : vector<1x1xf32> to vector<1x2xf32>
    %108 = vector.extract_strided_slice %61 {offsets = [0, 4], sizes = [14, 2], strides = [1, 1]} : vector<14x8xf32> to vector<14x2xf32>
    %109 = vector.shape_cast %108 : vector<14x2xf32> to vector<1x14x2xf32>
    %cst_27 = arith.constant dense<0.000000e+00> : vector<1xf32>
    %110 = vector.multi_reduction <add>, %109, %cst_27 [1, 2] : vector<1x14x2xf32> to vector<1xf32>
    %111 = vector.shape_cast %110 : vector<1xf32> to vector<1x1x1xf32>
    %112 = vector.extract %111[0, 0, 0] : f32 from vector<1x1x1xf32>
    %113 = vector.broadcast %112 : f32 to vector<1x1xf32>
    %cst_28 = arith.constant 2.800000e+01 : f32
    %114 = vector.broadcast %cst_28 : f32 to vector<1x1xf32>
    %115 = arith.divf %113, %114 : vector<1x1xf32>
    %116 = vector.broadcast %115 : vector<1x1xf32> to vector<14x2xf32>
    %117 = arith.subf %108, %116 : vector<14x2xf32>
    %118 = arith.mulf %117, %117 : vector<14x2xf32>
    %119 = vector.shape_cast %118 : vector<14x2xf32> to vector<1x14x2xf32>
    %cst_29 = arith.constant dense<0.000000e+00> : vector<1xf32>
    %120 = vector.multi_reduction <add>, %119, %cst_29 [1, 2] : vector<1x14x2xf32> to vector<1xf32>
    %121 = vector.shape_cast %120 : vector<1xf32> to vector<1x1x1xf32>
    %122 = vector.extract %121[0, 0, 0] : f32 from vector<1x1x1xf32>
    %123 = vector.broadcast %122 : f32 to vector<1x1xf32>
    %cst_30 = arith.constant 2.800000e+01 : f32
    %124 = vector.broadcast %cst_30 : f32 to vector<1x1xf32>
    %125 = arith.divf %123, %124 : vector<1x1xf32>
    %126 = vector.shape_cast %115 : vector<1x1xf32> to vector<1x1xf32>
    %127 = vector.broadcast %126 : vector<1x1xf32> to vector<1x2xf32>
    %128 = vector.shape_cast %125 : vector<1x1xf32> to vector<1x1xf32>
    %129 = vector.broadcast %128 : vector<1x1xf32> to vector<1x2xf32>
    %130 = vector.extract_strided_slice %61 {offsets = [0, 6], sizes = [14, 2], strides = [1, 1]} : vector<14x8xf32> to vector<14x2xf32>
    %131 = vector.shape_cast %130 : vector<14x2xf32> to vector<1x14x2xf32>
    %cst_31 = arith.constant dense<0.000000e+00> : vector<1xf32>
    %132 = vector.multi_reduction <add>, %131, %cst_31 [1, 2] : vector<1x14x2xf32> to vector<1xf32>
    %133 = vector.shape_cast %132 : vector<1xf32> to vector<1x1x1xf32>
    %134 = vector.extract %133[0, 0, 0] : f32 from vector<1x1x1xf32>
    %135 = vector.broadcast %134 : f32 to vector<1x1xf32>
    %cst_32 = arith.constant 2.800000e+01 : f32
    %136 = vector.broadcast %cst_32 : f32 to vector<1x1xf32>
    %137 = arith.divf %135, %136 : vector<1x1xf32>
    %138 = vector.broadcast %137 : vector<1x1xf32> to vector<14x2xf32>
    %139 = arith.subf %130, %138 : vector<14x2xf32>
    %140 = arith.mulf %139, %139 : vector<14x2xf32>
    %141 = vector.shape_cast %140 : vector<14x2xf32> to vector<1x14x2xf32>
    %cst_33 = arith.constant dense<0.000000e+00> : vector<1xf32>
    %142 = vector.multi_reduction <add>, %141, %cst_33 [1, 2] : vector<1x14x2xf32> to vector<1xf32>
    %143 = vector.shape_cast %142 : vector<1xf32> to vector<1x1x1xf32>
    %144 = vector.extract %143[0, 0, 0] : f32 from vector<1x1x1xf32>
    %145 = vector.broadcast %144 : f32 to vector<1x1xf32>
    %cst_34 = arith.constant 2.800000e+01 : f32
    %146 = vector.broadcast %cst_34 : f32 to vector<1x1xf32>
    %147 = arith.divf %145, %146 : vector<1x1xf32>
    %148 = vector.shape_cast %137 : vector<1x1xf32> to vector<1x1xf32>
    %149 = vector.broadcast %148 : vector<1x1xf32> to vector<1x2xf32>
    %150 = vector.shape_cast %147 : vector<1x1xf32> to vector<1x1xf32>
    %151 = vector.broadcast %150 : vector<1x1xf32> to vector<1x2xf32>
    %152 = tpu.concatenate %83, %105, %127, %149 in 1 : vector<1x2xf32>, vector<1x2xf32>, vector<1x2xf32>, vector<1x2xf32> -> vector<1x8xf32>
    %153 = tpu.concatenate %85, %107, %129, %151 in 1 : vector<1x2xf32>, vector<1x2xf32>, vector<1x2xf32>, vector<1x2xf32> -> vector<1x8xf32>
    %154 = vector.broadcast %152 : vector<1x8xf32> to vector<14x8xf32>
    %155 = arith.subf %61, %154 : vector<14x8xf32>
    %cst_35 = arith.constant 9.99999974E-6 : f32
    %156 = vector.broadcast %cst_35 : f32 to vector<1x8xf32>
    %157 = arith.addf %153, %156 : vector<1x8xf32>
    %158 = math.rsqrt %157 : vector<1x8xf32>
    %159 = vector.broadcast %158 : vector<1x8xf32> to vector<14x8xf32>
    %160 = arith.mulf %155, %159 : vector<14x8xf32>
    %161 = vector.broadcast %62 : vector<1x8xf32> to vector<14x8xf32>
    %162 = arith.mulf %160, %161 : vector<14x8xf32>
    %163 = vector.broadcast %63 : vector<1x8xf32> to vector<14x8xf32>
    %164 = arith.addf %162, %163 : vector<14x8xf32>
    %165 = arith.negf %164 : vector<14x8xf32>
    %166 = math.exp %165 : vector<14x8xf32>
    %cst_36 = arith.constant 1.000000e+00 : f32
    %167 = vector.broadcast %cst_36 : f32 to vector<14x8xf32>
    %168 = arith.addf %167, %166 : vector<14x8xf32>
    %169 = arith.divf %167, %168 : vector<14x8xf32>
    %cst_37 = arith.constant 0.000000e+00 : f32
    %170 = vector.broadcast %cst_37 : f32 to vector<4x8xf32>
    %171 = tpu.concatenate %170, %11, %170 in 0 : vector<4x8xf32>, vector<14x8xf32>, vector<4x8xf32> -> vector<22x8xf32>
    %cst_38 = arith.constant 0.000000e+00 : f32
    %172 = vector.broadcast %cst_38 : f32 to vector<14x8xf32>
    %173 = vector.extract_strided_slice %171 {offsets = [0, 0], sizes = [14, 8], strides = [1, 1]} : vector<22x8xf32> to vector<14x8xf32>
    %174 = vector.extract_strided_slice %2 {offsets = [0, 0], sizes = [1, 8], strides = [1, 1]} : vector<9x8xf32> to vector<1x8xf32>
    %175 = vector.broadcast %174 : vector<1x8xf32> to vector<14x8xf32>
    %176 = arith.mulf %173, %175 : vector<14x8xf32>
    %177 = arith.addf %172, %176 : vector<14x8xf32>
    %178 = vector.extract_strided_slice %171 {offsets = [1, 0], sizes = [14, 8], strides = [1, 1]} : vector<22x8xf32> to vector<14x8xf32>
    %179 = vector.extract_strided_slice %2 {offsets = [1, 0], sizes = [1, 8], strides = [1, 1]} : vector<9x8xf32> to vector<1x8xf32>
    %180 = vector.broadcast %179 : vector<1x8xf32> to vector<14x8xf32>
    %181 = arith.mulf %178, %180 : vector<14x8xf32>
    %182 = arith.addf %177, %181 : vector<14x8xf32>
    %183 = vector.extract_strided_slice %171 {offsets = [2, 0], sizes = [14, 8], strides = [1, 1]} : vector<22x8xf32> to vector<14x8xf32>
    %184 = vector.extract_strided_slice %2 {offsets = [2, 0], sizes = [1, 8], strides = [1, 1]} : vector<9x8xf32> to vector<1x8xf32>
    %185 = vector.broadcast %184 : vector<1x8xf32> to vector<14x8xf32>
    %186 = arith.mulf %183, %185 : vector<14x8xf32>
    %187 = arith.addf %182, %186 : vector<14x8xf32>
    %188 = vector.extract_strided_slice %171 {offsets = [3, 0], sizes = [14, 8], strides = [1, 1]} : vector<22x8xf32> to vector<14x8xf32>
    %189 = vector.extract_strided_slice %2 {offsets = [3, 0], sizes = [1, 8], strides = [1, 1]} : vector<9x8xf32> to vector<1x8xf32>
    %190 = vector.broadcast %189 : vector<1x8xf32> to vector<14x8xf32>
    %191 = arith.mulf %188, %190 : vector<14x8xf32>
    %192 = arith.addf %187, %191 : vector<14x8xf32>
    %193 = vector.extract_strided_slice %171 {offsets = [4, 0], sizes = [14, 8], strides = [1, 1]} : vector<22x8xf32> to vector<14x8xf32>
    %194 = vector.extract_strided_slice %2 {offsets = [4, 0], sizes = [1, 8], strides = [1, 1]} : vector<9x8xf32> to vector<1x8xf32>
    %195 = vector.broadcast %194 : vector<1x8xf32> to vector<14x8xf32>
    %196 = arith.mulf %193, %195 : vector<14x8xf32>
    %197 = arith.addf %192, %196 : vector<14x8xf32>
    %198 = vector.extract_strided_slice %171 {offsets = [5, 0], sizes = [14, 8], strides = [1, 1]} : vector<22x8xf32> to vector<14x8xf32>
    %199 = vector.extract_strided_slice %2 {offsets = [5, 0], sizes = [1, 8], strides = [1, 1]} : vector<9x8xf32> to vector<1x8xf32>
    %200 = vector.broadcast %199 : vector<1x8xf32> to vector<14x8xf32>
    %201 = arith.mulf %198, %200 : vector<14x8xf32>
    %202 = arith.addf %197, %201 : vector<14x8xf32>
    %203 = vector.extract_strided_slice %171 {offsets = [6, 0], sizes = [14, 8], strides = [1, 1]} : vector<22x8xf32> to vector<14x8xf32>
    %204 = vector.extract_strided_slice %2 {offsets = [6, 0], sizes = [1, 8], strides = [1, 1]} : vector<9x8xf32> to vector<1x8xf32>
    %205 = vector.broadcast %204 : vector<1x8xf32> to vector<14x8xf32>
    %206 = arith.mulf %203, %205 : vector<14x8xf32>
    %207 = arith.addf %202, %206 : vector<14x8xf32>
    %208 = vector.extract_strided_slice %171 {offsets = [7, 0], sizes = [14, 8], strides = [1, 1]} : vector<22x8xf32> to vector<14x8xf32>
    %209 = vector.extract_strided_slice %2 {offsets = [7, 0], sizes = [1, 8], strides = [1, 1]} : vector<9x8xf32> to vector<1x8xf32>
    %210 = vector.broadcast %209 : vector<1x8xf32> to vector<14x8xf32>
    %211 = arith.mulf %208, %210 : vector<14x8xf32>
    %212 = arith.addf %207, %211 : vector<14x8xf32>
    %213 = vector.extract_strided_slice %171 {offsets = [8, 0], sizes = [14, 8], strides = [1, 1]} : vector<22x8xf32> to vector<14x8xf32>
    %214 = vector.extract_strided_slice %2 {offsets = [8, 0], sizes = [1, 8], strides = [1, 1]} : vector<9x8xf32> to vector<1x8xf32>
    %215 = vector.broadcast %214 : vector<1x8xf32> to vector<14x8xf32>
    %216 = arith.mulf %213, %215 : vector<14x8xf32>
    %217 = arith.addf %212, %216 : vector<14x8xf32>
    %218 = vector.broadcast %3 : vector<1x8xf32> to vector<14x8xf32>
    %219 = arith.addf %217, %218 : vector<14x8xf32>
    %c0_39 = arith.constant 0 : index
    %c0_40 = arith.constant 0 : index
    %220 = vector.load %arg11[%c0_39, %c0_40] : memref<1x8xf32, #tpu.memory_space<vmem>>, vector<1x8xf32>
    %c0_41 = arith.constant 0 : index
    %c0_42 = arith.constant 0 : index
    %221 = vector.load %arg12[%c0_41, %c0_42] : memref<1x8xf32, #tpu.memory_space<vmem>>, vector<1x8xf32>
    %222 = vector.extract_strided_slice %219 {offsets = [0, 0], sizes = [14, 2], strides = [1, 1]} : vector<14x8xf32> to vector<14x2xf32>
    %223 = vector.shape_cast %222 : vector<14x2xf32> to vector<1x14x2xf32>
    %cst_43 = arith.constant dense<0.000000e+00> : vector<1xf32>
    %224 = vector.multi_reduction <add>, %223, %cst_43 [1, 2] : vector<1x14x2xf32> to vector<1xf32>
    %225 = vector.shape_cast %224 : vector<1xf32> to vector<1x1x1xf32>
    %226 = vector.extract %225[0, 0, 0] : f32 from vector<1x1x1xf32>
    %227 = vector.broadcast %226 : f32 to vector<1x1xf32>
    %cst_44 = arith.constant 2.800000e+01 : f32
    %228 = vector.broadcast %cst_44 : f32 to vector<1x1xf32>
    %229 = arith.divf %227, %228 : vector<1x1xf32>
    %230 = vector.broadcast %229 : vector<1x1xf32> to vector<14x2xf32>
    %231 = arith.subf %222, %230 : vector<14x2xf32>
    %232 = arith.mulf %231, %231 : vector<14x2xf32>
    %233 = vector.shape_cast %232 : vector<14x2xf32> to vector<1x14x2xf32>
    %cst_45 = arith.constant dense<0.000000e+00> : vector<1xf32>
    %234 = vector.multi_reduction <add>, %233, %cst_45 [1, 2] : vector<1x14x2xf32> to vector<1xf32>
    %235 = vector.shape_cast %234 : vector<1xf32> to vector<1x1x1xf32>
    %236 = vector.extract %235[0, 0, 0] : f32 from vector<1x1x1xf32>
    %237 = vector.broadcast %236 : f32 to vector<1x1xf32>
    %cst_46 = arith.constant 2.800000e+01 : f32
    %238 = vector.broadcast %cst_46 : f32 to vector<1x1xf32>
    %239 = arith.divf %237, %238 : vector<1x1xf32>
    %240 = vector.shape_cast %229 : vector<1x1xf32> to vector<1x1xf32>
    %241 = vector.broadcast %240 : vector<1x1xf32> to vector<1x2xf32>
    %242 = vector.shape_cast %239 : vector<1x1xf32> to vector<1x1xf32>
    %243 = vector.broadcast %242 : vector<1x1xf32> to vector<1x2xf32>
    %244 = vector.extract_strided_slice %219 {offsets = [0, 2], sizes = [14, 2], strides = [1, 1]} : vector<14x8xf32> to vector<14x2xf32>
    %245 = vector.shape_cast %244 : vector<14x2xf32> to vector<1x14x2xf32>
    %cst_47 = arith.constant dense<0.000000e+00> : vector<1xf32>
    %246 = vector.multi_reduction <add>, %245, %cst_47 [1, 2] : vector<1x14x2xf32> to vector<1xf32>
    %247 = vector.shape_cast %246 : vector<1xf32> to vector<1x1x1xf32>
    %248 = vector.extract %247[0, 0, 0] : f32 from vector<1x1x1xf32>
    %249 = vector.broadcast %248 : f32 to vector<1x1xf32>
    %cst_48 = arith.constant 2.800000e+01 : f32
    %250 = vector.broadcast %cst_48 : f32 to vector<1x1xf32>
    %251 = arith.divf %249, %250 : vector<1x1xf32>
    %252 = vector.broadcast %251 : vector<1x1xf32> to vector<14x2xf32>
    %253 = arith.subf %244, %252 : vector<14x2xf32>
    %254 = arith.mulf %253, %253 : vector<14x2xf32>
    %255 = vector.shape_cast %254 : vector<14x2xf32> to vector<1x14x2xf32>
    %cst_49 = arith.constant dense<0.000000e+00> : vector<1xf32>
    %256 = vector.multi_reduction <add>, %255, %cst_49 [1, 2] : vector<1x14x2xf32> to vector<1xf32>
    %257 = vector.shape_cast %256 : vector<1xf32> to vector<1x1x1xf32>
    %258 = vector.extract %257[0, 0, 0] : f32 from vector<1x1x1xf32>
    %259 = vector.broadcast %258 : f32 to vector<1x1xf32>
    %cst_50 = arith.constant 2.800000e+01 : f32
    %260 = vector.broadcast %cst_50 : f32 to vector<1x1xf32>
    %261 = arith.divf %259, %260 : vector<1x1xf32>
    %262 = vector.shape_cast %251 : vector<1x1xf32> to vector<1x1xf32>
    %263 = vector.broadcast %262 : vector<1x1xf32> to vector<1x2xf32>
    %264 = vector.shape_cast %261 : vector<1x1xf32> to vector<1x1xf32>
    %265 = vector.broadcast %264 : vector<1x1xf32> to vector<1x2xf32>
    %266 = vector.extract_strided_slice %219 {offsets = [0, 4], sizes = [14, 2], strides = [1, 1]} : vector<14x8xf32> to vector<14x2xf32>
    %267 = vector.shape_cast %266 : vector<14x2xf32> to vector<1x14x2xf32>
    %cst_51 = arith.constant dense<0.000000e+00> : vector<1xf32>
    %268 = vector.multi_reduction <add>, %267, %cst_51 [1, 2] : vector<1x14x2xf32> to vector<1xf32>
    %269 = vector.shape_cast %268 : vector<1xf32> to vector<1x1x1xf32>
    %270 = vector.extract %269[0, 0, 0] : f32 from vector<1x1x1xf32>
    %271 = vector.broadcast %270 : f32 to vector<1x1xf32>
    %cst_52 = arith.constant 2.800000e+01 : f32
    %272 = vector.broadcast %cst_52 : f32 to vector<1x1xf32>
    %273 = arith.divf %271, %272 : vector<1x1xf32>
    %274 = vector.broadcast %273 : vector<1x1xf32> to vector<14x2xf32>
    %275 = arith.subf %266, %274 : vector<14x2xf32>
    %276 = arith.mulf %275, %275 : vector<14x2xf32>
    %277 = vector.shape_cast %276 : vector<14x2xf32> to vector<1x14x2xf32>
    %cst_53 = arith.constant dense<0.000000e+00> : vector<1xf32>
    %278 = vector.multi_reduction <add>, %277, %cst_53 [1, 2] : vector<1x14x2xf32> to vector<1xf32>
    %279 = vector.shape_cast %278 : vector<1xf32> to vector<1x1x1xf32>
    %280 = vector.extract %279[0, 0, 0] : f32 from vector<1x1x1xf32>
    %281 = vector.broadcast %280 : f32 to vector<1x1xf32>
    %cst_54 = arith.constant 2.800000e+01 : f32
    %282 = vector.broadcast %cst_54 : f32 to vector<1x1xf32>
    %283 = arith.divf %281, %282 : vector<1x1xf32>
    %284 = vector.shape_cast %273 : vector<1x1xf32> to vector<1x1xf32>
    %285 = vector.broadcast %284 : vector<1x1xf32> to vector<1x2xf32>
    %286 = vector.shape_cast %283 : vector<1x1xf32> to vector<1x1xf32>
    %287 = vector.broadcast %286 : vector<1x1xf32> to vector<1x2xf32>
    %288 = vector.extract_strided_slice %219 {offsets = [0, 6], sizes = [14, 2], strides = [1, 1]} : vector<14x8xf32> to vector<14x2xf32>
    %289 = vector.shape_cast %288 : vector<14x2xf32> to vector<1x14x2xf32>
    %cst_55 = arith.constant dense<0.000000e+00> : vector<1xf32>
    %290 = vector.multi_reduction <add>, %289, %cst_55 [1, 2] : vector<1x14x2xf32> to vector<1xf32>
    %291 = vector.shape_cast %290 : vector<1xf32> to vector<1x1x1xf32>
    %292 = vector.extract %291[0, 0, 0] : f32 from vector<1x1x1xf32>
    %293 = vector.broadcast %292 : f32 to vector<1x1xf32>
    %cst_56 = arith.constant 2.800000e+01 : f32
    %294 = vector.broadcast %cst_56 : f32 to vector<1x1xf32>
    %295 = arith.divf %293, %294 : vector<1x1xf32>
    %296 = vector.broadcast %295 : vector<1x1xf32> to vector<14x2xf32>
    %297 = arith.subf %288, %296 : vector<14x2xf32>
    %298 = arith.mulf %297, %297 : vector<14x2xf32>
    %299 = vector.shape_cast %298 : vector<14x2xf32> to vector<1x14x2xf32>
    %cst_57 = arith.constant dense<0.000000e+00> : vector<1xf32>
    %300 = vector.multi_reduction <add>, %299, %cst_57 [1, 2] : vector<1x14x2xf32> to vector<1xf32>
    %301 = vector.shape_cast %300 : vector<1xf32> to vector<1x1x1xf32>
    %302 = vector.extract %301[0, 0, 0] : f32 from vector<1x1x1xf32>
    %303 = vector.broadcast %302 : f32 to vector<1x1xf32>
    %cst_58 = arith.constant 2.800000e+01 : f32
    %304 = vector.broadcast %cst_58 : f32 to vector<1x1xf32>
    %305 = arith.divf %303, %304 : vector<1x1xf32>
    %306 = vector.shape_cast %295 : vector<1x1xf32> to vector<1x1xf32>
    %307 = vector.broadcast %306 : vector<1x1xf32> to vector<1x2xf32>
    %308 = vector.shape_cast %305 : vector<1x1xf32> to vector<1x1xf32>
    %309 = vector.broadcast %308 : vector<1x1xf32> to vector<1x2xf32>
    %310 = tpu.concatenate %241, %263, %285, %307 in 1 : vector<1x2xf32>, vector<1x2xf32>, vector<1x2xf32>, vector<1x2xf32> -> vector<1x8xf32>
    %311 = tpu.concatenate %243, %265, %287, %309 in 1 : vector<1x2xf32>, vector<1x2xf32>, vector<1x2xf32>, vector<1x2xf32> -> vector<1x8xf32>
    %312 = vector.broadcast %310 : vector<1x8xf32> to vector<14x8xf32>
    %313 = arith.subf %219, %312 : vector<14x8xf32>
    %cst_59 = arith.constant 9.99999974E-6 : f32
    %314 = vector.broadcast %cst_59 : f32 to vector<1x8xf32>
    %315 = arith.addf %311, %314 : vector<1x8xf32>
    %316 = math.rsqrt %315 : vector<1x8xf32>
    %317 = vector.broadcast %316 : vector<1x8xf32> to vector<14x8xf32>
    %318 = arith.mulf %313, %317 : vector<14x8xf32>
    %319 = vector.broadcast %220 : vector<1x8xf32> to vector<14x8xf32>
    %320 = arith.mulf %318, %319 : vector<14x8xf32>
    %321 = vector.broadcast %221 : vector<1x8xf32> to vector<14x8xf32>
    %322 = arith.addf %320, %321 : vector<14x8xf32>
    %323 = arith.negf %322 : vector<14x8xf32>
    %324 = math.exp %323 : vector<14x8xf32>
    %cst_60 = arith.constant 1.000000e+00 : f32
    %325 = vector.broadcast %cst_60 : f32 to vector<14x8xf32>
    %326 = arith.addf %325, %324 : vector<14x8xf32>
    %327 = arith.divf %325, %326 : vector<14x8xf32>
    %c0_61 = arith.constant 0 : index
    %c0_62 = arith.constant 0 : index
    %328 = vector.load %arg4[%c0_61, %c0_62] : memref<224x14xf32, #tpu.memory_space<vmem>>, vector<224x14xf32>
    %cst_63 = arith.constant dense<0.000000e+00> : vector<224x8xf32>
    %329 = tpu.matmul %328, %169, %cst_63 {dimension_numbers = #tpu.dot_dimension_numbers<[1], [0], [0], [1], [0, 0, 1, 1], [], []>} : vector<224x14xf32>, vector<14x8xf32>, vector<224x8xf32> -> vector<224x8xf32>
    %c0_64 = arith.constant 0 : index
    %c0_65 = arith.constant 0 : index
    %330 = vector.load %arg5[%c0_64, %c0_65] : memref<224x14xf32, #tpu.memory_space<vmem>>, vector<224x14xf32>
    %cst_66 = arith.constant dense<0.000000e+00> : vector<224x8xf32>
    %331 = tpu.matmul %330, %327, %cst_66 {dimension_numbers = #tpu.dot_dimension_numbers<[1], [0], [0], [1], [0, 0, 1, 1], [], []>} : vector<224x14xf32>, vector<14x8xf32>, vector<224x8xf32> -> vector<224x8xf32>
    %332 = arith.mulf %1, %329 : vector<224x8xf32>
    %333 = arith.mulf %332, %331 : vector<224x8xf32>
    %c0_67 = arith.constant 0 : index
    %c0_68 = arith.constant 0 : index
    %334 = vector.load %arg6[%c0_67, %c0_68] : memref<4x224xf32, #tpu.memory_space<vmem>>, vector<4x224xf32>
    %cst_69 = arith.constant dense<0.000000e+00> : vector<4x8xf32>
    %335 = tpu.matmul %334, %333, %cst_69 {dimension_numbers = #tpu.dot_dimension_numbers<[1], [0], [0], [1], [0, 0, 1, 1], [], []>} : vector<4x224xf32>, vector<224x8xf32>, vector<4x8xf32> -> vector<4x8xf32>
    %cst_70 = arith.constant 0.0204081628 : f32
    %336 = vector.broadcast %cst_70 : f32 to vector<4x8xf32>
    %337 = arith.mulf %335, %336 : vector<4x8xf32>
    %338 = vector.shape_cast %337 : vector<4x8xf32> to vector<1x4x8xf32>
    %cst_71 = arith.constant dense<0.000000e+00> : vector<1xf32>
    %339 = vector.multi_reduction <add>, %338, %cst_71 [1, 2] : vector<1x4x8xf32> to vector<1xf32>
    %340 = vector.shape_cast %339 : vector<1xf32> to vector<1x1x1xf32>
    %341 = vector.extract %340[0, 0, 0] : f32 from vector<1x1x1xf32>
    %342 = vector.broadcast %341 : f32 to vector<1x1xf32>
    %cst_72 = arith.constant 3.200000e+01 : f32
    %343 = vector.broadcast %cst_72 : f32 to vector<1x1xf32>
    %344 = arith.divf %342, %343 : vector<1x1xf32>
    %345 = vector.broadcast %344 : vector<1x1xf32> to vector<4x8xf32>
    %346 = arith.subf %337, %345 : vector<4x8xf32>
    %347 = arith.mulf %346, %346 : vector<4x8xf32>
    %348 = vector.shape_cast %347 : vector<4x8xf32> to vector<1x4x8xf32>
    %cst_73 = arith.constant dense<0.000000e+00> : vector<1xf32>
    %349 = vector.multi_reduction <add>, %348, %cst_73 [1, 2] : vector<1x4x8xf32> to vector<1xf32>
    %350 = vector.shape_cast %349 : vector<1xf32> to vector<1x1x1xf32>
    %351 = vector.extract %350[0, 0, 0] : f32 from vector<1x1x1xf32>
    %352 = vector.broadcast %351 : f32 to vector<1x1xf32>
    %cst_74 = arith.constant 3.200000e+01 : f32
    %353 = vector.broadcast %cst_74 : f32 to vector<1x1xf32>
    %354 = arith.divf %352, %353 : vector<1x1xf32>
    %355 = vector.broadcast %344 : vector<1x1xf32> to vector<4x8xf32>
    %356 = arith.subf %337, %355 : vector<4x8xf32>
    %cst_75 = arith.constant 9.99999974E-6 : f32
    %357 = vector.broadcast %cst_75 : f32 to vector<1x1xf32>
    %358 = arith.addf %354, %357 : vector<1x1xf32>
    %359 = math.rsqrt %358 : vector<1x1xf32>
    %360 = vector.broadcast %359 : vector<1x1xf32> to vector<4x8xf32>
    %361 = arith.mulf %356, %360 : vector<4x8xf32>
    %c0_76 = arith.constant 0 : index
    %c0_77 = arith.constant 0 : index
    %362 = vector.load %arg13[%c0_76, %c0_77] : memref<1x8xf32, #tpu.memory_space<vmem>>, vector<1x8xf32>
    %363 = vector.broadcast %362 : vector<1x8xf32> to vector<4x8xf32>
    %364 = arith.mulf %361, %363 : vector<4x8xf32>
    %c0_78 = arith.constant 0 : index
    %c0_79 = arith.constant 0 : index
    %365 = vector.load %arg14[%c0_78, %c0_79] : memref<1x8xf32, #tpu.memory_space<vmem>>, vector<1x8xf32>
    %366 = vector.broadcast %365 : vector<1x8xf32> to vector<4x8xf32>
    %367 = arith.addf %364, %366 : vector<4x8xf32>
    %c0_80 = arith.constant 0 : index
    %c0_81 = arith.constant 0 : index
    %368 = vector.load %arg15[%c0_80, %c0_81] : memref<1x8xf32, #tpu.memory_space<vmem>>, vector<1x8xf32>
    %369 = vector.broadcast %368 : vector<1x8xf32> to vector<4x8xf32>
    %370 = arith.mulf %367, %369 : vector<4x8xf32>
    %c0_82 = arith.constant 0 : index
    %c0_83 = arith.constant 0 : index
    %371 = vector.load %arg16[%c0_82, %c0_83] : memref<1x8xf32, #tpu.memory_space<vmem>>, vector<1x8xf32>
    %372 = vector.broadcast %371 : vector<1x8xf32> to vector<4x8xf32>
    %373 = arith.mulf %367, %372 : vector<4x8xf32>
    %c0_84 = arith.constant 0 : index
    %c0_85 = arith.constant 0 : index
    %374 = vector.load %arg17[%c0_84, %c0_85] : memref<1x8xf32, #tpu.memory_space<vmem>>, vector<1x8xf32>
    %375 = vector.broadcast %374 : vector<1x8xf32> to vector<4x8xf32>
    %376 = arith.mulf %367, %375 : vector<4x8xf32>
    %cst_86 = arith.constant dense<0.000000e+00> : vector<8xf32>
    %377 = vector.multi_reduction <add>, %376, %cst_86 [0] : vector<4x8xf32> to vector<8xf32>
    %378 = vector.shape_cast %377 : vector<8xf32> to vector<1x8xf32>
    %cst_87 = arith.constant 4.000000e+00 : f32
    %379 = vector.broadcast %cst_87 : f32 to vector<1x8xf32>
    %380 = arith.divf %378, %379 : vector<1x8xf32>
    %cst_88 = arith.constant dense<0.000000e+00> : vector<8x8xf32>
    %381 = tpu.matmul %370, %373, %cst_88 {dimension_numbers = #tpu.dot_dimension_numbers<[0], [0], [1], [1], [0, 1, 1, 1], [], []>} : vector<4x8xf32>, vector<4x8xf32>, vector<8x8xf32> -> vector<8x8xf32>
    %cst_89 = arith.constant 0.353553385 : f32
    %382 = vector.broadcast %cst_89 : f32 to vector<8x8xf32>
    %383 = arith.mulf %381, %382 : vector<8x8xf32>
    %cst_90 = arith.constant dense<0xFF800000> : vector<8xf32>
    %384 = vector.multi_reduction <maximumf>, %383, %cst_90 [1] : vector<8x8xf32> to vector<8xf32>
    %385 = vector.shape_cast %384 : vector<8xf32> to vector<8x1xf32>
    %386 = vector.broadcast %385 : vector<8x1xf32> to vector<8x8xf32>
    %387 = arith.subf %383, %386 : vector<8x8xf32>
    %388 = math.exp %387 : vector<8x8xf32>
    %cst_91 = arith.constant dense<0.000000e+00> : vector<8xf32>
    %389 = vector.multi_reduction <add>, %388, %cst_91 [1] : vector<8x8xf32> to vector<8xf32>
    %390 = vector.shape_cast %389 : vector<8xf32> to vector<8x1xf32>
    %391 = tpu.reciprocal %390 {approx = true} : vector<8x1xf32> -> vector<8x1xf32>
    %392 = vector.broadcast %391 : vector<8x1xf32> to vector<8x8xf32>
    %393 = arith.mulf %388, %392 : vector<8x8xf32>
    %cst_92 = arith.constant dense<0.000000e+00> : vector<1x8xf32>
    %394 = tpu.matmul %380, %393, %cst_92 {dimension_numbers = #tpu.dot_dimension_numbers<[1], [1], [0], [0], [0, 0, 1, 0], [], []>} : vector<1x8xf32>, vector<8x8xf32>, vector<1x8xf32> -> vector<1x8xf32>
    %395 = arith.negf %394 : vector<1x8xf32>
    %396 = math.exp %395 : vector<1x8xf32>
    %cst_93 = arith.constant 1.000000e+00 : f32
    %397 = vector.broadcast %cst_93 : f32 to vector<1x8xf32>
    %398 = arith.addf %397, %396 : vector<1x8xf32>
    %399 = arith.divf %397, %398 : vector<1x8xf32>
    %400 = vector.broadcast %399 : vector<1x8xf32> to vector<224x8xf32>
    %401 = arith.mulf %333, %400 : vector<224x8xf32>
    %c0_94 = arith.constant 0 : index
    %c0_95 = arith.constant 0 : index
    %c0_96 = arith.constant 0 : index
    %402 = vector.load %arg18[%c0_94, %c0_95, %c0_96] : memref<1x224x8xf32, #tpu.memory_space<vmem>>, vector<1x224x8xf32>
    %403 = vector.shape_cast %402 : vector<1x224x8xf32> to vector<224x8xf32>
    %404 = vector.shape_cast %401 : vector<224x8xf32> to vector<1x224x8xf32>
    tpu.vector_store %arg18[%c0_94, %c0_95, %c0_96], %404 {strides = array<i32>} : memref<1x224x8xf32, #tpu.memory_space<vmem>>, vector<1x224x8xf32>,
    return
  }
  func.func @transform_0(%arg0: i32) -> (i32, i32, i32) {
    %c0_i32 = arith.constant 0 : i32
    %c0_i32_0 = arith.constant 0 : i32
    %c0_i32_1 = arith.constant 0 : i32
    return %arg0, %c0_i32, %c0_i32_0 : i32, i32, i32
  }
  func.func @transform_1(%arg0: i32) -> (i32, i32) {
    %c0_i32 = arith.constant 0 : i32
    %c0_i32_0 = arith.constant 0 : i32
    %c0_i32_1 = arith.constant 0 : i32
    return %c0_i32, %c0_i32_0 : i32, i32
  }
  func.func @transform_2(%arg0: i32) -> (i32, i32) {
    %c0_i32 = arith.constant 0 : i32
    %c0_i32_0 = arith.constant 0 : i32
    %c0_i32_1 = arith.constant 0 : i32
    return %c0_i32, %c0_i32_0 : i32, i32
  }
  func.func @transform_3(%arg0: i32) -> (i32, i32) {
    %c0_i32 = arith.constant 0 : i32
    %c0_i32_0 = arith.constant 0 : i32
    %c0_i32_1 = arith.constant 0 : i32
    return %c0_i32, %c0_i32_0 : i32, i32
  }
  func.func @transform_4(%arg0: i32) -> (i32, i32) {
    %c0_i32 = arith.constant 0 : i32
    %c0_i32_0 = arith.constant 0 : i32
    %c0_i32_1 = arith.constant 0 : i32
    return %c0_i32, %c0_i32_0 : i32, i32
  }
  func.func @transform_5(%arg0: i32) -> (i32, i32) {
    %c0_i32 = arith.constant 0 : i32
    %c0_i32_0 = arith.constant 0 : i32
    %c0_i32_1 = arith.constant 0 : i32
    return %c0_i32, %c0_i32_0 : i32, i32
  }
  func.func @transform_6(%arg0: i32) -> (i32, i32) {
    %c0_i32 = arith.constant 0 : i32
    %c0_i32_0 = arith.constant 0 : i32
    %c0_i32_1 = arith.constant 0 : i32
    return %c0_i32, %c0_i32_0 : i32, i32
  }
  func.func @transform_7(%arg0: i32) -> (i32, i32) {
    %c0_i32 = arith.constant 0 : i32
    %c0_i32_0 = arith.constant 0 : i32
    %c0_i32_1 = arith.constant 0 : i32
    return %c0_i32, %c0_i32_0 : i32, i32
  }
  func.func @transform_8(%arg0: i32) -> (i32, i32) {
    %c0_i32 = arith.constant 0 : i32
    %c0_i32_0 = arith.constant 0 : i32
    %c0_i32_1 = arith.constant 0 : i32
    return %c0_i32, %c0_i32_0 : i32, i32
  }
  func.func @transform_9(%arg0: i32) -> (i32, i32) {
    %c0_i32 = arith.constant 0 : i32
    %c0_i32_0 = arith.constant 0 : i32
    %c0_i32_1 = arith.constant 0 : i32
    return %c0_i32, %c0_i32_0 : i32, i32
  }
  func.func @transform_10(%arg0: i32) -> (i32, i32) {
    %c0_i32 = arith.constant 0 : i32
    %c0_i32_0 = arith.constant 0 : i32
    %c0_i32_1 = arith.constant 0 : i32
    return %c0_i32, %c0_i32_0 : i32, i32
  }
  func.func @transform_11(%arg0: i32) -> (i32, i32) {
    %c0_i32 = arith.constant 0 : i32
    %c0_i32_0 = arith.constant 0 : i32
    %c0_i32_1 = arith.constant 0 : i32
    return %c0_i32, %c0_i32_0 : i32, i32
  }
  func.func @transform_12(%arg0: i32) -> (i32, i32) {
    %c0_i32 = arith.constant 0 : i32
    %c0_i32_0 = arith.constant 0 : i32
    %c0_i32_1 = arith.constant 0 : i32
    return %c0_i32, %c0_i32_0 : i32, i32
  }
  func.func @transform_13(%arg0: i32) -> (i32, i32) {
    %c0_i32 = arith.constant 0 : i32
    %c0_i32_0 = arith.constant 0 : i32
    %c0_i32_1 = arith.constant 0 : i32
    return %c0_i32, %c0_i32_0 : i32, i32
  }
  func.func @transform_14(%arg0: i32) -> (i32, i32) {
    %c0_i32 = arith.constant 0 : i32
    %c0_i32_0 = arith.constant 0 : i32
    %c0_i32_1 = arith.constant 0 : i32
    return %c0_i32, %c0_i32_0 : i32, i32
  }
  func.func @transform_15(%arg0: i32) -> (i32, i32) {
    %c0_i32 = arith.constant 0 : i32
    %c0_i32_0 = arith.constant 0 : i32
    %c0_i32_1 = arith.constant 0 : i32
    return %c0_i32, %c0_i32_0 : i32, i32
  }
  func.func @transform_16(%arg0: i32) -> (i32, i32) {
    %c0_i32 = arith.constant 0 : i32
    %c0_i32_0 = arith.constant 0 : i32
    %c0_i32_1 = arith.constant 0 : i32
    return %c0_i32, %c0_i32_0 : i32, i32
  }
  func.func @transform_17(%arg0: i32) -> (i32, i32, i32) {
    %c0_i32 = arith.constant 0 : i32
    %c0_i32_0 = arith.constant 0 : i32
    %c0_i32_1 = arith.constant 0 : i32
    return %arg0, %c0_i32, %c0_i32_0 : i32, i32, i32
  }
}

module attributes {stable_mosaic.version = 11 : i64} {
  func.func @kernel(%arg0: i32, %arg1: memref<1x258x8xf32, #tpu.memory_space<vmem>>, %arg2: memref<72x16xbf16, #tpu.memory_space<vmem>>, %arg3: memref<1x16xf32, #tpu.memory_space<vmem>>, %arg4: memref<1x16xf32, #tpu.memory_space<vmem>>, %arg5: memref<1x224x16xf32, #tpu.memory_space<vmem>>, %arg6: memref<1x224x16xf32, #tpu.memory_space<vmem>>) attributes {dimension_semantics = [#tpu.dimension_semantics<parallel>], iteration_bounds = array<i64: 2>, scalar_prefetch = 0 : i64, scratch_operands = 0 : i64, tpu.core_type = #tpu.core_type<tc>, window_params = [{transform_indices = @transform_0, window_bounds = array<i64: 1, 258, 8>}, {pipeline_mode = #tpu.pipeline_mode<synchronous>, transform_indices = @transform_1, window_bounds = array<i64: 72, 16>}, {pipeline_mode = #tpu.pipeline_mode<synchronous>, transform_indices = @transform_2, window_bounds = array<i64: 1, 16>}, {pipeline_mode = #tpu.pipeline_mode<synchronous>, transform_indices = @transform_3, window_bounds = array<i64: 1, 16>}, {transform_indices = @transform_4, window_bounds = array<i64: 1, 224, 16>}, {transform_indices = @transform_5, window_bounds = array<i64: 1, 224, 16>}]} {
    %c0 = arith.constant 0 : index
    %c0_0 = arith.constant 0 : index
    %c0_1 = arith.constant 0 : index
    %0 = vector.load %arg1[%c0, %c0_0, %c0_1] : memref<1x258x8xf32, #tpu.memory_space<vmem>>, vector<1x258x8xf32>
    %1 = vector.shape_cast %0 : vector<1x258x8xf32> to vector<258x8xf32>
    %2 = vector.extract_strided_slice %1 {offsets = [0, 0], sizes = [224, 8], strides = [1, 1]} : vector<258x8xf32> to vector<224x8xf32>
    %3 = vector.extract_strided_slice %1 {offsets = [1, 0], sizes = [224, 8], strides = [1, 1]} : vector<258x8xf32> to vector<224x8xf32>
    %4 = vector.extract_strided_slice %1 {offsets = [2, 0], sizes = [224, 8], strides = [1, 1]} : vector<258x8xf32> to vector<224x8xf32>
    %5 = vector.extract_strided_slice %1 {offsets = [16, 0], sizes = [224, 8], strides = [1, 1]} : vector<258x8xf32> to vector<224x8xf32>
    %6 = vector.extract_strided_slice %1 {offsets = [17, 0], sizes = [224, 8], strides = [1, 1]} : vector<258x8xf32> to vector<224x8xf32>
    %7 = vector.extract_strided_slice %1 {offsets = [18, 0], sizes = [224, 8], strides = [1, 1]} : vector<258x8xf32> to vector<224x8xf32>
    %8 = vector.extract_strided_slice %1 {offsets = [32, 0], sizes = [224, 8], strides = [1, 1]} : vector<258x8xf32> to vector<224x8xf32>
    %9 = vector.extract_strided_slice %1 {offsets = [33, 0], sizes = [224, 8], strides = [1, 1]} : vector<258x8xf32> to vector<224x8xf32>
    %10 = vector.extract_strided_slice %1 {offsets = [34, 0], sizes = [224, 8], strides = [1, 1]} : vector<258x8xf32> to vector<224x8xf32>
    %11 = tpu.concatenate %2, %3, %4, %5, %6, %7, %8, %9, %10 in 1 : vector<224x8xf32>, vector<224x8xf32>, vector<224x8xf32>, vector<224x8xf32>, vector<224x8xf32>, vector<224x8xf32>, vector<224x8xf32>, vector<224x8xf32>, vector<224x8xf32> -> vector<224x72xf32>
    %12 = arith.truncf %11 : vector<224x72xf32> to vector<224x72xbf16>
    %c0_2 = arith.constant 0 : index
    %c0_3 = arith.constant 0 : index
    %13 = vector.load %arg2[%c0_2, %c0_3] : memref<72x16xbf16, #tpu.memory_space<vmem>>, vector<72x16xbf16>
    %cst = arith.constant dense<0.000000e+00> : vector<224x16xf32>
    %14 = tpu.matmul %12, %13, %cst {dimension_numbers = #tpu.dot_dimension_numbers<[1], [0], [0], [1], [0, 0, 1, 1], [], []>} : vector<224x72xbf16>, vector<72x16xbf16>, vector<224x16xf32> -> vector<224x16xf32>
    %c0_4 = arith.constant 0 : index
    %c0_5 = arith.constant 0 : index
    %15 = vector.load %arg3[%c0_4, %c0_5] : memref<1x16xf32, #tpu.memory_space<vmem>>, vector<1x16xf32>
    %16 = vector.broadcast %15 : vector<1x16xf32> to vector<224x16xf32>
    %17 = arith.mulf %14, %16 : vector<224x16xf32>
    %c0_6 = arith.constant 0 : index
    %c0_7 = arith.constant 0 : index
    %18 = vector.load %arg4[%c0_6, %c0_7] : memref<1x16xf32, #tpu.memory_space<vmem>>, vector<1x16xf32>
    %19 = vector.broadcast %18 : vector<1x16xf32> to vector<224x16xf32>
    %20 = arith.addf %17, %19 : vector<224x16xf32>
    %21 = arith.negf %20 : vector<224x16xf32>
    %22 = math.exp %21 : vector<224x16xf32>
    %cst_8 = arith.constant 1.000000e+00 : f32
    %23 = vector.broadcast %cst_8 : f32 to vector<224x16xf32>
    %24 = arith.addf %23, %22 : vector<224x16xf32>
    %25 = arith.divf %23, %24 : vector<224x16xf32>
    %26 = arith.mulf %20, %25 : vector<224x16xf32>
    %27 = tpu.iota {dimensions = array<i32: 0>} : vector<224x16xi32>
    %c16_i32 = arith.constant 16 : i32
    %c0_i32 = arith.constant 0 : i32
    %28 = arith.cmpi eq, %c16_i32, %c0_i32 : i32
    %c1_i32 = arith.constant 1 : i32
    %29 = arith.select %28, %c1_i32, %c16_i32 : i32
    %30 = vector.broadcast %29 : i32 to vector<224x16xi32>
    %31 = arith.remsi %27, %30 : vector<224x16xi32>
    %c0_i32_9 = arith.constant 0 : i32
    %32 = vector.broadcast %c0_i32_9 : i32 to vector<224x16xi32>
    %33 = arith.cmpi ne, %31, %32 : vector<224x16xi32>
    %c0_i32_10 = arith.constant 0 : i32
    %34 = vector.broadcast %c0_i32_10 : i32 to vector<224x16xi32>
    %35 = arith.cmpi slt, %31, %34 : vector<224x16xi32>
    %c0_i32_11 = arith.constant 0 : i32
    %36 = arith.cmpi slt, %29, %c0_i32_11 : i32
    %37 = vector.broadcast %36 : i1 to vector<224x16xi1>
    %38 = vector.broadcast %37 : vector<224x16xi1> to vector<224x16xi1>
    %39 = arith.xori %35, %38 : vector<224x16xi1>
    %40 = arith.andi %39, %33 : vector<224x16xi1>
    %41 = vector.broadcast %29 : i32 to vector<224x16xi32>
    %42 = arith.addi %31, %41 : vector<224x16xi32>
    %43 = arith.select %40, %42, %31 : vector<224x16xi1>, vector<224x16xi32>
    %c14_i32 = arith.constant 14 : i32
    %44 = vector.broadcast %c14_i32 : i32 to vector<224x16xi32>
    %45 = arith.cmpi slt, %43, %44 : vector<224x16xi32>
    %cst_12 = arith.constant 0.000000e+00 : f32
    %46 = vector.broadcast %cst_12 : f32 to vector<224x16xf32>
    %47 = arith.select %45, %26, %46 : vector<224x16xi1>, vector<224x16xf32>
    %c0_13 = arith.constant 0 : index
    %c0_14 = arith.constant 0 : index
    %c0_15 = arith.constant 0 : index
    %48 = vector.load %arg5[%c0_13, %c0_14, %c0_15] : memref<1x224x16xf32, #tpu.memory_space<vmem>>, vector<1x224x16xf32>
    %49 = vector.shape_cast %48 : vector<1x224x16xf32> to vector<224x16xf32>
    %50 = arith.addf %47, %49 : vector<224x16xf32>
    %c0_16 = arith.constant 0 : index
    %c0_17 = arith.constant 0 : index
    %c0_18 = arith.constant 0 : index
    %51 = vector.load %arg6[%c0_16, %c0_17, %c0_18] : memref<1x224x16xf32, #tpu.memory_space<vmem>>, vector<1x224x16xf32>
    %52 = vector.shape_cast %51 : vector<1x224x16xf32> to vector<224x16xf32>
    %53 = vector.shape_cast %50 : vector<224x16xf32> to vector<1x224x16xf32>
    tpu.vector_store %arg6[%c0_16, %c0_17, %c0_18], %53 {strides = array<i32>} : memref<1x224x16xf32, #tpu.memory_space<vmem>>, vector<1x224x16xf32>,
    return
  }
  func.func @transform_0(%arg0: i32) -> (i32, i32, i32) {
    %c0_i32 = arith.constant 0 : i32
    %c0_i32_0 = arith.constant 0 : i32
    %c0_i32_1 = arith.constant 0 : i32
    return %arg0, %c0_i32, %c0_i32_0 : i32, i32, i32
  }
  func.func @transform_1(%arg0: i32) -> (i32, i32) {
    %c0_i32 = arith.constant 0 : i32
    %c0_i32_0 = arith.constant 0 : i32
    %c0_i32_1 = arith.constant 0 : i32
    return %c0_i32, %c0_i32_0 : i32, i32
  }
  func.func @transform_2(%arg0: i32) -> (i32, i32) {
    %c0_i32 = arith.constant 0 : i32
    %c0_i32_0 = arith.constant 0 : i32
    %c0_i32_1 = arith.constant 0 : i32
    return %c0_i32, %c0_i32_0 : i32, i32
  }
  func.func @transform_3(%arg0: i32) -> (i32, i32) {
    %c0_i32 = arith.constant 0 : i32
    %c0_i32_0 = arith.constant 0 : i32
    %c0_i32_1 = arith.constant 0 : i32
    return %c0_i32, %c0_i32_0 : i32, i32
  }
  func.func @transform_4(%arg0: i32) -> (i32, i32, i32) {
    %c0_i32 = arith.constant 0 : i32
    %c0_i32_0 = arith.constant 0 : i32
    %c0_i32_1 = arith.constant 0 : i32
    return %arg0, %c0_i32, %c0_i32_0 : i32, i32, i32
  }
  func.func @transform_5(%arg0: i32) -> (i32, i32, i32) {
    %c0_i32 = arith.constant 0 : i32
    %c0_i32_0 = arith.constant 0 : i32
    %c0_i32_1 = arith.constant 0 : i32
    return %arg0, %c0_i32, %c0_i32_0 : i32, i32, i32
  }
}

</mosaic_0001>

<llo_original>
// kernel: bottleneck2_forward.3
$region0: #{bottleneck2_forward.3}
  #allocation0 [shape = 'u32[]', space=smem, size = 0x4, offset = 0x4, fixed_abs, tag = 'smem constant byte address 0x4 - core index']
  #allocation1 [shape = 'u32[144,128]{1,0:T(1,128)}', space=vmem, size = 0x12000, scoped, tag = 'internal scratch']
  %s0 = inlined_call_operand.vmem [shape: f32[2,258,16], index: 0, kind: input, shape index: {}]
  %s1 = inlined_call_operand.vmem [shape: bf16[144,8], index: 1, kind: input, shape index: {}]
  %s2 = inlined_call_operand.vmem [shape: f32[1,8], index: 2, kind: input, shape index: {}]
  %s3 = inlined_call_operand.vmem [shape: f32[1,8], index: 3, kind: input, shape index: {}]
  %s4 = inlined_call_operand.vmem [shape: f32[2,224,8], index: 4, kind: output, shape index: {}]
  %s5 = sld [smem:[#allocation0]]
  $region49: #{bottleneck2_forward.3} parent=0
    _
  %s7 = ssub.s32 1, %s5
  %s8 = scalar_select 0, %s7, %s5
  loop: start=0, step=1, limit=4
  $region2: #{bottleneck2_forward.3} parent=0 // loop_pre_header
    _
  $region3: #{bottleneck2_forward.3} parent=0 // loop_header
    %s10 = sphi 0, %s14
    %p11 = scmp.ge.s32.totalorder %s10, 4
    %s20 = sphi 0, %s22
    %s23 = sphi 0, %s20
    %s24 = sphi 0, %s23
    %s40 = sphi 0, %s24
    %s44 = sphi 0, %s44
    %s46 = sphi 0, %s44
    %s47 = sphi 0, %s46
    %s61 = sphi 0, %s47
    %s65 = sphi 0, %s65
    %s67 = sphi 0, %s65
    %s68 = sphi 0, %s67
    %s82 = sphi 0, %s68
    %s86 = sphi 0, %s86
    %s88 = sphi 0, %s86
    %s89 = sphi 0, %s88
    %s103 = sphi 0, %s89
    %s109 = sphi 0, %s111
    %s112 = sphi 0, %s109
    %s113 = sphi 0, %s112
    %s129 = sphi 0, %s113
  $region4: #{bottleneck2_forward.3} parent=0 // loop_header_branch
    %13 = sbr.rel (%p11) target = $region8
  $region5: #{bottleneck2_forward.3} parent=0 // loop_body
    %s15 = ssub.s32 %s10, 1
    %s16 = ssub.s32 %s10, 2
    %s17 = sadd.s32 %s10, 1
    %s18 = ssub.s32 %s10, %s17
    %p19 = scmp.eq.s32.totalorder %s18, 0
    %s21 = sadd.s32 %s20, 1
    %s22 = scalar_select %p19, %s20, %s21
    %p25 = pneg %p19
    %p26 = scmp.eq.s32.totalorder %s10, 1
    %p27 = por %p25, %p26
    %p28 = scmp.ne.s32.totalorder %s20, %s23
    %p29 = scmp.eq.s32.totalorder %s10, 0
    %p30 = por %p28, %p29
    %p31 = scmp.ne.s32.totalorder %s20, %s23
    %p32 = scmp.eq.s32.totalorder %s15, 1
    %p33 = por %p31, %p32
    %p34 = scmp.ne.s32.totalorder %s23, %s24
    %p35 = scmp.eq.s32.totalorder %s15, 0
    %p36 = por %p34, %p35
    %p37 = scmp.ne.s32.totalorder %s23, %s24
    %p38 = scmp.eq.s32.totalorder %s16, 1
    %p39 = por %p37, %p38
    %p41 = scmp.ne.s32.totalorder %s24, %s40
    %p42 = scmp.eq.s32.totalorder %s16, 0
    %p43 = por %p41, %p42
    %s45 = sadd.s32 %s44, 1
    %p48 = scmp.eq.s32.totalorder %s10, 1
    %p49 = scmp.ne.s32.totalorder %s44, %s46
    %p50 = scmp.eq.s32.totalorder %s10, 0
    %p51 = por %p49, %p50
    %p52 = scmp.ne.s32.totalorder %s44, %s46
    %p53 = scmp.eq.s32.totalorder %s15, 1
    %p54 = por %p52, %p53
    %p55 = scmp.ne.s32.totalorder %s46, %s47
    %p56 = scmp.eq.s32.totalorder %s15, 0
    %p57 = por %p55, %p56
    %p58 = scmp.ne.s32.totalorder %s46, %s47
    %p59 = scmp.eq.s32.totalorder %s16, 1
    %p60 = por %p58, %p59
    %p62 = scmp.ne.s32.totalorder %s47, %s61
    %p63 = scmp.eq.s32.totalorder %s16, 0
    %p64 = por %p62, %p63
    %s66 = sadd.s32 %s65, 1
    %p69 = scmp.eq.s32.totalorder %s10, 1
    %p70 = scmp.ne.s32.totalorder %s65, %s67
    %p71 = scmp.eq.s32.totalorder %s10, 0
    %p72 = por %p70, %p71
    %p73 = scmp.ne.s32.totalorder %s65, %s67
    %p74 = scmp.eq.s32.totalorder %s15, 1
    %p75 = por %p73, %p74
    %p76 = scmp.ne.s32.totalorder %s67, %s68
    %p77 = scmp.eq.s32.totalorder %s15, 0
    %p78 = por %p76, %p77
    %p79 = scmp.ne.s32.totalorder %s67, %s68
    %p80 = scmp.eq.s32.totalorder %s16, 1
    %p81 = por %p79, %p80
    %p83 = scmp.ne.s32.totalorder %s68, %s82
    %p84 = scmp.eq.s32.totalorder %s16, 0
    %p85 = por %p83, %p84
    %s87 = sadd.s32 %s86, 1
    %p90 = scmp.eq.s32.totalorder %s10, 1
    %p91 = scmp.ne.s32.totalorder %s86, %s88
    %p92 = scmp.eq.s32.totalorder %s10, 0
    %p93 = por %p91, %p92
    %p94 = scmp.ne.s32.totalorder %s86, %s88
    %p95 = scmp.eq.s32.totalorder %s15, 1
    %p96 = por %p94, %p95
    %p97 = scmp.ne.s32.totalorder %s88, %s89
    %p98 = scmp.eq.s32.totalorder %s15, 0
    %p99 = por %p97, %p98
    %p100 = scmp.ne.s32.totalorder %s88, %s89
    %p101 = scmp.eq.s32.totalorder %s16, 1
    %p102 = por %p100, %p101
    %p104 = scmp.ne.s32.totalorder %s89, %s103
    %p105 = scmp.eq.s32.totalorder %s16, 0
    %p106 = por %p104, %p105
    %s107 = ssub.s32 %s10, %s17
    %p108 = scmp.eq.s32.totalorder %s107, 0
    %s110 = sadd.s32 %s109, 1
    %s111 = scalar_select %p108, %s109, %s110
    %p114 = pneg %p108
    %p115 = scmp.eq.s32.totalorder %s10, 1
    %p116 = por %p114, %p115
    %p117 = scmp.ne.s32.totalorder %s109, %s112
    %p118 = scmp.eq.s32.totalorder %s10, 0
    %p119 = por %p117, %p118
    %p120 = scmp.ne.s32.totalorder %s109, %s112
    %p121 = scmp.eq.s32.totalorder %s15, 1
    %p122 = por %p120, %p121
    %p123 = scmp.ne.s32.totalorder %s112, %s113
    %p124 = scmp.eq.s32.totalorder %s15, 0
    %p125 = por %p123, %p124
    %p126 = scmp.ne.s32.totalorder %s112, %s113
    %p127 = scmp.eq.s32.totalorder %s16, 1
    %p128 = por %p126, %p127
    %p130 = scmp.ne.s32.totalorder %s113, %s129
    %p131 = scmp.eq.s32.totalorder %s16, 0
    %p132 = por %p130, %p131
    %p133 = scmp.le.s32.totalorder 1, %s10
    %p134 = scmp.lt.s32.totalorder %s10, 3
    %p135 = pnand %p133, %p134
    %p136 = pneg %p135
    // Predicated region
    $region9: #{bottleneck2_forward.3} parent=5 // pred_check
      _
    $region10: #{bottleneck2_forward.3} parent=5 // pred_check_branch
      %138 = sbr.rel (%p135) target = $region12
    $region11: #{bottleneck2_forward.3} parent=5 // pred_region
      %s139 = ssub.s32 %s10, 1
      // Predicated region
      $region13: #{bottleneck2_forward.3} parent=11 // pred_check
        %p140 = pneg %p57
      $region14: #{bottleneck2_forward.3} parent=11 // pred_check_branch
        %142 = sbr.rel (%p140) target = $region16
      $region15: #{bottleneck2_forward.3} parent=11 // pred_region
        _
      $region16: #{bottleneck2_forward.3} parent=11 // pred_fallthru
        _
      // Predicated region
      $region17: #{bottleneck2_forward.3} parent=11 // pred_check
        %p143 = pneg %p78
      $region18: #{bottleneck2_forward.3} parent=11 // pred_check_branch
        %145 = sbr.rel (%p143) target = $region20
      $region19: #{bottleneck2_forward.3} parent=11 // pred_region
        _
      $region20: #{bottleneck2_forward.3} parent=11 // pred_fallthru
        _
      // Predicated region
      $region21: #{bottleneck2_forward.3} parent=11 // pred_check
        %p146 = pneg %p99
      $region22: #{bottleneck2_forward.3} parent=11 // pred_check_branch
        %148 = sbr.rel (%p146) target = $region24
      $region23: #{bottleneck2_forward.3} parent=11 // pred_region
        _
      $region24: #{bottleneck2_forward.3} parent=11 // pred_fallthru
        _
    $region12: #{bottleneck2_forward.3} parent=5 // pred_fallthru
      _
    %p149 = scmp.lt.s32.totalorder %s10, 2
    // Predicated region
    $region25: #{bottleneck2_forward.3} parent=5 // pred_check
      %p150 = pneg %p149
    $region26: #{bottleneck2_forward.3} parent=5 // pred_check_branch
      %152 = sbr.rel (%p150) target = $region28
    $region27: #{bottleneck2_forward.3} parent=5 // pred_region
      // Predicated region
      $region29: #{bottleneck2_forward.3} parent=27 // pred_check
        %p153 = pneg %p30
      $region30: #{bottleneck2_forward.3} parent=27 // pred_check_branch
        %155 = sbr.rel (%p153) target = $region32
      $region31: #{bottleneck2_forward.3} parent=27 // pred_region
        %p156 = scmp.lt.s32.totalorder %s10, 1
        %s157 = scalar_select %p156, %s10, 1
        %s158 = smul.addr %s157, 33
        %s159 = smul.addr %s158, 8
        %s160 = scalar_lea.vmem %s0, %s159
      $region32: #{bottleneck2_forward.3} parent=27 // pred_fallthru
        _
    $region28: #{bottleneck2_forward.3} parent=5 // pred_fallthru
      _
    %p161 = scmp.le.s32.totalorder 1, %s10
    %p162 = scmp.lt.s32.totalorder %s10, 3
    %p163 = pnand %p161, %p162
    %p164 = pneg %p163
    // Predicated region
    $region33: #{bottleneck2_forward.3} parent=5 // pred_check
      _
    $region34: #{bottleneck2_forward.3} parent=5 // pred_check_branch
      %166 = sbr.rel (%p163) target = $region36
    $region35: #{bottleneck2_forward.3} parent=5 // pred_region
      %s167 = ssub.s32 %s10, 1
      %p168 = scmp.lt.s32.totalorder %s15, 1
      %s169 = scalar_select %p168, %s15, 1
      %s170 = smul.addr %s169, 33
      %s171 = smul.addr %s170, 8
      %s172 = scalar_lea.vmem %s0, %s171
      %p173 = pneg %p36
      %p174 = pneg %p33
      %p175 = pneg %p57
      %p176 = pneg %p54
      %p177 = pneg %p78
      %p178 = pneg %p75
      %p179 = pneg %p99
      %p180 = pneg %p96
      %p181 = pneg %p125
      %p182 = pneg %p122
      %p183 = scmp.lt.s32.totalorder %s15, 1
      %s184 = scalar_select %p183, %s15, 1
      %s185 = smul.addr %s184, 28
      %s186 = smul.addr %s185, 8
      %s187 = scalar_lea.vmem %s4, %s186
      %p188 = scmp.lt.s32.totalorder %s15, 1
      %s189 = scalar_select %p188, %s15, 1
      %s190 = smul.addr %s189, 33
      %s191 = smul.addr %s190, 8
      %s192 = scalar_lea.vmem %s0, %s191
      %p193 = scmp.lt.s32.totalorder %s15, 1
      %s194 = scalar_select %p193, %s15, 1
      %s195 = smul.addr %s194, 28
      %s196 = smul.addr %s195, 8
      %s197 = scalar_lea.vmem %s4, %s196
      %v199 = vld [vmem:[%s192] sm:$0xff]
      %v200 = vld [vmem:[%s192 + $0x8] sm:$0xff]
      %v201 = vld [vmem:[%s192 + $0x10] sm:$0xff]
      %v202 = vld [vmem:[%s192 + $0x18] sm:$0xff]
      %v203 = vld [vmem:[%s192 + $0x20] sm:$0xff]
      %v204 = vld [vmem:[%s192 + $0x28] sm:$0xff]
      %v205 = vld [vmem:[%s192 + $0x30] sm:$0xff]
      %v206 = vld [vmem:[%s192 + $0x38] sm:$0xff]
      %v207 = vld [vmem:[%s192 + $0x40] sm:$0xff]
      %v208 = vld [vmem:[%s192 + $0x48] sm:$0xff]
      %v209 = vld [vmem:[%s192 + $0x50] sm:$0xff]
      %v210 = vld [vmem:[%s192 + $0x58] sm:$0xff]
      %v211 = vld [vmem:[%s192 + $0x60] sm:$0xff]
      %v212 = vld [vmem:[%s192 + $0x68] sm:$0xff]
      %v213 = vld [vmem:[%s192 + $0x70] sm:$0xff]
      %v214 = vld [vmem:[%s192 + $0x78] sm:$0xff]
      %v215 = vld [vmem:[%s192 + $0x80] sm:$0xff]
      %v216 = vld [vmem:[%s192 + $0x88] sm:$0xff]
      %v217 = vld [vmem:[%s192 + $0x90] sm:$0xff]
      %v218 = vld [vmem:[%s192 + $0x98] sm:$0xff]
      %v219 = vld [vmem:[%s192 + $0xa0] sm:$0xff]
      %v220 = vld [vmem:[%s192 + $0xa8] sm:$0xff]
      %v221 = vld [vmem:[%s192 + $0xb0] sm:$0xff]
      %v222 = vld [vmem:[%s192 + $0xb8] sm:$0xff]
      %v223 = vld [vmem:[%s192 + $0xc0] sm:$0xff]
      %v224 = vld [vmem:[%s192 + $0xc8] sm:$0xff]
      %v225 = vld [vmem:[%s192 + $0xd0] sm:$0xff]
      %v226 = vld [vmem:[%s192 + $0xd8] sm:$0xff]
      %v227 = vld [vmem:[%s192 + $0xe0] sm:$0xff]
      %v228 = vld [vmem:[%s192 + $0xe8] sm:$0xff]
      %v229 = vld [vmem:[%s192 + $0xf0] sm:$0xff]
      %v230 = vld [vmem:[%s192 + $0xf8] sm:$0xff]
      %v231 = vld [vmem:[%s192 + $0x100] sm:$0x3]
      %vm261 = vcmask 1046528
      %v262 = vrot.slane %v199, 1
      %v263 = vrot.slane %v200, 1
      %v264 = vsel %vm261, %v262, %v263
      %v265 = vrot.slane %v201, 1
      %v266 = vsel %vm261, %v263, %v265
      %v267 = vrot.slane %v202, 1
      %v268 = vsel %vm261, %v265, %v267
      %v269 = vrot.slane %v203, 1
      %v270 = vsel %vm261, %v267, %v269
      %v271 = vrot.slane %v204, 1
      %v272 = vsel %vm261, %v269, %v271
      %v273 = vrot.slane %v205, 1
      %v274 = vsel %vm261, %v271, %v273
      %v275 = vrot.slane %v206, 1
      %v276 = vsel %vm261, %v273, %v275
      %v277 = vrot.slane %v207, 1
      %v278 = vsel %vm261, %v275, %v277
      %v279 = vrot.slane %v208, 1
      %v280 = vsel %vm261, %v277, %v279
      %v281 = vrot.slane %v209, 1
      %v282 = vsel %vm261, %v279, %v281
      %v283 = vrot.slane %v210, 1
      %v284 = vsel %vm261, %v281, %v283
      %v285 = vrot.slane %v211, 1
      %v286 = vsel %vm261, %v283, %v285
      %v287 = vrot.slane %v212, 1
      %v288 = vsel %vm261, %v285, %v287
      %v289 = vrot.slane %v213, 1
      %v290 = vsel %vm261, %v287, %v289
      %v291 = vrot.slane %v214, 1
      %v292 = vsel %vm261, %v289, %v291
      %v293 = vrot.slane %v215, 1
      %v294 = vsel %vm261, %v291, %v293
      %v295 = vrot.slane %v216, 1
      %v296 = vsel %vm261, %v293, %v295
      %v297 = vrot.slane %v217, 1
      %v298 = vsel %vm261, %v295, %v297
      %v299 = vrot.slane %v218, 1
      %v300 = vsel %vm261, %v297, %v299
      %v301 = vrot.slane %v219, 1
      %v302 = vsel %vm261, %v299, %v301
      %v303 = vrot.slane %v220, 1
      %v304 = vsel %vm261, %v301, %v303
      %v305 = vrot.slane %v221, 1
      %v306 = vsel %vm261, %v303, %v305
      %v307 = vrot.slane %v222, 1
      %v308 = vsel %vm261, %v305, %v307
      %v309 = vrot.slane %v223, 1
      %v310 = vsel %vm261, %v307, %v309
      %v311 = vrot.slane %v224, 1
      %v312 = vsel %vm261, %v309, %v311
      %v313 = vrot.slane %v225, 1
      %v314 = vsel %vm261, %v311, %v313
      %v315 = vrot.slane %v226, 1
      %v316 = vsel %vm261, %v313, %v315
      %v317 = vrot.slane %v227, 1
      %v318 = vsel %vm261, %v315, %v317
      %319 = vrot.lane.b32.xlu0 %v264, 16
      %v320 = vpop.permute.xlu0 %319
      %321 = vrot.lane.b32.xlu0 %v266, 16
      %v322 = vpop.permute.xlu0 %321
      %323 = vrot.lane.b32.xlu0 %v268, 16
      %v324 = vpop.permute.xlu0 %323
      %325 = vrot.lane.b32.xlu0 %v270, 16
      %v326 = vpop.permute.xlu0 %325
      %327 = vrot.lane.b32.xlu0 %v272, 16
      %v328 = vpop.permute.xlu0 %327
      %329 = vrot.lane.b32.xlu0 %v274, 16
      %v330 = vpop.permute.xlu0 %329
      %331 = vrot.lane.b32.xlu0 %v276, 16
      %v332 = vpop.permute.xlu0 %331
      %333 = vrot.lane.b32.xlu0 %v278, 16
      %v334 = vpop.permute.xlu0 %333
      %335 = vrot.lane.b32.xlu0 %v280, 16
      %v336 = vpop.permute.xlu0 %335
      %337 = vrot.lane.b32.xlu0 %v282, 16
      %v338 = vpop.permute.xlu0 %337
      %339 = vrot.lane.b32.xlu0 %v284, 16
      %v340 = vpop.permute.xlu0 %339
      %341 = vrot.lane.b32.xlu0 %v286, 16
      %v342 = vpop.permute.xlu0 %341
      %343 = vrot.lane.b32.xlu0 %v288, 16
      %v344 = vpop.permute.xlu0 %343
      %345 = vrot.lane.b32.xlu0 %v290, 16
      %v346 = vpop.permute.xlu0 %345
      %347 = vrot.lane.b32.xlu0 %v292, 16
      %v348 = vpop.permute.xlu0 %347
      %349 = vrot.lane.b32.xlu0 %v294, 16
      %v350 = vpop.permute.xlu0 %349
      %351 = vrot.lane.b32.xlu0 %v296, 16
      %v352 = vpop.permute.xlu0 %351
      %353 = vrot.lane.b32.xlu0 %v298, 16
      %v354 = vpop.permute.xlu0 %353
      %355 = vrot.lane.b32.xlu0 %v300, 16
      %v356 = vpop.permute.xlu0 %355
      %357 = vrot.lane.b32.xlu0 %v302, 16
      %v358 = vpop.permute.xlu0 %357
      %359 = vrot.lane.b32.xlu0 %v304, 16
      %v360 = vpop.permute.xlu0 %359
      %361 = vrot.lane.b32.xlu0 %v306, 16
      %v362 = vpop.permute.xlu0 %361
      %363 = vrot.lane.b32.xlu0 %v308, 16
      %v364 = vpop.permute.xlu0 %363
      %365 = vrot.lane.b32.xlu0 %v310, 16
      %v366 = vpop.permute.xlu0 %365
      %367 = vrot.lane.b32.xlu0 %v312, 16
      %v368 = vpop.permute.xlu0 %367
      %369 = vrot.lane.b32.xlu0 %v314, 16
      %v370 = vpop.permute.xlu0 %369
      %371 = vrot.lane.b32.xlu0 %v316, 16
      %v372 = vpop.permute.xlu0 %371
      %373 = vrot.lane.b32.xlu0 %v318, 16
      %v374 = vpop.permute.xlu0 %373
      %vm403 = vcmask 1045504
      %v404 = vrot.slane %v199, 2
      %v405 = vrot.slane %v200, 2
      %v406 = vsel %vm403, %v404, %v405
      %v407 = vrot.slane %v201, 2
      %v408 = vsel %vm403, %v405, %v407
      %v409 = vrot.slane %v202, 2
      %v410 = vsel %vm403, %v407, %v409
      %v411 = vrot.slane %v203, 2
      %v412 = vsel %vm403, %v409, %v411
      %v413 = vrot.slane %v204, 2
      %v414 = vsel %vm403, %v411, %v413
      %v415 = vrot.slane %v205, 2
      %v416 = vsel %vm403, %v413, %v415
      %v417 = vrot.slane %v206, 2
      %v418 = vsel %vm403, %v415, %v417
      %v419 = vrot.slane %v207, 2
      %v420 = vsel %vm403, %v417, %v419
      %v421 = vrot.slane %v208, 2
      %v422 = vsel %vm403, %v419, %v421
      %v423 = vrot.slane %v209, 2
      %v424 = vsel %vm403, %v421, %v423
      %v425 = vrot.slane %v210, 2
      %v426 = vsel %vm403, %v423, %v425
      %v427 = vrot.slane %v211, 2
      %v428 = vsel %vm403, %v425, %v427
      %v429 = vrot.slane %v212, 2
      %v430 = vsel %vm403, %v427, %v429
      %v431 = vrot.slane %v213, 2
      %v432 = vsel %vm403, %v429, %v431
      %v433 = vrot.slane %v214, 2
      %v434 = vsel %vm403, %v431, %v433
      %v435 = vrot.slane %v215, 2
      %v436 = vsel %vm403, %v433, %v435
      %v437 = vrot.slane %v216, 2
      %v438 = vsel %vm403, %v435, %v437
      %v439 = vrot.slane %v217, 2
      %v440 = vsel %vm403, %v437, %v439
      %v441 = vrot.slane %v218, 2
      %v442 = vsel %vm403, %v439, %v441
      %v443 = vrot.slane %v219, 2
      %v444 = vsel %vm403, %v441, %v443
      %v445 = vrot.slane %v220, 2
      %v446 = vsel %vm403, %v443, %v445
      %v447 = vrot.slane %v221, 2
      %v448 = vsel %vm403, %v445, %v447
      %v449 = vrot.slane %v222, 2
      %v450 = vsel %vm403, %v447, %v449
      %v451 = vrot.slane %v223, 2
      %v452 = vsel %vm403, %v449, %v451
      %v453 = vrot.slane %v224, 2
      %v454 = vsel %vm403, %v451, %v453
      %v455 = vrot.slane %v225, 2
      %v456 = vsel %vm403, %v453, %v455
      %v457 = vrot.slane %v226, 2
      %v458 = vsel %vm403, %v455, %v457
      %v459 = vrot.slane %v227, 2
      %v460 = vsel %vm403, %v457, %v459
      %461 = vrot.lane.b32.xlu0 %v406, 32
      %v462 = vpop.permute.xlu0 %461
      %463 = vrot.lane.b32.xlu0 %v408, 32
      %v464 = vpop.permute.xlu0 %463
      %465 = vrot.lane.b32.xlu0 %v410, 32
      %v466 = vpop.permute.xlu0 %465
      %467 = vrot.lane.b32.xlu0 %v412, 32
      %v468 = vpop.permute.xlu0 %467
      %469 = vrot.lane.b32.xlu0 %v414, 32
      %v470 = vpop.permute.xlu0 %469
      %471 = vrot.lane.b32.xlu0 %v416, 32
      %v472 = vpop.permute.xlu0 %471
      %473 = vrot.lane.b32.xlu0 %v418, 32
      %v474 = vpop.permute.xlu0 %473
      %475 = vrot.lane.b32.xlu0 %v420, 32
      %v476 = vpop.permute.xlu0 %475
      %477 = vrot.lane.b32.xlu0 %v422, 32
      %v478 = vpop.permute.xlu0 %477
      %479 = vrot.lane.b32.xlu0 %v424, 32
      %v480 = vpop.permute.xlu0 %479
      %481 = vrot.lane.b32.xlu0 %v426, 32
      %v482 = vpop.permute.xlu0 %481
      %483 = vrot.lane.b32.xlu0 %v428, 32
      %v484 = vpop.permute.xlu0 %483
      %485 = vrot.lane.b32.xlu0 %v430, 32
      %v486 = vpop.permute.xlu0 %485
      %487 = vrot.lane.b32.xlu0 %v432, 32
      %v488 = vpop.permute.xlu0 %487
      %489 = vrot.lane.b32.xlu0 %v434, 32
      %v490 = vpop.permute.xlu0 %489
      %491 = vrot.lane.b32.xlu0 %v436, 32
      %v492 = vpop.permute.xlu0 %491
      %493 = vrot.lane.b32.xlu0 %v438, 32
      %v494 = vpop.permute.xlu0 %493
      %495 = vrot.lane.b32.xlu0 %v440, 32
      %v496 = vpop.permute.xlu0 %495
      %497 = vrot.lane.b32.xlu0 %v442, 32
      %v498 = vpop.permute.xlu0 %497
      %499 = vrot.lane.b32.xlu0 %v444, 32
      %v500 = vpop.permute.xlu0 %499
      %501 = vrot.lane.b32.xlu0 %v446, 32
      %v502 = vpop.permute.xlu0 %501
      %503 = vrot.lane.b32.xlu0 %v448, 32
      %v504 = vpop.permute.xlu0 %503
      %505 = vrot.lane.b32.xlu0 %v450, 32
      %v506 = vpop.permute.xlu0 %505
      %507 = vrot.lane.b32.xlu0 %v452, 32
      %v508 = vpop.permute.xlu0 %507
      %509 = vrot.lane.b32.xlu0 %v454, 32
      %v510 = vpop.permute.xlu0 %509
      %511 = vrot.lane.b32.xlu0 %v456, 32
      %v512 = vpop.permute.xlu0 %511
      %513 = vrot.lane.b32.xlu0 %v458, 32
      %v514 = vpop.permute.xlu0 %513
      %515 = vrot.lane.b32.xlu0 %v460, 32
      %v516 = vpop.permute.xlu0 %515
      %546 = vrot.lane.b32.xlu0 %v201, 48
      %v547 = vpop.permute.xlu0 %546
      %548 = vrot.lane.b32.xlu0 %v202, 48
      %v549 = vpop.permute.xlu0 %548
      %550 = vrot.lane.b32.xlu0 %v203, 48
      %v551 = vpop.permute.xlu0 %550
      %552 = vrot.lane.b32.xlu0 %v204, 48
      %v553 = vpop.permute.xlu0 %552
      %554 = vrot.lane.b32.xlu0 %v205, 48
      %v555 = vpop.permute.xlu0 %554
      %556 = vrot.lane.b32.xlu0 %v206, 48
      %v557 = vpop.permute.xlu0 %556
      %558 = vrot.lane.b32.xlu0 %v207, 48
      %v559 = vpop.permute.xlu0 %558
      %560 = vrot.lane.b32.xlu0 %v208, 48
      %v561 = vpop.permute.xlu0 %560
      %562 = vrot.lane.b32.xlu0 %v209, 48
      %v563 = vpop.permute.xlu0 %562
      %564 = vrot.lane.b32.xlu0 %v210, 48
      %v565 = vpop.permute.xlu0 %564
      %566 = vrot.lane.b32.xlu0 %v211, 48
      %v567 = vpop.permute.xlu0 %566
      %568 = vrot.lane.b32.xlu0 %v212, 48
      %v569 = vpop.permute.xlu0 %568
      %570 = vrot.lane.b32.xlu0 %v213, 48
      %v571 = vpop.permute.xlu0 %570
      %572 = vrot.lane.b32.xlu0 %v214, 48
      %v573 = vpop.permute.xlu0 %572
      %574 = vrot.lane.b32.xlu0 %v215, 48
      %v575 = vpop.permute.xlu0 %574
      %576 = vrot.lane.b32.xlu0 %v216, 48
      %v577 = vpop.permute.xlu0 %576
      %578 = vrot.lane.b32.xlu0 %v217, 48
      %v579 = vpop.permute.xlu0 %578
      %580 = vrot.lane.b32.xlu0 %v218, 48
      %v581 = vpop.permute.xlu0 %580
      %582 = vrot.lane.b32.xlu0 %v219, 48
      %v583 = vpop.permute.xlu0 %582
      %584 = vrot.lane.b32.xlu0 %v220, 48
      %v585 = vpop.permute.xlu0 %584
      %586 = vrot.lane.b32.xlu0 %v221, 48
      %v587 = vpop.permute.xlu0 %586
      %588 = vrot.lane.b32.xlu0 %v222, 48
      %v589 = vpop.permute.xlu0 %588
      %590 = vrot.lane.b32.xlu0 %v223, 48
      %v591 = vpop.permute.xlu0 %590
      %592 = vrot.lane.b32.xlu0 %v224, 48
      %v593 = vpop.permute.xlu0 %592
      %594 = vrot.lane.b32.xlu0 %v225, 48
      %v595 = vpop.permute.xlu0 %594
      %596 = vrot.lane.b32.xlu0 %v226, 48
      %v597 = vpop.permute.xlu0 %596
      %598 = vrot.lane.b32.xlu0 %v227, 48
      %v599 = vpop.permute.xlu0 %598
      %600 = vrot.lane.b32.xlu0 %v228, 48
      %v601 = vpop.permute.xlu0 %600
      %v631 = vrot.slane %v228, 1
      %v632 = vsel %vm261, %v317, %v631
      %v633 = vrot.slane %v229, 1
      %v634 = vsel %vm261, %v631, %v633
      %635 = vrot.lane.b32.xlu0 %v268, 64
      %v636 = vpop.permute.xlu0 %635
      %637 = vrot.lane.b32.xlu0 %v270, 64
      %v638 = vpop.permute.xlu0 %637
      %639 = vrot.lane.b32.xlu0 %v272, 64
      %v640 = vpop.permute.xlu0 %639
      %641 = vrot.lane.b32.xlu0 %v274, 64
      %v642 = vpop.permute.xlu0 %641
      %643 = vrot.lane.b32.xlu0 %v276, 64
      %v644 = vpop.permute.xlu0 %643
      %645 = vrot.lane.b32.xlu0 %v278, 64
      %v646 = vpop.permute.xlu0 %645
      %647 = vrot.lane.b32.xlu0 %v280, 64
      %v648 = vpop.permute.xlu0 %647
      %649 = vrot.lane.b32.xlu0 %v282, 64
      %v650 = vpop.permute.xlu0 %649
      %651 = vrot.lane.b32.xlu0 %v284, 64
      %v652 = vpop.permute.xlu0 %651
      %653 = vrot.lane.b32.xlu0 %v286, 64
      %v654 = vpop.permute.xlu0 %653
      %655 = vrot.lane.b32.xlu0 %v288, 64
      %v656 = vpop.permute.xlu0 %655
      %657 = vrot.lane.b32.xlu0 %v290, 64
      %v658 = vpop.permute.xlu0 %657
      %659 = vrot.lane.b32.xlu0 %v292, 64
      %v660 = vpop.permute.xlu0 %659
      %661 = vrot.lane.b32.xlu0 %v294, 64
      %v662 = vpop.permute.xlu0 %661
      %663 = vrot.lane.b32.xlu0 %v296, 64
      %v664 = vpop.permute.xlu0 %663
      %665 = vrot.lane.b32.xlu0 %v298, 64
      %v666 = vpop.permute.xlu0 %665
      %667 = vrot.lane.b32.xlu0 %v300, 64
      %v668 = vpop.permute.xlu0 %667
      %669 = vrot.lane.b32.xlu0 %v302, 64
      %v670 = vpop.permute.xlu0 %669
      %671 = vrot.lane.b32.xlu0 %v304, 64
      %v672 = vpop.permute.xlu0 %671
      %673 = vrot.lane.b32.xlu0 %v306, 64
      %v674 = vpop.permute.xlu0 %673
      %675 = vrot.lane.b32.xlu0 %v308, 64
      %v676 = vpop.permute.xlu0 %675
      %677 = vrot.lane.b32.xlu0 %v310, 64
      %v678 = vpop.permute.xlu0 %677
      %679 = vrot.lane.b32.xlu0 %v312, 64
      %v680 = vpop.permute.xlu0 %679
      %681 = vrot.lane.b32.xlu0 %v314, 64
      %v682 = vpop.permute.xlu0 %681
      %683 = vrot.lane.b32.xlu0 %v316, 64
      %v684 = vpop.permute.xlu0 %683
      %685 = vrot.lane.b32.xlu0 %v318, 64
      %v686 = vpop.permute.xlu0 %685
      %687 = vrot.lane.b32.xlu0 %v632, 64
      %v688 = vpop.permute.xlu0 %687
      %689 = vrot.lane.b32.xlu0 %v634, 64
      %v690 = vpop.permute.xlu0 %689
      %v719 = vrot.slane %v228, 2
      %v720 = vsel %vm403, %v459, %v719
      %v721 = vrot.slane %v229, 2
      %v722 = vsel %vm403, %v719, %v721
      %723 = vrot.lane.b32.xlu0 %v410, 80
      %v724 = vpop.permute.xlu0 %723
      %725 = vrot.lane.b32.xlu0 %v412, 80
      %v726 = vpop.permute.xlu0 %725
      %727 = vrot.lane.b32.xlu0 %v414, 80
      %v728 = vpop.permute.xlu0 %727
      %729 = vrot.lane.b32.xlu0 %v416, 80
      %v730 = vpop.permute.xlu0 %729
      %731 = vrot.lane.b32.xlu0 %v418, 80
      %v732 = vpop.permute.xlu0 %731
      %733 = vrot.lane.b32.xlu0 %v420, 80
      %v734 = vpop.permute.xlu0 %733
      %735 = vrot.lane.b32.xlu0 %v422, 80
      %v736 = vpop.permute.xlu0 %735
      %737 = vrot.lane.b32.xlu0 %v424, 80
      %v738 = vpop.permute.xlu0 %737
      %739 = vrot.lane.b32.xlu0 %v426, 80
      %v740 = vpop.permute.xlu0 %739
      %741 = vrot.lane.b32.xlu0 %v428, 80
      %v742 = vpop.permute.xlu0 %741
      %743 = vrot.lane.b32.xlu0 %v430, 80
      %v744 = vpop.permute.xlu0 %743
      %745 = vrot.lane.b32.xlu0 %v432, 80
      %v746 = vpop.permute.xlu0 %745
      %747 = vrot.lane.b32.xlu0 %v434, 80
      %v748 = vpop.permute.xlu0 %747
      %749 = vrot.lane.b32.xlu0 %v436, 80
      %v750 = vpop.permute.xlu0 %749
      %751 = vrot.lane.b32.xlu0 %v438, 80
      %v752 = vpop.permute.xlu0 %751
      %753 = vrot.lane.b32.xlu0 %v440, 80
      %v754 = vpop.permute.xlu0 %753
      %755 = vrot.lane.b32.xlu0 %v442, 80
      %v756 = vpop.permute.xlu0 %755
      %757 = vrot.lane.b32.xlu0 %v444, 80
      %v758 = vpop.permute.xlu0 %757
      %759 = vrot.lane.b32.xlu0 %v446, 80
      %v760 = vpop.permute.xlu0 %759
      %761 = vrot.lane.b32.xlu0 %v448, 80
      %v762 = vpop.permute.xlu0 %761
      %763 = vrot.lane.b32.xlu0 %v450, 80
      %v764 = vpop.permute.xlu0 %763
      %765 = vrot.lane.b32.xlu0 %v452, 80
      %v766 = vpop.permute.xlu0 %765
      %767 = vrot.lane.b32.xlu0 %v454, 80
      %v768 = vpop.permute.xlu0 %767
      %769 = vrot.lane.b32.xlu0 %v456, 80
      %v770 = vpop.permute.xlu0 %769
      %771 = vrot.lane.b32.xlu0 %v458, 80
      %v772 = vpop.permute.xlu0 %771
      %773 = vrot.lane.b32.xlu0 %v460, 80
      %v774 = vpop.permute.xlu0 %773
      %775 = vrot.lane.b32.xlu0 %v720, 80
      %v776 = vpop.permute.xlu0 %775
      %777 = vrot.lane.b32.xlu0 %v722, 80
      %v778 = vpop.permute.xlu0 %777
      %808 = vrot.lane.b32.xlu0 %v203, 96
      %v809 = vpop.permute.xlu0 %808
      %810 = vrot.lane.b32.xlu0 %v204, 96
      %v811 = vpop.permute.xlu0 %810
      %812 = vrot.lane.b32.xlu0 %v205, 96
      %v813 = vpop.permute.xlu0 %812
      %814 = vrot.lane.b32.xlu0 %v206, 96
      %v815 = vpop.permute.xlu0 %814
      %816 = vrot.lane.b32.xlu0 %v207, 96
      %v817 = vpop.permute.xlu0 %816
      %818 = vrot.lane.b32.xlu0 %v208, 96
      %v819 = vpop.permute.xlu0 %818
      %820 = vrot.lane.b32.xlu0 %v209, 96
      %v821 = vpop.permute.xlu0 %820
      %822 = vrot.lane.b32.xlu0 %v210, 96
      %v823 = vpop.permute.xlu0 %822
      %824 = vrot.lane.b32.xlu0 %v211, 96
      %v825 = vpop.permute.xlu0 %824
      %826 = vrot.lane.b32.xlu0 %v212, 96
      %v827 = vpop.permute.xlu0 %826
      %828 = vrot.lane.b32.xlu0 %v213, 96
      %v829 = vpop.permute.xlu0 %828
      %830 = vrot.lane.b32.xlu0 %v214, 96
      %v831 = vpop.permute.xlu0 %830
      %832 = vrot.lane.b32.xlu0 %v215, 96
      %v833 = vpop.permute.xlu0 %832
      %834 = vrot.lane.b32.xlu0 %v216, 96
      %v835 = vpop.permute.xlu0 %834
      %836 = vrot.lane.b32.xlu0 %v217, 96
      %v837 = vpop.permute.xlu0 %836
      %838 = vrot.lane.b32.xlu0 %v218, 96
      %v839 = vpop.permute.xlu0 %838
      %840 = vrot.lane.b32.xlu0 %v219, 96
      %v841 = vpop.permute.xlu0 %840
      %842 = vrot.lane.b32.xlu0 %v220, 96
      %v843 = vpop.permute.xlu0 %842
      %844 = vrot.lane.b32.xlu0 %v221, 96
      %v845 = vpop.permute.xlu0 %844
      %846 = vrot.lane.b32.xlu0 %v222, 96
      %v847 = vpop.permute.xlu0 %846
      %848 = vrot.lane.b32.xlu0 %v223, 96
      %v849 = vpop.permute.xlu0 %848
      %850 = vrot.lane.b32.xlu0 %v224, 96
      %v851 = vpop.permute.xlu0 %850
      %852 = vrot.lane.b32.xlu0 %v225, 96
      %v853 = vpop.permute.xlu0 %852
      %854 = vrot.lane.b32.xlu0 %v226, 96
      %v855 = vpop.permute.xlu0 %854
      %856 = vrot.lane.b32.xlu0 %v227, 96
      %v857 = vpop.permute.xlu0 %856
      %858 = vrot.lane.b32.xlu0 %v228, 96
      %v859 = vpop.permute.xlu0 %858
      %860 = vrot.lane.b32.xlu0 %v229, 96
      %v861 = vpop.permute.xlu0 %860
      %862 = vrot.lane.b32.xlu0 %v230, 96
      %v863 = vpop.permute.xlu0 %862
      %v893 = vrot.slane %v230, 1
      %v894 = vsel %vm261, %v633, %v893
      %v895 = vrot.slane %v231, 1
      %v896 = vsel %vm261, %v893, %v895
      %897 = vrot.lane.b32.xlu0 %v272, 112
      %v898 = vpop.permute.xlu0 %897
      %899 = vrot.lane.b32.xlu0 %v274, 112
      %v900 = vpop.permute.xlu0 %899
      %901 = vrot.lane.b32.xlu0 %v276, 112
      %v902 = vpop.permute.xlu0 %901
      %903 = vrot.lane.b32.xlu0 %v278, 112
      %v904 = vpop.permute.xlu0 %903
      %905 = vrot.lane.b32.xlu0 %v280, 112
      %v906 = vpop.permute.xlu0 %905
      %907 = vrot.lane.b32.xlu0 %v282, 112
      %v908 = vpop.permute.xlu0 %907
      %909 = vrot.lane.b32.xlu0 %v284, 112
      %v910 = vpop.permute.xlu0 %909
      %911 = vrot.lane.b32.xlu0 %v286, 112
      %v912 = vpop.permute.xlu0 %911
      %913 = vrot.lane.b32.xlu0 %v288, 112
      %v914 = vpop.permute.xlu0 %913
      %915 = vrot.lane.b32.xlu0 %v290, 112
      %v916 = vpop.permute.xlu0 %915
      %917 = vrot.lane.b32.xlu0 %v292, 112
      %v918 = vpop.permute.xlu0 %917
      %919 = vrot.lane.b32.xlu0 %v294, 112
      %v920 = vpop.permute.xlu0 %919
      %921 = vrot.lane.b32.xlu0 %v296, 112
      %v922 = vpop.permute.xlu0 %921
      %923 = vrot.lane.b32.xlu0 %v298, 112
      %v924 = vpop.permute.xlu0 %923
      %925 = vrot.lane.b32.xlu0 %v300, 112
      %v926 = vpop.permute.xlu0 %925
      %927 = vrot.lane.b32.xlu0 %v302, 112
      %v928 = vpop.permute.xlu0 %927
      %929 = vrot.lane.b32.xlu0 %v304, 112
      %v930 = vpop.permute.xlu0 %929
      %931 = vrot.lane.b32.xlu0 %v306, 112
      %v932 = vpop.permute.xlu0 %931
      %933 = vrot.lane.b32.xlu0 %v308, 112
      %v934 = vpop.permute.xlu0 %933
      %935 = vrot.lane.b32.xlu0 %v310, 112
      %v936 = vpop.permute.xlu0 %935
      %937 = vrot.lane.b32.xlu0 %v312, 112
      %v938 = vpop.permute.xlu0 %937
      %939 = vrot.lane.b32.xlu0 %v314, 112
      %v940 = vpop.permute.xlu0 %939
      %941 = vrot.lane.b32.xlu0 %v316, 112
      %v942 = vpop.permute.xlu0 %941
      %943 = vrot.lane.b32.xlu0 %v318, 112
      %v944 = vpop.permute.xlu0 %943
      %945 = vrot.lane.b32.xlu0 %v632, 112
      %v946 = vpop.permute.xlu0 %945
      %947 = vrot.lane.b32.xlu0 %v634, 112
      %v948 = vpop.permute.xlu0 %947
      %949 = vrot.lane.b32.xlu0 %v894, 112
      %v950 = vpop.permute.xlu0 %949
      %951 = vrot.lane.b32.xlu0 %v896, 112
      %v952 = vpop.permute.xlu0 %951
      %v981 = vrot.slane %v230, 2
      %v982 = vsel %vm403, %v721, %v981
      %v983 = vrot.slane %v231, 2
      %v984 = vsel %vm403, %v981, %v983
      %vm1013 = vcmask 130048
      %v1014 = vsel %vm1013, %v199, %v320
      %v1015 = vsel %vm1013, %v200, %v322
      %v1016 = vsel %vm1013, %v201, %v324
      %v1017 = vsel %vm1013, %v202, %v326
      %v1018 = vsel %vm1013, %v203, %v328
      %v1019 = vsel %vm1013, %v204, %v330
      %v1020 = vsel %vm1013, %v205, %v332
      %v1021 = vsel %vm1013, %v206, %v334
      %v1022 = vsel %vm1013, %v207, %v336
      %v1023 = vsel %vm1013, %v208, %v338
      %v1024 = vsel %vm1013, %v209, %v340
      %v1025 = vsel %vm1013, %v210, %v342
      %v1026 = vsel %vm1013, %v211, %v344
      %v1027 = vsel %vm1013, %v212, %v346
      %v1028 = vsel %vm1013, %v213, %v348
      %v1029 = vsel %vm1013, %v214, %v350
      %v1030 = vsel %vm1013, %v215, %v352
      %v1031 = vsel %vm1013, %v216, %v354
      %v1032 = vsel %vm1013, %v217, %v356
      %v1033 = vsel %vm1013, %v218, %v358
      %v1034 = vsel %vm1013, %v219, %v360
      %v1035 = vsel %vm1013, %v220, %v362
      %v1036 = vsel %vm1013, %v221, %v364
      %v1037 = vsel %vm1013, %v222, %v366
      %v1038 = vsel %vm1013, %v223, %v368
      %v1039 = vsel %vm1013, %v224, %v370
      %v1040 = vsel %vm1013, %v225, %v372
      %v1041 = vsel %vm1013, %v226, %v374
      %vm1042 = vcmask 261120
      %v1043 = vsel %vm1042, %v1014, %v462
      %v1044 = vsel %vm1042, %v1015, %v464
      %v1045 = vsel %vm1042, %v1016, %v466
      %v1046 = vsel %vm1042, %v1017, %v468
      %v1047 = vsel %vm1042, %v1018, %v470
      %v1048 = vsel %vm1042, %v1019, %v472
      %v1049 = vsel %vm1042, %v1020, %v474
      %v1050 = vsel %vm1042, %v1021, %v476
      %v1051 = vsel %vm1042, %v1022, %v478
      %v1052 = vsel %vm1042, %v1023, %v480
      %v1053 = vsel %vm1042, %v1024, %v482
      %v1054 = vsel %vm1042, %v1025, %v484
      %v1055 = vsel %vm1042, %v1026, %v486
      %v1056 = vsel %vm1042, %v1027, %v488
      %v1057 = vsel %vm1042, %v1028, %v490
      %v1058 = vsel %vm1042, %v1029, %v492
      %v1059 = vsel %vm1042, %v1030, %v494
      %v1060 = vsel %vm1042, %v1031, %v496
      %v1061 = vsel %vm1042, %v1032, %v498
      %v1062 = vsel %vm1042, %v1033, %v500
      %v1063 = vsel %vm1042, %v1034, %v502
      %v1064 = vsel %vm1042, %v1035, %v504
      %v1065 = vsel %vm1042, %v1036, %v506
      %v1066 = vsel %vm1042, %v1037, %v508
      %v1067 = vsel %vm1042, %v1038, %v510
      %v1068 = vsel %vm1042, %v1039, %v512
      %v1069 = vsel %vm1042, %v1040, %v514
      %v1070 = vsel %vm1042, %v1041, %v516
      %vm1071 = vcmask 392192
      %v1072 = vsel %vm1071, %v1043, %v547
      %v1073 = vsel %vm1071, %v1044, %v549
      %v1074 = vsel %vm1071, %v1045, %v551
      %v1075 = vsel %vm1071, %v1046, %v553
      %v1076 = vsel %vm1071, %v1047, %v555
      %v1077 = vsel %vm1071, %v1048, %v557
      %v1078 = vsel %vm1071, %v1049, %v559
      %v1079 = vsel %vm1071, %v1050, %v561
      %v1080 = vsel %vm1071, %v1051, %v563
      %v1081 = vsel %vm1071, %v1052, %v565
      %v1082 = vsel %vm1071, %v1053, %v567
      %v1083 = vsel %vm1071, %v1054, %v569
      %v1084 = vsel %vm1071, %v1055, %v571
      %v1085 = vsel %vm1071, %v1056, %v573
      %v1086 = vsel %vm1071, %v1057, %v575
      %v1087 = vsel %vm1071, %v1058, %v577
      %v1088 = vsel %vm1071, %v1059, %v579
      %v1089 = vsel %vm1071, %v1060, %v581
      %v1090 = vsel %vm1071, %v1061, %v583
      %v1091 = vsel %vm1071, %v1062, %v585
      %v1092 = vsel %vm1071, %v1063, %v587
      %v1093 = vsel %vm1071, %v1064, %v589
      %v1094 = vsel %vm1071, %v1065, %v591
      %v1095 = vsel %vm1071, %v1066, %v593
      %v1096 = vsel %vm1071, %v1067, %v595
      %v1097 = vsel %vm1071, %v1068, %v597
      %v1098 = vsel %vm1071, %v1069, %v599
      %v1099 = vsel %vm1071, %v1070, %v601
      %vm1100 = vcmask 523264
      %v1101 = vsel %vm1100, %v1072, %v636
      %v1102 = vsel %vm1100, %v1073, %v638
      %v1103 = vsel %vm1100, %v1074, %v640
      %v1104 = vsel %vm1100, %v1075, %v642
      %v1105 = vsel %vm1100, %v1076, %v644
      %v1106 = vsel %vm1100, %v1077, %v646
      %v1107 = vsel %vm1100, %v1078, %v648
      %v1108 = vsel %vm1100, %v1079, %v650
      %v1109 = vsel %vm1100, %v1080, %v652
      %v1110 = vsel %vm1100, %v1081, %v654
      %v1111 = vsel %vm1100, %v1082, %v656
      %v1112 = vsel %vm1100, %v1083, %v658
      %v1113 = vsel %vm1100, %v1084, %v660
      %v1114 = vsel %vm1100, %v1085, %v662
      %v1115 = vsel %vm1100, %v1086, %v664
      %v1116 = vsel %vm1100, %v1087, %v666
      %v1117 = vsel %vm1100, %v1088, %v668
      %v1118 = vsel %vm1100, %v1089, %v670
      %v1119 = vsel %vm1100, %v1090, %v672
      %v1120 = vsel %vm1100, %v1091, %v674
      %v1121 = vsel %vm1100, %v1092, %v676
      %v1122 = vsel %vm1100, %v1093, %v678
      %v1123 = vsel %vm1100, %v1094, %v680
      %v1124 = vsel %vm1100, %v1095, %v682
      %v1125 = vsel %vm1100, %v1096, %v684
      %v1126 = vsel %vm1100, %v1097, %v686
      %v1127 = vsel %vm1100, %v1098, %v688
      %v1128 = vsel %vm1100, %v1099, %v690
      %vm1129 = vcmask 654336
      %v1130 = vsel %vm1129, %v1101, %v724
      %v1131 = vsel %vm1129, %v1102, %v726
      %v1132 = vsel %vm1129, %v1103, %v728
      %v1133 = vsel %vm1129, %v1104, %v730
      %v1134 = vsel %vm1129, %v1105, %v732
      %v1135 = vsel %vm1129, %v1106, %v734
      %v1136 = vsel %vm1129, %v1107, %v736
      %v1137 = vsel %vm1129, %v1108, %v738
      %v1138 = vsel %vm1129, %v1109, %v740
      %v1139 = vsel %vm1129, %v1110, %v742
      %v1140 = vsel %vm1129, %v1111, %v744
      %v1141 = vsel %vm1129, %v1112, %v746
      %v1142 = vsel %vm1129, %v1113, %v748
      %v1143 = vsel %vm1129, %v1114, %v750
      %v1144 = vsel %vm1129, %v1115, %v752
      %v1145 = vsel %vm1129, %v1116, %v754
      %v1146 = vsel %vm1129, %v1117, %v756
      %v1147 = vsel %vm1129, %v1118, %v758
      %v1148 = vsel %vm1129, %v1119, %v760
      %v1149 = vsel %vm1129, %v1120, %v762
      %v1150 = vsel %vm1129, %v1121, %v764
      %v1151 = vsel %vm1129, %v1122, %v766
      %v1152 = vsel %vm1129, %v1123, %v768
      %v1153 = vsel %vm1129, %v1124, %v770
      %v1154 = vsel %vm1129, %v1125, %v772
      %v1155 = vsel %vm1129, %v1126, %v774
      %v1156 = vsel %vm1129, %v1127, %v776
      %v1157 = vsel %vm1129, %v1128, %v778
      %vm1158 = vcmask 785408
      %v1159 = vsel %vm1158, %v1130, %v809
      %v1160 = vsel %vm1158, %v1131, %v811
      %v1161 = vsel %vm1158, %v1132, %v813
      %v1162 = vsel %vm1158, %v1133, %v815
      %v1163 = vsel %vm1158, %v1134, %v817
      %v1164 = vsel %vm1158, %v1135, %v819
      %v1165 = vsel %vm1158, %v1136, %v821
      %v1166 = vsel %vm1158, %v1137, %v823
      %v1167 = vsel %vm1158, %v1138, %v825
      %v1168 = vsel %vm1158, %v1139, %v827
      %v1169 = vsel %vm1158, %v1140, %v829
      %v1170 = vsel %vm1158, %v1141, %v831
      %v1171 = vsel %vm1158, %v1142, %v833
      %v1172 = vsel %vm1158, %v1143, %v835
      %v1173 = vsel %vm1158, %v1144, %v837
      %v1174 = vsel %vm1158, %v1145, %v839
      %v1175 = vsel %vm1158, %v1146, %v841
      %v1176 = vsel %vm1158, %v1147, %v843
      %v1177 = vsel %vm1158, %v1148, %v845
      %v1178 = vsel %vm1158, %v1149, %v847
      %v1179 = vsel %vm1158, %v1150, %v849
      %v1180 = vsel %vm1158, %v1151, %v851
      %v1181 = vsel %vm1158, %v1152, %v853
      %v1182 = vsel %vm1158, %v1153, %v855
      %v1183 = vsel %vm1158, %v1154, %v857
      %v1184 = vsel %vm1158, %v1155, %v859
      %v1185 = vsel %vm1158, %v1156, %v861
      %v1186 = vsel %vm1158, %v1157, %v863
      %vm1187 = vcmask 916480
      %v1188 = vsel %vm1187, %v1159, %v898
      %v1189 = vsel %vm1187, %v1160, %v900
      %v1190 = vsel %vm1187, %v1161, %v902
      %v1191 = vsel %vm1187, %v1162, %v904
      %v1192 = vsel %vm1187, %v1163, %v906
      %v1193 = vsel %vm1187, %v1164, %v908
      %v1194 = vsel %vm1187, %v1165, %v910
      %v1195 = vsel %vm1187, %v1166, %v912
      %v1196 = vsel %vm1187, %v1167, %v914
      %v1197 = vsel %vm1187, %v1168, %v916
      %v1198 = vsel %vm1187, %v1169, %v918
      %v1199 = vsel %vm1187, %v1170, %v920
      %v1200 = vsel %vm1187, %v1171, %v922
      %v1201 = vsel %vm1187, %v1172, %v924
      %v1202 = vsel %vm1187, %v1173, %v926
      %v1203 = vsel %vm1187, %v1174, %v928
      %v1204 = vsel %vm1187, %v1175, %v930
      %v1205 = vsel %vm1187, %v1176, %v932
      %v1206 = vsel %vm1187, %v1177, %v934
      %v1207 = vsel %vm1187, %v1178, %v936
      %v1208 = vsel %vm1187, %v1179, %v938
      %v1209 = vsel %vm1187, %v1180, %v940
      %v1210 = vsel %vm1187, %v1181, %v942
      %v1211 = vsel %vm1187, %v1182, %v944
      %v1212 = vsel %vm1187, %v1183, %v946
      %v1213 = vsel %vm1187, %v1184, %v948
      %v1214 = vsel %vm1187, %v1185, %v950
      %v1215 = vsel %vm1187, %v1186, %v952
      %v1216 = vpack.c.bf16 %v1189, %v1188
      %v1217 = vpack.c.bf16 %v416, %v414
      %v1218 = vpack.c.bf16 %v1191, %v1190
      %v1219 = vpack.c.bf16 %v420, %v418
      %v1220 = vpack.c.bf16 %v1193, %v1192
      %v1221 = vpack.c.bf16 %v424, %v422
      %v1222 = vpack.c.bf16 %v1195, %v1194
      %v1223 = vpack.c.bf16 %v428, %v426
      %v1224 = vpack.c.bf16 %v1197, %v1196
      %v1225 = vpack.c.bf16 %v432, %v430
      %v1226 = vpack.c.bf16 %v1199, %v1198
      %v1227 = vpack.c.bf16 %v436, %v434
      %v1228 = vpack.c.bf16 %v1201, %v1200
      %v1229 = vpack.c.bf16 %v440, %v438
      %v1230 = vpack.c.bf16 %v1203, %v1202
      %v1231 = vpack.c.bf16 %v444, %v442
      %v1232 = vpack.c.bf16 %v1205, %v1204
      %v1233 = vpack.c.bf16 %v448, %v446
      %v1234 = vpack.c.bf16 %v1207, %v1206
      %v1235 = vpack.c.bf16 %v452, %v450
      %v1236 = vpack.c.bf16 %v1209, %v1208
      %v1237 = vpack.c.bf16 %v456, %v454
      %v1238 = vpack.c.bf16 %v1211, %v1210
      %v1239 = vpack.c.bf16 %v460, %v458
      %v1240 = vpack.c.bf16 %v1213, %v1212
      %v1241 = vpack.c.bf16 %v722, %v720
      %v1242 = vpack.c.bf16 %v1215, %v1214
      %v1243 = vpack.c.bf16 %v984, %v982
      %v1244 = vld [vmem:[%s1] sm:$0xf]
      %v1245 = vld [vmem:[%s1 + $0x4] sm:$0xf]
      %v1246 = vld [vmem:[%s1 + $0x8] sm:$0xf]
      %v1247 = vld [vmem:[%s1 + $0xc] sm:$0xf]
      %v1248 = vld [vmem:[%s1 + $0x10] sm:$0xf]
      %v1249 = vld [vmem:[%s1 + $0x14] sm:$0xf]
      %v1250 = vld [vmem:[%s1 + $0x18] sm:$0xf]
      %v1251 = vld [vmem:[%s1 + $0x1c] sm:$0xf]
      %v1252 = vld [vmem:[%s1 + $0x20] sm:$0xf]
      %v1253 = vld [vmem:[%s1 + $0x24] sm:$0xf]
      %v1254 = vld [vmem:[%s1 + $0x28] sm:$0xf]
      %v1255 = vld [vmem:[%s1 + $0x2c] sm:$0xf]
      %v1256 = vld [vmem:[%s1 + $0x30] sm:$0xf]
      %v1257 = vld [vmem:[%s1 + $0x34] sm:$0xf]
      %v1258 = vld [vmem:[%s1 + $0x38] sm:$0xf]
      %v1259 = vld [vmem:[%s1 + $0x3c] sm:$0xf]
      %v1260 = vld [vmem:[%s1 + $0x40] sm:$0xf]
      %v1261 = vld [vmem:[%s1 + $0x44] sm:$0xf]
      %v1280 = vunpack.c.l.b16 %v1244
      %v1281 = vunpack.c.l.b16 %v1245
      %v1282 = vunpack.c.l.b16 %v1246
      %v1283 = vunpack.c.l.b16 %v1247
      %v1284 = vunpack.c.l.b16 %v1248
      %v1285 = vunpack.c.l.b16 %v1249
      %v1286 = vunpack.c.l.b16 %v1250
      %v1287 = vunpack.c.l.b16 %v1251
      %v1288 = vunpack.c.l.b16 %v1252
      %v1289 = vunpack.c.l.b16 %v1253
      %v1290 = vunpack.c.l.b16 %v1254
      %v1291 = vunpack.c.l.b16 %v1255
      %v1292 = vunpack.c.l.b16 %v1256
      %v1293 = vunpack.c.l.b16 %v1257
      %v1294 = vunpack.c.l.b16 %v1258
      %v1295 = vunpack.c.l.b16 %v1259
      %v1296 = vunpack.c.l.b16 %v1260
      %v1297 = vunpack.c.l.b16 %v1261
      %v1298 = vpack.c.b16 %v1281, %v1280
      %v1299 = vpack.c.b16 %v1283, %v1282
      %v1300 = vpack.c.b16 %v1285, %v1284
      %v1301 = vpack.c.b16 %v1287, %v1286
      %v1302 = vpack.c.b16 %v1289, %v1288
      %v1303 = vpack.c.b16 %v1291, %v1290
      %v1304 = vpack.c.b16 %v1293, %v1292
      %v1305 = vpack.c.b16 %v1295, %v1294
      %v1306 = vpack.c.b16 %v1297, %v1296
      %v1317 = vsel %vm1013, %v1217, 0
      %v1320 = vsel %vm1013, %v1219, 0
      %v1323 = vsel %vm1013, %v1221, 0
      %v1326 = vsel %vm1013, %v1223, 0
      %v1329 = vsel %vm1013, %v1225, 0
      %v1332 = vsel %vm1013, %v1227, 0
      %v1335 = vsel %vm1013, %v1229, 0
      %v1338 = vsel %vm1013, %v1231, 0
      %v1341 = vsel %vm1013, %v1233, 0
      %v1344 = vsel %vm1013, %v1235, 0
      %v1347 = vsel %vm1013, %v1237, 0
      %v1350 = vsel %vm1013, %v1239, 0
      %v1353 = vsel %vm1013, %v1241, 0
      %v1356 = vsel %vm1013, %v1243, 0
      %1358 = vmatprep.subr.bf16.mxu0 0
      %1359 = vmatpush1.bf16.msra.mxu0 %v1298
      %1360 = vmatprep.subr.bf16.mxu0 0
      %1361 = vmatpush1.bf16.msra.mxu0 %v1299
      %1362 = vmatprep.subr.bf16.mxu0 0
      %1363 = vmatpush1.bf16.msra.mxu0 %v1300
      %1364 = vmatprep.subr.bf16.mxu0 0
      %1365 = vmatpush1.bf16.msra.mxu0 %v1301
      %1366 = vmatprep.subr.bf16.mxu0 0
      %1367 = vmatpush1.bf16.msra.mxu0 %v1302
      %1368 = vmatprep.subr.bf16.mxu0 0
      %1369 = vmatpush1.bf16.msra.mxu0 %v1303
      %1370 = vmatprep.subr.bf16.mxu0 0
      %1371 = vmatpush1.bf16.msra.mxu0 %v1304
      %1372 = vmatprep.subr.bf16.mxu0 0
      %1373 = vmatpush1.bf16.msra.mxu0 %v1305
      %1374 = vmatprep.subr.bf16.mxu0 0
      %1375 = vmatpush1.bf16.msra.mxu0 %v1306
      %1376 = vmatprep.subr.bf16.mxu0 0
      %1377 = vmatpush1.bf16.msra.mxu0 0
      %1378 = vmatprep.subr.bf16.mxu0 0
      %1379 = vmatpush1.bf16.msra.mxu0 0
      %1380 = vmatprep.subr.bf16.mxu0 0
      %1381 = vmatpush1.bf16.msra.mxu0 0
      %1382 = vmatprep.subr.bf16.mxu0 0
      %1383 = vmatpush1.bf16.msra.mxu0 0
      %1384 = vmatprep.subr.bf16.mxu0 0
      %1385 = vmatpush1.bf16.msra.mxu0 0
      %1386 = vmatprep.subr.bf16.mxu0 0
      %1387 = vmatpush1.bf16.msra.mxu0 0
      %1388 = vmatprep.subr.bf16.mxu0 0
      %1389 = vmatpush1.bf16.msra.mxu0 0
      %1390 = vmatprep.mubr.bf16.mxu0 %v1317
      %1391 = vmatmul.mubr.bf16.gmra.mrb[0].mxu0 %v1216
      %v1392 = vpop.f32.mrb[0].mxu0
      %v1393 = vadd.f32 0.0, %v1392
      %v1394 = vpop.f32.mrb[0].mxu0
      %v1395 = vpop.f32.mrb[0].mxu0
      %v1396 = vadd.f32 0.0, %v1395
      %v1397 = vpop.f32.mrb[0].mxu0
      %1398 = vmatprep.mubr.bf16.mxu0 %v1320
      %1399 = vmatmul.mubr.bf16.gmra.mrb[0].mxu0 %v1218
      %v1400 = vpop.f32.mrb[0].mxu0
      %v1401 = vadd.f32 0.0, %v1400
      %v1402 = vpop.f32.mrb[0].mxu0
      %v1403 = vpop.f32.mrb[0].mxu0
      %v1404 = vadd.f32 0.0, %v1403
      %v1405 = vpop.f32.mrb[0].mxu0
      %1406 = vmatprep.mubr.bf16.mxu0 %v1323
      %1407 = vmatmul.mubr.bf16.gmra.mrb[0].mxu0 %v1220
      %v1408 = vpop.f32.mrb[0].mxu0
      %v1409 = vadd.f32 0.0, %v1408
      %v1410 = vpop.f32.mrb[0].mxu0
      %v1411 = vpop.f32.mrb[0].mxu0
      %v1412 = vadd.f32 0.0, %v1411
      %v1413 = vpop.f32.mrb[0].mxu0
      %1414 = vmatprep.mubr.bf16.mxu0 %v1326
      %1415 = vmatmul.mubr.bf16.gmra.mrb[0].mxu0 %v1222
      %v1416 = vpop.f32.mrb[0].mxu0
      %v1417 = vadd.f32 0.0, %v1416
      %v1418 = vpop.f32.mrb[0].mxu0
      %v1419 = vpop.f32.mrb[0].mxu0
      %v1420 = vadd.f32 0.0, %v1419
      %v1421 = vpop.f32.mrb[0].mxu0
      %1422 = vmatprep.mubr.bf16.mxu0 %v1329
      %1423 = vmatmul.mubr.bf16.gmra.mrb[0].mxu0 %v1224
      %v1424 = vpop.f32.mrb[0].mxu0
      %v1425 = vadd.f32 0.0, %v1424
      %v1426 = vpop.f32.mrb[0].mxu0
      %v1427 = vpop.f32.mrb[0].mxu0
      %v1428 = vadd.f32 0.0, %v1427
      %v1429 = vpop.f32.mrb[0].mxu0
      %1430 = vmatprep.mubr.bf16.mxu0 %v1332
      %1431 = vmatmul.mubr.bf16.gmra.mrb[0].mxu0 %v1226
      %v1432 = vpop.f32.mrb[0].mxu0
      %v1433 = vadd.f32 0.0, %v1432
      %v1434 = vpop.f32.mrb[0].mxu0
      %v1435 = vpop.f32.mrb[0].mxu0
      %v1436 = vadd.f32 0.0, %v1435
      %v1437 = vpop.f32.mrb[0].mxu0
      %1438 = vmatprep.mubr.bf16.mxu0 %v1335
      %1439 = vmatmul.mubr.bf16.gmra.mrb[0].mxu0 %v1228
      %v1440 = vpop.f32.mrb[0].mxu0
      %v1441 = vadd.f32 0.0, %v1440
      %v1442 = vpop.f32.mrb[0].mxu0
      %v1443 = vpop.f32.mrb[0].mxu0
      %v1444 = vadd.f32 0.0, %v1443
      %v1445 = vpop.f32.mrb[0].mxu0
      %1446 = vmatprep.mubr.bf16.mxu0 %v1338
      %1447 = vmatmul.mubr.bf16.gmra.mrb[0].mxu0 %v1230
      %v1448 = vpop.f32.mrb[0].mxu0
      %v1449 = vadd.f32 0.0, %v1448
      %v1450 = vpop.f32.mrb[0].mxu0
      %v1451 = vpop.f32.mrb[0].mxu0
      %v1452 = vadd.f32 0.0, %v1451
      %v1453 = vpop.f32.mrb[0].mxu0
      %1454 = vmatprep.mubr.bf16.mxu0 %v1341
      %1455 = vmatmul.mubr.bf16.gmra.mrb[0].mxu0 %v1232
      %v1456 = vpop.f32.mrb[0].mxu0
      %v1457 = vadd.f32 0.0, %v1456
      %v1458 = vpop.f32.mrb[0].mxu0
      %v1459 = vpop.f32.mrb[0].mxu0
      %v1460 = vadd.f32 0.0, %v1459
      %v1461 = vpop.f32.mrb[0].mxu0
      %1462 = vmatprep.mubr.bf16.mxu0 %v1344
      %1463 = vmatmul.mubr.bf16.gmra.mrb[0].mxu0 %v1234
      %v1464 = vpop.f32.mrb[0].mxu0
      %v1465 = vadd.f32 0.0, %v1464
      %v1466 = vpop.f32.mrb[0].mxu0
      %v1467 = vpop.f32.mrb[0].mxu0
      %v1468 = vadd.f32 0.0, %v1467
      %v1469 = vpop.f32.mrb[0].mxu0
      %1470 = vmatprep.mubr.bf16.mxu0 %v1347
      %1471 = vmatmul.mubr.bf16.gmra.mrb[0].mxu0 %v1236
      %v1472 = vpop.f32.mrb[0].mxu0
      %v1473 = vadd.f32 0.0, %v1472
      %v1474 = vpop.f32.mrb[0].mxu0
      %v1475 = vpop.f32.mrb[0].mxu0
      %v1476 = vadd.f32 0.0, %v1475
      %v1477 = vpop.f32.mrb[0].mxu0
      %1478 = vmatprep.mubr.bf16.mxu0 %v1350
      %1479 = vmatmul.mubr.bf16.gmra.mrb[0].mxu0 %v1238
      %v1480 = vpop.f32.mrb[0].mxu0
      %v1481 = vadd.f32 0.0, %v1480
      %v1482 = vpop.f32.mrb[0].mxu0
      %v1483 = vpop.f32.mrb[0].mxu0
      %v1484 = vadd.f32 0.0, %v1483
      %v1485 = vpop.f32.mrb[0].mxu0
      %1486 = vmatprep.mubr.bf16.mxu0 %v1353
      %1487 = vmatmul.mubr.bf16.gmra.mrb[0].mxu0 %v1240
      %v1488 = vpop.f32.mrb[0].mxu0
      %v1489 = vadd.f32 0.0, %v1488
      %v1490 = vpop.f32.mrb[0].mxu0
      %v1491 = vpop.f32.mrb[0].mxu0
      %v1492 = vadd.f32 0.0, %v1491
      %v1493 = vpop.f32.mrb[0].mxu0
      %1494 = vmatprep.mubr.bf16.mxu0 %v1356
      %1495 = vmatmul.mubr.bf16.gmra.mrb[0].mxu0 %v1242
      %v1496 = vpop.f32.mrb[0].mxu0
      %v1497 = vadd.f32 0.0, %v1496
      %v1498 = vpop.f32.mrb[0].mxu0
      %v1499 = vpop.f32.mrb[0].mxu0
      %v1500 = vadd.f32 0.0, %v1499
      %v1501 = vpop.f32.mrb[0].mxu0
      %1502 = vdwg.mxu0
      %v1503 = vld [vmem:[%s2] sm:$0x1]
      %v1505 = vlaneseq
      %v1506 = vshrl.u32 %v1505, 7
      %v1507 = vsub.s32 0, %v1506
      %v1508 = vrot.slane %v1503, %v1507
      %v1510 = vmul.f32 %v1393, %v1508
      %v1511 = vmul.f32 %v1396, %v1508
      %v1512 = vmul.f32 %v1401, %v1508
      %v1513 = vmul.f32 %v1404, %v1508
      %v1514 = vmul.f32 %v1409, %v1508
      %v1515 = vmul.f32 %v1412, %v1508
      %v1516 = vmul.f32 %v1417, %v1508
      %v1517 = vmul.f32 %v1420, %v1508
      %v1518 = vmul.f32 %v1425, %v1508
      %v1519 = vmul.f32 %v1428, %v1508
      %v1520 = vmul.f32 %v1433, %v1508
      %v1521 = vmul.f32 %v1436, %v1508
      %v1522 = vmul.f32 %v1441, %v1508
      %v1523 = vmul.f32 %v1444, %v1508
      %v1524 = vmul.f32 %v1449, %v1508
      %v1525 = vmul.f32 %v1452, %v1508
      %v1526 = vmul.f32 %v1457, %v1508
      %v1527 = vmul.f32 %v1460, %v1508
      %v1528 = vmul.f32 %v1465, %v1508
      %v1529 = vmul.f32 %v1468, %v1508
      %v1530 = vmul.f32 %v1473, %v1508
      %v1531 = vmul.f32 %v1476, %v1508
      %v1532 = vmul.f32 %v1481, %v1508
      %v1533 = vmul.f32 %v1484, %v1508
      %v1534 = vmul.f32 %v1489, %v1508
      %v1535 = vmul.f32 %v1492, %v1508
      %v1536 = vmul.f32 %v1497, %v1508
      %v1537 = vmul.f32 %v1500, %v1508
      %v1538 = vld [vmem:[%s3] sm:$0x1]
      %v1540 = vlaneseq
      %v1541 = vshrl.u32 %v1540, 7
      %v1542 = vsub.s32 0, %v1541
      %v1543 = vrot.slane %v1538, %v1542
      %v1545 = vadd.f32 %v1510, %v1543
      %v1546 = vadd.f32 %v1511, %v1543
      %v1547 = vadd.f32 %v1512, %v1543
      %v1548 = vadd.f32 %v1513, %v1543
      %v1549 = vadd.f32 %v1514, %v1543
      %v1550 = vadd.f32 %v1515, %v1543
      %v1551 = vadd.f32 %v1516, %v1543
      %v1552 = vadd.f32 %v1517, %v1543
      %v1553 = vadd.f32 %v1518, %v1543
      %v1554 = vadd.f32 %v1519, %v1543
      %v1555 = vadd.f32 %v1520, %v1543
      %v1556 = vadd.f32 %v1521, %v1543
      %v1557 = vadd.f32 %v1522, %v1543
      %v1558 = vadd.f32 %v1523, %v1543
      %v1559 = vadd.f32 %v1524, %v1543
      %v1560 = vadd.f32 %v1525, %v1543
      %v1561 = vadd.f32 %v1526, %v1543
      %v1562 = vadd.f32 %v1527, %v1543
      %v1563 = vadd.f32 %v1528, %v1543
      %v1564 = vadd.f32 %v1529, %v1543
      %v1565 = vadd.f32 %v1530, %v1543
      %v1566 = vadd.f32 %v1531, %v1543
      %v1567 = vadd.f32 %v1532, %v1543
      %v1568 = vadd.f32 %v1533, %v1543
      %v1569 = vadd.f32 %v1534, %v1543
      %v1570 = vadd.f32 %v1535, %v1543
      %v1571 = vadd.f32 %v1536, %v1543
      %v1572 = vadd.f32 %v1537, %v1543
      %v1573 = vxor.u32 %v1545, 2147483648
      %v1574 = vxor.u32 %v1546, 2147483648
      %v1575 = vxor.u32 %v1547, 2147483648
      %v1576 = vxor.u32 %v1548, 2147483648
      %v1577 = vxor.u32 %v1549, 2147483648
      %v1578 = vxor.u32 %v1550, 2147483648
      %v1579 = vxor.u32 %v1551, 2147483648
      %v1580 = vxor.u32 %v1552, 2147483648
      %v1581 = vxor.u32 %v1553, 2147483648
      %v1582 = vxor.u32 %v1554, 2147483648
      %v1583 = vxor.u32 %v1555, 2147483648
      %v1584 = vxor.u32 %v1556, 2147483648
      %v1585 = vxor.u32 %v1557, 2147483648
      %v1586 = vxor.u32 %v1558, 2147483648
      %v1587 = vxor.u32 %v1559, 2147483648
      %v1588 = vxor.u32 %v1560, 2147483648
      %v1589 = vxor.u32 %v1561, 2147483648
      %v1590 = vxor.u32 %v1562, 2147483648
      %v1591 = vxor.u32 %v1563, 2147483648
      %v1592 = vxor.u32 %v1564, 2147483648
      %v1593 = vxor.u32 %v1565, 2147483648
      %v1594 = vxor.u32 %v1566, 2147483648
      %v1595 = vxor.u32 %v1567, 2147483648
      %v1596 = vxor.u32 %v1568, 2147483648
      %v1597 = vxor.u32 %v1569, 2147483648
      %v1598 = vxor.u32 %v1570, 2147483648
      %v1599 = vxor.u32 %v1571, 2147483648
      %v1600 = vxor.u32 %v1572, 2147483648
      %v1601 = vmul.f32 %v1573, 1.442695
      %v1602 = vpow.pop %v1601
      %v1603 = vmul.f32 %v1574, 1.442695
      %v1604 = vpow.pop %v1603
      %v1605 = vmul.f32 %v1575, 1.442695
      %v1606 = vpow.pop %v1605
      %v1607 = vmul.f32 %v1576, 1.442695
      %v1608 = vpow.pop %v1607
      %v1609 = vmul.f32 %v1577, 1.442695
      %v1610 = vpow.pop %v1609
      %v1611 = vmul.f32 %v1578, 1.442695
      %v1612 = vpow.pop %v1611
      %v1613 = vmul.f32 %v1579, 1.442695
      %v1614 = vpow.pop %v1613
      %v1615 = vmul.f32 %v1580, 1.442695
      %v1616 = vpow.pop %v1615
      %v1617 = vmul.f32 %v1581, 1.442695
      %v1618 = vpow.pop %v1617
      %v1619 = vmul.f32 %v1582, 1.442695
      %v1620 = vpow.pop %v1619
      %v1621 = vmul.f32 %v1583, 1.442695
      %v1622 = vpow.pop %v1621
      %v1623 = vmul.f32 %v1584, 1.442695
      %v1624 = vpow.pop %v1623
      %v1625 = vmul.f32 %v1585, 1.442695
      %v1626 = vpow.pop %v1625
      %v1627 = vmul.f32 %v1586, 1.442695
      %v1628 = vpow.pop %v1627
      %v1629 = vmul.f32 %v1587, 1.442695
      %v1630 = vpow.pop %v1629
      %v1631 = vmul.f32 %v1588, 1.442695
      %v1632 = vpow.pop %v1631
      %v1633 = vmul.f32 %v1589, 1.442695
      %v1634 = vpow.pop %v1633
      %v1635 = vmul.f32 %v1590, 1.442695
      %v1636 = vpow.pop %v1635
      %v1637 = vmul.f32 %v1591, 1.442695
      %v1638 = vpow.pop %v1637
      %v1639 = vmul.f32 %v1592, 1.442695
      %v1640 = vpow.pop %v1639
      %v1641 = vmul.f32 %v1593, 1.442695
      %v1642 = vpow.pop %v1641
      %v1643 = vmul.f32 %v1594, 1.442695
      %v1644 = vpow.pop %v1643
      %v1645 = vmul.f32 %v1595, 1.442695
      %v1646 = vpow.pop %v1645
      %v1647 = vmul.f32 %v1596, 1.442695
      %v1648 = vpow.pop %v1647
      %v1649 = vmul.f32 %v1597, 1.442695
      %v1650 = vpow.pop %v1649
      %v1651 = vmul.f32 %v1598, 1.442695
      %v1652 = vpow.pop %v1651
      %v1653 = vmul.f32 %v1599, 1.442695
      %v1654 = vpow.pop %v1653
      %v1655 = vmul.f32 %v1600, 1.442695
      %v1656 = vpow.pop %v1655
      %v1657 = vadd.f32 %v1602, 1.0
      %v1658 = vadd.f32 %v1604, 1.0
      %v1659 = vadd.f32 %v1606, 1.0
      %v1660 = vadd.f32 %v1608, 1.0
      %v1661 = vadd.f32 %v1610, 1.0
      %v1662 = vadd.f32 %v1612, 1.0
      %v1663 = vadd.f32 %v1614, 1.0
      %v1664 = vadd.f32 %v1616, 1.0
      %v1665 = vadd.f32 %v1618, 1.0
      %v1666 = vadd.f32 %v1620, 1.0
      %v1667 = vadd.f32 %v1622, 1.0
      %v1668 = vadd.f32 %v1624, 1.0
      %v1669 = vadd.f32 %v1626, 1.0
      %v1670 = vadd.f32 %v1628, 1.0
      %v1671 = vadd.f32 %v1630, 1.0
      %v1672 = vadd.f32 %v1632, 1.0
      %v1673 = vadd.f32 %v1634, 1.0
      %v1674 = vadd.f32 %v1636, 1.0
      %v1675 = vadd.f32 %v1638, 1.0
      %v1676 = vadd.f32 %v1640, 1.0
      %v1677 = vadd.f32 %v1642, 1.0
      %v1678 = vadd.f32 %v1644, 1.0
      %v1679 = vadd.f32 %v1646, 1.0
      %v1680 = vadd.f32 %v1648, 1.0
      %v1681 = vadd.f32 %v1650, 1.0
      %v1682 = vadd.f32 %v1652, 1.0
      %v1683 = vadd.f32 %v1654, 1.0
      %v1684 = vadd.f32 %v1656, 1.0
      %v1685 = vrcp.pop %v1657
      %v1686 = vmul.f32 1.0, %v1685
      %v1687 = vrcp.pop %v1658
      %v1688 = vmul.f32 1.0, %v1687
      %v1689 = vrcp.pop %v1659
      %v1690 = vmul.f32 1.0, %v1689
      %v1691 = vrcp.pop %v1660
      %v1692 = vmul.f32 1.0, %v1691
      %v1693 = vrcp.pop %v1661
      %v1694 = vmul.f32 1.0, %v1693
      %v1695 = vrcp.pop %v1662
      %v1696 = vmul.f32 1.0, %v1695
      %v1697 = vrcp.pop %v1663
      %v1698 = vmul.f32 1.0, %v1697
      %v1699 = vrcp.pop %v1664
      %v1700 = vmul.f32 1.0, %v1699
      %v1701 = vrcp.pop %v1665
      %v1702 = vmul.f32 1.0, %v1701
      %v1703 = vrcp.pop %v1666
      %v1704 = vmul.f32 1.0, %v1703
      %v1705 = vrcp.pop %v1667
      %v1706 = vmul.f32 1.0, %v1705
      %v1707 = vrcp.pop %v1668
      %v1708 = vmul.f32 1.0, %v1707
      %v1709 = vrcp.pop %v1669
      %v1710 = vmul.f32 1.0, %v1709
      %v1711 = vrcp.pop %v1670
      %v1712 = vmul.f32 1.0, %v1711
      %v1713 = vrcp.pop %v1671
      %v1714 = vmul.f32 1.0, %v1713
      %v1715 = vrcp.pop %v1672
      %v1716 = vmul.f32 1.0, %v1715
      %v1717 = vrcp.pop %v1673
      %v1718 = vmul.f32 1.0, %v1717
      %v1719 = vrcp.pop %v1674
      %v1720 = vmul.f32 1.0, %v1719
      %v1721 = vrcp.pop %v1675
      %v1722 = vmul.f32 1.0, %v1721
      %v1723 = vrcp.pop %v1676
      %v1724 = vmul.f32 1.0, %v1723
      %v1725 = vrcp.pop %v1677
      %v1726 = vmul.f32 1.0, %v1725
      %v1727 = vrcp.pop %v1678
      %v1728 = vmul.f32 1.0, %v1727
      %v1729 = vrcp.pop %v1679
      %v1730 = vmul.f32 1.0, %v1729
      %v1731 = vrcp.pop %v1680
      %v1732 = vmul.f32 1.0, %v1731
      %v1733 = vrcp.pop %v1681
      %v1734 = vmul.f32 1.0, %v1733
      %v1735 = vrcp.pop %v1682
      %v1736 = vmul.f32 1.0, %v1735
      %v1737 = vrcp.pop %v1683
      %v1738 = vmul.f32 1.0, %v1737
      %v1739 = vrcp.pop %v1684
      %v1740 = vmul.f32 1.0, %v1739
      %v1741 = vmul.f32 %v1545, %v1686
      %v1742 = vmul.f32 %v1546, %v1688
      %v1743 = vmul.f32 %v1547, %v1690
      %v1744 = vmul.f32 %v1548, %v1692
      %v1745 = vmul.f32 %v1549, %v1694
      %v1746 = vmul.f32 %v1550, %v1696
      %v1747 = vmul.f32 %v1551, %v1698
      %v1748 = vmul.f32 %v1552, %v1700
      %v1749 = vmul.f32 %v1553, %v1702
      %v1750 = vmul.f32 %v1554, %v1704
      %v1751 = vmul.f32 %v1555, %v1706
      %v1752 = vmul.f32 %v1556, %v1708
      %v1753 = vmul.f32 %v1557, %v1710
      %v1754 = vmul.f32 %v1558, %v1712
      %v1755 = vmul.f32 %v1559, %v1714
      %v1756 = vmul.f32 %v1560, %v1716
      %v1757 = vmul.f32 %v1561, %v1718
      %v1758 = vmul.f32 %v1562, %v1720
      %v1759 = vmul.f32 %v1563, %v1722
      %v1760 = vmul.f32 %v1564, %v1724
      %v1761 = vmul.f32 %v1565, %v1726
      %v1762 = vmul.f32 %v1566, %v1728
      %v1763 = vmul.f32 %v1567, %v1730
      %v1764 = vmul.f32 %v1568, %v1732
      %v1765 = vmul.f32 %v1569, %v1734
      %v1766 = vmul.f32 %v1570, %v1736
      %v1767 = vmul.f32 %v1571, %v1738
      %v1768 = vmul.f32 %v1572, %v1740
      %v1769 = vlaneseq
      %v1770 = vshrl.u32 %v1769, 7
      %v1771 = vadd.s32 %v1770, 8
      %v1772 = vadd.s32 %v1770, 16
      %v1773 = vadd.s32 %v1770, 24
      %v1774 = vadd.s32 %v1770, 32
      %v1775 = vadd.s32 %v1770, 40
      %v1776 = vadd.s32 %v1770, 48
      %v1777 = vadd.s32 %v1770, 56
      %v1778 = vadd.s32 %v1770, 64
      %v1779 = vadd.s32 %v1770, 72
      %v1780 = vadd.s32 %v1770, 80
      %v1781 = vadd.s32 %v1770, 88
      %v1782 = vadd.s32 %v1770, 96
      %v1783 = vadd.s32 %v1770, 104
      %v1784 = vadd.s32 %v1770, 112
      %v1785 = vadd.s32 %v1770, 120
      %v1786 = vadd.s32 %v1770, 128
      %v1787 = vadd.s32 %v1770, 136
      %v1788 = vadd.s32 %v1770, 144
      %v1789 = vadd.s32 %v1770, 152
      %v1790 = vadd.s32 %v1770, 160
      %v1791 = vadd.s32 %v1770, 168
      %v1792 = vadd.s32 %v1770, 176
      %v1793 = vadd.s32 %v1770, 184
      %v1794 = vadd.s32 %v1770, 192
      %v1795 = vadd.s32 %v1770, 200
      %v1796 = vadd.s32 %v1770, 208
      %v1797 = vadd.s32 %v1770, 216
      %vm1798 = vcmp.lt.s32.totalorder %v1770, 0
      %v1799 = vsub.s32 0, %v1770
      %v1800 = vsel %vm1798, %v1799, %v1770
      %v1801 = vshrl.u32 %v1800, 4
      %v1802 = vand.u32 %v1800, 15
      %v1803 = vsub.s32 0, %v1802
      %v1804 = vsel %vm1798, %v1803, %v1802
      %vm1805 = vcmp.lt.s32.totalorder %v1771, 0
      %v1806 = vsub.s32 0, %v1771
      %v1807 = vsel %vm1805, %v1806, %v1771
      %v1808 = vshrl.u32 %v1807, 4
      %v1809 = vand.u32 %v1807, 15
      %v1810 = vsub.s32 0, %v1809
      %v1811 = vsel %vm1805, %v1810, %v1809
      %vm1812 = vcmp.lt.s32.totalorder %v1772, 0
      %v1813 = vsub.s32 0, %v1772
      %v1814 = vsel %vm1812, %v1813, %v1772
      %v1815 = vshrl.u32 %v1814, 4
      %v1816 = vand.u32 %v1814, 15
      %v1817 = vsub.s32 0, %v1816
      %v1818 = vsel %vm1812, %v1817, %v1816
      %vm1819 = vcmp.lt.s32.totalorder %v1773, 0
      %v1820 = vsub.s32 0, %v1773
      %v1821 = vsel %vm1819, %v1820, %v1773
      %v1822 = vshrl.u32 %v1821, 4
      %v1823 = vand.u32 %v1821, 15
      %v1824 = vsub.s32 0, %v1823
      %v1825 = vsel %vm1819, %v1824, %v1823
      %vm1826 = vcmp.lt.s32.totalorder %v1774, 0
      %v1827 = vsub.s32 0, %v1774
      %v1828 = vsel %vm1826, %v1827, %v1774
      %v1829 = vshrl.u32 %v1828, 4
      %v1830 = vand.u32 %v1828, 15
      %v1831 = vsub.s32 0, %v1830
      %v1832 = vsel %vm1826, %v1831, %v1830
      %vm1833 = vcmp.lt.s32.totalorder %v1775, 0
      %v1834 = vsub.s32 0, %v1775
      %v1835 = vsel %vm1833, %v1834, %v1775
      %v1836 = vshrl.u32 %v1835, 4
      %v1837 = vand.u32 %v1835, 15
      %v1838 = vsub.s32 0, %v1837
      %v1839 = vsel %vm1833, %v1838, %v1837
      %vm1840 = vcmp.lt.s32.totalorder %v1776, 0
      %v1841 = vsub.s32 0, %v1776
      %v1842 = vsel %vm1840, %v1841, %v1776
      %v1843 = vshrl.u32 %v1842, 4
      %v1844 = vand.u32 %v1842, 15
      %v1845 = vsub.s32 0, %v1844
      %v1846 = vsel %vm1840, %v1845, %v1844
      %vm1847 = vcmp.lt.s32.totalorder %v1777, 0
      %v1848 = vsub.s32 0, %v1777
      %v1849 = vsel %vm1847, %v1848, %v1777
      %v1850 = vshrl.u32 %v1849, 4
      %v1851 = vand.u32 %v1849, 15
      %v1852 = vsub.s32 0, %v1851
      %v1853 = vsel %vm1847, %v1852, %v1851
      %vm1854 = vcmp.lt.s32.totalorder %v1778, 0
      %v1855 = vsub.s32 0, %v1778
      %v1856 = vsel %vm1854, %v1855, %v1778
      %v1857 = vshrl.u32 %v1856, 4
      %v1858 = vand.u32 %v1856, 15
      %v1859 = vsub.s32 0, %v1858
      %v1860 = vsel %vm1854, %v1859, %v1858
      %vm1861 = vcmp.lt.s32.totalorder %v1779, 0
      %v1862 = vsub.s32 0, %v1779
      %v1863 = vsel %vm1861, %v1862, %v1779
      %v1864 = vshrl.u32 %v1863, 4
      %v1865 = vand.u32 %v1863, 15
      %v1866 = vsub.s32 0, %v1865
      %v1867 = vsel %vm1861, %v1866, %v1865
      %vm1868 = vcmp.lt.s32.totalorder %v1780, 0
      %v1869 = vsub.s32 0, %v1780
      %v1870 = vsel %vm1868, %v1869, %v1780
      %v1871 = vshrl.u32 %v1870, 4
      %v1872 = vand.u32 %v1870, 15
      %v1873 = vsub.s32 0, %v1872
      %v1874 = vsel %vm1868, %v1873, %v1872
      %vm1875 = vcmp.lt.s32.totalorder %v1781, 0
      %v1876 = vsub.s32 0, %v1781
      %v1877 = vsel %vm1875, %v1876, %v1781
      %v1878 = vshrl.u32 %v1877, 4
      %v1879 = vand.u32 %v1877, 15
      %v1880 = vsub.s32 0, %v1879
      %v1881 = vsel %vm1875, %v1880, %v1879
      %vm1882 = vcmp.lt.s32.totalorder %v1782, 0
      %v1883 = vsub.s32 0, %v1782
      %v1884 = vsel %vm1882, %v1883, %v1782
      %v1885 = vshrl.u32 %v1884, 4
      %v1886 = vand.u32 %v1884, 15
      %v1887 = vsub.s32 0, %v1886
      %v1888 = vsel %vm1882, %v1887, %v1886
      %vm1889 = vcmp.lt.s32.totalorder %v1783, 0
      %v1890 = vsub.s32 0, %v1783
      %v1891 = vsel %vm1889, %v1890, %v1783
      %v1892 = vshrl.u32 %v1891, 4
      %v1893 = vand.u32 %v1891, 15
      %v1894 = vsub.s32 0, %v1893
      %v1895 = vsel %vm1889, %v1894, %v1893
      %vm1896 = vcmp.lt.s32.totalorder %v1784, 0
      %v1897 = vsub.s32 0, %v1784
      %v1898 = vsel %vm1896, %v1897, %v1784
      %v1899 = vshrl.u32 %v1898, 4
      %v1900 = vand.u32 %v1898, 15
      %v1901 = vsub.s32 0, %v1900
      %v1902 = vsel %vm1896, %v1901, %v1900
      %vm1903 = vcmp.lt.s32.totalorder %v1785, 0
      %v1904 = vsub.s32 0, %v1785
      %v1905 = vsel %vm1903, %v1904, %v1785
      %v1906 = vshrl.u32 %v1905, 4
      %v1907 = vand.u32 %v1905, 15
      %v1908 = vsub.s32 0, %v1907
      %v1909 = vsel %vm1903, %v1908, %v1907
      %vm1910 = vcmp.lt.s32.totalorder %v1786, 0
      %v1911 = vsub.s32 0, %v1786
      %v1912 = vsel %vm1910, %v1911, %v1786
      %v1913 = vshrl.u32 %v1912, 4
      %v1914 = vand.u32 %v1912, 15
      %v1915 = vsub.s32 0, %v1914
      %v1916 = vsel %vm1910, %v1915, %v1914
      %vm1917 = vcmp.lt.s32.totalorder %v1787, 0
      %v1918 = vsub.s32 0, %v1787
      %v1919 = vsel %vm1917, %v1918, %v1787
      %v1920 = vshrl.u32 %v1919, 4
      %v1921 = vand.u32 %v1919, 15
      %v1922 = vsub.s32 0, %v1921
      %v1923 = vsel %vm1917, %v1922, %v1921
      %vm1924 = vcmp.lt.s32.totalorder %v1788, 0
      %v1925 = vsub.s32 0, %v1788
      %v1926 = vsel %vm1924, %v1925, %v1788
      %v1927 = vshrl.u32 %v1926, 4
      %v1928 = vand.u32 %v1926, 15
      %v1929 = vsub.s32 0, %v1928
      %v1930 = vsel %vm1924, %v1929, %v1928
      %vm1931 = vcmp.lt.s32.totalorder %v1789, 0
      %v1932 = vsub.s32 0, %v1789
      %v1933 = vsel %vm1931, %v1932, %v1789
      %v1934 = vshrl.u32 %v1933, 4
      %v1935 = vand.u32 %v1933, 15
      %v1936 = vsub.s32 0, %v1935
      %v1937 = vsel %vm1931, %v1936, %v1935
      %vm1938 = vcmp.lt.s32.totalorder %v1790, 0
      %v1939 = vsub.s32 0, %v1790
      %v1940 = vsel %vm1938, %v1939, %v1790
      %v1941 = vshrl.u32 %v1940, 4
      %v1942 = vand.u32 %v1940, 15
      %v1943 = vsub.s32 0, %v1942
      %v1944 = vsel %vm1938, %v1943, %v1942
      %vm1945 = vcmp.lt.s32.totalorder %v1791, 0
      %v1946 = vsub.s32 0, %v1791
      %v1947 = vsel %vm1945, %v1946, %v1791
      %v1948 = vshrl.u32 %v1947, 4
      %v1949 = vand.u32 %v1947, 15
      %v1950 = vsub.s32 0, %v1949
      %v1951 = vsel %vm1945, %v1950, %v1949
      %vm1952 = vcmp.lt.s32.totalorder %v1792, 0
      %v1953 = vsub.s32 0, %v1792
      %v1954 = vsel %vm1952, %v1953, %v1792
      %v1955 = vshrl.u32 %v1954, 4
      %v1956 = vand.u32 %v1954, 15
      %v1957 = vsub.s32 0, %v1956
      %v1958 = vsel %vm1952, %v1957, %v1956
      %vm1959 = vcmp.lt.s32.totalorder %v1793, 0
      %v1960 = vsub.s32 0, %v1793
      %v1961 = vsel %vm1959, %v1960, %v1793
      %v1962 = vshrl.u32 %v1961, 4
      %v1963 = vand.u32 %v1961, 15
      %v1964 = vsub.s32 0, %v1963
      %v1965 = vsel %vm1959, %v1964, %v1963
      %vm1966 = vcmp.lt.s32.totalorder %v1794, 0
      %v1967 = vsub.s32 0, %v1794
      %v1968 = vsel %vm1966, %v1967, %v1794
      %v1969 = vshrl.u32 %v1968, 4
      %v1970 = vand.u32 %v1968, 15
      %v1971 = vsub.s32 0, %v1970
      %v1972 = vsel %vm1966, %v1971, %v1970
      %vm1973 = vcmp.lt.s32.totalorder %v1795, 0
      %v1974 = vsub.s32 0, %v1795
      %v1975 = vsel %vm1973, %v1974, %v1795
      %v1976 = vshrl.u32 %v1975, 4
      %v1977 = vand.u32 %v1975, 15
      %v1978 = vsub.s32 0, %v1977
      %v1979 = vsel %vm1973, %v1978, %v1977
      %vm1980 = vcmp.lt.s32.totalorder %v1796, 0
      %v1981 = vsub.s32 0, %v1796
      %v1982 = vsel %vm1980, %v1981, %v1796
      %v1983 = vshrl.u32 %v1982, 4
      %v1984 = vand.u32 %v1982, 15
      %v1985 = vsub.s32 0, %v1984
      %v1986 = vsel %vm1980, %v1985, %v1984
      %vm1987 = vcmp.lt.s32.totalorder %v1797, 0
      %v1988 = vsub.s32 0, %v1797
      %v1989 = vsel %vm1987, %v1988, %v1797
      %v1990 = vshrl.u32 %v1989, 4
      %v1991 = vand.u32 %v1989, 15
      %v1992 = vsub.s32 0, %v1991
      %v1993 = vsel %vm1987, %v1992, %v1991
      %vm1994 = vcmp.ne.s32.totalorder %v1804, 0
      %vm1995 = vcmp.ne.s32.totalorder %v1811, 0
      %vm1996 = vcmp.ne.s32.totalorder %v1818, 0
      %vm1997 = vcmp.ne.s32.totalorder %v1825, 0
      %vm1998 = vcmp.ne.s32.totalorder %v1832, 0
      %vm1999 = vcmp.ne.s32.totalorder %v1839, 0
      %vm2000 = vcmp.ne.s32.totalorder %v1846, 0
      %vm2001 = vcmp.ne.s32.totalorder %v1853, 0
      %vm2002 = vcmp.ne.s32.totalorder %v1860, 0
      %vm2003 = vcmp.ne.s32.totalorder %v1867, 0
      %vm2004 = vcmp.ne.s32.totalorder %v1874, 0
      %vm2005 = vcmp.ne.s32.totalorder %v1881, 0
      %vm2006 = vcmp.ne.s32.totalorder %v1888, 0
      %vm2007 = vcmp.ne.s32.totalorder %v1895, 0
      %vm2008 = vcmp.ne.s32.totalorder %v1902, 0
      %vm2009 = vcmp.ne.s32.totalorder %v1909, 0
      %vm2010 = vcmp.ne.s32.totalorder %v1916, 0
      %vm2011 = vcmp.ne.s32.totalorder %v1923, 0
      %vm2012 = vcmp.ne.s32.totalorder %v1930, 0
      %vm2013 = vcmp.ne.s32.totalorder %v1937, 0
      %vm2014 = vcmp.ne.s32.totalorder %v1944, 0
      %vm2015 = vcmp.ne.s32.totalorder %v1951, 0
      %vm2016 = vcmp.ne.s32.totalorder %v1958, 0
      %vm2017 = vcmp.ne.s32.totalorder %v1965, 0
      %vm2018 = vcmp.ne.s32.totalorder %v1972, 0
      %vm2019 = vcmp.ne.s32.totalorder %v1979, 0
      %vm2020 = vcmp.ne.s32.totalorder %v1986, 0
      %vm2021 = vcmp.ne.s32.totalorder %v1993, 0
      %vm2022 = vcmp.lt.s32.totalorder %v1804, 0
      %vm2023 = vcmp.lt.s32.totalorder %v1811, 0
      %vm2024 = vcmp.lt.s32.totalorder %v1818, 0
      %vm2025 = vcmp.lt.s32.totalorder %v1825, 0
      %vm2026 = vcmp.lt.s32.totalorder %v1832, 0
      %vm2027 = vcmp.lt.s32.totalorder %v1839, 0
      %vm2028 = vcmp.lt.s32.totalorder %v1846, 0
      %vm2029 = vcmp.lt.s32.totalorder %v1853, 0
      %vm2030 = vcmp.lt.s32.totalorder %v1860, 0
      %vm2031 = vcmp.lt.s32.totalorder %v1867, 0
      %vm2032 = vcmp.lt.s32.totalorder %v1874, 0
      %vm2033 = vcmp.lt.s32.totalorder %v1881, 0
      %vm2034 = vcmp.lt.s32.totalorder %v1888, 0
      %vm2035 = vcmp.lt.s32.totalorder %v1895, 0
      %vm2036 = vcmp.lt.s32.totalorder %v1902, 0
      %vm2037 = vcmp.lt.s32.totalorder %v1909, 0
      %vm2038 = vcmp.lt.s32.totalorder %v1916, 0
      %vm2039 = vcmp.lt.s32.totalorder %v1923, 0
      %vm2040 = vcmp.lt.s32.totalorder %v1930, 0
      %vm2041 = vcmp.lt.s32.totalorder %v1937, 0
      %vm2042 = vcmp.lt.s32.totalorder %v1944, 0
      %vm2043 = vcmp.lt.s32.totalorder %v1951, 0
      %vm2044 = vcmp.lt.s32.totalorder %v1958, 0
      %vm2045 = vcmp.lt.s32.totalorder %v1965, 0
      %vm2046 = vcmp.lt.s32.totalorder %v1972, 0
      %vm2047 = vcmp.lt.s32.totalorder %v1979, 0
      %vm2048 = vcmp.lt.s32.totalorder %v1986, 0
      %vm2049 = vcmp.lt.s32.totalorder %v1993, 0
      %vm2050 = vmand %vm2022, %vm1994
      %vm2051 = vmand %vm2023, %vm1995
      %vm2052 = vmand %vm2024, %vm1996
      %vm2053 = vmand %vm2025, %vm1997
      %vm2054 = vmand %vm2026, %vm1998
      %vm2055 = vmand %vm2027, %vm1999
      %vm2056 = vmand %vm2028, %vm2000
      %vm2057 = vmand %vm2029, %vm2001
      %vm2058 = vmand %vm2030, %vm2002
      %vm2059 = vmand %vm2031, %vm2003
      %vm2060 = vmand %vm2032, %vm2004
      %vm2061 = vmand %vm2033, %vm2005
      %vm2062 = vmand %vm2034, %vm2006
      %vm2063 = vmand %vm2035, %vm2007
      %vm2064 = vmand %vm2036, %vm2008
      %vm2065 = vmand %vm2037, %vm2009
      %vm2066 = vmand %vm2038, %vm2010
      %vm2067 = vmand %vm2039, %vm2011
      %vm2068 = vmand %vm2040, %vm2012
      %vm2069 = vmand %vm2041, %vm2013
      %vm2070 = vmand %vm2042, %vm2014
      %vm2071 = vmand %vm2043, %vm2015
      %vm2072 = vmand %vm2044, %vm2016
      %vm2073 = vmand %vm2045, %vm2017
      %vm2074 = vmand %vm2046, %vm2018
      %vm2075 = vmand %vm2047, %vm2019
      %vm2076 = vmand %vm2048, %vm2020
      %vm2077 = vmand %vm2049, %vm2021
      %v2078 = vadd.s32 %v1804, 16
      %v2079 = vadd.s32 %v1811, 16
      %v2080 = vadd.s32 %v1818, 16
      %v2081 = vadd.s32 %v1825, 16
      %v2082 = vadd.s32 %v1832, 16
      %v2083 = vadd.s32 %v1839, 16
      %v2084 = vadd.s32 %v1846, 16
      %v2085 = vadd.s32 %v1853, 16
      %v2086 = vadd.s32 %v1860, 16
      %v2087 = vadd.s32 %v1867, 16
      %v2088 = vadd.s32 %v1874, 16
      %v2089 = vadd.s32 %v1881, 16
      %v2090 = vadd.s32 %v1888, 16
      %v2091 = vadd.s32 %v1895, 16
      %v2092 = vadd.s32 %v1902, 16
      %v2093 = vadd.s32 %v1909, 16
      %v2094 = vadd.s32 %v1916, 16
      %v2095 = vadd.s32 %v1923, 16
      %v2096 = vadd.s32 %v1930, 16
      %v2097 = vadd.s32 %v1937, 16
      %v2098 = vadd.s32 %v1944, 16
      %v2099 = vadd.s32 %v1951, 16
      %v2100 = vadd.s32 %v1958, 16
      %v2101 = vadd.s32 %v1965, 16
      %v2102 = vadd.s32 %v1972, 16
      %v2103 = vadd.s32 %v1979, 16
      %v2104 = vadd.s32 %v1986, 16
      %v2105 = vadd.s32 %v1993, 16
      %v2106 = vsel %vm2050, %v2078, %v1804
      %v2107 = vsel %vm2051, %v2079, %v1811
      %v2108 = vsel %vm2052, %v2080, %v1818
      %v2109 = vsel %vm2053, %v2081, %v1825
      %v2110 = vsel %vm2054, %v2082, %v1832
      %v2111 = vsel %vm2055, %v2083, %v1839
      %v2112 = vsel %vm2056, %v2084, %v1846
      %v2113 = vsel %vm2057, %v2085, %v1853
      %v2114 = vsel %vm2058, %v2086, %v1860
      %v2115 = vsel %vm2059, %v2087, %v1867
      %v2116 = vsel %vm2060, %v2088, %v1874
      %v2117 = vsel %vm2061, %v2089, %v1881
      %v2118 = vsel %vm2062, %v2090, %v1888
      %v2119 = vsel %vm2063, %v2091, %v1895
      %v2120 = vsel %vm2064, %v2092, %v1902
      %v2121 = vsel %vm2065, %v2093, %v1909
      %v2122 = vsel %vm2066, %v2094, %v1916
      %v2123 = vsel %vm2067, %v2095, %v1923
      %v2124 = vsel %vm2068, %v2096, %v1930
      %v2125 = vsel %vm2069, %v2097, %v1937
      %v2126 = vsel %vm2070, %v2098, %v1944
      %v2127 = vsel %vm2071, %v2099, %v1951
      %v2128 = vsel %vm2072, %v2100, %v1958
      %v2129 = vsel %vm2073, %v2101, %v1965
      %v2130 = vsel %vm2074, %v2102, %v1972
      %v2131 = vsel %vm2075, %v2103, %v1979
      %v2132 = vsel %vm2076, %v2104, %v1986
      %v2133 = vsel %vm2077, %v2105, %v1993
      %vm2134 = vcmp.lt.s32.totalorder %v2106, 14
      %vm2135 = vcmp.lt.s32.totalorder %v2107, 14
      %vm2136 = vcmp.lt.s32.totalorder %v2108, 14
      %vm2137 = vcmp.lt.s32.totalorder %v2109, 14
      %vm2138 = vcmp.lt.s32.totalorder %v2110, 14
      %vm2139 = vcmp.lt.s32.totalorder %v2111, 14
      %vm2140 = vcmp.lt.s32.totalorder %v2112, 14
      %vm2141 = vcmp.lt.s32.totalorder %v2113, 14
      %vm2142 = vcmp.lt.s32.totalorder %v2114, 14
      %vm2143 = vcmp.lt.s32.totalorder %v2115, 14
      %vm2144 = vcmp.lt.s32.totalorder %v2116, 14
      %vm2145 = vcmp.lt.s32.totalorder %v2117, 14
      %vm2146 = vcmp.lt.s32.totalorder %v2118, 14
      %vm2147 = vcmp.lt.s32.totalorder %v2119, 14
      %vm2148 = vcmp.lt.s32.totalorder %v2120, 14
      %vm2149 = vcmp.lt.s32.totalorder %v2121, 14
      %vm2150 = vcmp.lt.s32.totalorder %v2122, 14
      %vm2151 = vcmp.lt.s32.totalorder %v2123, 14
      %vm2152 = vcmp.lt.s32.totalorder %v2124, 14
      %vm2153 = vcmp.lt.s32.totalorder %v2125, 14
      %vm2154 = vcmp.lt.s32.totalorder %v2126, 14
      %vm2155 = vcmp.lt.s32.totalorder %v2127, 14
      %vm2156 = vcmp.lt.s32.totalorder %v2128, 14
      %vm2157 = vcmp.lt.s32.totalorder %v2129, 14
      %vm2158 = vcmp.lt.s32.totalorder %v2130, 14
      %vm2159 = vcmp.lt.s32.totalorder %v2131, 14
      %vm2160 = vcmp.lt.s32.totalorder %v2132, 14
      %vm2161 = vcmp.lt.s32.totalorder %v2133, 14
      %v2162 = vsel %vm2134, %v1741, 0.0
      %v2163 = vsel %vm2135, %v1742, 0.0
      %v2164 = vsel %vm2136, %v1743, 0.0
      %v2165 = vsel %vm2137, %v1744, 0.0
      %v2166 = vsel %vm2138, %v1745, 0.0
      %v2167 = vsel %vm2139, %v1746, 0.0
      %v2168 = vsel %vm2140, %v1747, 0.0
      %v2169 = vsel %vm2141, %v1748, 0.0
      %v2170 = vsel %vm2142, %v1749, 0.0
      %v2171 = vsel %vm2143, %v1750, 0.0
      %v2172 = vsel %vm2144, %v1751, 0.0
      %v2173 = vsel %vm2145, %v1752, 0.0
      %v2174 = vsel %vm2146, %v1753, 0.0
      %v2175 = vsel %vm2147, %v1754, 0.0
      %v2176 = vsel %vm2148, %v1755, 0.0
      %v2177 = vsel %vm2149, %v1756, 0.0
      %v2178 = vsel %vm2150, %v1757, 0.0
      %v2179 = vsel %vm2151, %v1758, 0.0
      %v2180 = vsel %vm2152, %v1759, 0.0
      %v2181 = vsel %vm2153, %v1760, 0.0
      %v2182 = vsel %vm2154, %v1761, 0.0
      %v2183 = vsel %vm2155, %v1762, 0.0
      %v2184 = vsel %vm2156, %v1763, 0.0
      %v2185 = vsel %vm2157, %v1764, 0.0
      %v2186 = vsel %vm2158, %v1765, 0.0
      %v2187 = vsel %vm2159, %v1766, 0.0
      %v2188 = vsel %vm2160, %v1767, 0.0
      %v2189 = vsel %vm2161, %v1768, 0.0
      %vm2190 = vcmask 64512
      %2191 = vst.msk [vmem:[%s197] sm:$0xff] %vm2190, %v2162
      %2192 = vst.msk [vmem:[%s197 + $0x8] sm:$0xff] %vm2190, %v2163
      %2193 = vst.msk [vmem:[%s197 + $0x10] sm:$0xff] %vm2190, %v2164
      %2194 = vst.msk [vmem:[%s197 + $0x18] sm:$0xff] %vm2190, %v2165
      %2195 = vst.msk [vmem:[%s197 + $0x20] sm:$0xff] %vm2190, %v2166
      %2196 = vst.msk [vmem:[%s197 + $0x28] sm:$0xff] %vm2190, %v2167
      %2197 = vst.msk [vmem:[%s197 + $0x30] sm:$0xff] %vm2190, %v2168
      %2198 = vst.msk [vmem:[%s197 + $0x38] sm:$0xff] %vm2190, %v2169
      %2199 = vst.msk [vmem:[%s197 + $0x40] sm:$0xff] %vm2190, %v2170
      %2200 = vst.msk [vmem:[%s197 + $0x48] sm:$0xff] %vm2190, %v2171
      %2201 = vst.msk [vmem:[%s197 + $0x50] sm:$0xff] %vm2190, %v2172
      %2202 = vst.msk [vmem:[%s197 + $0x58] sm:$0xff] %vm2190, %v2173
      %2203 = vst.msk [vmem:[%s197 + $0x60] sm:$0xff] %vm2190, %v2174
      %2204 = vst.msk [vmem:[%s197 + $0x68] sm:$0xff] %vm2190, %v2175
      %2205 = vst.msk [vmem:[%s197 + $0x70] sm:$0xff] %vm2190, %v2176
      %2206 = vst.msk [vmem:[%s197 + $0x78] sm:$0xff] %vm2190, %v2177
      %2207 = vst.msk [vmem:[%s197 + $0x80] sm:$0xff] %vm2190, %v2178
      %2208 = vst.msk [vmem:[%s197 + $0x88] sm:$0xff] %vm2190, %v2179
      %2209 = vst.msk [vmem:[%s197 + $0x90] sm:$0xff] %vm2190, %v2180
      %2210 = vst.msk [vmem:[%s197 + $0x98] sm:$0xff] %vm2190, %v2181
      %2211 = vst.msk [vmem:[%s197 + $0xa0] sm:$0xff] %vm2190, %v2182
      %2212 = vst.msk [vmem:[%s197 + $0xa8] sm:$0xff] %vm2190, %v2183
      %2213 = vst.msk [vmem:[%s197 + $0xb0] sm:$0xff] %vm2190, %v2184
      %2214 = vst.msk [vmem:[%s197 + $0xb8] sm:$0xff] %vm2190, %v2185
      %2215 = vst.msk [vmem:[%s197 + $0xc0] sm:$0xff] %vm2190, %v2186
      %2216 = vst.msk [vmem:[%s197 + $0xc8] sm:$0xff] %vm2190, %v2187
      %2217 = vst.msk [vmem:[%s197 + $0xd0] sm:$0xff] %vm2190, %v2188
      %2218 = vst.msk [vmem:[%s197 + $0xd8] sm:$0xff] %vm2190, %v2189
      %p2219 = scmp.lt.s32.totalorder %s15, 1
      %s2220 = scalar_select %p2219, %s15, 1
      %s2221 = smul.addr %s2220, 28
      %s2222 = smul.addr %s2221, 8
      %s2223 = scalar_lea.vmem %s4, %s2222
      // Predicated region
      $region37: #{bottleneck2_forward.3} parent=35 // pred_check
        %p2224 = pneg %p122
      $region38: #{bottleneck2_forward.3} parent=35 // pred_check_branch
        %2226 = sbr.rel (%p2224) target = $region40
      $region39: #{bottleneck2_forward.3} parent=35 // pred_region
        _
      $region40: #{bottleneck2_forward.3} parent=35 // pred_fallthru
        _
    $region36: #{bottleneck2_forward.3} parent=5 // pred_fallthru
      _
    %p2227 = scmp.le.s32.totalorder 2, %s10
    // Predicated region
    $region41: #{bottleneck2_forward.3} parent=5 // pred_check
      %p2228 = pneg %p2227
    $region42: #{bottleneck2_forward.3} parent=5 // pred_check_branch
      %2230 = sbr.rel (%p2228) target = $region44
    $region43: #{bottleneck2_forward.3} parent=5 // pred_region
      %s2231 = ssub.s32 %s10, 2
      // Predicated region
      $region45: #{bottleneck2_forward.3} parent=43 // pred_check
        %p2232 = pneg %p128
      $region46: #{bottleneck2_forward.3} parent=43 // pred_check_branch
        %2234 = sbr.rel (%p2232) target = $region48
      $region47: #{bottleneck2_forward.3} parent=43 // pred_region
        %p2235 = scmp.lt.s32.totalorder %s16, 1
        %s2236 = scalar_select %p2235, %s16, 1
        %s2237 = smul.addr %s2236, 28
        %s2238 = smul.addr %s2237, 8
        %s2239 = scalar_lea.vmem %s4, %s2238
      $region48: #{bottleneck2_forward.3} parent=43 // pred_fallthru
        _
    $region44: #{bottleneck2_forward.3} parent=5 // pred_fallthru
      _
  $region6: #{bottleneck2_forward.3} parent=0 // loop_footer
    %s14 = sadd.s32 1, %s10
  $region7: #{bottleneck2_forward.3} parent=0 // loop_footer_branch
    %9 = sbr.rel target = $region3
  $region8: #{bottleneck2_forward.3} parent=0 // loop_exit
    _

// kernel: bottleneck2_forward.4
$region0: #{bottleneck2_forward.4}
  #allocation0 [shape = 'u32[]', space=smem, size = 0x4, offset = 0x4, fixed_abs, tag = 'smem constant byte address 0x4 - core index']
  #allocation1 [shape = 'u32[144,128]{1,0:T(1,128)}', space=vmem, size = 0x12000, scoped, tag = 'internal scratch']
  %s0 = inlined_call_operand.vmem [shape: f32[2,224,8], index: 0, kind: input, shape index: {}]
  %s1 = inlined_call_operand.vmem [shape: f32[14,224], index: 1, kind: input, shape index: {}]
  %s2 = inlined_call_operand.vmem [shape: f32[14,224], index: 2, kind: input, shape index: {}]
  %s3 = inlined_call_operand.vmem [shape: f32[224,14], index: 3, kind: input, shape index: {}]
  %s4 = inlined_call_operand.vmem [shape: f32[224,14], index: 4, kind: input, shape index: {}]
  %s5 = inlined_call_operand.vmem [shape: f32[4,224], index: 5, kind: input, shape index: {}]
  %s6 = inlined_call_operand.vmem [shape: f32[9,8], index: 6, kind: input, shape index: {}]
  %s7 = inlined_call_operand.vmem [shape: f32[1,8], index: 7, kind: input, shape index: {}]
  %s8 = inlined_call_operand.vmem [shape: f32[1,8], index: 8, kind: input, shape index: {}]
  %s9 = inlined_call_operand.vmem [shape: f32[1,8], index: 9, kind: input, shape index: {}]
  %s10 = inlined_call_operand.vmem [shape: f32[1,8], index: 10, kind: input, shape index: {}]
  %s11 = inlined_call_operand.vmem [shape: f32[1,8], index: 11, kind: input, shape index: {}]
  %s12 = inlined_call_operand.vmem [shape: f32[1,8], index: 12, kind: input, shape index: {}]
  %s13 = inlined_call_operand.vmem [shape: f32[1,8], index: 13, kind: input, shape index: {}]
  %s14 = inlined_call_operand.vmem [shape: f32[1,8], index: 14, kind: input, shape index: {}]
  %s15 = inlined_call_operand.vmem [shape: f32[1,8], index: 15, kind: input, shape index: {}]
  %s16 = inlined_call_operand.vmem [shape: f32[1,8], index: 16, kind: input, shape index: {}]
  %s17 = inlined_call_operand.vmem [shape: f32[2,224,8], index: 17, kind: output, shape index: {}]
  %s18 = sld [smem:[#allocation0]]
  $region101: #{bottleneck2_forward.4} parent=0
    _
  %s20 = ssub.s32 1, %s18
  %s21 = scalar_select 0, %s20, %s18
  loop: start=0, step=1, limit=4
  $region2: #{bottleneck2_forward.4} parent=0 // loop_pre_header
    _
  $region3: #{bottleneck2_forward.4} parent=0 // loop_header
    %s23 = sphi 0, %s27
    %p24 = scmp.ge.s32.totalorder %s23, 4
    %s33 = sphi 0, %s35
    %s36 = sphi 0, %s33
    %s37 = sphi 0, %s36
    %s53 = sphi 0, %s37
    %s57 = sphi 0, %s57
    %s59 = sphi 0, %s57
    %s60 = sphi 0, %s59
    %s74 = sphi 0, %s60
    %s78 = sphi 0, %s78
    %s80 = sphi 0, %s78
    %s81 = sphi 0, %s80
    %s95 = sphi 0, %s81
    %s99 = sphi 0, %s99
    %s101 = sphi 0, %s99
    %s102 = sphi 0, %s101
    %s116 = sphi 0, %s102
    %s120 = sphi 0, %s120
    %s122 = sphi 0, %s120
    %s123 = sphi 0, %s122
    %s137 = sphi 0, %s123
    %s141 = sphi 0, %s141
    %s143 = sphi 0, %s141
    %s144 = sphi 0, %s143
    %s158 = sphi 0, %s144
    %s162 = sphi 0, %s162
    %s164 = sphi 0, %s162
    %s165 = sphi 0, %s164
    %s179 = sphi 0, %s165
    %s183 = sphi 0, %s183
    %s185 = sphi 0, %s183
    %s186 = sphi 0, %s185
    %s200 = sphi 0, %s186
    %s204 = sphi 0, %s204
    %s206 = sphi 0, %s204
    %s207 = sphi 0, %s206
    %s221 = sphi 0, %s207
    %s225 = sphi 0, %s225
    %s227 = sphi 0, %s225
    %s228 = sphi 0, %s227
    %s242 = sphi 0, %s228
    %s246 = sphi 0, %s246
    %s248 = sphi 0, %s246
    %s249 = sphi 0, %s248
    %s263 = sphi 0, %s249
    %s267 = sphi 0, %s267
    %s269 = sphi 0, %s267
    %s270 = sphi 0, %s269
    %s284 = sphi 0, %s270
    %s288 = sphi 0, %s288
    %s290 = sphi 0, %s288
    %s291 = sphi 0, %s290
    %s305 = sphi 0, %s291
    %s309 = sphi 0, %s309
    %s311 = sphi 0, %s309
    %s312 = sphi 0, %s311
    %s326 = sphi 0, %s312
    %s330 = sphi 0, %s330
    %s332 = sphi 0, %s330
    %s333 = sphi 0, %s332
    %s347 = sphi 0, %s333
    %s351 = sphi 0, %s351
    %s353 = sphi 0, %s351
    %s354 = sphi 0, %s353
    %s368 = sphi 0, %s354
    %s372 = sphi 0, %s372
    %s374 = sphi 0, %s372
    %s375 = sphi 0, %s374
    %s389 = sphi 0, %s375
    %s395 = sphi 0, %s397
    %s398 = sphi 0, %s395
    %s399 = sphi 0, %s398
    %s415 = sphi 0, %s399
  $region4: #{bottleneck2_forward.4} parent=0 // loop_header_branch
    %26 = sbr.rel (%p24) target = $region8
  $region5: #{bottleneck2_forward.4} parent=0 // loop_body
    %s28 = ssub.s32 %s23, 1
    %s29 = ssub.s32 %s23, 2
    %s30 = sadd.s32 %s23, 1
    %s31 = ssub.s32 %s23, %s30
    %p32 = scmp.eq.s32.totalorder %s31, 0
    %s34 = sadd.s32 %s33, 1
    %s35 = scalar_select %p32, %s33, %s34
    %p38 = pneg %p32
    %p39 = scmp.eq.s32.totalorder %s23, 1
    %p40 = por %p38, %p39
    %p41 = scmp.ne.s32.totalorder %s33, %s36
    %p42 = scmp.eq.s32.totalorder %s23, 0
    %p43 = por %p41, %p42
    %p44 = scmp.ne.s32.totalorder %s33, %s36
    %p45 = scmp.eq.s32.totalorder %s28, 1
    %p46 = por %p44, %p45
    %p47 = scmp.ne.s32.totalorder %s36, %s37
    %p48 = scmp.eq.s32.totalorder %s28, 0
    %p49 = por %p47, %p48
    %p50 = scmp.ne.s32.totalorder %s36, %s37
    %p51 = scmp.eq.s32.totalorder %s29, 1
    %p52 = por %p50, %p51
    %p54 = scmp.ne.s32.totalorder %s37, %s53
    %p55 = scmp.eq.s32.totalorder %s29, 0
    %p56 = por %p54, %p55
    %s58 = sadd.s32 %s57, 1
    %p61 = scmp.eq.s32.totalorder %s23, 1
    %p62 = scmp.ne.s32.totalorder %s57, %s59
    %p63 = scmp.eq.s32.totalorder %s23, 0
    %p64 = por %p62, %p63
    %p65 = scmp.ne.s32.totalorder %s57, %s59
    %p66 = scmp.eq.s32.totalorder %s28, 1
    %p67 = por %p65, %p66
    %p68 = scmp.ne.s32.totalorder %s59, %s60
    %p69 = scmp.eq.s32.totalorder %s28, 0
    %p70 = por %p68, %p69
    %p71 = scmp.ne.s32.totalorder %s59, %s60
    %p72 = scmp.eq.s32.totalorder %s29, 1
    %p73 = por %p71, %p72
    %p75 = scmp.ne.s32.totalorder %s60, %s74
    %p76 = scmp.eq.s32.totalorder %s29, 0
    %p77 = por %p75, %p76
    %s79 = sadd.s32 %s78, 1
    %p82 = scmp.eq.s32.totalorder %s23, 1
    %p83 = scmp.ne.s32.totalorder %s78, %s80
    %p84 = scmp.eq.s32.totalorder %s23, 0
    %p85 = por %p83, %p84
    %p86 = scmp.ne.s32.totalorder %s78, %s80
    %p87 = scmp.eq.s32.totalorder %s28, 1
    %p88 = por %p86, %p87
    %p89 = scmp.ne.s32.totalorder %s80, %s81
    %p90 = scmp.eq.s32.totalorder %s28, 0
    %p91 = por %p89, %p90
    %p92 = scmp.ne.s32.totalorder %s80, %s81
    %p93 = scmp.eq.s32.totalorder %s29, 1
    %p94 = por %p92, %p93
    %p96 = scmp.ne.s32.totalorder %s81, %s95
    %p97 = scmp.eq.s32.totalorder %s29, 0
    %p98 = por %p96, %p97
    %s100 = sadd.s32 %s99, 1
    %p103 = scmp.eq.s32.totalorder %s23, 1
    %p104 = scmp.ne.s32.totalorder %s99, %s101
    %p105 = scmp.eq.s32.totalorder %s23, 0
    %p106 = por %p104, %p105
    %p107 = scmp.ne.s32.totalorder %s99, %s101
    %p108 = scmp.eq.s32.totalorder %s28, 1
    %p109 = por %p107, %p108
    %p110 = scmp.ne.s32.totalorder %s101, %s102
    %p111 = scmp.eq.s32.totalorder %s28, 0
    %p112 = por %p110, %p111
    %p113 = scmp.ne.s32.totalorder %s101, %s102
    %p114 = scmp.eq.s32.totalorder %s29, 1
    %p115 = por %p113, %p114
    %p117 = scmp.ne.s32.totalorder %s102, %s116
    %p118 = scmp.eq.s32.totalorder %s29, 0
    %p119 = por %p117, %p118
    %s121 = sadd.s32 %s120, 1
    %p124 = scmp.eq.s32.totalorder %s23, 1
    %p125 = scmp.ne.s32.totalorder %s120, %s122
    %p126 = scmp.eq.s32.totalorder %s23, 0
    %p127 = por %p125, %p126
    %p128 = scmp.ne.s32.totalorder %s120, %s122
    %p129 = scmp.eq.s32.totalorder %s28, 1
    %p130 = por %p128, %p129
    %p131 = scmp.ne.s32.totalorder %s122, %s123
    %p132 = scmp.eq.s32.totalorder %s28, 0
    %p133 = por %p131, %p132
    %p134 = scmp.ne.s32.totalorder %s122, %s123
    %p135 = scmp.eq.s32.totalorder %s29, 1
    %p136 = por %p134, %p135
    %p138 = scmp.ne.s32.totalorder %s123, %s137
    %p139 = scmp.eq.s32.totalorder %s29, 0
    %p140 = por %p138, %p139
    %s142 = sadd.s32 %s141, 1
    %p145 = scmp.eq.s32.totalorder %s23, 1
    %p146 = scmp.ne.s32.totalorder %s141, %s143
    %p147 = scmp.eq.s32.totalorder %s23, 0
    %p148 = por %p146, %p147
    %p149 = scmp.ne.s32.totalorder %s141, %s143
    %p150 = scmp.eq.s32.totalorder %s28, 1
    %p151 = por %p149, %p150
    %p152 = scmp.ne.s32.totalorder %s143, %s144
    %p153 = scmp.eq.s32.totalorder %s28, 0
    %p154 = por %p152, %p153
    %p155 = scmp.ne.s32.totalorder %s143, %s144
    %p156 = scmp.eq.s32.totalorder %s29, 1
    %p157 = por %p155, %p156
    %p159 = scmp.ne.s32.totalorder %s144, %s158
    %p160 = scmp.eq.s32.totalorder %s29, 0
    %p161 = por %p159, %p160
    %s163 = sadd.s32 %s162, 1
    %p166 = scmp.eq.s32.totalorder %s23, 1
    %p167 = scmp.ne.s32.totalorder %s162, %s164
    %p168 = scmp.eq.s32.totalorder %s23, 0
    %p169 = por %p167, %p168
    %p170 = scmp.ne.s32.totalorder %s162, %s164
    %p171 = scmp.eq.s32.totalorder %s28, 1
    %p172 = por %p170, %p171
    %p173 = scmp.ne.s32.totalorder %s164, %s165
    %p174 = scmp.eq.s32.totalorder %s28, 0
    %p175 = por %p173, %p174
    %p176 = scmp.ne.s32.totalorder %s164, %s165
    %p177 = scmp.eq.s32.totalorder %s29, 1
    %p178 = por %p176, %p177
    %p180 = scmp.ne.s32.totalorder %s165, %s179
    %p181 = scmp.eq.s32.totalorder %s29, 0
    %p182 = por %p180, %p181
    %s184 = sadd.s32 %s183, 1
    %p187 = scmp.eq.s32.totalorder %s23, 1
    %p188 = scmp.ne.s32.totalorder %s183, %s185
    %p189 = scmp.eq.s32.totalorder %s23, 0
    %p190 = por %p188, %p189
    %p191 = scmp.ne.s32.totalorder %s183, %s185
    %p192 = scmp.eq.s32.totalorder %s28, 1
    %p193 = por %p191, %p192
    %p194 = scmp.ne.s32.totalorder %s185, %s186
    %p195 = scmp.eq.s32.totalorder %s28, 0
    %p196 = por %p194, %p195
    %p197 = scmp.ne.s32.totalorder %s185, %s186
    %p198 = scmp.eq.s32.totalorder %s29, 1
    %p199 = por %p197, %p198
    %p201 = scmp.ne.s32.totalorder %s186, %s200
    %p202 = scmp.eq.s32.totalorder %s29, 0
    %p203 = por %p201, %p202
    %s205 = sadd.s32 %s204, 1
    %p208 = scmp.eq.s32.totalorder %s23, 1
    %p209 = scmp.ne.s32.totalorder %s204, %s206
    %p210 = scmp.eq.s32.totalorder %s23, 0
    %p211 = por %p209, %p210
    %p212 = scmp.ne.s32.totalorder %s204, %s206
    %p213 = scmp.eq.s32.totalorder %s28, 1
    %p214 = por %p212, %p213
    %p215 = scmp.ne.s32.totalorder %s206, %s207
    %p216 = scmp.eq.s32.totalorder %s28, 0
    %p217 = por %p215, %p216
    %p218 = scmp.ne.s32.totalorder %s206, %s207
    %p219 = scmp.eq.s32.totalorder %s29, 1
    %p220 = por %p218, %p219
    %p222 = scmp.ne.s32.totalorder %s207, %s221
    %p223 = scmp.eq.s32.totalorder %s29, 0
    %p224 = por %p222, %p223
    %s226 = sadd.s32 %s225, 1
    %p229 = scmp.eq.s32.totalorder %s23, 1
    %p230 = scmp.ne.s32.totalorder %s225, %s227
    %p231 = scmp.eq.s32.totalorder %s23, 0
    %p232 = por %p230, %p231
    %p233 = scmp.ne.s32.totalorder %s225, %s227
    %p234 = scmp.eq.s32.totalorder %s28, 1
    %p235 = por %p233, %p234
    %p236 = scmp.ne.s32.totalorder %s227, %s228
    %p237 = scmp.eq.s32.totalorder %s28, 0
    %p238 = por %p236, %p237
    %p239 = scmp.ne.s32.totalorder %s227, %s228
    %p240 = scmp.eq.s32.totalorder %s29, 1
    %p241 = por %p239, %p240
    %p243 = scmp.ne.s32.totalorder %s228, %s242
    %p244 = scmp.eq.s32.totalorder %s29, 0
    %p245 = por %p243, %p244
    %s247 = sadd.s32 %s246, 1
    %p250 = scmp.eq.s32.totalorder %s23, 1
    %p251 = scmp.ne.s32.totalorder %s246, %s248
    %p252 = scmp.eq.s32.totalorder %s23, 0
    %p253 = por %p251, %p252
    %p254 = scmp.ne.s32.totalorder %s246, %s248
    %p255 = scmp.eq.s32.totalorder %s28, 1
    %p256 = por %p254, %p255
    %p257 = scmp.ne.s32.totalorder %s248, %s249
    %p258 = scmp.eq.s32.totalorder %s28, 0
    %p259 = por %p257, %p258
    %p260 = scmp.ne.s32.totalorder %s248, %s249
    %p261 = scmp.eq.s32.totalorder %s29, 1
    %p262 = por %p260, %p261
    %p264 = scmp.ne.s32.totalorder %s249, %s263
    %p265 = scmp.eq.s32.totalorder %s29, 0
    %p266 = por %p264, %p265
    %s268 = sadd.s32 %s267, 1
    %p271 = scmp.eq.s32.totalorder %s23, 1
    %p272 = scmp.ne.s32.totalorder %s267, %s269
    %p273 = scmp.eq.s32.totalorder %s23, 0
    %p274 = por %p272, %p273
    %p275 = scmp.ne.s32.totalorder %s267, %s269
    %p276 = scmp.eq.s32.totalorder %s28, 1
    %p277 = por %p275, %p276
    %p278 = scmp.ne.s32.totalorder %s269, %s270
    %p279 = scmp.eq.s32.totalorder %s28, 0
    %p280 = por %p278, %p279
    %p281 = scmp.ne.s32.totalorder %s269, %s270
    %p282 = scmp.eq.s32.totalorder %s29, 1
    %p283 = por %p281, %p282
    %p285 = scmp.ne.s32.totalorder %s270, %s284
    %p286 = scmp.eq.s32.totalorder %s29, 0
    %p287 = por %p285, %p286
    %s289 = sadd.s32 %s288, 1
    %p292 = scmp.eq.s32.totalorder %s23, 1
    %p293 = scmp.ne.s32.totalorder %s288, %s290
    %p294 = scmp.eq.s32.totalorder %s23, 0
    %p295 = por %p293, %p294
    %p296 = scmp.ne.s32.totalorder %s288, %s290
    %p297 = scmp.eq.s32.totalorder %s28, 1
    %p298 = por %p296, %p297
    %p299 = scmp.ne.s32.totalorder %s290, %s291
    %p300 = scmp.eq.s32.totalorder %s28, 0
    %p301 = por %p299, %p300
    %p302 = scmp.ne.s32.totalorder %s290, %s291
    %p303 = scmp.eq.s32.totalorder %s29, 1
    %p304 = por %p302, %p303
    %p306 = scmp.ne.s32.totalorder %s291, %s305
    %p307 = scmp.eq.s32.totalorder %s29, 0
    %p308 = por %p306, %p307
    %s310 = sadd.s32 %s309, 1
    %p313 = scmp.eq.s32.totalorder %s23, 1
    %p314 = scmp.ne.s32.totalorder %s309, %s311
    %p315 = scmp.eq.s32.totalorder %s23, 0
    %p316 = por %p314, %p315
    %p317 = scmp.ne.s32.totalorder %s309, %s311
    %p318 = scmp.eq.s32.totalorder %s28, 1
    %p319 = por %p317, %p318
    %p320 = scmp.ne.s32.totalorder %s311, %s312
    %p321 = scmp.eq.s32.totalorder %s28, 0
    %p322 = por %p320, %p321
    %p323 = scmp.ne.s32.totalorder %s311, %s312
    %p324 = scmp.eq.s32.totalorder %s29, 1
    %p325 = por %p323, %p324
    %p327 = scmp.ne.s32.totalorder %s312, %s326
    %p328 = scmp.eq.s32.totalorder %s29, 0
    %p329 = por %p327, %p328
    %s331 = sadd.s32 %s330, 1
    %p334 = scmp.eq.s32.totalorder %s23, 1
    %p335 = scmp.ne.s32.totalorder %s330, %s332
    %p336 = scmp.eq.s32.totalorder %s23, 0
    %p337 = por %p335, %p336
    %p338 = scmp.ne.s32.totalorder %s330, %s332
    %p339 = scmp.eq.s32.totalorder %s28, 1
    %p340 = por %p338, %p339
    %p341 = scmp.ne.s32.totalorder %s332, %s333
    %p342 = scmp.eq.s32.totalorder %s28, 0
    %p343 = por %p341, %p342
    %p344 = scmp.ne.s32.totalorder %s332, %s333
    %p345 = scmp.eq.s32.totalorder %s29, 1
    %p346 = por %p344, %p345
    %p348 = scmp.ne.s32.totalorder %s333, %s347
    %p349 = scmp.eq.s32.totalorder %s29, 0
    %p350 = por %p348, %p349
    %s352 = sadd.s32 %s351, 1
    %p355 = scmp.eq.s32.totalorder %s23, 1
    %p356 = scmp.ne.s32.totalorder %s351, %s353
    %p357 = scmp.eq.s32.totalorder %s23, 0
    %p358 = por %p356, %p357
    %p359 = scmp.ne.s32.totalorder %s351, %s353
    %p360 = scmp.eq.s32.totalorder %s28, 1
    %p361 = por %p359, %p360
    %p362 = scmp.ne.s32.totalorder %s353, %s354
    %p363 = scmp.eq.s32.totalorder %s28, 0
    %p364 = por %p362, %p363
    %p365 = scmp.ne.s32.totalorder %s353, %s354
    %p366 = scmp.eq.s32.totalorder %s29, 1
    %p367 = por %p365, %p366
    %p369 = scmp.ne.s32.totalorder %s354, %s368
    %p370 = scmp.eq.s32.totalorder %s29, 0
    %p371 = por %p369, %p370
    %s373 = sadd.s32 %s372, 1
    %p376 = scmp.eq.s32.totalorder %s23, 1
    %p377 = scmp.ne.s32.totalorder %s372, %s374
    %p378 = scmp.eq.s32.totalorder %s23, 0
    %p379 = por %p377, %p378
    %p380 = scmp.ne.s32.totalorder %s372, %s374
    %p381 = scmp.eq.s32.totalorder %s28, 1
    %p382 = por %p380, %p381
    %p383 = scmp.ne.s32.totalorder %s374, %s375
    %p384 = scmp.eq.s32.totalorder %s28, 0
    %p385 = por %p383, %p384
    %p386 = scmp.ne.s32.totalorder %s374, %s375
    %p387 = scmp.eq.s32.totalorder %s29, 1
    %p388 = por %p386, %p387
    %p390 = scmp.ne.s32.totalorder %s375, %s389
    %p391 = scmp.eq.s32.totalorder %s29, 0
    %p392 = por %p390, %p391
    %s393 = ssub.s32 %s23, %s30
    %p394 = scmp.eq.s32.totalorder %s393, 0
    %s396 = sadd.s32 %s395, 1
    %s397 = scalar_select %p394, %s395, %s396
    %p400 = pneg %p394
    %p401 = scmp.eq.s32.totalorder %s23, 1
    %p402 = por %p400, %p401
    %p403 = scmp.ne.s32.totalorder %s395, %s398
    %p404 = scmp.eq.s32.totalorder %s23, 0
    %p405 = por %p403, %p404
    %p406 = scmp.ne.s32.totalorder %s395, %s398
    %p407 = scmp.eq.s32.totalorder %s28, 1
    %p408 = por %p406, %p407
    %p409 = scmp.ne.s32.totalorder %s398, %s399
    %p410 = scmp.eq.s32.totalorder %s28, 0
    %p411 = por %p409, %p410
    %p412 = scmp.ne.s32.totalorder %s398, %s399
    %p413 = scmp.eq.s32.totalorder %s29, 1
    %p414 = por %p412, %p413
    %p416 = scmp.ne.s32.totalorder %s399, %s415
    %p417 = scmp.eq.s32.totalorder %s29, 0
    %p418 = por %p416, %p417
    %p419 = scmp.le.s32.totalorder 1, %s23
    %p420 = scmp.lt.s32.totalorder %s23, 3
    %p421 = pnand %p419, %p420
    %p422 = pneg %p421
    // Predicated region
    $region9: #{bottleneck2_forward.4} parent=5 // pred_check
      _
    $region10: #{bottleneck2_forward.4} parent=5 // pred_check_branch
      %424 = sbr.rel (%p421) target = $region12
    $region11: #{bottleneck2_forward.4} parent=5 // pred_region
      %s425 = ssub.s32 %s23, 1
      // Predicated region
      $region13: #{bottleneck2_forward.4} parent=11 // pred_check
        %p426 = pneg %p70
      $region14: #{bottleneck2_forward.4} parent=11 // pred_check_branch
        %428 = sbr.rel (%p426) target = $region16
      $region15: #{bottleneck2_forward.4} parent=11 // pred_region
        _
      $region16: #{bottleneck2_forward.4} parent=11 // pred_fallthru
        _
      // Predicated region
      $region17: #{bottleneck2_forward.4} parent=11 // pred_check
        %p429 = pneg %p91
      $region18: #{bottleneck2_forward.4} parent=11 // pred_check_branch
        %431 = sbr.rel (%p429) target = $region20
      $region19: #{bottleneck2_forward.4} parent=11 // pred_region
        _
      $region20: #{bottleneck2_forward.4} parent=11 // pred_fallthru
        _
      // Predicated region
      $region21: #{bottleneck2_forward.4} parent=11 // pred_check
        %p432 = pneg %p112
      $region22: #{bottleneck2_forward.4} parent=11 // pred_check_branch
        %434 = sbr.rel (%p432) target = $region24
      $region23: #{bottleneck2_forward.4} parent=11 // pred_region
        _
      $region24: #{bottleneck2_forward.4} parent=11 // pred_fallthru
        _
      // Predicated region
      $region25: #{bottleneck2_forward.4} parent=11 // pred_check
        %p435 = pneg %p133
      $region26: #{bottleneck2_forward.4} parent=11 // pred_check_branch
        %437 = sbr.rel (%p435) target = $region28
      $region27: #{bottleneck2_forward.4} parent=11 // pred_region
        _
      $region28: #{bottleneck2_forward.4} parent=11 // pred_fallthru
        _
      // Predicated region
      $region29: #{bottleneck2_forward.4} parent=11 // pred_check
        %p438 = pneg %p154
      $region30: #{bottleneck2_forward.4} parent=11 // pred_check_branch
        %440 = sbr.rel (%p438) target = $region32
      $region31: #{bottleneck2_forward.4} parent=11 // pred_region
        _
      $region32: #{bottleneck2_forward.4} parent=11 // pred_fallthru
        _
      // Predicated region
      $region33: #{bottleneck2_forward.4} parent=11 // pred_check
        %p441 = pneg %p175
      $region34: #{bottleneck2_forward.4} parent=11 // pred_check_branch
        %443 = sbr.rel (%p441) target = $region36
      $region35: #{bottleneck2_forward.4} parent=11 // pred_region
        _
      $region36: #{bottleneck2_forward.4} parent=11 // pred_fallthru
        _
      // Predicated region
      $region37: #{bottleneck2_forward.4} parent=11 // pred_check
        %p444 = pneg %p196
      $region38: #{bottleneck2_forward.4} parent=11 // pred_check_branch
        %446 = sbr.rel (%p444) target = $region40
      $region39: #{bottleneck2_forward.4} parent=11 // pred_region
        _
      $region40: #{bottleneck2_forward.4} parent=11 // pred_fallthru
        _
      // Predicated region
      $region41: #{bottleneck2_forward.4} parent=11 // pred_check
        %p447 = pneg %p217
      $region42: #{bottleneck2_forward.4} parent=11 // pred_check_branch
        %449 = sbr.rel (%p447) target = $region44
      $region43: #{bottleneck2_forward.4} parent=11 // pred_region
        _
      $region44: #{bottleneck2_forward.4} parent=11 // pred_fallthru
        _
      // Predicated region
      $region45: #{bottleneck2_forward.4} parent=11 // pred_check
        %p450 = pneg %p238
      $region46: #{bottleneck2_forward.4} parent=11 // pred_check_branch
        %452 = sbr.rel (%p450) target = $region48
      $region47: #{bottleneck2_forward.4} parent=11 // pred_region
        _
      $region48: #{bottleneck2_forward.4} parent=11 // pred_fallthru
        _
      // Predicated region
      $region49: #{bottleneck2_forward.4} parent=11 // pred_check
        %p453 = pneg %p259
      $region50: #{bottleneck2_forward.4} parent=11 // pred_check_branch
        %455 = sbr.rel (%p453) target = $region52
      $region51: #{bottleneck2_forward.4} parent=11 // pred_region
        _
      $region52: #{bottleneck2_forward.4} parent=11 // pred_fallthru
        _
      // Predicated region
      $region53: #{bottleneck2_forward.4} parent=11 // pred_check
        %p456 = pneg %p280
      $region54: #{bottleneck2_forward.4} parent=11 // pred_check_branch
        %458 = sbr.rel (%p456) target = $region56
      $region55: #{bottleneck2_forward.4} parent=11 // pred_region
        _
      $region56: #{bottleneck2_forward.4} parent=11 // pred_fallthru
        _
      // Predicated region
      $region57: #{bottleneck2_forward.4} parent=11 // pred_check
        %p459 = pneg %p301
      $region58: #{bottleneck2_forward.4} parent=11 // pred_check_branch
        %461 = sbr.rel (%p459) target = $region60
      $region59: #{bottleneck2_forward.4} parent=11 // pred_region
        _
      $region60: #{bottleneck2_forward.4} parent=11 // pred_fallthru
        _
      // Predicated region
      $region61: #{bottleneck2_forward.4} parent=11 // pred_check
        %p462 = pneg %p322
      $region62: #{bottleneck2_forward.4} parent=11 // pred_check_branch
        %464 = sbr.rel (%p462) target = $region64
      $region63: #{bottleneck2_forward.4} parent=11 // pred_region
        _
      $region64: #{bottleneck2_forward.4} parent=11 // pred_fallthru
        _
      // Predicated region
      $region65: #{bottleneck2_forward.4} parent=11 // pred_check
        %p465 = pneg %p343
      $region66: #{bottleneck2_forward.4} parent=11 // pred_check_branch
        %467 = sbr.rel (%p465) target = $region68
      $region67: #{bottleneck2_forward.4} parent=11 // pred_region
        _
      $region68: #{bottleneck2_forward.4} parent=11 // pred_fallthru
        _
      // Predicated region
      $region69: #{bottleneck2_forward.4} parent=11 // pred_check
        %p468 = pneg %p364
      $region70: #{bottleneck2_forward.4} parent=11 // pred_check_branch
        %470 = sbr.rel (%p468) target = $region72
      $region71: #{bottleneck2_forward.4} parent=11 // pred_region
        _
      $region72: #{bottleneck2_forward.4} parent=11 // pred_fallthru
        _
      // Predicated region
      $region73: #{bottleneck2_forward.4} parent=11 // pred_check
        %p471 = pneg %p385
      $region74: #{bottleneck2_forward.4} parent=11 // pred_check_branch
        %473 = sbr.rel (%p471) target = $region76
      $region75: #{bottleneck2_forward.4} parent=11 // pred_region
        _
      $region76: #{bottleneck2_forward.4} parent=11 // pred_fallthru
        _
    $region12: #{bottleneck2_forward.4} parent=5 // pred_fallthru
      _
    %p474 = scmp.lt.s32.totalorder %s23, 2
    // Predicated region
    $region77: #{bottleneck2_forward.4} parent=5 // pred_check
      %p475 = pneg %p474
    $region78: #{bottleneck2_forward.4} parent=5 // pred_check_branch
      %477 = sbr.rel (%p475) target = $region80
    $region79: #{bottleneck2_forward.4} parent=5 // pred_region
      // Predicated region
      $region81: #{bottleneck2_forward.4} parent=79 // pred_check
        %p478 = pneg %p43
      $region82: #{bottleneck2_forward.4} parent=79 // pred_check_branch
        %480 = sbr.rel (%p478) target = $region84
      $region83: #{bottleneck2_forward.4} parent=79 // pred_region
        %p481 = scmp.lt.s32.totalorder %s23, 1
        %s482 = scalar_select %p481, %s23, 1
        %s483 = smul.addr %s482, 28
        %s484 = smul.addr %s483, 8
        %s485 = scalar_lea.vmem %s0, %s484
      $region84: #{bottleneck2_forward.4} parent=79 // pred_fallthru
        _
    $region80: #{bottleneck2_forward.4} parent=5 // pred_fallthru
      _
    %p486 = scmp.le.s32.totalorder 1, %s23
    %p487 = scmp.lt.s32.totalorder %s23, 3
    %p488 = pnand %p486, %p487
    %p489 = pneg %p488
    // Predicated region
    $region85: #{bottleneck2_forward.4} parent=5 // pred_check
      _
    $region86: #{bottleneck2_forward.4} parent=5 // pred_check_branch
      %491 = sbr.rel (%p488) target = $region88
    $region87: #{bottleneck2_forward.4} parent=5 // pred_region
      %s492 = ssub.s32 %s23, 1
      %p493 = scmp.lt.s32.totalorder %s28, 1
      %s494 = scalar_select %p493, %s28, 1
      %s495 = smul.addr %s494, 28
      %s496 = smul.addr %s495, 8
      %s497 = scalar_lea.vmem %s0, %s496
      %p498 = pneg %p49
      %p499 = pneg %p46
      %p500 = pneg %p70
      %p501 = pneg %p67
      %p502 = pneg %p91
      %p503 = pneg %p88
      %p504 = pneg %p112
      %p505 = pneg %p109
      %p506 = pneg %p133
      %p507 = pneg %p130
      %p508 = pneg %p154
      %p509 = pneg %p151
      %p510 = pneg %p175
      %p511 = pneg %p172
      %p512 = pneg %p196
      %p513 = pneg %p193
      %p514 = pneg %p217
      %p515 = pneg %p214
      %p516 = pneg %p238
      %p517 = pneg %p235
      %p518 = pneg %p259
      %p519 = pneg %p256
      %p520 = pneg %p280
      %p521 = pneg %p277
      %p522 = pneg %p301
      %p523 = pneg %p298
      %p524 = pneg %p322
      %p525 = pneg %p319
      %p526 = pneg %p343
      %p527 = pneg %p340
      %p528 = pneg %p364
      %p529 = pneg %p361
      %p530 = pneg %p385
      %p531 = pneg %p382
      %p532 = pneg %p411
      %p533 = pneg %p408
      %p534 = scmp.lt.s32.totalorder %s28, 1
      %s535 = scalar_select %p534, %s28, 1
      %s536 = smul.addr %s535, 28
      %s537 = smul.addr %s536, 8
      %s538 = scalar_lea.vmem %s17, %s537
      %p539 = scmp.lt.s32.totalorder %s28, 1
      %s540 = scalar_select %p539, %s28, 1
      %s541 = smul.addr %s540, 28
      %s542 = smul.addr %s541, 8
      %s543 = scalar_lea.vmem %s0, %s542
      %p544 = scmp.lt.s32.totalorder %s28, 1
      %s545 = scalar_select %p544, %s28, 1
      %s546 = smul.addr %s545, 28
      %s547 = smul.addr %s546, 8
      %s548 = scalar_lea.vmem %s17, %s547
      %v549 = vld [vmem:[%s543] sm:$0xff]
      %v550 = vld [vmem:[%s543 + $0x8] sm:$0xff]
      %v551 = vld [vmem:[%s543 + $0x10] sm:$0xff]
      %v552 = vld [vmem:[%s543 + $0x18] sm:$0xff]
      %v553 = vld [vmem:[%s543 + $0x20] sm:$0xff]
      %v554 = vld [vmem:[%s543 + $0x28] sm:$0xff]
      %v555 = vld [vmem:[%s543 + $0x30] sm:$0xff]
      %v556 = vld [vmem:[%s543 + $0x38] sm:$0xff]
      %v557 = vld [vmem:[%s543 + $0x40] sm:$0xff]
      %v558 = vld [vmem:[%s543 + $0x48] sm:$0xff]
      %v559 = vld [vmem:[%s543 + $0x50] sm:$0xff]
      %v560 = vld [vmem:[%s543 + $0x58] sm:$0xff]
      %v561 = vld [vmem:[%s543 + $0x60] sm:$0xff]
      %v562 = vld [vmem:[%s543 + $0x68] sm:$0xff]
      %v563 = vld [vmem:[%s543 + $0x70] sm:$0xff]
      %v564 = vld [vmem:[%s543 + $0x78] sm:$0xff]
      %v565 = vld [vmem:[%s543 + $0x80] sm:$0xff]
      %v566 = vld [vmem:[%s543 + $0x88] sm:$0xff]
      %v567 = vld [vmem:[%s543 + $0x90] sm:$0xff]
      %v568 = vld [vmem:[%s543 + $0x98] sm:$0xff]
      %v569 = vld [vmem:[%s543 + $0xa0] sm:$0xff]
      %v570 = vld [vmem:[%s543 + $0xa8] sm:$0xff]
      %v571 = vld [vmem:[%s543 + $0xb0] sm:$0xff]
      %v572 = vld [vmem:[%s543 + $0xb8] sm:$0xff]
      %v573 = vld [vmem:[%s543 + $0xc0] sm:$0xff]
      %v574 = vld [vmem:[%s543 + $0xc8] sm:$0xff]
      %v575 = vld [vmem:[%s543 + $0xd0] sm:$0xff]
      %v576 = vld [vmem:[%s543 + $0xd8] sm:$0xff]
      %v577 = vld [vmem:[%s6] sm:$0xff]
      %v578 = vld [vmem:[%s6 + $0x8] sm:$0x1]
      %v579 = vld [vmem:[%s7] sm:$0x1]
      %v580 = vld [vmem:[%s1] sm:$0xff]
      %v581 = vld [vmem:[%s1 + $0x8] sm:$0xff]
      %v582 = vld [vmem:[%s1 + $0x10] sm:$0x3f]
      %v583 = vld [vmem:[%s1 + $0x18] sm:$0x3f]
      %vm584 = vcmask 785408
      %v586 = vsel %vm584, %v581, 0
      %v589 = vsel %vm584, %v583, 0
      %591 = vmatprep.subr.mxu0 0.0
      %592 = vmatpush1.msra.mxu0 %v549
      %593 = vmatprep.subr.mxu0 0.0
      %594 = vmatpush1.msra.mxu0 %v550
      %595 = vmatprep.subr.mxu0 0.0
      %596 = vmatpush1.msra.mxu0 %v551
      %597 = vmatprep.subr.mxu0 0.0
      %598 = vmatpush1.msra.mxu0 %v552
      %599 = vmatprep.subr.mxu0 0.0
      %600 = vmatpush1.msra.mxu0 %v553
      %601 = vmatprep.subr.mxu0 0.0
      %602 = vmatpush1.msra.mxu0 %v554
      %603 = vmatprep.subr.mxu0 0.0
      %604 = vmatpush1.msra.mxu0 %v555
      %605 = vmatprep.subr.mxu0 0.0
      %606 = vmatpush1.msra.mxu0 %v556
      %607 = vmatprep.subr.mxu0 0.0
      %608 = vmatpush1.msra.mxu0 %v557
      %609 = vmatprep.subr.mxu0 0.0
      %610 = vmatpush1.msra.mxu0 %v558
      %611 = vmatprep.subr.mxu0 0.0
      %612 = vmatpush1.msra.mxu0 %v559
      %613 = vmatprep.subr.mxu0 0.0
      %614 = vmatpush1.msra.mxu0 %v560
      %615 = vmatprep.subr.mxu0 0.0
      %616 = vmatpush1.msra.mxu0 %v561
      %617 = vmatprep.subr.mxu0 0.0
      %618 = vmatpush1.msra.mxu0 %v562
      %619 = vmatprep.subr.mxu0 0.0
      %620 = vmatpush1.msra.mxu0 %v563
      %621 = vmatprep.subr.mxu0 0.0
      %622 = vmatpush1.msra.mxu0 %v564
      %623 = vmatprep.subr.mxu0 0.0
      %624 = vmatpush1.msra.mxu0 %v565
      %625 = vmatprep.subr.mxu0 0.0
      %626 = vmatpush1.msra.mxu0 %v566
      %627 = vmatprep.subr.mxu0 0.0
      %628 = vmatpush1.msra.mxu0 %v567
      %629 = vmatprep.subr.mxu0 0.0
      %630 = vmatpush1.msra.mxu0 %v568
      %631 = vmatprep.subr.mxu0 0.0
      %632 = vmatpush1.msra.mxu0 %v569
      %633 = vmatprep.subr.mxu0 0.0
      %634 = vmatpush1.msra.mxu0 %v570
      %635 = vmatprep.subr.mxu0 0.0
      %636 = vmatpush1.msra.mxu0 %v571
      %637 = vmatprep.subr.mxu0 0.0
      %638 = vmatpush1.msra.mxu0 %v572
      %639 = vmatprep.subr.mxu0 0.0
      %640 = vmatpush1.msra.mxu0 %v573
      %641 = vmatprep.subr.mxu0 0.0
      %642 = vmatpush1.msra.mxu0 %v574
      %643 = vmatprep.subr.mxu0 0.0
      %644 = vmatpush1.msra.mxu0 %v575
      %645 = vmatprep.subr.mxu0 0.0
      %646 = vmatpush1.msra.mxu0 %v576
      %647 = vmatprep.subr.mxu0 0.0
      %648 = vmatpush1.msra.mxu0 0.0
      %649 = vmatprep.subr.mxu0 0.0
      %650 = vmatpush1.msra.mxu0 0.0
      %651 = vmatprep.subr.mxu0 0.0
      %652 = vmatpush1.msra.mxu0 0.0
      %653 = vmatprep.subr.mxu0 0.0
      %654 = vmatpush1.msra.mxu0 0.0
      %655 = vmatprep.mubr.f32.mxu0 %v586
      %656 = vmatmul.mubr.f32.gmra.mrb[0].mxu0 %v580
      %v657 = vpop.f32.mrb[0].mxu0
      %v658 = vadd.f32 0.0, %v657
      %v659 = vpop.f32.mrb[0].mxu0
      %660 = vmatprep.mubr.f32.mxu0 %v589
      %661 = vmatmul.mubr.f32.gmra.mrb[0].mxu0 %v582
      %v662 = vpop.f32.mrb[0].mxu0
      %v663 = vadd.f32 0.0, %v662
      %v664 = vpop.f32.mrb[0].mxu0
      %665 = vdwg.mxu0
      %v666 = vmul.f32 %v658, 0.071428575
      %v667 = vmul.f32 %v663, 0.071428575
      %v668 = vld [vmem:[%s2] sm:$0xff]
      %v669 = vld [vmem:[%s2 + $0x8] sm:$0xff]
      %v670 = vld [vmem:[%s2 + $0x10] sm:$0x3f]
      %v671 = vld [vmem:[%s2 + $0x18] sm:$0x3f]
      %v673 = vsel %vm584, %v669, 0
      %v676 = vsel %vm584, %v671, 0
      %678 = vmatprep.subr.mxu0 0.0
      %679 = vmatpush1.msra.mxu0 %v549
      %680 = vmatprep.subr.mxu0 0.0
      %681 = vmatpush1.msra.mxu0 %v550
      %682 = vmatprep.subr.mxu0 0.0
      %683 = vmatpush1.msra.mxu0 %v551
      %684 = vmatprep.subr.mxu0 0.0
      %685 = vmatpush1.msra.mxu0 %v552
      %686 = vmatprep.subr.mxu0 0.0
      %687 = vmatpush1.msra.mxu0 %v553
      %688 = vmatprep.subr.mxu0 0.0
      %689 = vmatpush1.msra.mxu0 %v554
      %690 = vmatprep.subr.mxu0 0.0
      %691 = vmatpush1.msra.mxu0 %v555
      %692 = vmatprep.subr.mxu0 0.0
      %693 = vmatpush1.msra.mxu0 %v556
      %694 = vmatprep.subr.mxu0 0.0
      %695 = vmatpush1.msra.mxu0 %v557
      %696 = vmatprep.subr.mxu0 0.0
      %697 = vmatpush1.msra.mxu0 %v558
      %698 = vmatprep.subr.mxu0 0.0
      %699 = vmatpush1.msra.mxu0 %v559
      %700 = vmatprep.subr.mxu0 0.0
      %701 = vmatpush1.msra.mxu0 %v560
      %702 = vmatprep.subr.mxu0 0.0
      %703 = vmatpush1.msra.mxu0 %v561
      %704 = vmatprep.subr.mxu0 0.0
      %705 = vmatpush1.msra.mxu0 %v562
      %706 = vmatprep.subr.mxu0 0.0
      %707 = vmatpush1.msra.mxu0 %v563
      %708 = vmatprep.subr.mxu0 0.0
      %709 = vmatpush1.msra.mxu0 %v564
      %710 = vmatprep.subr.mxu0 0.0
      %711 = vmatpush1.msra.mxu0 %v565
      %712 = vmatprep.subr.mxu0 0.0
      %713 = vmatpush1.msra.mxu0 %v566
      %714 = vmatprep.subr.mxu0 0.0
      %715 = vmatpush1.msra.mxu0 %v567
      %716 = vmatprep.subr.mxu0 0.0
      %717 = vmatpush1.msra.mxu0 %v568
      %718 = vmatprep.subr.mxu0 0.0
      %719 = vmatpush1.msra.mxu0 %v569
      %720 = vmatprep.subr.mxu0 0.0
      %721 = vmatpush1.msra.mxu0 %v570
      %722 = vmatprep.subr.mxu0 0.0
      %723 = vmatpush1.msra.mxu0 %v571
      %724 = vmatprep.subr.mxu0 0.0
      %725 = vmatpush1.msra.mxu0 %v572
      %726 = vmatprep.subr.mxu0 0.0
      %727 = vmatpush1.msra.mxu0 %v573
      %728 = vmatprep.subr.mxu0 0.0
      %729 = vmatpush1.msra.mxu0 %v574
      %730 = vmatprep.subr.mxu0 0.0
      %731 = vmatpush1.msra.mxu0 %v575
      %732 = vmatprep.subr.mxu0 0.0
      %733 = vmatpush1.msra.mxu0 %v576
      %734 = vmatprep.subr.mxu0 0.0
      %735 = vmatpush1.msra.mxu0 0.0
      %736 = vmatprep.subr.mxu0 0.0
      %737 = vmatpush1.msra.mxu0 0.0
      %738 = vmatprep.subr.mxu0 0.0
      %739 = vmatpush1.msra.mxu0 0.0
      %740 = vmatprep.subr.mxu0 0.0
      %741 = vmatpush1.msra.mxu0 0.0
      %742 = vmatprep.mubr.f32.mxu0 %v673
      %743 = vmatmul.mubr.f32.gmra.mrb[0].mxu0 %v668
      %v744 = vpop.f32.mrb[0].mxu0
      %v745 = vadd.f32 0.0, %v744
      %v746 = vpop.f32.mrb[0].mxu0
      %747 = vmatprep.mubr.f32.mxu0 %v676
      %748 = vmatmul.mubr.f32.gmra.mrb[0].mxu0 %v670
      %v749 = vpop.f32.mrb[0].mxu0
      %v750 = vadd.f32 0.0, %v749
      %v751 = vpop.f32.mrb[0].mxu0
      %752 = vdwg.mxu0
      %v753 = vmul.f32 %v745, 0.071428575
      %v754 = vmul.f32 %v750, 0.071428575
      %vm757 = vcmask 1043456
      %v758 = vrot.slane %v666, 4
      %v759 = vrot.slane %v667, 4
      %v760 = vsel %vm757, %v758, %v759
      %v764 = vsel %vm757, 0.0, %v758
      %vm765 = vcmask 1041408
      %v766 = vsel %vm765, %v759, 0.0
      %v767 = vlaneseq
      %v768 = vshrl.u32 %v767, 7
      %v769 = vsub.s32 0, %v768
      %v770 = vrot.slane %v577, %v769
      %v771 = vmul.f32 %v764, %v770
      %v772 = vmul.f32 %v760, %v770
      %v773 = vadd.f32 %v771, 0.0
      %v774 = vadd.f32 %v772, 0.0
      %v775 = vlaneseq
      %v776 = vshrl.u32 %v775, 7
      %v777 = vsub.s32 1, %v776
      %v778 = vrot.slane %v577, %v777
      %v779 = vmul.f32 %v764, %v778
      %v780 = vmul.f32 %v760, %v778
      %vm783 = vcmask 1046528
      %v784 = vrot.slane %v779, 1
      %v785 = vrot.slane %v780, 1
      %v786 = vsel %vm783, %v784, %v785
      %v789 = vadd.f32 %v773, %v786
      %v790 = vadd.f32 %v774, %v785
      %v791 = vlaneseq
      %v792 = vshrl.u32 %v791, 7
      %v793 = vsub.s32 2, %v792
      %v794 = vrot.slane %v577, %v793
      %v795 = vmul.f32 %v764, %v794
      %v796 = vmul.f32 %v760, %v794
      %vm799 = vcmask 1045504
      %v800 = vrot.slane %v795, 2
      %v801 = vrot.slane %v796, 2
      %v802 = vsel %vm799, %v800, %v801
      %v805 = vadd.f32 %v789, %v802
      %v806 = vadd.f32 %v790, %v801
      %v807 = vlaneseq
      %v808 = vshrl.u32 %v807, 7
      %v809 = vsub.s32 3, %v808
      %v810 = vrot.slane %v577, %v809
      %v811 = vmul.f32 %v764, %v810
      %v812 = vmul.f32 %v760, %v810
      %v813 = vmul.f32 %v766, %v810
      %vm817 = vcmask 1044480
      %v818 = vrot.slane %v811, 3
      %v819 = vrot.slane %v812, 3
      %v820 = vsel %vm817, %v818, %v819
      %v821 = vrot.slane %v813, 3
      %v822 = vsel %vm817, %v819, %v821
      %v825 = vadd.f32 %v805, %v820
      %v826 = vadd.f32 %v806, %v822
      %v827 = vlaneseq
      %v828 = vshrl.u32 %v827, 7
      %v829 = vsub.s32 4, %v828
      %v830 = vrot.slane %v577, %v829
      %v831 = vmul.f32 %v764, %v830
      %v832 = vmul.f32 %v760, %v830
      %v833 = vmul.f32 %v766, %v830
      %v837 = vrot.slane %v831, 4
      %v838 = vrot.slane %v832, 4
      %v839 = vsel %vm757, %v837, %v838
      %v840 = vrot.slane %v833, 4
      %v841 = vsel %vm757, %v838, %v840
      %v844 = vadd.f32 %v825, %v839
      %v845 = vadd.f32 %v826, %v841
      %v846 = vlaneseq
      %v847 = vshrl.u32 %v846, 7
      %v848 = vsub.s32 5, %v847
      %v849 = vrot.slane %v577, %v848
      %v850 = vmul.f32 %v764, %v849
      %v851 = vmul.f32 %v760, %v849
      %v852 = vmul.f32 %v766, %v849
      %vm856 = vcmask 1042432
      %v857 = vrot.slane %v850, 5
      %v858 = vrot.slane %v851, 5
      %v859 = vsel %vm856, %v857, %v858
      %v860 = vrot.slane %v852, 5
      %v861 = vsel %vm856, %v858, %v860
      %v864 = vadd.f32 %v844, %v859
      %v865 = vadd.f32 %v845, %v861
      %v866 = vlaneseq
      %v867 = vshrl.u32 %v866, 7
      %v868 = vsub.s32 6, %v867
      %v869 = vrot.slane %v577, %v868
      %v870 = vmul.f32 %v764, %v869
      %v871 = vmul.f32 %v760, %v869
      %v872 = vmul.f32 %v766, %v869
      %v876 = vrot.slane %v870, 6
      %v877 = vrot.slane %v871, 6
      %v878 = vsel %vm765, %v876, %v877
      %v879 = vrot.slane %v872, 6
      %v880 = vsel %vm765, %v877, %v879
      %v883 = vadd.f32 %v864, %v878
      %v884 = vadd.f32 %v865, %v880
      %v885 = vlaneseq
      %v886 = vshrl.u32 %v885, 7
      %v887 = vsub.s32 7, %v886
      %v888 = vrot.slane %v577, %v887
      %v889 = vmul.f32 %v764, %v888
      %v890 = vmul.f32 %v760, %v888
      %v891 = vmul.f32 %v766, %v888
      %vm895 = vcmask 1040384
      %v896 = vrot.slane %v889, 7
      %v897 = vrot.slane %v890, 7
      %v898 = vsel %vm895, %v896, %v897
      %v899 = vrot.slane %v891, 7
      %v900 = vsel %vm895, %v897, %v899
      %v903 = vadd.f32 %v883, %v898
      %v904 = vadd.f32 %v884, %v900
      %v905 = vlaneseq
      %v906 = vshrl.u32 %v905, 7
      %v907 = vsub.s32 0, %v906
      %v908 = vrot.slane %v578, %v907
      %v909 = vmul.f32 %v760, %v908
      %v910 = vmul.f32 %v766, %v908
      %v911 = vadd.f32 %v903, %v909
      %v912 = vadd.f32 %v904, %v910
      %v914 = vlaneseq
      %v915 = vshrl.u32 %v914, 7
      %v916 = vsub.s32 0, %v915
      %v917 = vrot.slane %v579, %v916
      %v919 = vadd.f32 %v911, %v917
      %v920 = vadd.f32 %v912, %v917
      %v921 = vld [vmem:[%s8] sm:$0x1]
      %v922 = vld [vmem:[%s9] sm:$0x1]
      %vm923 = vcmask 15360
      %v924 = vsel %vm923, %v919, 0.0
      %vm925 = vcmask 13312
      %v926 = vsel %vm925, %v920, 0.0
      %v927 = vadd.f32 %v924, %v926
      %928 = vadd.xlane.f32.xlu0 %v927
      %v929 = vpop.xlane.xlu0 %928
      %v930 = vrot.slane %v929, 4
      %v931 = vadd.f32 %v929, %v930
      %v932 = vrot.slane %v931, 2
      %v933 = vadd.f32 %v931, %v932
      %v934 = vrot.slane %v933, 1
      %v935 = vadd.f32 %v933, %v934
      %s936 = vtos %v935
      %v937 = vstv %s936
      %v938 = vrcp.pop 28.0
      %v939 = vmul.f32 %v937, %v938
      %v940 = vsub.f32 %v919, %v939
      %v941 = vsub.f32 %v920, %v939
      %v942 = vmul.f32 %v940, %v940
      %v943 = vmul.f32 %v941, %v941
      %v944 = vsel %vm923, %v942, 0.0
      %v945 = vsel %vm925, %v943, 0.0
      %v946 = vadd.f32 %v944, %v945
      %947 = vadd.xlane.f32.xlu0 %v946
      %v948 = vpop.xlane.xlu0 %947
      %v949 = vrot.slane %v948, 4
      %v950 = vadd.f32 %v948, %v949
      %v951 = vrot.slane %v950, 2
      %v952 = vadd.f32 %v950, %v951
      %v953 = vrot.slane %v952, 1
      %v954 = vadd.f32 %v952, %v953
      %s955 = vtos %v954
      %v956 = vstv %s955
      %v957 = vmul.f32 %v956, %v938
      %960 = vrot.lane.b32.xlu0 %v919, 126
      %v961 = vpop.permute.xlu0 %960
      %962 = vrot.lane.b32.xlu0 %v920, 126
      %v963 = vpop.permute.xlu0 %962
      %v966 = vsel %vm923, %v961, 0.0
      %v967 = vsel %vm925, %v963, 0.0
      %v968 = vadd.f32 %v966, %v967
      %969 = vadd.xlane.f32.xlu0 %v968
      %v970 = vpop.xlane.xlu0 %969
      %v971 = vrot.slane %v970, 4
      %v972 = vadd.f32 %v970, %v971
      %v973 = vrot.slane %v972, 2
      %v974 = vadd.f32 %v972, %v973
      %v975 = vrot.slane %v974, 1
      %v976 = vadd.f32 %v974, %v975
      %s977 = vtos %v976
      %v978 = vstv %s977
      %v979 = vmul.f32 %v978, %v938
      %v980 = vsub.f32 %v919, %v979
      %v981 = vsub.f32 %v920, %v979
      %v982 = vmul.f32 %v980, %v980
      %v983 = vmul.f32 %v981, %v981
      %986 = vrot.lane.b32.xlu0 %v982, 126
      %v987 = vpop.permute.xlu0 %986
      %988 = vrot.lane.b32.xlu0 %v983, 126
      %v989 = vpop.permute.xlu0 %988
      %v992 = vsel %vm923, %v987, 0.0
      %v993 = vsel %vm925, %v989, 0.0
      %v994 = vadd.f32 %v992, %v993
      %995 = vadd.xlane.f32.xlu0 %v994
      %v996 = vpop.xlane.xlu0 %995
      %v997 = vrot.slane %v996, 4
      %v998 = vadd.f32 %v996, %v997
      %v999 = vrot.slane %v998, 2
      %v1000 = vadd.f32 %v998, %v999
      %v1001 = vrot.slane %v1000, 1
      %v1002 = vadd.f32 %v1000, %v1001
      %s1003 = vtos %v1002
      %v1004 = vstv %s1003
      %v1005 = vmul.f32 %v1004, %v938
      %1006 = vrot.lane.b32.xlu0 %v919, 124
      %v1007 = vpop.permute.xlu0 %1006
      %1008 = vrot.lane.b32.xlu0 %v920, 124
      %v1009 = vpop.permute.xlu0 %1008
      %v1012 = vsel %vm923, %v1007, 0.0
      %v1013 = vsel %vm925, %v1009, 0.0
      %v1014 = vadd.f32 %v1012, %v1013
      %1015 = vadd.xlane.f32.xlu0 %v1014
      %v1016 = vpop.xlane.xlu0 %1015
      %v1017 = vrot.slane %v1016, 4
      %v1018 = vadd.f32 %v1016, %v1017
      %v1019 = vrot.slane %v1018, 2
      %v1020 = vadd.f32 %v1018, %v1019
      %v1021 = vrot.slane %v1020, 1
      %v1022 = vadd.f32 %v1020, %v1021
      %s1023 = vtos %v1022
      %v1024 = vstv %s1023
      %v1025 = vmul.f32 %v1024, %v938
      %v1026 = vsub.f32 %v919, %v1025
      %v1027 = vsub.f32 %v920, %v1025
      %v1028 = vmul.f32 %v1026, %v1026
      %v1029 = vmul.f32 %v1027, %v1027
      %1032 = vrot.lane.b32.xlu0 %v1028, 124
      %v1033 = vpop.permute.xlu0 %1032
      %1034 = vrot.lane.b32.xlu0 %v1029, 124
      %v1035 = vpop.permute.xlu0 %1034
      %v1038 = vsel %vm923, %v1033, 0.0
      %v1039 = vsel %vm925, %v1035, 0.0
      %v1040 = vadd.f32 %v1038, %v1039
      %1041 = vadd.xlane.f32.xlu0 %v1040
      %v1042 = vpop.xlane.xlu0 %1041
      %v1043 = vrot.slane %v1042, 4
      %v1044 = vadd.f32 %v1042, %v1043
      %v1045 = vrot.slane %v1044, 2
      %v1046 = vadd.f32 %v1044, %v1045
      %v1047 = vrot.slane %v1046, 1
      %v1048 = vadd.f32 %v1046, %v1047
      %s1049 = vtos %v1048
      %v1050 = vstv %s1049
      %v1051 = vmul.f32 %v1050, %v938
      %1052 = vrot.lane.b32.xlu0 %v919, 122
      %v1053 = vpop.permute.xlu0 %1052
      %1054 = vrot.lane.b32.xlu0 %v920, 122
      %v1055 = vpop.permute.xlu0 %1054
      %v1058 = vsel %vm923, %v1053, 0.0
      %v1059 = vsel %vm925, %v1055, 0.0
      %v1060 = vadd.f32 %v1058, %v1059
      %1061 = vadd.xlane.f32.xlu0 %v1060
      %v1062 = vpop.xlane.xlu0 %1061
      %v1063 = vrot.slane %v1062, 4
      %v1064 = vadd.f32 %v1062, %v1063
      %v1065 = vrot.slane %v1064, 2
      %v1066 = vadd.f32 %v1064, %v1065
      %v1067 = vrot.slane %v1066, 1
      %v1068 = vadd.f32 %v1066, %v1067
      %s1069 = vtos %v1068
      %v1070 = vstv %s1069
      %v1071 = vmul.f32 %v1070, %v938
      %v1072 = vsub.f32 %v919, %v1071
      %v1073 = vsub.f32 %v920, %v1071
      %v1074 = vmul.f32 %v1072, %v1072
      %v1075 = vmul.f32 %v1073, %v1073
      %1078 = vrot.lane.b32.xlu0 %v1074, 122
      %v1079 = vpop.permute.xlu0 %1078
      %1080 = vrot.lane.b32.xlu0 %v1075, 122
      %v1081 = vpop.permute.xlu0 %1080
      %v1084 = vsel %vm923, %v1079, 0.0
      %v1085 = vsel %vm925, %v1081, 0.0
      %v1086 = vadd.f32 %v1084, %v1085
      %1087 = vadd.xlane.f32.xlu0 %v1086
      %v1088 = vpop.xlane.xlu0 %1087
      %v1089 = vrot.slane %v1088, 4
      %v1090 = vadd.f32 %v1088, %v1089
      %v1091 = vrot.slane %v1090, 2
      %v1092 = vadd.f32 %v1090, %v1091
      %v1093 = vrot.slane %v1092, 1
      %v1094 = vadd.f32 %v1092, %v1093
      %s1095 = vtos %v1094
      %v1096 = vstv %s1095
      %v1097 = vmul.f32 %v1096, %v938
      %v1098 = vsel %vm923, %v939, %v979
      %vm1099 = vcmask 31744
      %v1100 = vsel %vm1099, %v1098, %v1025
      %vm1101 = vcmask 48128
      %v1102 = vsel %vm1101, %v1100, %v1071
      %v1103 = vsel %vm923, %v957, %v1005
      %v1104 = vsel %vm1099, %v1103, %v1051
      %v1105 = vsel %vm1101, %v1104, %v1097
      %v1106 = vlaneseq
      %v1107 = vshrl.u32 %v1106, 7
      %v1108 = vsub.s32 0, %v1107
      %v1109 = vrot.slane %v1102, %v1108
      %v1110 = vsub.f32 %v919, %v1109
      %v1111 = vsub.f32 %v920, %v1109
      %v1112 = vadd.f32 %v1105, 1e-05
      %v1113 = vrsqrt.pop %v1112
      %v1114 = vlaneseq
      %v1115 = vshrl.u32 %v1114, 7
      %v1116 = vsub.s32 0, %v1115
      %v1117 = vrot.slane %v1113, %v1116
      %v1118 = vmul.f32 %v1110, %v1117
      %v1119 = vmul.f32 %v1111, %v1117
      %v1121 = vlaneseq
      %v1122 = vshrl.u32 %v1121, 7
      %v1123 = vsub.s32 0, %v1122
      %v1124 = vrot.slane %v921, %v1123
      %v1126 = vmul.f32 %v1118, %v1124
      %v1127 = vmul.f32 %v1119, %v1124
      %v1129 = vlaneseq
      %v1130 = vshrl.u32 %v1129, 7
      %v1131 = vsub.s32 0, %v1130
      %v1132 = vrot.slane %v922, %v1131
      %v1134 = vadd.f32 %v1126, %v1132
      %v1135 = vadd.f32 %v1127, %v1132
      %v1136 = vxor.u32 %v1134, 2147483648
      %v1137 = vxor.u32 %v1135, 2147483648
      %v1138 = vmul.f32 %v1136, 1.442695
      %v1139 = vpow.pop %v1138
      %v1140 = vmul.f32 %v1137, 1.442695
      %v1141 = vpow.pop %v1140
      %v1142 = vadd.f32 %v1139, 1.0
      %v1143 = vadd.f32 %v1141, 1.0
      %v1144 = vrcp.pop %v1142
      %v1145 = vmul.f32 1.0, %v1144
      %v1146 = vrcp.pop %v1143
      %v1147 = vmul.f32 1.0, %v1146
      %v1150 = vrot.slane %v753, 4
      %v1151 = vrot.slane %v754, 4
      %v1152 = vsel %vm757, %v1150, %v1151
      %v1156 = vsel %vm757, 0.0, %v1150
      %v1157 = vsel %vm765, %v1151, 0.0
      %v1158 = vmul.f32 %v1156, %v770
      %v1159 = vmul.f32 %v1152, %v770
      %v1160 = vadd.f32 %v1158, 0.0
      %v1161 = vadd.f32 %v1159, 0.0
      %v1162 = vmul.f32 %v1156, %v778
      %v1163 = vmul.f32 %v1152, %v778
      %v1166 = vrot.slane %v1162, 1
      %v1167 = vrot.slane %v1163, 1
      %v1168 = vsel %vm783, %v1166, %v1167
      %v1171 = vadd.f32 %v1160, %v1168
      %v1172 = vadd.f32 %v1161, %v1167
      %v1173 = vmul.f32 %v1156, %v794
      %v1174 = vmul.f32 %v1152, %v794
      %v1177 = vrot.slane %v1173, 2
      %v1178 = vrot.slane %v1174, 2
      %v1179 = vsel %vm799, %v1177, %v1178
      %v1182 = vadd.f32 %v1171, %v1179
      %v1183 = vadd.f32 %v1172, %v1178
      %v1184 = vmul.f32 %v1156, %v810
      %v1185 = vmul.f32 %v1152, %v810
      %v1186 = vmul.f32 %v1157, %v810
      %v1190 = vrot.slane %v1184, 3
      %v1191 = vrot.slane %v1185, 3
      %v1192 = vsel %vm817, %v1190, %v1191
      %v1193 = vrot.slane %v1186, 3
      %v1194 = vsel %vm817, %v1191, %v1193
      %v1197 = vadd.f32 %v1182, %v1192
      %v1198 = vadd.f32 %v1183, %v1194
      %v1199 = vmul.f32 %v1156, %v830
      %v1200 = vmul.f32 %v1152, %v830
      %v1201 = vmul.f32 %v1157, %v830
      %v1205 = vrot.slane %v1199, 4
      %v1206 = vrot.slane %v1200, 4
      %v1207 = vsel %vm757, %v1205, %v1206
      %v1208 = vrot.slane %v1201, 4
      %v1209 = vsel %vm757, %v1206, %v1208
      %v1212 = vadd.f32 %v1197, %v1207
      %v1213 = vadd.f32 %v1198, %v1209
      %v1214 = vmul.f32 %v1156, %v849
      %v1215 = vmul.f32 %v1152, %v849
      %v1216 = vmul.f32 %v1157, %v849
      %v1220 = vrot.slane %v1214, 5
      %v1221 = vrot.slane %v1215, 5
      %v1222 = vsel %vm856, %v1220, %v1221
      %v1223 = vrot.slane %v1216, 5
      %v1224 = vsel %vm856, %v1221, %v1223
      %v1227 = vadd.f32 %v1212, %v1222
      %v1228 = vadd.f32 %v1213, %v1224
      %v1229 = vmul.f32 %v1156, %v869
      %v1230 = vmul.f32 %v1152, %v869
      %v1231 = vmul.f32 %v1157, %v869
      %v1235 = vrot.slane %v1229, 6
      %v1236 = vrot.slane %v1230, 6
      %v1237 = vsel %vm765, %v1235, %v1236
      %v1238 = vrot.slane %v1231, 6
      %v1239 = vsel %vm765, %v1236, %v1238
      %v1242 = vadd.f32 %v1227, %v1237
      %v1243 = vadd.f32 %v1228, %v1239
      %v1244 = vmul.f32 %v1156, %v888
      %v1245 = vmul.f32 %v1152, %v888
      %v1246 = vmul.f32 %v1157, %v888
      %v1250 = vrot.slane %v1244, 7
      %v1251 = vrot.slane %v1245, 7
      %v1252 = vsel %vm895, %v1250, %v1251
      %v1253 = vrot.slane %v1246, 7
      %v1254 = vsel %vm895, %v1251, %v1253
      %v1257 = vadd.f32 %v1242, %v1252
      %v1258 = vadd.f32 %v1243, %v1254
      %v1259 = vmul.f32 %v1152, %v908
      %v1260 = vmul.f32 %v1157, %v908
      %v1261 = vadd.f32 %v1257, %v1259
      %v1262 = vadd.f32 %v1258, %v1260
      %v1263 = vadd.f32 %v1261, %v917
      %v1264 = vadd.f32 %v1262, %v917
      %v1265 = vld [vmem:[%s10] sm:$0x1]
      %v1266 = vld [vmem:[%s11] sm:$0x1]
      %v1267 = vsel %vm923, %v1263, 0.0
      %v1268 = vsel %vm925, %v1264, 0.0
      %v1269 = vadd.f32 %v1267, %v1268
      %1270 = vadd.xlane.f32.xlu0 %v1269
      %v1271 = vpop.xlane.xlu0 %1270
      %v1272 = vrot.slane %v1271, 4
      %v1273 = vadd.f32 %v1271, %v1272
      %v1274 = vrot.slane %v1273, 2
      %v1275 = vadd.f32 %v1273, %v1274
      %v1276 = vrot.slane %v1275, 1
      %v1277 = vadd.f32 %v1275, %v1276
      %s1278 = vtos %v1277
      %v1279 = vstv %s1278
      %v1280 = vmul.f32 %v1279, %v938
      %v1281 = vsub.f32 %v1263, %v1280
      %v1282 = vsub.f32 %v1264, %v1280
      %v1283 = vmul.f32 %v1281, %v1281
      %v1284 = vmul.f32 %v1282, %v1282
      %v1285 = vsel %vm923, %v1283, 0.0
      %v1286 = vsel %vm925, %v1284, 0.0
      %v1287 = vadd.f32 %v1285, %v1286
      %1288 = vadd.xlane.f32.xlu0 %v1287
      %v1289 = vpop.xlane.xlu0 %1288
      %v1290 = vrot.slane %v1289, 4
      %v1291 = vadd.f32 %v1289, %v1290
      %v1292 = vrot.slane %v1291, 2
      %v1293 = vadd.f32 %v1291, %v1292
      %v1294 = vrot.slane %v1293, 1
      %v1295 = vadd.f32 %v1293, %v1294
      %s1296 = vtos %v1295
      %v1297 = vstv %s1296
      %v1298 = vmul.f32 %v1297, %v938
      %1301 = vrot.lane.b32.xlu0 %v1263, 126
      %v1302 = vpop.permute.xlu0 %1301
      %1303 = vrot.lane.b32.xlu0 %v1264, 126
      %v1304 = vpop.permute.xlu0 %1303
      %v1307 = vsel %vm923, %v1302, 0.0
      %v1308 = vsel %vm925, %v1304, 0.0
      %v1309 = vadd.f32 %v1307, %v1308
      %1310 = vadd.xlane.f32.xlu0 %v1309
      %v1311 = vpop.xlane.xlu0 %1310
      %v1312 = vrot.slane %v1311, 4
      %v1313 = vadd.f32 %v1311, %v1312
      %v1314 = vrot.slane %v1313, 2
      %v1315 = vadd.f32 %v1313, %v1314
      %v1316 = vrot.slane %v1315, 1
      %v1317 = vadd.f32 %v1315, %v1316
      %s1318 = vtos %v1317
      %v1319 = vstv %s1318
      %v1320 = vmul.f32 %v1319, %v938
      %v1321 = vsub.f32 %v1263, %v1320
      %v1322 = vsub.f32 %v1264, %v1320
      %v1323 = vmul.f32 %v1321, %v1321
      %v1324 = vmul.f32 %v1322, %v1322
      %1327 = vrot.lane.b32.xlu0 %v1323, 126
      %v1328 = vpop.permute.xlu0 %1327
      %1329 = vrot.lane.b32.xlu0 %v1324, 126
      %v1330 = vpop.permute.xlu0 %1329
      %v1333 = vsel %vm923, %v1328, 0.0
      %v1334 = vsel %vm925, %v1330, 0.0
      %v1335 = vadd.f32 %v1333, %v1334
      %1336 = vadd.xlane.f32.xlu0 %v1335
      %v1337 = vpop.xlane.xlu0 %1336
      %v1338 = vrot.slane %v1337, 4
      %v1339 = vadd.f32 %v1337, %v1338
      %v1340 = vrot.slane %v1339, 2
      %v1341 = vadd.f32 %v1339, %v1340
      %v1342 = vrot.slane %v1341, 1
      %v1343 = vadd.f32 %v1341, %v1342
      %s1344 = vtos %v1343
      %v1345 = vstv %s1344
      %v1346 = vmul.f32 %v1345, %v938
      %1347 = vrot.lane.b32.xlu0 %v1263, 124
      %v1348 = vpop.permute.xlu0 %1347
      %1349 = vrot.lane.b32.xlu0 %v1264, 124
      %v1350 = vpop.permute.xlu0 %1349
      %v1353 = vsel %vm923, %v1348, 0.0
      %v1354 = vsel %vm925, %v1350, 0.0
      %v1355 = vadd.f32 %v1353, %v1354
      %1356 = vadd.xlane.f32.xlu0 %v1355
      %v1357 = vpop.xlane.xlu0 %1356
      %v1358 = vrot.slane %v1357, 4
      %v1359 = vadd.f32 %v1357, %v1358
      %v1360 = vrot.slane %v1359, 2
      %v1361 = vadd.f32 %v1359, %v1360
      %v1362 = vrot.slane %v1361, 1
      %v1363 = vadd.f32 %v1361, %v1362
      %s1364 = vtos %v1363
      %v1365 = vstv %s1364
      %v1366 = vmul.f32 %v1365, %v938
      %v1367 = vsub.f32 %v1263, %v1366
      %v1368 = vsub.f32 %v1264, %v1366
      %v1369 = vmul.f32 %v1367, %v1367
      %v1370 = vmul.f32 %v1368, %v1368
      %1373 = vrot.lane.b32.xlu0 %v1369, 124
      %v1374 = vpop.permute.xlu0 %1373
      %1375 = vrot.lane.b32.xlu0 %v1370, 124
      %v1376 = vpop.permute.xlu0 %1375
      %v1379 = vsel %vm923, %v1374, 0.0
      %v1380 = vsel %vm925, %v1376, 0.0
      %v1381 = vadd.f32 %v1379, %v1380
      %1382 = vadd.xlane.f32.xlu0 %v1381
      %v1383 = vpop.xlane.xlu0 %1382
      %v1384 = vrot.slane %v1383, 4
      %v1385 = vadd.f32 %v1383, %v1384
      %v1386 = vrot.slane %v1385, 2
      %v1387 = vadd.f32 %v1385, %v1386
      %v1388 = vrot.slane %v1387, 1
      %v1389 = vadd.f32 %v1387, %v1388
      %s1390 = vtos %v1389
      %v1391 = vstv %s1390
      %v1392 = vmul.f32 %v1391, %v938
      %1393 = vrot.lane.b32.xlu0 %v1263, 122
      %v1394 = vpop.permute.xlu0 %1393
      %1395 = vrot.lane.b32.xlu0 %v1264, 122
      %v1396 = vpop.permute.xlu0 %1395
      %v1399 = vsel %vm923, %v1394, 0.0
      %v1400 = vsel %vm925, %v1396, 0.0
      %v1401 = vadd.f32 %v1399, %v1400
      %1402 = vadd.xlane.f32.xlu0 %v1401
      %v1403 = vpop.xlane.xlu0 %1402
      %v1404 = vrot.slane %v1403, 4
      %v1405 = vadd.f32 %v1403, %v1404
      %v1406 = vrot.slane %v1405, 2
      %v1407 = vadd.f32 %v1405, %v1406
      %v1408 = vrot.slane %v1407, 1
      %v1409 = vadd.f32 %v1407, %v1408
      %s1410 = vtos %v1409
      %v1411 = vstv %s1410
      %v1412 = vmul.f32 %v1411, %v938
      %v1413 = vsub.f32 %v1263, %v1412
      %v1414 = vsub.f32 %v1264, %v1412
      %v1415 = vmul.f32 %v1413, %v1413
      %v1416 = vmul.f32 %v1414, %v1414
      %1419 = vrot.lane.b32.xlu0 %v1415, 122
      %v1420 = vpop.permute.xlu0 %1419
      %1421 = vrot.lane.b32.xlu0 %v1416, 122
      %v1422 = vpop.permute.xlu0 %1421
      %v1425 = vsel %vm923, %v1420, 0.0
      %v1426 = vsel %vm925, %v1422, 0.0
      %v1427 = vadd.f32 %v1425, %v1426
      %1428 = vadd.xlane.f32.xlu0 %v1427
      %v1429 = vpop.xlane.xlu0 %1428
      %v1430 = vrot.slane %v1429, 4
      %v1431 = vadd.f32 %v1429, %v1430
      %v1432 = vrot.slane %v1431, 2
      %v1433 = vadd.f32 %v1431, %v1432
      %v1434 = vrot.slane %v1433, 1
      %v1435 = vadd.f32 %v1433, %v1434
      %s1436 = vtos %v1435
      %v1437 = vstv %s1436
      %v1438 = vmul.f32 %v1437, %v938
      %v1439 = vsel %vm923, %v1280, %v1320
      %v1440 = vsel %vm1099, %v1439, %v1366
      %v1441 = vsel %vm1101, %v1440, %v1412
      %v1442 = vsel %vm923, %v1298, %v1346
      %v1443 = vsel %vm1099, %v1442, %v1392
      %v1444 = vsel %vm1101, %v1443, %v1438
      %v1445 = vlaneseq
      %v1446 = vshrl.u32 %v1445, 7
      %v1447 = vsub.s32 0, %v1446
      %v1448 = vrot.slane %v1441, %v1447
      %v1449 = vsub.f32 %v1263, %v1448
      %v1450 = vsub.f32 %v1264, %v1448
      %v1451 = vadd.f32 %v1444, 1e-05
      %v1452 = vrsqrt.pop %v1451
      %v1453 = vlaneseq
      %v1454 = vshrl.u32 %v1453, 7
      %v1455 = vsub.s32 0, %v1454
      %v1456 = vrot.slane %v1452, %v1455
      %v1457 = vmul.f32 %v1449, %v1456
      %v1458 = vmul.f32 %v1450, %v1456
      %v1460 = vlaneseq
      %v1461 = vshrl.u32 %v1460, 7
      %v1462 = vsub.s32 0, %v1461
      %v1463 = vrot.slane %v1265, %v1462
      %v1465 = vmul.f32 %v1457, %v1463
      %v1466 = vmul.f32 %v1458, %v1463
      %v1468 = vlaneseq
      %v1469 = vshrl.u32 %v1468, 7
      %v1470 = vsub.s32 0, %v1469
      %v1471 = vrot.slane %v1266, %v1470
      %v1473 = vadd.f32 %v1465, %v1471
      %v1474 = vadd.f32 %v1466, %v1471
      %v1475 = vxor.u32 %v1473, 2147483648
      %v1476 = vxor.u32 %v1474, 2147483648
      %v1477 = vmul.f32 %v1475, 1.442695
      %v1478 = vpow.pop %v1477
      %v1479 = vmul.f32 %v1476, 1.442695
      %v1480 = vpow.pop %v1479
      %v1481 = vadd.f32 %v1478, 1.0
      %v1482 = vadd.f32 %v1480, 1.0
      %v1483 = vrcp.pop %v1481
      %v1484 = vmul.f32 1.0, %v1483
      %v1485 = vrcp.pop %v1482
      %v1486 = vmul.f32 1.0, %v1485
      %v1487 = vld [vmem:[%s3] sm:$0xff]
      %v1488 = vld [vmem:[%s3 + $0x8] sm:$0xff]
      %v1489 = vld [vmem:[%s3 + $0x10] sm:$0xff]
      %v1490 = vld [vmem:[%s3 + $0x18] sm:$0xff]
      %v1491 = vld [vmem:[%s3 + $0x20] sm:$0xff]
      %v1492 = vld [vmem:[%s3 + $0x28] sm:$0xff]
      %v1493 = vld [vmem:[%s3 + $0x30] sm:$0xff]
      %v1494 = vld [vmem:[%s3 + $0x38] sm:$0xff]
      %v1495 = vld [vmem:[%s3 + $0x40] sm:$0xff]
      %v1496 = vld [vmem:[%s3 + $0x48] sm:$0xff]
      %v1497 = vld [vmem:[%s3 + $0x50] sm:$0xff]
      %v1498 = vld [vmem:[%s3 + $0x58] sm:$0xff]
      %v1499 = vld [vmem:[%s3 + $0x60] sm:$0xff]
      %v1500 = vld [vmem:[%s3 + $0x68] sm:$0xff]
      %v1501 = vld [vmem:[%s3 + $0x70] sm:$0xff]
      %v1502 = vld [vmem:[%s3 + $0x78] sm:$0xff]
      %v1503 = vld [vmem:[%s3 + $0x80] sm:$0xff]
      %v1504 = vld [vmem:[%s3 + $0x88] sm:$0xff]
      %v1505 = vld [vmem:[%s3 + $0x90] sm:$0xff]
      %v1506 = vld [vmem:[%s3 + $0x98] sm:$0xff]
      %v1507 = vld [vmem:[%s3 + $0xa0] sm:$0xff]
      %v1508 = vld [vmem:[%s3 + $0xa8] sm:$0xff]
      %v1509 = vld [vmem:[%s3 + $0xb0] sm:$0xff]
      %v1510 = vld [vmem:[%s3 + $0xb8] sm:$0xff]
      %v1511 = vld [vmem:[%s3 + $0xc0] sm:$0xff]
      %v1512 = vld [vmem:[%s3 + $0xc8] sm:$0xff]
      %v1513 = vld [vmem:[%s3 + $0xd0] sm:$0xff]
      %v1514 = vld [vmem:[%s3 + $0xd8] sm:$0xff]
      %vm1515 = vcmask 113664
      %v1517 = vsel %vm1515, %v1487, 0
      %v1520 = vsel %vm1515, %v1488, 0
      %v1523 = vsel %vm1515, %v1489, 0
      %v1526 = vsel %vm1515, %v1490, 0
      %v1529 = vsel %vm1515, %v1491, 0
      %v1532 = vsel %vm1515, %v1492, 0
      %v1535 = vsel %vm1515, %v1493, 0
      %v1538 = vsel %vm1515, %v1494, 0
      %v1541 = vsel %vm1515, %v1495, 0
      %v1544 = vsel %vm1515, %v1496, 0
      %v1547 = vsel %vm1515, %v1497, 0
      %v1550 = vsel %vm1515, %v1498, 0
      %v1553 = vsel %vm1515, %v1499, 0
      %v1556 = vsel %vm1515, %v1500, 0
      %v1559 = vsel %vm1515, %v1501, 0
      %v1562 = vsel %vm1515, %v1502, 0
      %v1565 = vsel %vm1515, %v1503, 0
      %v1568 = vsel %vm1515, %v1504, 0
      %v1571 = vsel %vm1515, %v1505, 0
      %v1574 = vsel %vm1515, %v1506, 0
      %v1577 = vsel %vm1515, %v1507, 0
      %v1580 = vsel %vm1515, %v1508, 0
      %v1583 = vsel %vm1515, %v1509, 0
      %v1586 = vsel %vm1515, %v1510, 0
      %v1589 = vsel %vm1515, %v1511, 0
      %v1592 = vsel %vm1515, %v1512, 0
      %v1595 = vsel %vm1515, %v1513, 0
      %v1598 = vsel %vm1515, %v1514, 0
      %v1601 = vsel %vm799, %v1147, 0
      %1603 = vmatprep.subr.mxu0 0.0
      %1604 = vmatpush1.msra.mxu0 %v1145
      %1605 = vmatprep.subr.mxu0 0.0
      %1606 = vmatpush1.msra.mxu0 %v1601
      %1607 = vmatprep.subr.mxu0 0.0
      %1608 = vmatpush1.msra.mxu0 0.0
      %1609 = vmatprep.subr.mxu0 0.0
      %1610 = vmatpush1.msra.mxu0 0.0
      %1611 = vmatprep.subr.mxu0 0.0
      %1612 = vmatpush1.msra.mxu0 0.0
      %1613 = vmatprep.subr.mxu0 0.0
      %1614 = vmatpush1.msra.mxu0 0.0
      %1615 = vmatprep.subr.mxu0 0.0
      %1616 = vmatpush1.msra.mxu0 0.0
      %1617 = vmatprep.subr.mxu0 0.0
      %1618 = vmatpush1.msra.mxu0 0.0
      %1619 = vmatprep.subr.mxu0 0.0
      %1620 = vmatpush1.msra.mxu0 0.0
      %1621 = vmatprep.subr.mxu0 0.0
      %1622 = vmatpush1.msra.mxu0 0.0
      %1623 = vmatprep.subr.mxu0 0.0
      %1624 = vmatpush1.msra.mxu0 0.0
      %1625 = vmatprep.subr.mxu0 0.0
      %1626 = vmatpush1.msra.mxu0 0.0
      %1627 = vmatprep.subr.mxu0 0.0
      %1628 = vmatpush1.msra.mxu0 0.0
      %1629 = vmatprep.subr.mxu0 0.0
      %1630 = vmatpush1.msra.mxu0 0.0
      %1631 = vmatprep.subr.mxu0 0.0
      %1632 = vmatpush1.msra.mxu0 0.0
      %1633 = vmatprep.subr.mxu0 0.0
      %1634 = vmatpush1.msra.mxu0 0.0
      %1635 = vmatprep.subr.mxu0 0.0
      %1636 = vmatpush1.msra.mxu0 0.0
      %1637 = vmatprep.subr.mxu0 0.0
      %1638 = vmatpush1.msra.mxu0 0.0
      %1639 = vmatprep.subr.mxu0 0.0
      %1640 = vmatpush1.msra.mxu0 0.0
      %1641 = vmatprep.subr.mxu0 0.0
      %1642 = vmatpush1.msra.mxu0 0.0
      %1643 = vmatprep.subr.mxu0 0.0
      %1644 = vmatpush1.msra.mxu0 0.0
      %1645 = vmatprep.subr.mxu0 0.0
      %1646 = vmatpush1.msra.mxu0 0.0
      %1647 = vmatprep.subr.mxu0 0.0
      %1648 = vmatpush1.msra.mxu0 0.0
      %1649 = vmatprep.subr.mxu0 0.0
      %1650 = vmatpush1.msra.mxu0 0.0
      %1651 = vmatprep.subr.mxu0 0.0
      %1652 = vmatpush1.msra.mxu0 0.0
      %1653 = vmatprep.subr.mxu0 0.0
      %1654 = vmatpush1.msra.mxu0 0.0
      %1655 = vmatprep.subr.mxu0 0.0
      %1656 = vmatpush1.msra.mxu0 0.0
      %1657 = vmatprep.subr.mxu0 0.0
      %1658 = vmatpush1.msra.mxu0 0.0
      %1659 = vmatprep.subr.mxu0 0.0
      %1660 = vmatpush1.msra.mxu0 0.0
      %1661 = vmatprep.subr.mxu0 0.0
      %1662 = vmatpush1.msra.mxu0 0.0
      %1663 = vmatprep.subr.mxu0 0.0
      %1664 = vmatpush1.msra.mxu0 0.0
      %1665 = vmatprep.subr.mxu0 0.0
      %1666 = vmatpush1.msra.mxu0 0.0
      %1667 = vmatprep.mubr.f32.mxu0 0.0
      %1668 = vmatmul.mubr.f32.gmra.mrb[0].mxu0 %v1517
      %v1669 = vpop.f32.mrb[0].mxu0
      %v1670 = vadd.f32 0.0, %v1669
      %v1671 = vpop.f32.mrb[0].mxu0
      %1672 = vmatprep.mubr.f32.mxu0 0.0
      %1673 = vmatmul.mubr.f32.gmra.mrb[0].mxu0 %v1520
      %v1674 = vpop.f32.mrb[0].mxu0
      %v1675 = vadd.f32 0.0, %v1674
      %v1676 = vpop.f32.mrb[0].mxu0
      %1677 = vmatprep.mubr.f32.mxu0 0.0
      %1678 = vmatmul.mubr.f32.gmra.mrb[0].mxu0 %v1523
      %v1679 = vpop.f32.mrb[0].mxu0
      %v1680 = vadd.f32 0.0, %v1679
      %v1681 = vpop.f32.mrb[0].mxu0
      %1682 = vmatprep.mubr.f32.mxu0 0.0
      %1683 = vmatmul.mubr.f32.gmra.mrb[0].mxu0 %v1526
      %v1684 = vpop.f32.mrb[0].mxu0
      %v1685 = vadd.f32 0.0, %v1684
      %v1686 = vpop.f32.mrb[0].mxu0
      %1687 = vmatprep.mubr.f32.mxu0 0.0
      %1688 = vmatmul.mubr.f32.gmra.mrb[0].mxu0 %v1529
      %v1689 = vpop.f32.mrb[0].mxu0
      %v1690 = vadd.f32 0.0, %v1689
      %v1691 = vpop.f32.mrb[0].mxu0
      %1692 = vmatprep.mubr.f32.mxu0 0.0
      %1693 = vmatmul.mubr.f32.gmra.mrb[0].mxu0 %v1532
      %v1694 = vpop.f32.mrb[0].mxu0
      %v1695 = vadd.f32 0.0, %v1694
      %v1696 = vpop.f32.mrb[0].mxu0
      %1697 = vmatprep.mubr.f32.mxu0 0.0
      %1698 = vmatmul.mubr.f32.gmra.mrb[0].mxu0 %v1535
      %v1699 = vpop.f32.mrb[0].mxu0
      %v1700 = vadd.f32 0.0, %v1699
      %v1701 = vpop.f32.mrb[0].mxu0
      %1702 = vmatprep.mubr.f32.mxu0 0.0
      %1703 = vmatmul.mubr.f32.gmra.mrb[0].mxu0 %v1538
      %v1704 = vpop.f32.mrb[0].mxu0
      %v1705 = vadd.f32 0.0, %v1704
      %v1706 = vpop.f32.mrb[0].mxu0
      %1707 = vmatprep.mubr.f32.mxu0 0.0
      %1708 = vmatmul.mubr.f32.gmra.mrb[0].mxu0 %v1541
      %v1709 = vpop.f32.mrb[0].mxu0
      %v1710 = vadd.f32 0.0, %v1709
      %v1711 = vpop.f32.mrb[0].mxu0
      %1712 = vmatprep.mubr.f32.mxu0 0.0
      %1713 = vmatmul.mubr.f32.gmra.mrb[0].mxu0 %v1544
      %v1714 = vpop.f32.mrb[0].mxu0
      %v1715 = vadd.f32 0.0, %v1714
      %v1716 = vpop.f32.mrb[0].mxu0
      %1717 = vmatprep.mubr.f32.mxu0 0.0
      %1718 = vmatmul.mubr.f32.gmra.mrb[0].mxu0 %v1547
      %v1719 = vpop.f32.mrb[0].mxu0
      %v1720 = vadd.f32 0.0, %v1719
      %v1721 = vpop.f32.mrb[0].mxu0
      %1722 = vmatprep.mubr.f32.mxu0 0.0
      %1723 = vmatmul.mubr.f32.gmra.mrb[0].mxu0 %v1550
      %v1724 = vpop.f32.mrb[0].mxu0
      %v1725 = vadd.f32 0.0, %v1724
      %v1726 = vpop.f32.mrb[0].mxu0
      %1727 = vmatprep.mubr.f32.mxu0 0.0
      %1728 = vmatmul.mubr.f32.gmra.mrb[0].mxu0 %v1553
      %v1729 = vpop.f32.mrb[0].mxu0
      %v1730 = vadd.f32 0.0, %v1729
      %v1731 = vpop.f32.mrb[0].mxu0
      %1732 = vmatprep.mubr.f32.mxu0 0.0
      %1733 = vmatmul.mubr.f32.gmra.mrb[0].mxu0 %v1556
      %v1734 = vpop.f32.mrb[0].mxu0
      %v1735 = vadd.f32 0.0, %v1734
      %v1736 = vpop.f32.mrb[0].mxu0
      %1737 = vmatprep.mubr.f32.mxu0 0.0
      %1738 = vmatmul.mubr.f32.gmra.mrb[0].mxu0 %v1559
      %v1739 = vpop.f32.mrb[0].mxu0
      %v1740 = vadd.f32 0.0, %v1739
      %v1741 = vpop.f32.mrb[0].mxu0
      %1742 = vmatprep.mubr.f32.mxu0 0.0
      %1743 = vmatmul.mubr.f32.gmra.mrb[0].mxu0 %v1562
      %v1744 = vpop.f32.mrb[0].mxu0
      %v1745 = vadd.f32 0.0, %v1744
      %v1746 = vpop.f32.mrb[0].mxu0
      %1747 = vmatprep.mubr.f32.mxu0 0.0
      %1748 = vmatmul.mubr.f32.gmra.mrb[0].mxu0 %v1565
      %v1749 = vpop.f32.mrb[0].mxu0
      %v1750 = vadd.f32 0.0, %v1749
      %v1751 = vpop.f32.mrb[0].mxu0
      %1752 = vmatprep.mubr.f32.mxu0 0.0
      %1753 = vmatmul.mubr.f32.gmra.mrb[0].mxu0 %v1568
      %v1754 = vpop.f32.mrb[0].mxu0
      %v1755 = vadd.f32 0.0, %v1754
      %v1756 = vpop.f32.mrb[0].mxu0
      %1757 = vmatprep.mubr.f32.mxu0 0.0
      %1758 = vmatmul.mubr.f32.gmra.mrb[0].mxu0 %v1571
      %v1759 = vpop.f32.mrb[0].mxu0
      %v1760 = vadd.f32 0.0, %v1759
      %v1761 = vpop.f32.mrb[0].mxu0
      %1762 = vmatprep.mubr.f32.mxu0 0.0
      %1763 = vmatmul.mubr.f32.gmra.mrb[0].mxu0 %v1574
      %v1764 = vpop.f32.mrb[0].mxu0
      %v1765 = vadd.f32 0.0, %v1764
      %v1766 = vpop.f32.mrb[0].mxu0
      %1767 = vmatprep.mubr.f32.mxu0 0.0
      %1768 = vmatmul.mubr.f32.gmra.mrb[0].mxu0 %v1577
      %v1769 = vpop.f32.mrb[0].mxu0
      %v1770 = vadd.f32 0.0, %v1769
      %v1771 = vpop.f32.mrb[0].mxu0
      %1772 = vmatprep.mubr.f32.mxu0 0.0
      %1773 = vmatmul.mubr.f32.gmra.mrb[0].mxu0 %v1580
      %v1774 = vpop.f32.mrb[0].mxu0
      %v1775 = vadd.f32 0.0, %v1774
      %v1776 = vpop.f32.mrb[0].mxu0
      %1777 = vmatprep.mubr.f32.mxu0 0.0
      %1778 = vmatmul.mubr.f32.gmra.mrb[0].mxu0 %v1583
      %v1779 = vpop.f32.mrb[0].mxu0
      %v1780 = vadd.f32 0.0, %v1779
      %v1781 = vpop.f32.mrb[0].mxu0
      %1782 = vmatprep.mubr.f32.mxu0 0.0
      %1783 = vmatmul.mubr.f32.gmra.mrb[0].mxu0 %v1586
      %v1784 = vpop.f32.mrb[0].mxu0
      %v1785 = vadd.f32 0.0, %v1784
      %v1786 = vpop.f32.mrb[0].mxu0
      %1787 = vmatprep.mubr.f32.mxu0 0.0
      %1788 = vmatmul.mubr.f32.gmra.mrb[0].mxu0 %v1589
      %v1789 = vpop.f32.mrb[0].mxu0
      %v1790 = vadd.f32 0.0, %v1789
      %v1791 = vpop.f32.mrb[0].mxu0
      %1792 = vmatprep.mubr.f32.mxu0 0.0
      %1793 = vmatmul.mubr.f32.gmra.mrb[0].mxu0 %v1592
      %v1794 = vpop.f32.mrb[0].mxu0
      %v1795 = vadd.f32 0.0, %v1794
      %v1796 = vpop.f32.mrb[0].mxu0
      %1797 = vmatprep.mubr.f32.mxu0 0.0
      %1798 = vmatmul.mubr.f32.gmra.mrb[0].mxu0 %v1595
      %v1799 = vpop.f32.mrb[0].mxu0
      %v1800 = vadd.f32 0.0, %v1799
      %v1801 = vpop.f32.mrb[0].mxu0
      %1802 = vmatprep.mubr.f32.mxu0 0.0
      %1803 = vmatmul.mubr.f32.gmra.mrb[0].mxu0 %v1598
      %v1804 = vpop.f32.mrb[0].mxu0
      %v1805 = vadd.f32 0.0, %v1804
      %v1806 = vpop.f32.mrb[0].mxu0
      %1807 = vdwg.mxu0
      %v1808 = vld [vmem:[%s4] sm:$0xff]
      %v1809 = vld [vmem:[%s4 + $0x8] sm:$0xff]
      %v1810 = vld [vmem:[%s4 + $0x10] sm:$0xff]
      %v1811 = vld [vmem:[%s4 + $0x18] sm:$0xff]
      %v1812 = vld [vmem:[%s4 + $0x20] sm:$0xff]
      %v1813 = vld [vmem:[%s4 + $0x28] sm:$0xff]
      %v1814 = vld [vmem:[%s4 + $0x30] sm:$0xff]
      %v1815 = vld [vmem:[%s4 + $0x38] sm:$0xff]
      %v1816 = vld [vmem:[%s4 + $0x40] sm:$0xff]
      %v1817 = vld [vmem:[%s4 + $0x48] sm:$0xff]
      %v1818 = vld [vmem:[%s4 + $0x50] sm:$0xff]
      %v1819 = vld [vmem:[%s4 + $0x58] sm:$0xff]
      %v1820 = vld [vmem:[%s4 + $0x60] sm:$0xff]
      %v1821 = vld [vmem:[%s4 + $0x68] sm:$0xff]
      %v1822 = vld [vmem:[%s4 + $0x70] sm:$0xff]
      %v1823 = vld [vmem:[%s4 + $0x78] sm:$0xff]
      %v1824 = vld [vmem:[%s4 + $0x80] sm:$0xff]
      %v1825 = vld [vmem:[%s4 + $0x88] sm:$0xff]
      %v1826 = vld [vmem:[%s4 + $0x90] sm:$0xff]
      %v1827 = vld [vmem:[%s4 + $0x98] sm:$0xff]
      %v1828 = vld [vmem:[%s4 + $0xa0] sm:$0xff]
      %v1829 = vld [vmem:[%s4 + $0xa8] sm:$0xff]
      %v1830 = vld [vmem:[%s4 + $0xb0] sm:$0xff]
      %v1831 = vld [vmem:[%s4 + $0xb8] sm:$0xff]
      %v1832 = vld [vmem:[%s4 + $0xc0] sm:$0xff]
      %v1833 = vld [vmem:[%s4 + $0xc8] sm:$0xff]
      %v1834 = vld [vmem:[%s4 + $0xd0] sm:$0xff]
      %v1835 = vld [vmem:[%s4 + $0xd8] sm:$0xff]
      %v1837 = vsel %vm1515, %v1808, 0
      %v1840 = vsel %vm1515, %v1809, 0
      %v1843 = vsel %vm1515, %v1810, 0
      %v1846 = vsel %vm1515, %v1811, 0
      %v1849 = vsel %vm1515, %v1812, 0
      %v1852 = vsel %vm1515, %v1813, 0
      %v1855 = vsel %vm1515, %v1814, 0
      %v1858 = vsel %vm1515, %v1815, 0
      %v1861 = vsel %vm1515, %v1816, 0
      %v1864 = vsel %vm1515, %v1817, 0
      %v1867 = vsel %vm1515, %v1818, 0
      %v1870 = vsel %vm1515, %v1819, 0
      %v1873 = vsel %vm1515, %v1820, 0
      %v1876 = vsel %vm1515, %v1821, 0
      %v1879 = vsel %vm1515, %v1822, 0
      %v1882 = vsel %vm1515, %v1823, 0
      %v1885 = vsel %vm1515, %v1824, 0
      %v1888 = vsel %vm1515, %v1825, 0
      %v1891 = vsel %vm1515, %v1826, 0
      %v1894 = vsel %vm1515, %v1827, 0
      %v1897 = vsel %vm1515, %v1828, 0
      %v1900 = vsel %vm1515, %v1829, 0
      %v1903 = vsel %vm1515, %v1830, 0
      %v1906 = vsel %vm1515, %v1831, 0
      %v1909 = vsel %vm1515, %v1832, 0
      %v1912 = vsel %vm1515, %v1833, 0
      %v1915 = vsel %vm1515, %v1834, 0
      %v1918 = vsel %vm1515, %v1835, 0
      %v1921 = vsel %vm799, %v1486, 0
      %1923 = vmatprep.subr.mxu0 0.0
      %1924 = vmatpush1.msra.mxu0 %v1484
      %1925 = vmatprep.subr.mxu0 0.0
      %1926 = vmatpush1.msra.mxu0 %v1921
      %1927 = vmatprep.subr.mxu0 0.0
      %1928 = vmatpush1.msra.mxu0 0.0
      %1929 = vmatprep.subr.mxu0 0.0
      %1930 = vmatpush1.msra.mxu0 0.0
      %1931 = vmatprep.subr.mxu0 0.0
      %1932 = vmatpush1.msra.mxu0 0.0
      %1933 = vmatprep.subr.mxu0 0.0
      %1934 = vmatpush1.msra.mxu0 0.0
      %1935 = vmatprep.subr.mxu0 0.0
      %1936 = vmatpush1.msra.mxu0 0.0
      %1937 = vmatprep.subr.mxu0 0.0
      %1938 = vmatpush1.msra.mxu0 0.0
      %1939 = vmatprep.subr.mxu0 0.0
      %1940 = vmatpush1.msra.mxu0 0.0
      %1941 = vmatprep.subr.mxu0 0.0
      %1942 = vmatpush1.msra.mxu0 0.0
      %1943 = vmatprep.subr.mxu0 0.0
      %1944 = vmatpush1.msra.mxu0 0.0
      %1945 = vmatprep.subr.mxu0 0.0
      %1946 = vmatpush1.msra.mxu0 0.0
      %1947 = vmatprep.subr.mxu0 0.0
      %1948 = vmatpush1.msra.mxu0 0.0
      %1949 = vmatprep.subr.mxu0 0.0
      %1950 = vmatpush1.msra.mxu0 0.0
      %1951 = vmatprep.subr.mxu0 0.0
      %1952 = vmatpush1.msra.mxu0 0.0
      %1953 = vmatprep.subr.mxu0 0.0
      %1954 = vmatpush1.msra.mxu0 0.0
      %1955 = vmatprep.subr.mxu0 0.0
      %1956 = vmatpush1.msra.mxu0 0.0
      %1957 = vmatprep.subr.mxu0 0.0
      %1958 = vmatpush1.msra.mxu0 0.0
      %1959 = vmatprep.subr.mxu0 0.0
      %1960 = vmatpush1.msra.mxu0 0.0
      %1961 = vmatprep.subr.mxu0 0.0
      %1962 = vmatpush1.msra.mxu0 0.0
      %1963 = vmatprep.subr.mxu0 0.0
      %1964 = vmatpush1.msra.mxu0 0.0
      %1965 = vmatprep.subr.mxu0 0.0
      %1966 = vmatpush1.msra.mxu0 0.0
      %1967 = vmatprep.subr.mxu0 0.0
      %1968 = vmatpush1.msra.mxu0 0.0
      %1969 = vmatprep.subr.mxu0 0.0
      %1970 = vmatpush1.msra.mxu0 0.0
      %1971 = vmatprep.subr.mxu0 0.0
      %1972 = vmatpush1.msra.mxu0 0.0
      %1973 = vmatprep.subr.mxu0 0.0
      %1974 = vmatpush1.msra.mxu0 0.0
      %1975 = vmatprep.subr.mxu0 0.0
      %1976 = vmatpush1.msra.mxu0 0.0
      %1977 = vmatprep.subr.mxu0 0.0
      %1978 = vmatpush1.msra.mxu0 0.0
      %1979 = vmatprep.subr.mxu0 0.0
      %1980 = vmatpush1.msra.mxu0 0.0
      %1981 = vmatprep.subr.mxu0 0.0
      %1982 = vmatpush1.msra.mxu0 0.0
      %1983 = vmatprep.subr.mxu0 0.0
      %1984 = vmatpush1.msra.mxu0 0.0
      %1985 = vmatprep.subr.mxu0 0.0
      %1986 = vmatpush1.msra.mxu0 0.0
      %1987 = vmatprep.mubr.f32.mxu0 0.0
      %1988 = vmatmul.mubr.f32.gmra.mrb[0].mxu0 %v1837
      %v1989 = vpop.f32.mrb[0].mxu0
      %v1990 = vadd.f32 0.0, %v1989
      %v1991 = vpop.f32.mrb[0].mxu0
      %1992 = vmatprep.mubr.f32.mxu0 0.0
      %1993 = vmatmul.mubr.f32.gmra.mrb[0].mxu0 %v1840
      %v1994 = vpop.f32.mrb[0].mxu0
      %v1995 = vadd.f32 0.0, %v1994
      %v1996 = vpop.f32.mrb[0].mxu0
      %1997 = vmatprep.mubr.f32.mxu0 0.0
      %1998 = vmatmul.mubr.f32.gmra.mrb[0].mxu0 %v1843
      %v1999 = vpop.f32.mrb[0].mxu0
      %v2000 = vadd.f32 0.0, %v1999
      %v2001 = vpop.f32.mrb[0].mxu0
      %2002 = vmatprep.mubr.f32.mxu0 0.0
      %2003 = vmatmul.mubr.f32.gmra.mrb[0].mxu0 %v1846
      %v2004 = vpop.f32.mrb[0].mxu0
      %v2005 = vadd.f32 0.0, %v2004
      %v2006 = vpop.f32.mrb[0].mxu0
      %2007 = vmatprep.mubr.f32.mxu0 0.0
      %2008 = vmatmul.mubr.f32.gmra.mrb[0].mxu0 %v1849
      %v2009 = vpop.f32.mrb[0].mxu0
      %v2010 = vadd.f32 0.0, %v2009
      %v2011 = vpop.f32.mrb[0].mxu0
      %2012 = vmatprep.mubr.f32.mxu0 0.0
      %2013 = vmatmul.mubr.f32.gmra.mrb[0].mxu0 %v1852
      %v2014 = vpop.f32.mrb[0].mxu0
      %v2015 = vadd.f32 0.0, %v2014
      %v2016 = vpop.f32.mrb[0].mxu0
      %2017 = vmatprep.mubr.f32.mxu0 0.0
      %2018 = vmatmul.mubr.f32.gmra.mrb[0].mxu0 %v1855
      %v2019 = vpop.f32.mrb[0].mxu0
      %v2020 = vadd.f32 0.0, %v2019
      %v2021 = vpop.f32.mrb[0].mxu0
      %2022 = vmatprep.mubr.f32.mxu0 0.0
      %2023 = vmatmul.mubr.f32.gmra.mrb[0].mxu0 %v1858
      %v2024 = vpop.f32.mrb[0].mxu0
      %v2025 = vadd.f32 0.0, %v2024
      %v2026 = vpop.f32.mrb[0].mxu0
      %2027 = vmatprep.mubr.f32.mxu0 0.0
      %2028 = vmatmul.mubr.f32.gmra.mrb[0].mxu0 %v1861
      %v2029 = vpop.f32.mrb[0].mxu0
      %v2030 = vadd.f32 0.0, %v2029
      %v2031 = vpop.f32.mrb[0].mxu0
      %2032 = vmatprep.mubr.f32.mxu0 0.0
      %2033 = vmatmul.mubr.f32.gmra.mrb[0].mxu0 %v1864
      %v2034 = vpop.f32.mrb[0].mxu0
      %v2035 = vadd.f32 0.0, %v2034
      %v2036 = vpop.f32.mrb[0].mxu0
      %2037 = vmatprep.mubr.f32.mxu0 0.0
      %2038 = vmatmul.mubr.f32.gmra.mrb[0].mxu0 %v1867
      %v2039 = vpop.f32.mrb[0].mxu0
      %v2040 = vadd.f32 0.0, %v2039
      %v2041 = vpop.f32.mrb[0].mxu0
      %2042 = vmatprep.mubr.f32.mxu0 0.0
      %2043 = vmatmul.mubr.f32.gmra.mrb[0].mxu0 %v1870
      %v2044 = vpop.f32.mrb[0].mxu0
      %v2045 = vadd.f32 0.0, %v2044
      %v2046 = vpop.f32.mrb[0].mxu0
      %2047 = vmatprep.mubr.f32.mxu0 0.0
      %2048 = vmatmul.mubr.f32.gmra.mrb[0].mxu0 %v1873
      %v2049 = vpop.f32.mrb[0].mxu0
      %v2050 = vadd.f32 0.0, %v2049
      %v2051 = vpop.f32.mrb[0].mxu0
      %2052 = vmatprep.mubr.f32.mxu0 0.0
      %2053 = vmatmul.mubr.f32.gmra.mrb[0].mxu0 %v1876
      %v2054 = vpop.f32.mrb[0].mxu0
      %v2055 = vadd.f32 0.0, %v2054
      %v2056 = vpop.f32.mrb[0].mxu0
      %2057 = vmatprep.mubr.f32.mxu0 0.0
      %2058 = vmatmul.mubr.f32.gmra.mrb[0].mxu0 %v1879
      %v2059 = vpop.f32.mrb[0].mxu0
      %v2060 = vadd.f32 0.0, %v2059
      %v2061 = vpop.f32.mrb[0].mxu0
      %2062 = vmatprep.mubr.f32.mxu0 0.0
      %2063 = vmatmul.mubr.f32.gmra.mrb[0].mxu0 %v1882
      %v2064 = vpop.f32.mrb[0].mxu0
      %v2065 = vadd.f32 0.0, %v2064
      %v2066 = vpop.f32.mrb[0].mxu0
      %2067 = vmatprep.mubr.f32.mxu0 0.0
      %2068 = vmatmul.mubr.f32.gmra.mrb[0].mxu0 %v1885
      %v2069 = vpop.f32.mrb[0].mxu0
      %v2070 = vadd.f32 0.0, %v2069
      %v2071 = vpop.f32.mrb[0].mxu0
      %2072 = vmatprep.mubr.f32.mxu0 0.0
      %2073 = vmatmul.mubr.f32.gmra.mrb[0].mxu0 %v1888
      %v2074 = vpop.f32.mrb[0].mxu0
      %v2075 = vadd.f32 0.0, %v2074
      %v2076 = vpop.f32.mrb[0].mxu0
      %2077 = vmatprep.mubr.f32.mxu0 0.0
      %2078 = vmatmul.mubr.f32.gmra.mrb[0].mxu0 %v1891
      %v2079 = vpop.f32.mrb[0].mxu0
      %v2080 = vadd.f32 0.0, %v2079
      %v2081 = vpop.f32.mrb[0].mxu0
      %2082 = vmatprep.mubr.f32.mxu0 0.0
      %2083 = vmatmul.mubr.f32.gmra.mrb[0].mxu0 %v1894
      %v2084 = vpop.f32.mrb[0].mxu0
      %v2085 = vadd.f32 0.0, %v2084
      %v2086 = vpop.f32.mrb[0].mxu0
      %2087 = vmatprep.mubr.f32.mxu0 0.0
      %2088 = vmatmul.mubr.f32.gmra.mrb[0].mxu0 %v1897
      %v2089 = vpop.f32.mrb[0].mxu0
      %v2090 = vadd.f32 0.0, %v2089
      %v2091 = vpop.f32.mrb[0].mxu0
      %2092 = vmatprep.mubr.f32.mxu0 0.0
      %2093 = vmatmul.mubr.f32.gmra.mrb[0].mxu0 %v1900
      %v2094 = vpop.f32.mrb[0].mxu0
      %v2095 = vadd.f32 0.0, %v2094
      %v2096 = vpop.f32.mrb[0].mxu0
      %2097 = vmatprep.mubr.f32.mxu0 0.0
      %2098 = vmatmul.mubr.f32.gmra.mrb[0].mxu0 %v1903
      %v2099 = vpop.f32.mrb[0].mxu0
      %v2100 = vadd.f32 0.0, %v2099
      %v2101 = vpop.f32.mrb[0].mxu0
      %2102 = vmatprep.mubr.f32.mxu0 0.0
      %2103 = vmatmul.mubr.f32.gmra.mrb[0].mxu0 %v1906
      %v2104 = vpop.f32.mrb[0].mxu0
      %v2105 = vadd.f32 0.0, %v2104
      %v2106 = vpop.f32.mrb[0].mxu0
      %2107 = vmatprep.mubr.f32.mxu0 0.0
      %2108 = vmatmul.mubr.f32.gmra.mrb[0].mxu0 %v1909
      %v2109 = vpop.f32.mrb[0].mxu0
      %v2110 = vadd.f32 0.0, %v2109
      %v2111 = vpop.f32.mrb[0].mxu0
      %2112 = vmatprep.mubr.f32.mxu0 0.0
      %2113 = vmatmul.mubr.f32.gmra.mrb[0].mxu0 %v1912
      %v2114 = vpop.f32.mrb[0].mxu0
      %v2115 = vadd.f32 0.0, %v2114
      %v2116 = vpop.f32.mrb[0].mxu0
      %2117 = vmatprep.mubr.f32.mxu0 0.0
      %2118 = vmatmul.mubr.f32.gmra.mrb[0].mxu0 %v1915
      %v2119 = vpop.f32.mrb[0].mxu0
      %v2120 = vadd.f32 0.0, %v2119
      %v2121 = vpop.f32.mrb[0].mxu0
      %2122 = vmatprep.mubr.f32.mxu0 0.0
      %2123 = vmatmul.mubr.f32.gmra.mrb[0].mxu0 %v1918
      %v2124 = vpop.f32.mrb[0].mxu0
      %v2125 = vadd.f32 0.0, %v2124
      %v2126 = vpop.f32.mrb[0].mxu0
      %2127 = vdwg.mxu0
      %v2128 = vmul.f32 %v549, %v1670
      %v2129 = vmul.f32 %v550, %v1675
      %v2130 = vmul.f32 %v551, %v1680
      %v2131 = vmul.f32 %v552, %v1685
      %v2132 = vmul.f32 %v553, %v1690
      %v2133 = vmul.f32 %v554, %v1695
      %v2134 = vmul.f32 %v555, %v1700
      %v2135 = vmul.f32 %v556, %v1705
      %v2136 = vmul.f32 %v557, %v1710
      %v2137 = vmul.f32 %v558, %v1715
      %v2138 = vmul.f32 %v559, %v1720
      %v2139 = vmul.f32 %v560, %v1725
      %v2140 = vmul.f32 %v561, %v1730
      %v2141 = vmul.f32 %v562, %v1735
      %v2142 = vmul.f32 %v563, %v1740
      %v2143 = vmul.f32 %v564, %v1745
      %v2144 = vmul.f32 %v565, %v1750
      %v2145 = vmul.f32 %v566, %v1755
      %v2146 = vmul.f32 %v567, %v1760
      %v2147 = vmul.f32 %v568, %v1765
      %v2148 = vmul.f32 %v569, %v1770
      %v2149 = vmul.f32 %v570, %v1775
      %v2150 = vmul.f32 %v571, %v1780
      %v2151 = vmul.f32 %v572, %v1785
      %v2152 = vmul.f32 %v573, %v1790
      %v2153 = vmul.f32 %v574, %v1795
      %v2154 = vmul.f32 %v575, %v1800
      %v2155 = vmul.f32 %v576, %v1805
      %v2156 = vmul.f32 %v2128, %v1990
      %v2157 = vmul.f32 %v2129, %v1995
      %v2158 = vmul.f32 %v2130, %v2000
      %v2159 = vmul.f32 %v2131, %v2005
      %v2160 = vmul.f32 %v2132, %v2010
      %v2161 = vmul.f32 %v2133, %v2015
      %v2162 = vmul.f32 %v2134, %v2020
      %v2163 = vmul.f32 %v2135, %v2025
      %v2164 = vmul.f32 %v2136, %v2030
      %v2165 = vmul.f32 %v2137, %v2035
      %v2166 = vmul.f32 %v2138, %v2040
      %v2167 = vmul.f32 %v2139, %v2045
      %v2168 = vmul.f32 %v2140, %v2050
      %v2169 = vmul.f32 %v2141, %v2055
      %v2170 = vmul.f32 %v2142, %v2060
      %v2171 = vmul.f32 %v2143, %v2065
      %v2172 = vmul.f32 %v2144, %v2070
      %v2173 = vmul.f32 %v2145, %v2075
      %v2174 = vmul.f32 %v2146, %v2080
      %v2175 = vmul.f32 %v2147, %v2085
      %v2176 = vmul.f32 %v2148, %v2090
      %v2177 = vmul.f32 %v2149, %v2095
      %v2178 = vmul.f32 %v2150, %v2100
      %v2179 = vmul.f32 %v2151, %v2105
      %v2180 = vmul.f32 %v2152, %v2110
      %v2181 = vmul.f32 %v2153, %v2115
      %v2182 = vmul.f32 %v2154, %v2120
      %v2183 = vmul.f32 %v2155, %v2125
      %v2184 = vld [vmem:[%s5] sm:$0xff]
      %v2186 = vcombine.high %v2184, %v2184
      %v2187 = vsel %vm584, %v2186, 0
      %2189 = vmatprep.subr.mxu0 0.0
      %2190 = vmatpush1.msra.mxu0 %v2156
      %2191 = vmatprep.subr.mxu0 0.0
      %2192 = vmatpush1.msra.mxu0 %v2157
      %2193 = vmatprep.subr.mxu0 0.0
      %2194 = vmatpush1.msra.mxu0 %v2158
      %2195 = vmatprep.subr.mxu0 0.0
      %2196 = vmatpush1.msra.mxu0 %v2159
      %2197 = vmatprep.subr.mxu0 0.0
      %2198 = vmatpush1.msra.mxu0 %v2160
      %2199 = vmatprep.subr.mxu0 0.0
      %2200 = vmatpush1.msra.mxu0 %v2161
      %2201 = vmatprep.subr.mxu0 0.0
      %2202 = vmatpush1.msra.mxu0 %v2162
      %2203 = vmatprep.subr.mxu0 0.0
      %2204 = vmatpush1.msra.mxu0 %v2163
      %2205 = vmatprep.subr.mxu0 0.0
      %2206 = vmatpush1.msra.mxu0 %v2164
      %2207 = vmatprep.subr.mxu0 0.0
      %2208 = vmatpush1.msra.mxu0 %v2165
      %2209 = vmatprep.subr.mxu0 0.0
      %2210 = vmatpush1.msra.mxu0 %v2166
      %2211 = vmatprep.subr.mxu0 0.0
      %2212 = vmatpush1.msra.mxu0 %v2167
      %2213 = vmatprep.subr.mxu0 0.0
      %2214 = vmatpush1.msra.mxu0 %v2168
      %2215 = vmatprep.subr.mxu0 0.0
      %2216 = vmatpush1.msra.mxu0 %v2169
      %2217 = vmatprep.subr.mxu0 0.0
      %2218 = vmatpush1.msra.mxu0 %v2170
      %2219 = vmatprep.subr.mxu0 0.0
      %2220 = vmatpush1.msra.mxu0 %v2171
      %2221 = vmatprep.subr.mxu0 0.0
      %2222 = vmatpush1.msra.mxu0 %v2172
      %2223 = vmatprep.subr.mxu0 0.0
      %2224 = vmatpush1.msra.mxu0 %v2173
      %2225 = vmatprep.subr.mxu0 0.0
      %2226 = vmatpush1.msra.mxu0 %v2174
      %2227 = vmatprep.subr.mxu0 0.0
      %2228 = vmatpush1.msra.mxu0 %v2175
      %2229 = vmatprep.subr.mxu0 0.0
      %2230 = vmatpush1.msra.mxu0 %v2176
      %2231 = vmatprep.subr.mxu0 0.0
      %2232 = vmatpush1.msra.mxu0 %v2177
      %2233 = vmatprep.subr.mxu0 0.0
      %2234 = vmatpush1.msra.mxu0 %v2178
      %2235 = vmatprep.subr.mxu0 0.0
      %2236 = vmatpush1.msra.mxu0 %v2179
      %2237 = vmatprep.subr.mxu0 0.0
      %2238 = vmatpush1.msra.mxu0 %v2180
      %2239 = vmatprep.subr.mxu0 0.0
      %2240 = vmatpush1.msra.mxu0 %v2181
      %2241 = vmatprep.subr.mxu0 0.0
      %2242 = vmatpush1.msra.mxu0 %v2182
      %2243 = vmatprep.subr.mxu0 0.0
      %2244 = vmatpush1.msra.mxu0 %v2183
      %2245 = vmatprep.subr.mxu0 0.0
      %2246 = vmatpush1.msra.mxu0 0.0
      %2247 = vmatprep.subr.mxu0 0.0
      %2248 = vmatpush1.msra.mxu0 0.0
      %2249 = vmatprep.subr.mxu0 0.0
      %2250 = vmatpush1.msra.mxu0 0.0
      %2251 = vmatprep.subr.mxu0 0.0
      %2252 = vmatpush1.msra.mxu0 0.0
      %2253 = vmatprep.mubr.f32.mxu0 %v2187
      %2254 = vmatmul.mubr.f32.gmra.mrb[0].mxu0 %v2184
      %v2255 = vpop.f32.mrb[0].mxu0
      %v2256 = vadd.f32 0.0, %v2255
      %v2257 = vpop.f32.mrb[0].mxu0
      %2258 = vdwg.mxu0
      %v2259 = vmul.f32 %v2256, 0.020408163
      %vm2260 = vcmask 60416
      %v2261 = vsel %vm2260, %v2259, 0.0
      %2262 = vadd.xlane.f32.xlu0 %v2261
      %v2263 = vpop.xlane.xlu0 %2262
      %v2264 = vrot.slane %v2263, 4
      %v2265 = vadd.f32 %v2263, %v2264
      %v2266 = vrot.slane %v2265, 2
      %v2267 = vadd.f32 %v2265, %v2266
      %v2268 = vrot.slane %v2267, 1
      %v2269 = vadd.f32 %v2267, %v2268
      %s2270 = vtos %v2269
      %v2271 = vstv %s2270
      %v2272 = vrcp.pop 32.0
      %v2273 = vmul.f32 %v2271, %v2272
      %v2274 = vsub.f32 %v2259, %v2273
      %v2275 = vmul.f32 %v2274, %v2274
      %v2276 = vsel %vm2260, %v2275, 0.0
      %2277 = vadd.xlane.f32.xlu0 %v2276
      %v2278 = vpop.xlane.xlu0 %2277
      %v2279 = vrot.slane %v2278, 4
      %v2280 = vadd.f32 %v2278, %v2279
      %v2281 = vrot.slane %v2280, 2
      %v2282 = vadd.f32 %v2280, %v2281
      %v2283 = vrot.slane %v2282, 1
      %v2284 = vadd.f32 %v2282, %v2283
      %s2285 = vtos %v2284
      %v2286 = vstv %s2285
      %v2287 = vmul.f32 %v2286, %v2272
      %v2288 = vadd.f32 %v2287, 1e-05
      %v2289 = vrsqrt.pop %v2288
      %v2290 = vmul.f32 %v2274, %v2289
      %v2291 = vld [vmem:[%s12] sm:$0x1]
      %v2293 = vlaneseq
      %v2294 = vshrl.u32 %v2293, 7
      %v2295 = vsub.s32 0, %v2294
      %v2296 = vrot.slane %v2291, %v2295
      %v2298 = vmul.f32 %v2290, %v2296
      %v2299 = vld [vmem:[%s13] sm:$0x1]
      %v2301 = vlaneseq
      %v2302 = vshrl.u32 %v2301, 7
      %v2303 = vsub.s32 0, %v2302
      %v2304 = vrot.slane %v2299, %v2303
      %v2306 = vadd.f32 %v2298, %v2304
      %v2307 = vld [vmem:[%s14] sm:$0x1]
      %v2309 = vlaneseq
      %v2310 = vshrl.u32 %v2309, 7
      %v2311 = vsub.s32 0, %v2310
      %v2312 = vrot.slane %v2307, %v2311
      %v2314 = vmul.f32 %v2306, %v2312
      %v2315 = vld [vmem:[%s15] sm:$0x1]
      %v2317 = vlaneseq
      %v2318 = vshrl.u32 %v2317, 7
      %v2319 = vsub.s32 0, %v2318
      %v2320 = vrot.slane %v2315, %v2319
      %v2322 = vmul.f32 %v2306, %v2320
      %v2323 = vld [vmem:[%s16] sm:$0x1]
      %v2325 = vlaneseq
      %v2326 = vshrl.u32 %v2325, 7
      %v2327 = vsub.s32 0, %v2326
      %v2328 = vrot.slane %v2323, %v2327
      %v2330 = vmul.f32 %v2306, %v2328
      %v2331 = vsel %vm2260, %v2330, 0.0
      %v2332 = vrot.slane %v2331, 4
      %v2333 = vadd.f32 %v2331, %v2332
      %v2334 = vrot.slane %v2333, 2
      %v2335 = vadd.f32 %v2333, %v2334
      %v2336 = vrot.slane %v2335, 1
      %v2337 = vadd.f32 %v2335, %v2336
      %v2338 = vrcp.pop 4.0
      %v2339 = vmul.f32 %v2337, %v2338
      %2340 = vxpose.xlu0.b32.start [1/16] %v2314, 128
      %2341 = vxpose.xlu0.b32.cont [2/16] 0.0, 128
      %2342 = vxpose.xlu0.b32.cont [3/16] 0.0, 128
      %2343 = vxpose.xlu0.b32.cont [4/16] 0.0, 128
      %2344 = vxpose.xlu0.b32.cont [5/16] 0.0, 128
      %2345 = vxpose.xlu0.b32.cont [6/16] 0.0, 128
      %2346 = vxpose.xlu0.b32.cont [7/16] 0.0, 128
      %2347 = vxpose.xlu0.b32.cont [8/16] 0.0, 128
      %2348 = vxpose.xlu0.b32.cont [9/16] 0.0, 128
      %2349 = vxpose.xlu0.b32.cont [10/16] 0.0, 128
      %2350 = vxpose.xlu0.b32.cont [11/16] 0.0, 128
      %2351 = vxpose.xlu0.b32.cont [12/16] 0.0, 128
      %2352 = vxpose.xlu0.b32.cont [13/16] 0.0, 128
      %2353 = vxpose.xlu0.b32.cont [14/16] 0.0, 128
      %2354 = vxpose.xlu0.b32.cont [15/16] 0.0, 128
      %2355 = vxpose.xlu0.b32.end [16/16] 0.0, 128
      %v2356 = vpop.trf.xlu0
      %v2357 = vpop.trf.xlu0
      %v2358 = vpop.trf.xlu0
      %v2359 = vpop.trf.xlu0
      %v2360 = vpop.trf.xlu0
      %v2361 = vpop.trf.xlu0
      %v2362 = vpop.trf.xlu0
      %v2363 = vpop.trf.xlu0
      %v2364 = vpop.trf.xlu0
      %v2365 = vpop.trf.xlu0
      %v2366 = vpop.trf.xlu0
      %v2367 = vpop.trf.xlu0
      %v2368 = vpop.trf.xlu0
      %v2369 = vpop.trf.xlu0
      %v2370 = vpop.trf.xlu0
      %v2371 = vpop.trf.xlu0
      %v2373 = vsel %vm1099, %v2356, 0
      %v2376 = vsel %vm757, %v2322, 0
      %2378 = vmatprep.subr.mxu0 0.0
      %2379 = vmatpush1.msra.mxu0 %v2376
      %2380 = vmatprep.subr.mxu0 0.0
      %2381 = vmatpush1.msra.mxu0 0.0
      %2382 = vmatprep.subr.mxu0 0.0
      %2383 = vmatpush1.msra.mxu0 0.0
      %2384 = vmatprep.subr.mxu0 0.0
      %2385 = vmatpush1.msra.mxu0 0.0
      %2386 = vmatprep.subr.mxu0 0.0
      %2387 = vmatpush1.msra.mxu0 0.0
      %2388 = vmatprep.subr.mxu0 0.0
      %2389 = vmatpush1.msra.mxu0 0.0
      %2390 = vmatprep.subr.mxu0 0.0
      %2391 = vmatpush1.msra.mxu0 0.0
      %2392 = vmatprep.subr.mxu0 0.0
      %2393 = vmatpush1.msra.mxu0 0.0
      %2394 = vmatprep.subr.mxu0 0.0
      %2395 = vmatpush1.msra.mxu0 0.0
      %2396 = vmatprep.subr.mxu0 0.0
      %2397 = vmatpush1.msra.mxu0 0.0
      %2398 = vmatprep.subr.mxu0 0.0
      %2399 = vmatpush1.msra.mxu0 0.0
      %2400 = vmatprep.subr.mxu0 0.0
      %2401 = vmatpush1.msra.mxu0 0.0
      %2402 = vmatprep.subr.mxu0 0.0
      %2403 = vmatpush1.msra.mxu0 0.0
      %2404 = vmatprep.subr.mxu0 0.0
      %2405 = vmatpush1.msra.mxu0 0.0
      %2406 = vmatprep.subr.mxu0 0.0
      %2407 = vmatpush1.msra.mxu0 0.0
      %2408 = vmatprep.subr.mxu0 0.0
      %2409 = vmatpush1.msra.mxu0 0.0
      %2410 = vmatprep.subr.mxu0 0.0
      %2411 = vmatpush1.msra.mxu0 0.0
      %2412 = vmatprep.subr.mxu0 0.0
      %2413 = vmatpush1.msra.mxu0 0.0
      %2414 = vmatprep.subr.mxu0 0.0
      %2415 = vmatpush1.msra.mxu0 0.0
      %2416 = vmatprep.subr.mxu0 0.0
      %2417 = vmatpush1.msra.mxu0 0.0
      %2418 = vmatprep.subr.mxu0 0.0
      %2419 = vmatpush1.msra.mxu0 0.0
      %2420 = vmatprep.subr.mxu0 0.0
      %2421 = vmatpush1.msra.mxu0 0.0
      %2422 = vmatprep.subr.mxu0 0.0
      %2423 = vmatpush1.msra.mxu0 0.0
      %2424 = vmatprep.subr.mxu0 0.0
      %2425 = vmatpush1.msra.mxu0 0.0
      %2426 = vmatprep.subr.mxu0 0.0
      %2427 = vmatpush1.msra.mxu0 0.0
      %2428 = vmatprep.subr.mxu0 0.0
      %2429 = vmatpush1.msra.mxu0 0.0
      %2430 = vmatprep.subr.mxu0 0.0
      %2431 = vmatpush1.msra.mxu0 0.0
      %2432 = vmatprep.subr.mxu0 0.0
      %2433 = vmatpush1.msra.mxu0 0.0
      %2434 = vmatprep.subr.mxu0 0.0
      %2435 = vmatpush1.msra.mxu0 0.0
      %2436 = vmatprep.subr.mxu0 0.0
      %2437 = vmatpush1.msra.mxu0 0.0
      %2438 = vmatprep.subr.mxu0 0.0
      %2439 = vmatpush1.msra.mxu0 0.0
      %2440 = vmatprep.subr.mxu0 0.0
      %2441 = vmatpush1.msra.mxu0 0.0
      %2442 = vmatprep.mubr.f32.mxu0 0.0
      %2443 = vmatmul.mubr.f32.gmra.mrb[0].mxu0 %v2373
      %v2444 = vpop.f32.mrb[0].mxu0
      %v2445 = vadd.f32 0.0, %v2444
      %v2446 = vpop.f32.mrb[0].mxu0
      %2447 = vdwg.mxu0
      %v2448 = vmul.f32 %v2445, 0.35355338
      %vm2449 = vcmask 64512
      %v2450 = vsel %vm2449, %v2448, -inf
      %2451 = vmax.xlane.f32.xlu0 %v2450
      %v2452 = vpop.xlane.xlu0 %2451
      %v2453 = vsub.f32 %v2448, %v2452
      %v2454 = vmul.f32 %v2453, 1.442695
      %v2455 = vpow.pop %v2454
      %v2456 = vsel %vm2449, %v2455, 0.0
      %2457 = vadd.xlane.f32.xlu0 %v2456
      %v2458 = vpop.xlane.xlu0 %2457
      %v2459 = vrcp.pop %v2458
      %v2460 = vmul.f32 %v2455, %v2459
      %v2462 = vsel %vm2449, %v2339, 0
      %v2465 = vsel %vm2449, %v2460, 0
      %2467 = vmatprep.subr.mxu0 0.0
      %2468 = vmatpush1.xpose.msra.mxu0 %v2465
      %2469 = vmatprep.subr.mxu0 0.0
      %2470 = vmatpush1.xpose.msra.mxu0 0.0
      %2471 = vmatprep.subr.mxu0 0.0
      %2472 = vmatpush1.xpose.msra.mxu0 0.0
      %2473 = vmatprep.subr.mxu0 0.0
      %2474 = vmatpush1.xpose.msra.mxu0 0.0
      %2475 = vmatprep.subr.mxu0 0.0
      %2476 = vmatpush1.xpose.msra.mxu0 0.0
      %2477 = vmatprep.subr.mxu0 0.0
      %2478 = vmatpush1.xpose.msra.mxu0 0.0
      %2479 = vmatprep.subr.mxu0 0.0
      %2480 = vmatpush1.xpose.msra.mxu0 0.0
      %2481 = vmatprep.subr.mxu0 0.0
      %2482 = vmatpush1.xpose.msra.mxu0 0.0
      %2483 = vmatprep.subr.mxu0 0.0
      %2484 = vmatpush1.xpose.msra.mxu0 0.0
      %2485 = vmatprep.subr.mxu0 0.0
      %2486 = vmatpush1.xpose.msra.mxu0 0.0
      %2487 = vmatprep.subr.mxu0 0.0
      %2488 = vmatpush1.xpose.msra.mxu0 0.0
      %2489 = vmatprep.subr.mxu0 0.0
      %2490 = vmatpush1.xpose.msra.mxu0 0.0
      %2491 = vmatprep.subr.mxu0 0.0
      %2492 = vmatpush1.xpose.msra.mxu0 0.0
      %2493 = vmatprep.subr.mxu0 0.0
      %2494 = vmatpush1.xpose.msra.mxu0 0.0
      %2495 = vmatprep.subr.mxu0 0.0
      %2496 = vmatpush1.xpose.msra.mxu0 0.0
      %2497 = vmatprep.subr.mxu0 0.0
      %2498 = vmatpush1.xpose.msra.mxu0 0.0
      %2499 = vmatprep.subr.mxu0 0.0
      %2500 = vmatpush1.xpose.msra.mxu0 0.0
      %2501 = vmatprep.subr.mxu0 0.0
      %2502 = vmatpush1.xpose.msra.mxu0 0.0
      %2503 = vmatprep.subr.mxu0 0.0
      %2504 = vmatpush1.xpose.msra.mxu0 0.0
      %2505 = vmatprep.subr.mxu0 0.0
      %2506 = vmatpush1.xpose.msra.mxu0 0.0
      %2507 = vmatprep.subr.mxu0 0.0
      %2508 = vmatpush1.xpose.msra.mxu0 0.0
      %2509 = vmatprep.subr.mxu0 0.0
      %2510 = vmatpush1.xpose.msra.mxu0 0.0
      %2511 = vmatprep.subr.mxu0 0.0
      %2512 = vmatpush1.xpose.msra.mxu0 0.0
      %2513 = vmatprep.subr.mxu0 0.0
      %2514 = vmatpush1.xpose.msra.mxu0 0.0
      %2515 = vmatprep.subr.mxu0 0.0
      %2516 = vmatpush1.xpose.msra.mxu0 0.0
      %2517 = vmatprep.subr.mxu0 0.0
      %2518 = vmatpush1.xpose.msra.mxu0 0.0
      %2519 = vmatprep.subr.mxu0 0.0
      %2520 = vmatpush1.xpose.msra.mxu0 0.0
      %2521 = vmatprep.subr.mxu0 0.0
      %2522 = vmatpush1.xpose.msra.mxu0 0.0
      %2523 = vmatprep.subr.mxu0 0.0
      %2524 = vmatpush1.xpose.msra.mxu0 0.0
      %2525 = vmatprep.subr.mxu0 0.0
      %2526 = vmatpush1.xpose.msra.mxu0 0.0
      %2527 = vmatprep.subr.mxu0 0.0
      %2528 = vmatpush1.xpose.msra.mxu0 0.0
      %2529 = vmatprep.subr.mxu0 0.0
      %2530 = vmatpush1.xpose.msra.mxu0 0.0
      %2531 = vmatprep.mubr.f32.mxu0 0.0
      %2532 = vmatmul.mubr.f32.gmra.mrb[0].mxu0 %v2462
      %v2533 = vpop.f32.mrb[0].mxu0
      %v2534 = vadd.f32 0.0, %v2533
      %v2535 = vpop.f32.mrb[0].mxu0
      %2536 = vdwg.mxu0
      %v2537 = vxor.u32 %v2534, 2147483648
      %v2538 = vmul.f32 %v2537, 1.442695
      %v2539 = vpow.pop %v2538
      %v2540 = vadd.f32 %v2539, 1.0
      %v2541 = vrcp.pop %v2540
      %v2542 = vmul.f32 1.0, %v2541
      %v2543 = vlaneseq
      %v2544 = vshrl.u32 %v2543, 7
      %v2545 = vsub.s32 0, %v2544
      %v2546 = vrot.slane %v2542, %v2545
      %v2547 = vmul.f32 %v2156, %v2546
      %v2548 = vmul.f32 %v2157, %v2546
      %v2549 = vmul.f32 %v2158, %v2546
      %v2550 = vmul.f32 %v2159, %v2546
      %v2551 = vmul.f32 %v2160, %v2546
      %v2552 = vmul.f32 %v2161, %v2546
      %v2553 = vmul.f32 %v2162, %v2546
      %v2554 = vmul.f32 %v2163, %v2546
      %v2555 = vmul.f32 %v2164, %v2546
      %v2556 = vmul.f32 %v2165, %v2546
      %v2557 = vmul.f32 %v2166, %v2546
      %v2558 = vmul.f32 %v2167, %v2546
      %v2559 = vmul.f32 %v2168, %v2546
      %v2560 = vmul.f32 %v2169, %v2546
      %v2561 = vmul.f32 %v2170, %v2546
      %v2562 = vmul.f32 %v2171, %v2546
      %v2563 = vmul.f32 %v2172, %v2546
      %v2564 = vmul.f32 %v2173, %v2546
      %v2565 = vmul.f32 %v2174, %v2546
      %v2566 = vmul.f32 %v2175, %v2546
      %v2567 = vmul.f32 %v2176, %v2546
      %v2568 = vmul.f32 %v2177, %v2546
      %v2569 = vmul.f32 %v2178, %v2546
      %v2570 = vmul.f32 %v2179, %v2546
      %v2571 = vmul.f32 %v2180, %v2546
      %v2572 = vmul.f32 %v2181, %v2546
      %v2573 = vmul.f32 %v2182, %v2546
      %v2574 = vmul.f32 %v2183, %v2546
      %2575 = vst.msk [vmem:[%s548] sm:$0xff] %vm2449, %v2547
      %2576 = vst.msk [vmem:[%s548 + $0x8] sm:$0xff] %vm2449, %v2548
      %2577 = vst.msk [vmem:[%s548 + $0x10] sm:$0xff] %vm2449, %v2549
      %2578 = vst.msk [vmem:[%s548 + $0x18] sm:$0xff] %vm2449, %v2550
      %2579 = vst.msk [vmem:[%s548 + $0x20] sm:$0xff] %vm2449, %v2551
      %2580 = vst.msk [vmem:[%s548 + $0x28] sm:$0xff] %vm2449, %v2552
      %2581 = vst.msk [vmem:[%s548 + $0x30] sm:$0xff] %vm2449, %v2553
      %2582 = vst.msk [vmem:[%s548 + $0x38] sm:$0xff] %vm2449, %v2554
      %2583 = vst.msk [vmem:[%s548 + $0x40] sm:$0xff] %vm2449, %v2555
      %2584 = vst.msk [vmem:[%s548 + $0x48] sm:$0xff] %vm2449, %v2556
      %2585 = vst.msk [vmem:[%s548 + $0x50] sm:$0xff] %vm2449, %v2557
      %2586 = vst.msk [vmem:[%s548 + $0x58] sm:$0xff] %vm2449, %v2558
      %2587 = vst.msk [vmem:[%s548 + $0x60] sm:$0xff] %vm2449, %v2559
      %2588 = vst.msk [vmem:[%s548 + $0x68] sm:$0xff] %vm2449, %v2560
      %2589 = vst.msk [vmem:[%s548 + $0x70] sm:$0xff] %vm2449, %v2561
      %2590 = vst.msk [vmem:[%s548 + $0x78] sm:$0xff] %vm2449, %v2562
      %2591 = vst.msk [vmem:[%s548 + $0x80] sm:$0xff] %vm2449, %v2563
      %2592 = vst.msk [vmem:[%s548 + $0x88] sm:$0xff] %vm2449, %v2564
      %2593 = vst.msk [vmem:[%s548 + $0x90] sm:$0xff] %vm2449, %v2565
      %2594 = vst.msk [vmem:[%s548 + $0x98] sm:$0xff] %vm2449, %v2566
      %2595 = vst.msk [vmem:[%s548 + $0xa0] sm:$0xff] %vm2449, %v2567
      %2596 = vst.msk [vmem:[%s548 + $0xa8] sm:$0xff] %vm2449, %v2568
      %2597 = vst.msk [vmem:[%s548 + $0xb0] sm:$0xff] %vm2449, %v2569
      %2598 = vst.msk [vmem:[%s548 + $0xb8] sm:$0xff] %vm2449, %v2570
      %2599 = vst.msk [vmem:[%s548 + $0xc0] sm:$0xff] %vm2449, %v2571
      %2600 = vst.msk [vmem:[%s548 + $0xc8] sm:$0xff] %vm2449, %v2572
      %2601 = vst.msk [vmem:[%s548 + $0xd0] sm:$0xff] %vm2449, %v2573
      %2602 = vst.msk [vmem:[%s548 + $0xd8] sm:$0xff] %vm2449, %v2574
      %p2603 = scmp.lt.s32.totalorder %s28, 1
      %s2604 = scalar_select %p2603, %s28, 1
      %s2605 = smul.addr %s2604, 28
      %s2606 = smul.addr %s2605, 8
      %s2607 = scalar_lea.vmem %s17, %s2606
      // Predicated region
      $region89: #{bottleneck2_forward.4} parent=87 // pred_check
        %p2608 = pneg %p408
      $region90: #{bottleneck2_forward.4} parent=87 // pred_check_branch
        %2610 = sbr.rel (%p2608) target = $region92
      $region91: #{bottleneck2_forward.4} parent=87 // pred_region
        _
      $region92: #{bottleneck2_forward.4} parent=87 // pred_fallthru
        _
    $region88: #{bottleneck2_forward.4} parent=5 // pred_fallthru
      _
    %p2611 = scmp.le.s32.totalorder 2, %s23
    // Predicated region
    $region93: #{bottleneck2_forward.4} parent=5 // pred_check
      %p2612 = pneg %p2611
    $region94: #{bottleneck2_forward.4} parent=5 // pred_check_branch
      %2614 = sbr.rel (%p2612) target = $region96
    $region95: #{bottleneck2_forward.4} parent=5 // pred_region
      %s2615 = ssub.s32 %s23, 2
      // Predicated region
      $region97: #{bottleneck2_forward.4} parent=95 // pred_check
        %p2616 = pneg %p414
      $region98: #{bottleneck2_forward.4} parent=95 // pred_check_branch
        %2618 = sbr.rel (%p2616) target = $region100
      $region99: #{bottleneck2_forward.4} parent=95 // pred_region
        %p2619 = scmp.lt.s32.totalorder %s29, 1
        %s2620 = scalar_select %p2619, %s29, 1
        %s2621 = smul.addr %s2620, 28
        %s2622 = smul.addr %s2621, 8
        %s2623 = scalar_lea.vmem %s17, %s2622
      $region100: #{bottleneck2_forward.4} parent=95 // pred_fallthru
        _
    $region96: #{bottleneck2_forward.4} parent=5 // pred_fallthru
      _
  $region6: #{bottleneck2_forward.4} parent=0 // loop_footer
    %s27 = sadd.s32 1, %s23
  $region7: #{bottleneck2_forward.4} parent=0 // loop_footer_branch
    %22 = sbr.rel target = $region3
  $region8: #{bottleneck2_forward.4} parent=0 // loop_exit
    _

// kernel: bottleneck2_forward.5
$region0: #{bottleneck2_forward.5}
  #allocation0 [shape = 'u32[]', space=smem, size = 0x4, offset = 0x4, fixed_abs, tag = 'smem constant byte address 0x4 - core index']
  #allocation1 [shape = 'u32[144,128]{1,0:T(1,128)}', space=vmem, size = 0x12000, scoped, tag = 'internal scratch']
  %s0 = inlined_call_operand.vmem [shape: f32[2,258,8], index: 0, kind: input, shape index: {}]
  %s1 = inlined_call_operand.vmem [shape: bf16[72,16], index: 1, kind: input, shape index: {}]
  %s2 = inlined_call_operand.vmem [shape: f32[1,16], index: 2, kind: input, shape index: {}]
  %s3 = inlined_call_operand.vmem [shape: f32[1,16], index: 3, kind: input, shape index: {}]
  %s4 = inlined_call_operand.vmem [shape: f32[2,224,16], index: 4, kind: input, shape index: {}]
  %s5 = inlined_call_operand.vmem [shape: f32[2,224,16], index: 5, kind: output, shape index: {}]
  %s6 = sld [smem:[#allocation0]]
  $region53: #{bottleneck2_forward.5} parent=0
    _
  %s8 = ssub.s32 1, %s6
  %s9 = scalar_select 0, %s8, %s6
  loop: start=0, step=1, limit=4
  $region2: #{bottleneck2_forward.5} parent=0 // loop_pre_header
    _
  $region3: #{bottleneck2_forward.5} parent=0 // loop_header
    %s11 = sphi 0, %s15
    %p12 = scmp.ge.s32.totalorder %s11, 4
    %s21 = sphi 0, %s23
    %s24 = sphi 0, %s21
    %s25 = sphi 0, %s24
    %s41 = sphi 0, %s25
    %s45 = sphi 0, %s45
    %s47 = sphi 0, %s45
    %s48 = sphi 0, %s47
    %s62 = sphi 0, %s48
    %s66 = sphi 0, %s66
    %s68 = sphi 0, %s66
    %s69 = sphi 0, %s68
    %s83 = sphi 0, %s69
    %s87 = sphi 0, %s87
    %s89 = sphi 0, %s87
    %s90 = sphi 0, %s89
    %s104 = sphi 0, %s90
    %s110 = sphi 0, %s112
    %s113 = sphi 0, %s110
    %s114 = sphi 0, %s113
    %s130 = sphi 0, %s114
    %s136 = sphi 0, %s138
    %s139 = sphi 0, %s136
    %s140 = sphi 0, %s139
    %s156 = sphi 0, %s140
  $region4: #{bottleneck2_forward.5} parent=0 // loop_header_branch
    %14 = sbr.rel (%p12) target = $region8
  $region5: #{bottleneck2_forward.5} parent=0 // loop_body
    %s16 = ssub.s32 %s11, 1
    %s17 = ssub.s32 %s11, 2
    %s18 = sadd.s32 %s11, 1
    %s19 = ssub.s32 %s11, %s18
    %p20 = scmp.eq.s32.totalorder %s19, 0
    %s22 = sadd.s32 %s21, 1
    %s23 = scalar_select %p20, %s21, %s22
    %p26 = pneg %p20
    %p27 = scmp.eq.s32.totalorder %s11, 1
    %p28 = por %p26, %p27
    %p29 = scmp.ne.s32.totalorder %s21, %s24
    %p30 = scmp.eq.s32.totalorder %s11, 0
    %p31 = por %p29, %p30
    %p32 = scmp.ne.s32.totalorder %s21, %s24
    %p33 = scmp.eq.s32.totalorder %s16, 1
    %p34 = por %p32, %p33
    %p35 = scmp.ne.s32.totalorder %s24, %s25
    %p36 = scmp.eq.s32.totalorder %s16, 0
    %p37 = por %p35, %p36
    %p38 = scmp.ne.s32.totalorder %s24, %s25
    %p39 = scmp.eq.s32.totalorder %s17, 1
    %p40 = por %p38, %p39
    %p42 = scmp.ne.s32.totalorder %s25, %s41
    %p43 = scmp.eq.s32.totalorder %s17, 0
    %p44 = por %p42, %p43
    %s46 = sadd.s32 %s45, 1
    %p49 = scmp.eq.s32.totalorder %s11, 1
    %p50 = scmp.ne.s32.totalorder %s45, %s47
    %p51 = scmp.eq.s32.totalorder %s11, 0
    %p52 = por %p50, %p51
    %p53 = scmp.ne.s32.totalorder %s45, %s47
    %p54 = scmp.eq.s32.totalorder %s16, 1
    %p55 = por %p53, %p54
    %p56 = scmp.ne.s32.totalorder %s47, %s48
    %p57 = scmp.eq.s32.totalorder %s16, 0
    %p58 = por %p56, %p57
    %p59 = scmp.ne.s32.totalorder %s47, %s48
    %p60 = scmp.eq.s32.totalorder %s17, 1
    %p61 = por %p59, %p60
    %p63 = scmp.ne.s32.totalorder %s48, %s62
    %p64 = scmp.eq.s32.totalorder %s17, 0
    %p65 = por %p63, %p64
    %s67 = sadd.s32 %s66, 1
    %p70 = scmp.eq.s32.totalorder %s11, 1
    %p71 = scmp.ne.s32.totalorder %s66, %s68
    %p72 = scmp.eq.s32.totalorder %s11, 0
    %p73 = por %p71, %p72
    %p74 = scmp.ne.s32.totalorder %s66, %s68
    %p75 = scmp.eq.s32.totalorder %s16, 1
    %p76 = por %p74, %p75
    %p77 = scmp.ne.s32.totalorder %s68, %s69
    %p78 = scmp.eq.s32.totalorder %s16, 0
    %p79 = por %p77, %p78
    %p80 = scmp.ne.s32.totalorder %s68, %s69
    %p81 = scmp.eq.s32.totalorder %s17, 1
    %p82 = por %p80, %p81
    %p84 = scmp.ne.s32.totalorder %s69, %s83
    %p85 = scmp.eq.s32.totalorder %s17, 0
    %p86 = por %p84, %p85
    %s88 = sadd.s32 %s87, 1
    %p91 = scmp.eq.s32.totalorder %s11, 1
    %p92 = scmp.ne.s32.totalorder %s87, %s89
    %p93 = scmp.eq.s32.totalorder %s11, 0
    %p94 = por %p92, %p93
    %p95 = scmp.ne.s32.totalorder %s87, %s89
    %p96 = scmp.eq.s32.totalorder %s16, 1
    %p97 = por %p95, %p96
    %p98 = scmp.ne.s32.totalorder %s89, %s90
    %p99 = scmp.eq.s32.totalorder %s16, 0
    %p100 = por %p98, %p99
    %p101 = scmp.ne.s32.totalorder %s89, %s90
    %p102 = scmp.eq.s32.totalorder %s17, 1
    %p103 = por %p101, %p102
    %p105 = scmp.ne.s32.totalorder %s90, %s104
    %p106 = scmp.eq.s32.totalorder %s17, 0
    %p107 = por %p105, %p106
    %s108 = ssub.s32 %s11, %s18
    %p109 = scmp.eq.s32.totalorder %s108, 0
    %s111 = sadd.s32 %s110, 1
    %s112 = scalar_select %p109, %s110, %s111
    %p115 = pneg %p109
    %p116 = scmp.eq.s32.totalorder %s11, 1
    %p117 = por %p115, %p116
    %p118 = scmp.ne.s32.totalorder %s110, %s113
    %p119 = scmp.eq.s32.totalorder %s11, 0
    %p120 = por %p118, %p119
    %p121 = scmp.ne.s32.totalorder %s110, %s113
    %p122 = scmp.eq.s32.totalorder %s16, 1
    %p123 = por %p121, %p122
    %p124 = scmp.ne.s32.totalorder %s113, %s114
    %p125 = scmp.eq.s32.totalorder %s16, 0
    %p126 = por %p124, %p125
    %p127 = scmp.ne.s32.totalorder %s113, %s114
    %p128 = scmp.eq.s32.totalorder %s17, 1
    %p129 = por %p127, %p128
    %p131 = scmp.ne.s32.totalorder %s114, %s130
    %p132 = scmp.eq.s32.totalorder %s17, 0
    %p133 = por %p131, %p132
    %s134 = ssub.s32 %s11, %s18
    %p135 = scmp.eq.s32.totalorder %s134, 0
    %s137 = sadd.s32 %s136, 1
    %s138 = scalar_select %p135, %s136, %s137
    %p141 = pneg %p135
    %p142 = scmp.eq.s32.totalorder %s11, 1
    %p143 = por %p141, %p142
    %p144 = scmp.ne.s32.totalorder %s136, %s139
    %p145 = scmp.eq.s32.totalorder %s11, 0
    %p146 = por %p144, %p145
    %p147 = scmp.ne.s32.totalorder %s136, %s139
    %p148 = scmp.eq.s32.totalorder %s16, 1
    %p149 = por %p147, %p148
    %p150 = scmp.ne.s32.totalorder %s139, %s140
    %p151 = scmp.eq.s32.totalorder %s16, 0
    %p152 = por %p150, %p151
    %p153 = scmp.ne.s32.totalorder %s139, %s140
    %p154 = scmp.eq.s32.totalorder %s17, 1
    %p155 = por %p153, %p154
    %p157 = scmp.ne.s32.totalorder %s140, %s156
    %p158 = scmp.eq.s32.totalorder %s17, 0
    %p159 = por %p157, %p158
    %p160 = scmp.le.s32.totalorder 1, %s11
    %p161 = scmp.lt.s32.totalorder %s11, 3
    %p162 = pnand %p160, %p161
    %p163 = pneg %p162
    // Predicated region
    $region9: #{bottleneck2_forward.5} parent=5 // pred_check
      _
    $region10: #{bottleneck2_forward.5} parent=5 // pred_check_branch
      %165 = sbr.rel (%p162) target = $region12
    $region11: #{bottleneck2_forward.5} parent=5 // pred_region
      %s166 = ssub.s32 %s11, 1
      // Predicated region
      $region13: #{bottleneck2_forward.5} parent=11 // pred_check
        %p167 = pneg %p58
      $region14: #{bottleneck2_forward.5} parent=11 // pred_check_branch
        %169 = sbr.rel (%p167) target = $region16
      $region15: #{bottleneck2_forward.5} parent=11 // pred_region
        _
      $region16: #{bottleneck2_forward.5} parent=11 // pred_fallthru
        _
      // Predicated region
      $region17: #{bottleneck2_forward.5} parent=11 // pred_check
        %p170 = pneg %p79
      $region18: #{bottleneck2_forward.5} parent=11 // pred_check_branch
        %172 = sbr.rel (%p170) target = $region20
      $region19: #{bottleneck2_forward.5} parent=11 // pred_region
        _
      $region20: #{bottleneck2_forward.5} parent=11 // pred_fallthru
        _
      // Predicated region
      $region21: #{bottleneck2_forward.5} parent=11 // pred_check
        %p173 = pneg %p100
      $region22: #{bottleneck2_forward.5} parent=11 // pred_check_branch
        %175 = sbr.rel (%p173) target = $region24
      $region23: #{bottleneck2_forward.5} parent=11 // pred_region
        _
      $region24: #{bottleneck2_forward.5} parent=11 // pred_fallthru
        _
    $region12: #{bottleneck2_forward.5} parent=5 // pred_fallthru
      _
    %p176 = scmp.lt.s32.totalorder %s11, 2
    // Predicated region
    $region25: #{bottleneck2_forward.5} parent=5 // pred_check
      %p177 = pneg %p176
    $region26: #{bottleneck2_forward.5} parent=5 // pred_check_branch
      %179 = sbr.rel (%p177) target = $region28
    $region27: #{bottleneck2_forward.5} parent=5 // pred_region
      // Predicated region
      $region29: #{bottleneck2_forward.5} parent=27 // pred_check
        %p180 = pneg %p31
      $region30: #{bottleneck2_forward.5} parent=27 // pred_check_branch
        %182 = sbr.rel (%p180) target = $region32
      $region31: #{bottleneck2_forward.5} parent=27 // pred_region
        %p183 = scmp.lt.s32.totalorder %s11, 1
        %s184 = scalar_select %p183, %s11, 1
        %s185 = smul.addr %s184, 33
        %s186 = smul.addr %s185, 8
        %s187 = scalar_lea.vmem %s0, %s186
      $region32: #{bottleneck2_forward.5} parent=27 // pred_fallthru
        _
      // Predicated region
      $region33: #{bottleneck2_forward.5} parent=27 // pred_check
        %p188 = pneg %p120
      $region34: #{bottleneck2_forward.5} parent=27 // pred_check_branch
        %190 = sbr.rel (%p188) target = $region36
      $region35: #{bottleneck2_forward.5} parent=27 // pred_region
        %p191 = scmp.lt.s32.totalorder %s11, 1
        %s192 = scalar_select %p191, %s11, 1
        %s193 = smul.addr %s192, 28
        %s194 = smul.addr %s193, 8
        %s195 = scalar_lea.vmem %s4, %s194
      $region36: #{bottleneck2_forward.5} parent=27 // pred_fallthru
        _
    $region28: #{bottleneck2_forward.5} parent=5 // pred_fallthru
      _
    %p196 = scmp.le.s32.totalorder 1, %s11
    %p197 = scmp.lt.s32.totalorder %s11, 3
    %p198 = pnand %p196, %p197
    %p199 = pneg %p198
    // Predicated region
    $region37: #{bottleneck2_forward.5} parent=5 // pred_check
      _
    $region38: #{bottleneck2_forward.5} parent=5 // pred_check_branch
      %201 = sbr.rel (%p198) target = $region40
    $region39: #{bottleneck2_forward.5} parent=5 // pred_region
      %s202 = ssub.s32 %s11, 1
      %p203 = scmp.lt.s32.totalorder %s16, 1
      %s204 = scalar_select %p203, %s16, 1
      %s205 = smul.addr %s204, 33
      %s206 = smul.addr %s205, 8
      %s207 = scalar_lea.vmem %s0, %s206
      %p208 = pneg %p37
      %p209 = pneg %p34
      %p210 = pneg %p58
      %p211 = pneg %p55
      %p212 = pneg %p79
      %p213 = pneg %p76
      %p214 = pneg %p100
      %p215 = pneg %p97
      %p216 = scmp.lt.s32.totalorder %s16, 1
      %s217 = scalar_select %p216, %s16, 1
      %s218 = smul.addr %s217, 28
      %s219 = smul.addr %s218, 8
      %s220 = scalar_lea.vmem %s4, %s219
      %p221 = pneg %p126
      %p222 = pneg %p123
      %p223 = pneg %p152
      %p224 = pneg %p149
      %p225 = scmp.lt.s32.totalorder %s16, 1
      %s226 = scalar_select %p225, %s16, 1
      %s227 = smul.addr %s226, 28
      %s228 = smul.addr %s227, 8
      %s229 = scalar_lea.vmem %s5, %s228
      %p230 = scmp.lt.s32.totalorder %s16, 1
      %s231 = scalar_select %p230, %s16, 1
      %s232 = smul.addr %s231, 33
      %s233 = smul.addr %s232, 8
      %s234 = scalar_lea.vmem %s0, %s233
      %p235 = scmp.lt.s32.totalorder %s16, 1
      %s236 = scalar_select %p235, %s16, 1
      %s237 = smul.addr %s236, 28
      %s238 = smul.addr %s237, 8
      %s239 = scalar_lea.vmem %s4, %s238
      %p240 = scmp.lt.s32.totalorder %s16, 1
      %s241 = scalar_select %p240, %s16, 1
      %s242 = smul.addr %s241, 28
      %s243 = smul.addr %s242, 8
      %s244 = scalar_lea.vmem %s5, %s243
      %v246 = vld [vmem:[%s234] sm:$0xff]
      %v247 = vld [vmem:[%s234 + $0x8] sm:$0xff]
      %v248 = vld [vmem:[%s234 + $0x10] sm:$0xff]
      %v249 = vld [vmem:[%s234 + $0x18] sm:$0xff]
      %v250 = vld [vmem:[%s234 + $0x20] sm:$0xff]
      %v251 = vld [vmem:[%s234 + $0x28] sm:$0xff]
      %v252 = vld [vmem:[%s234 + $0x30] sm:$0xff]
      %v253 = vld [vmem:[%s234 + $0x38] sm:$0xff]
      %v254 = vld [vmem:[%s234 + $0x40] sm:$0xff]
      %v255 = vld [vmem:[%s234 + $0x48] sm:$0xff]
      %v256 = vld [vmem:[%s234 + $0x50] sm:$0xff]
      %v257 = vld [vmem:[%s234 + $0x58] sm:$0xff]
      %v258 = vld [vmem:[%s234 + $0x60] sm:$0xff]
      %v259 = vld [vmem:[%s234 + $0x68] sm:$0xff]
      %v260 = vld [vmem:[%s234 + $0x70] sm:$0xff]
      %v261 = vld [vmem:[%s234 + $0x78] sm:$0xff]
      %v262 = vld [vmem:[%s234 + $0x80] sm:$0xff]
      %v263 = vld [vmem:[%s234 + $0x88] sm:$0xff]
      %v264 = vld [vmem:[%s234 + $0x90] sm:$0xff]
      %v265 = vld [vmem:[%s234 + $0x98] sm:$0xff]
      %v266 = vld [vmem:[%s234 + $0xa0] sm:$0xff]
      %v267 = vld [vmem:[%s234 + $0xa8] sm:$0xff]
      %v268 = vld [vmem:[%s234 + $0xb0] sm:$0xff]
      %v269 = vld [vmem:[%s234 + $0xb8] sm:$0xff]
      %v270 = vld [vmem:[%s234 + $0xc0] sm:$0xff]
      %v271 = vld [vmem:[%s234 + $0xc8] sm:$0xff]
      %v272 = vld [vmem:[%s234 + $0xd0] sm:$0xff]
      %v273 = vld [vmem:[%s234 + $0xd8] sm:$0xff]
      %v274 = vld [vmem:[%s234 + $0xe0] sm:$0xff]
      %v275 = vld [vmem:[%s234 + $0xe8] sm:$0xff]
      %v276 = vld [vmem:[%s234 + $0xf0] sm:$0xff]
      %v277 = vld [vmem:[%s234 + $0xf8] sm:$0xff]
      %v278 = vld [vmem:[%s234 + $0x100] sm:$0x3]
      %vm308 = vcmask 1046528
      %v309 = vrot.slane %v246, 1
      %v310 = vrot.slane %v247, 1
      %v311 = vsel %vm308, %v309, %v310
      %v312 = vrot.slane %v248, 1
      %v313 = vsel %vm308, %v310, %v312
      %v314 = vrot.slane %v249, 1
      %v315 = vsel %vm308, %v312, %v314
      %v316 = vrot.slane %v250, 1
      %v317 = vsel %vm308, %v314, %v316
      %v318 = vrot.slane %v251, 1
      %v319 = vsel %vm308, %v316, %v318
      %v320 = vrot.slane %v252, 1
      %v321 = vsel %vm308, %v318, %v320
      %v322 = vrot.slane %v253, 1
      %v323 = vsel %vm308, %v320, %v322
      %v324 = vrot.slane %v254, 1
      %v325 = vsel %vm308, %v322, %v324
      %v326 = vrot.slane %v255, 1
      %v327 = vsel %vm308, %v324, %v326
      %v328 = vrot.slane %v256, 1
      %v329 = vsel %vm308, %v326, %v328
      %v330 = vrot.slane %v257, 1
      %v331 = vsel %vm308, %v328, %v330
      %v332 = vrot.slane %v258, 1
      %v333 = vsel %vm308, %v330, %v332
      %v334 = vrot.slane %v259, 1
      %v335 = vsel %vm308, %v332, %v334
      %v336 = vrot.slane %v260, 1
      %v337 = vsel %vm308, %v334, %v336
      %v338 = vrot.slane %v261, 1
      %v339 = vsel %vm308, %v336, %v338
      %v340 = vrot.slane %v262, 1
      %v341 = vsel %vm308, %v338, %v340
      %v342 = vrot.slane %v263, 1
      %v343 = vsel %vm308, %v340, %v342
      %v344 = vrot.slane %v264, 1
      %v345 = vsel %vm308, %v342, %v344
      %v346 = vrot.slane %v265, 1
      %v347 = vsel %vm308, %v344, %v346
      %v348 = vrot.slane %v266, 1
      %v349 = vsel %vm308, %v346, %v348
      %v350 = vrot.slane %v267, 1
      %v351 = vsel %vm308, %v348, %v350
      %v352 = vrot.slane %v268, 1
      %v353 = vsel %vm308, %v350, %v352
      %v354 = vrot.slane %v269, 1
      %v355 = vsel %vm308, %v352, %v354
      %v356 = vrot.slane %v270, 1
      %v357 = vsel %vm308, %v354, %v356
      %v358 = vrot.slane %v271, 1
      %v359 = vsel %vm308, %v356, %v358
      %v360 = vrot.slane %v272, 1
      %v361 = vsel %vm308, %v358, %v360
      %v362 = vrot.slane %v273, 1
      %v363 = vsel %vm308, %v360, %v362
      %v364 = vrot.slane %v274, 1
      %v365 = vsel %vm308, %v362, %v364
      %366 = vrot.lane.b32.xlu0 %v311, 8
      %v367 = vpop.permute.xlu0 %366
      %368 = vrot.lane.b32.xlu0 %v313, 8
      %v369 = vpop.permute.xlu0 %368
      %370 = vrot.lane.b32.xlu0 %v315, 8
      %v371 = vpop.permute.xlu0 %370
      %372 = vrot.lane.b32.xlu0 %v317, 8
      %v373 = vpop.permute.xlu0 %372
      %374 = vrot.lane.b32.xlu0 %v319, 8
      %v375 = vpop.permute.xlu0 %374
      %376 = vrot.lane.b32.xlu0 %v321, 8
      %v377 = vpop.permute.xlu0 %376
      %378 = vrot.lane.b32.xlu0 %v323, 8
      %v379 = vpop.permute.xlu0 %378
      %380 = vrot.lane.b32.xlu0 %v325, 8
      %v381 = vpop.permute.xlu0 %380
      %382 = vrot.lane.b32.xlu0 %v327, 8
      %v383 = vpop.permute.xlu0 %382
      %384 = vrot.lane.b32.xlu0 %v329, 8
      %v385 = vpop.permute.xlu0 %384
      %386 = vrot.lane.b32.xlu0 %v331, 8
      %v387 = vpop.permute.xlu0 %386
      %388 = vrot.lane.b32.xlu0 %v333, 8
      %v389 = vpop.permute.xlu0 %388
      %390 = vrot.lane.b32.xlu0 %v335, 8
      %v391 = vpop.permute.xlu0 %390
      %392 = vrot.lane.b32.xlu0 %v337, 8
      %v393 = vpop.permute.xlu0 %392
      %394 = vrot.lane.b32.xlu0 %v339, 8
      %v395 = vpop.permute.xlu0 %394
      %396 = vrot.lane.b32.xlu0 %v341, 8
      %v397 = vpop.permute.xlu0 %396
      %398 = vrot.lane.b32.xlu0 %v343, 8
      %v399 = vpop.permute.xlu0 %398
      %400 = vrot.lane.b32.xlu0 %v345, 8
      %v401 = vpop.permute.xlu0 %400
      %402 = vrot.lane.b32.xlu0 %v347, 8
      %v403 = vpop.permute.xlu0 %402
      %404 = vrot.lane.b32.xlu0 %v349, 8
      %v405 = vpop.permute.xlu0 %404
      %406 = vrot.lane.b32.xlu0 %v351, 8
      %v407 = vpop.permute.xlu0 %406
      %408 = vrot.lane.b32.xlu0 %v353, 8
      %v409 = vpop.permute.xlu0 %408
      %410 = vrot.lane.b32.xlu0 %v355, 8
      %v411 = vpop.permute.xlu0 %410
      %412 = vrot.lane.b32.xlu0 %v357, 8
      %v413 = vpop.permute.xlu0 %412
      %414 = vrot.lane.b32.xlu0 %v359, 8
      %v415 = vpop.permute.xlu0 %414
      %416 = vrot.lane.b32.xlu0 %v361, 8
      %v417 = vpop.permute.xlu0 %416
      %418 = vrot.lane.b32.xlu0 %v363, 8
      %v419 = vpop.permute.xlu0 %418
      %420 = vrot.lane.b32.xlu0 %v365, 8
      %v421 = vpop.permute.xlu0 %420
      %vm450 = vcmask 1045504
      %v451 = vrot.slane %v246, 2
      %v452 = vrot.slane %v247, 2
      %v453 = vsel %vm450, %v451, %v452
      %v454 = vrot.slane %v248, 2
      %v455 = vsel %vm450, %v452, %v454
      %v456 = vrot.slane %v249, 2
      %v457 = vsel %vm450, %v454, %v456
      %v458 = vrot.slane %v250, 2
      %v459 = vsel %vm450, %v456, %v458
      %v460 = vrot.slane %v251, 2
      %v461 = vsel %vm450, %v458, %v460
      %v462 = vrot.slane %v252, 2
      %v463 = vsel %vm450, %v460, %v462
      %v464 = vrot.slane %v253, 2
      %v465 = vsel %vm450, %v462, %v464
      %v466 = vrot.slane %v254, 2
      %v467 = vsel %vm450, %v464, %v466
      %v468 = vrot.slane %v255, 2
      %v469 = vsel %vm450, %v466, %v468
      %v470 = vrot.slane %v256, 2
      %v471 = vsel %vm450, %v468, %v470
      %v472 = vrot.slane %v257, 2
      %v473 = vsel %vm450, %v470, %v472
      %v474 = vrot.slane %v258, 2
      %v475 = vsel %vm450, %v472, %v474
      %v476 = vrot.slane %v259, 2
      %v477 = vsel %vm450, %v474, %v476
      %v478 = vrot.slane %v260, 2
      %v479 = vsel %vm450, %v476, %v478
      %v480 = vrot.slane %v261, 2
      %v481 = vsel %vm450, %v478, %v480
      %v482 = vrot.slane %v262, 2
      %v483 = vsel %vm450, %v480, %v482
      %v484 = vrot.slane %v263, 2
      %v485 = vsel %vm450, %v482, %v484
      %v486 = vrot.slane %v264, 2
      %v487 = vsel %vm450, %v484, %v486
      %v488 = vrot.slane %v265, 2
      %v489 = vsel %vm450, %v486, %v488
      %v490 = vrot.slane %v266, 2
      %v491 = vsel %vm450, %v488, %v490
      %v492 = vrot.slane %v267, 2
      %v493 = vsel %vm450, %v490, %v492
      %v494 = vrot.slane %v268, 2
      %v495 = vsel %vm450, %v492, %v494
      %v496 = vrot.slane %v269, 2
      %v497 = vsel %vm450, %v494, %v496
      %v498 = vrot.slane %v270, 2
      %v499 = vsel %vm450, %v496, %v498
      %v500 = vrot.slane %v271, 2
      %v501 = vsel %vm450, %v498, %v500
      %v502 = vrot.slane %v272, 2
      %v503 = vsel %vm450, %v500, %v502
      %v504 = vrot.slane %v273, 2
      %v505 = vsel %vm450, %v502, %v504
      %v506 = vrot.slane %v274, 2
      %v507 = vsel %vm450, %v504, %v506
      %508 = vrot.lane.b32.xlu0 %v453, 16
      %v509 = vpop.permute.xlu0 %508
      %510 = vrot.lane.b32.xlu0 %v455, 16
      %v511 = vpop.permute.xlu0 %510
      %512 = vrot.lane.b32.xlu0 %v457, 16
      %v513 = vpop.permute.xlu0 %512
      %514 = vrot.lane.b32.xlu0 %v459, 16
      %v515 = vpop.permute.xlu0 %514
      %516 = vrot.lane.b32.xlu0 %v461, 16
      %v517 = vpop.permute.xlu0 %516
      %518 = vrot.lane.b32.xlu0 %v463, 16
      %v519 = vpop.permute.xlu0 %518
      %520 = vrot.lane.b32.xlu0 %v465, 16
      %v521 = vpop.permute.xlu0 %520
      %522 = vrot.lane.b32.xlu0 %v467, 16
      %v523 = vpop.permute.xlu0 %522
      %524 = vrot.lane.b32.xlu0 %v469, 16
      %v525 = vpop.permute.xlu0 %524
      %526 = vrot.lane.b32.xlu0 %v471, 16
      %v527 = vpop.permute.xlu0 %526
      %528 = vrot.lane.b32.xlu0 %v473, 16
      %v529 = vpop.permute.xlu0 %528
      %530 = vrot.lane.b32.xlu0 %v475, 16
      %v531 = vpop.permute.xlu0 %530
      %532 = vrot.lane.b32.xlu0 %v477, 16
      %v533 = vpop.permute.xlu0 %532
      %534 = vrot.lane.b32.xlu0 %v479, 16
      %v535 = vpop.permute.xlu0 %534
      %536 = vrot.lane.b32.xlu0 %v481, 16
      %v537 = vpop.permute.xlu0 %536
      %538 = vrot.lane.b32.xlu0 %v483, 16
      %v539 = vpop.permute.xlu0 %538
      %540 = vrot.lane.b32.xlu0 %v485, 16
      %v541 = vpop.permute.xlu0 %540
      %542 = vrot.lane.b32.xlu0 %v487, 16
      %v543 = vpop.permute.xlu0 %542
      %544 = vrot.lane.b32.xlu0 %v489, 16
      %v545 = vpop.permute.xlu0 %544
      %546 = vrot.lane.b32.xlu0 %v491, 16
      %v547 = vpop.permute.xlu0 %546
      %548 = vrot.lane.b32.xlu0 %v493, 16
      %v549 = vpop.permute.xlu0 %548
      %550 = vrot.lane.b32.xlu0 %v495, 16
      %v551 = vpop.permute.xlu0 %550
      %552 = vrot.lane.b32.xlu0 %v497, 16
      %v553 = vpop.permute.xlu0 %552
      %554 = vrot.lane.b32.xlu0 %v499, 16
      %v555 = vpop.permute.xlu0 %554
      %556 = vrot.lane.b32.xlu0 %v501, 16
      %v557 = vpop.permute.xlu0 %556
      %558 = vrot.lane.b32.xlu0 %v503, 16
      %v559 = vpop.permute.xlu0 %558
      %560 = vrot.lane.b32.xlu0 %v505, 16
      %v561 = vpop.permute.xlu0 %560
      %562 = vrot.lane.b32.xlu0 %v507, 16
      %v563 = vpop.permute.xlu0 %562
      %593 = vrot.lane.b32.xlu0 %v248, 24
      %v594 = vpop.permute.xlu0 %593
      %595 = vrot.lane.b32.xlu0 %v249, 24
      %v596 = vpop.permute.xlu0 %595
      %597 = vrot.lane.b32.xlu0 %v250, 24
      %v598 = vpop.permute.xlu0 %597
      %599 = vrot.lane.b32.xlu0 %v251, 24
      %v600 = vpop.permute.xlu0 %599
      %601 = vrot.lane.b32.xlu0 %v252, 24
      %v602 = vpop.permute.xlu0 %601
      %603 = vrot.lane.b32.xlu0 %v253, 24
      %v604 = vpop.permute.xlu0 %603
      %605 = vrot.lane.b32.xlu0 %v254, 24
      %v606 = vpop.permute.xlu0 %605
      %607 = vrot.lane.b32.xlu0 %v255, 24
      %v608 = vpop.permute.xlu0 %607
      %609 = vrot.lane.b32.xlu0 %v256, 24
      %v610 = vpop.permute.xlu0 %609
      %611 = vrot.lane.b32.xlu0 %v257, 24
      %v612 = vpop.permute.xlu0 %611
      %613 = vrot.lane.b32.xlu0 %v258, 24
      %v614 = vpop.permute.xlu0 %613
      %615 = vrot.lane.b32.xlu0 %v259, 24
      %v616 = vpop.permute.xlu0 %615
      %617 = vrot.lane.b32.xlu0 %v260, 24
      %v618 = vpop.permute.xlu0 %617
      %619 = vrot.lane.b32.xlu0 %v261, 24
      %v620 = vpop.permute.xlu0 %619
      %621 = vrot.lane.b32.xlu0 %v262, 24
      %v622 = vpop.permute.xlu0 %621
      %623 = vrot.lane.b32.xlu0 %v263, 24
      %v624 = vpop.permute.xlu0 %623
      %625 = vrot.lane.b32.xlu0 %v264, 24
      %v626 = vpop.permute.xlu0 %625
      %627 = vrot.lane.b32.xlu0 %v265, 24
      %v628 = vpop.permute.xlu0 %627
      %629 = vrot.lane.b32.xlu0 %v266, 24
      %v630 = vpop.permute.xlu0 %629
      %631 = vrot.lane.b32.xlu0 %v267, 24
      %v632 = vpop.permute.xlu0 %631
      %633 = vrot.lane.b32.xlu0 %v268, 24
      %v634 = vpop.permute.xlu0 %633
      %635 = vrot.lane.b32.xlu0 %v269, 24
      %v636 = vpop.permute.xlu0 %635
      %637 = vrot.lane.b32.xlu0 %v270, 24
      %v638 = vpop.permute.xlu0 %637
      %639 = vrot.lane.b32.xlu0 %v271, 24
      %v640 = vpop.permute.xlu0 %639
      %641 = vrot.lane.b32.xlu0 %v272, 24
      %v642 = vpop.permute.xlu0 %641
      %643 = vrot.lane.b32.xlu0 %v273, 24
      %v644 = vpop.permute.xlu0 %643
      %645 = vrot.lane.b32.xlu0 %v274, 24
      %v646 = vpop.permute.xlu0 %645
      %647 = vrot.lane.b32.xlu0 %v275, 24
      %v648 = vpop.permute.xlu0 %647
      %v678 = vrot.slane %v275, 1
      %v679 = vsel %vm308, %v364, %v678
      %v680 = vrot.slane %v276, 1
      %v681 = vsel %vm308, %v678, %v680
      %682 = vrot.lane.b32.xlu0 %v315, 32
      %v683 = vpop.permute.xlu0 %682
      %684 = vrot.lane.b32.xlu0 %v317, 32
      %v685 = vpop.permute.xlu0 %684
      %686 = vrot.lane.b32.xlu0 %v319, 32
      %v687 = vpop.permute.xlu0 %686
      %688 = vrot.lane.b32.xlu0 %v321, 32
      %v689 = vpop.permute.xlu0 %688
      %690 = vrot.lane.b32.xlu0 %v323, 32
      %v691 = vpop.permute.xlu0 %690
      %692 = vrot.lane.b32.xlu0 %v325, 32
      %v693 = vpop.permute.xlu0 %692
      %694 = vrot.lane.b32.xlu0 %v327, 32
      %v695 = vpop.permute.xlu0 %694
      %696 = vrot.lane.b32.xlu0 %v329, 32
      %v697 = vpop.permute.xlu0 %696
      %698 = vrot.lane.b32.xlu0 %v331, 32
      %v699 = vpop.permute.xlu0 %698
      %700 = vrot.lane.b32.xlu0 %v333, 32
      %v701 = vpop.permute.xlu0 %700
      %702 = vrot.lane.b32.xlu0 %v335, 32
      %v703 = vpop.permute.xlu0 %702
      %704 = vrot.lane.b32.xlu0 %v337, 32
      %v705 = vpop.permute.xlu0 %704
      %706 = vrot.lane.b32.xlu0 %v339, 32
      %v707 = vpop.permute.xlu0 %706
      %708 = vrot.lane.b32.xlu0 %v341, 32
      %v709 = vpop.permute.xlu0 %708
      %710 = vrot.lane.b32.xlu0 %v343, 32
      %v711 = vpop.permute.xlu0 %710
      %712 = vrot.lane.b32.xlu0 %v345, 32
      %v713 = vpop.permute.xlu0 %712
      %714 = vrot.lane.b32.xlu0 %v347, 32
      %v715 = vpop.permute.xlu0 %714
      %716 = vrot.lane.b32.xlu0 %v349, 32
      %v717 = vpop.permute.xlu0 %716
      %718 = vrot.lane.b32.xlu0 %v351, 32
      %v719 = vpop.permute.xlu0 %718
      %720 = vrot.lane.b32.xlu0 %v353, 32
      %v721 = vpop.permute.xlu0 %720
      %722 = vrot.lane.b32.xlu0 %v355, 32
      %v723 = vpop.permute.xlu0 %722
      %724 = vrot.lane.b32.xlu0 %v357, 32
      %v725 = vpop.permute.xlu0 %724
      %726 = vrot.lane.b32.xlu0 %v359, 32
      %v727 = vpop.permute.xlu0 %726
      %728 = vrot.lane.b32.xlu0 %v361, 32
      %v729 = vpop.permute.xlu0 %728
      %730 = vrot.lane.b32.xlu0 %v363, 32
      %v731 = vpop.permute.xlu0 %730
      %732 = vrot.lane.b32.xlu0 %v365, 32
      %v733 = vpop.permute.xlu0 %732
      %734 = vrot.lane.b32.xlu0 %v679, 32
      %v735 = vpop.permute.xlu0 %734
      %736 = vrot.lane.b32.xlu0 %v681, 32
      %v737 = vpop.permute.xlu0 %736
      %v766 = vrot.slane %v275, 2
      %v767 = vsel %vm450, %v506, %v766
      %v768 = vrot.slane %v276, 2
      %v769 = vsel %vm450, %v766, %v768
      %770 = vrot.lane.b32.xlu0 %v457, 40
      %v771 = vpop.permute.xlu0 %770
      %772 = vrot.lane.b32.xlu0 %v459, 40
      %v773 = vpop.permute.xlu0 %772
      %774 = vrot.lane.b32.xlu0 %v461, 40
      %v775 = vpop.permute.xlu0 %774
      %776 = vrot.lane.b32.xlu0 %v463, 40
      %v777 = vpop.permute.xlu0 %776
      %778 = vrot.lane.b32.xlu0 %v465, 40
      %v779 = vpop.permute.xlu0 %778
      %780 = vrot.lane.b32.xlu0 %v467, 40
      %v781 = vpop.permute.xlu0 %780
      %782 = vrot.lane.b32.xlu0 %v469, 40
      %v783 = vpop.permute.xlu0 %782
      %784 = vrot.lane.b32.xlu0 %v471, 40
      %v785 = vpop.permute.xlu0 %784
      %786 = vrot.lane.b32.xlu0 %v473, 40
      %v787 = vpop.permute.xlu0 %786
      %788 = vrot.lane.b32.xlu0 %v475, 40
      %v789 = vpop.permute.xlu0 %788
      %790 = vrot.lane.b32.xlu0 %v477, 40
      %v791 = vpop.permute.xlu0 %790
      %792 = vrot.lane.b32.xlu0 %v479, 40
      %v793 = vpop.permute.xlu0 %792
      %794 = vrot.lane.b32.xlu0 %v481, 40
      %v795 = vpop.permute.xlu0 %794
      %796 = vrot.lane.b32.xlu0 %v483, 40
      %v797 = vpop.permute.xlu0 %796
      %798 = vrot.lane.b32.xlu0 %v485, 40
      %v799 = vpop.permute.xlu0 %798
      %800 = vrot.lane.b32.xlu0 %v487, 40
      %v801 = vpop.permute.xlu0 %800
      %802 = vrot.lane.b32.xlu0 %v489, 40
      %v803 = vpop.permute.xlu0 %802
      %804 = vrot.lane.b32.xlu0 %v491, 40
      %v805 = vpop.permute.xlu0 %804
      %806 = vrot.lane.b32.xlu0 %v493, 40
      %v807 = vpop.permute.xlu0 %806
      %808 = vrot.lane.b32.xlu0 %v495, 40
      %v809 = vpop.permute.xlu0 %808
      %810 = vrot.lane.b32.xlu0 %v497, 40
      %v811 = vpop.permute.xlu0 %810
      %812 = vrot.lane.b32.xlu0 %v499, 40
      %v813 = vpop.permute.xlu0 %812
      %814 = vrot.lane.b32.xlu0 %v501, 40
      %v815 = vpop.permute.xlu0 %814
      %816 = vrot.lane.b32.xlu0 %v503, 40
      %v817 = vpop.permute.xlu0 %816
      %818 = vrot.lane.b32.xlu0 %v505, 40
      %v819 = vpop.permute.xlu0 %818
      %820 = vrot.lane.b32.xlu0 %v507, 40
      %v821 = vpop.permute.xlu0 %820
      %822 = vrot.lane.b32.xlu0 %v767, 40
      %v823 = vpop.permute.xlu0 %822
      %824 = vrot.lane.b32.xlu0 %v769, 40
      %v825 = vpop.permute.xlu0 %824
      %855 = vrot.lane.b32.xlu0 %v250, 48
      %v856 = vpop.permute.xlu0 %855
      %857 = vrot.lane.b32.xlu0 %v251, 48
      %v858 = vpop.permute.xlu0 %857
      %859 = vrot.lane.b32.xlu0 %v252, 48
      %v860 = vpop.permute.xlu0 %859
      %861 = vrot.lane.b32.xlu0 %v253, 48
      %v862 = vpop.permute.xlu0 %861
      %863 = vrot.lane.b32.xlu0 %v254, 48
      %v864 = vpop.permute.xlu0 %863
      %865 = vrot.lane.b32.xlu0 %v255, 48
      %v866 = vpop.permute.xlu0 %865
      %867 = vrot.lane.b32.xlu0 %v256, 48
      %v868 = vpop.permute.xlu0 %867
      %869 = vrot.lane.b32.xlu0 %v257, 48
      %v870 = vpop.permute.xlu0 %869
      %871 = vrot.lane.b32.xlu0 %v258, 48
      %v872 = vpop.permute.xlu0 %871
      %873 = vrot.lane.b32.xlu0 %v259, 48
      %v874 = vpop.permute.xlu0 %873
      %875 = vrot.lane.b32.xlu0 %v260, 48
      %v876 = vpop.permute.xlu0 %875
      %877 = vrot.lane.b32.xlu0 %v261, 48
      %v878 = vpop.permute.xlu0 %877
      %879 = vrot.lane.b32.xlu0 %v262, 48
      %v880 = vpop.permute.xlu0 %879
      %881 = vrot.lane.b32.xlu0 %v263, 48
      %v882 = vpop.permute.xlu0 %881
      %883 = vrot.lane.b32.xlu0 %v264, 48
      %v884 = vpop.permute.xlu0 %883
      %885 = vrot.lane.b32.xlu0 %v265, 48
      %v886 = vpop.permute.xlu0 %885
      %887 = vrot.lane.b32.xlu0 %v266, 48
      %v888 = vpop.permute.xlu0 %887
      %889 = vrot.lane.b32.xlu0 %v267, 48
      %v890 = vpop.permute.xlu0 %889
      %891 = vrot.lane.b32.xlu0 %v268, 48
      %v892 = vpop.permute.xlu0 %891
      %893 = vrot.lane.b32.xlu0 %v269, 48
      %v894 = vpop.permute.xlu0 %893
      %895 = vrot.lane.b32.xlu0 %v270, 48
      %v896 = vpop.permute.xlu0 %895
      %897 = vrot.lane.b32.xlu0 %v271, 48
      %v898 = vpop.permute.xlu0 %897
      %899 = vrot.lane.b32.xlu0 %v272, 48
      %v900 = vpop.permute.xlu0 %899
      %901 = vrot.lane.b32.xlu0 %v273, 48
      %v902 = vpop.permute.xlu0 %901
      %903 = vrot.lane.b32.xlu0 %v274, 48
      %v904 = vpop.permute.xlu0 %903
      %905 = vrot.lane.b32.xlu0 %v275, 48
      %v906 = vpop.permute.xlu0 %905
      %907 = vrot.lane.b32.xlu0 %v276, 48
      %v908 = vpop.permute.xlu0 %907
      %909 = vrot.lane.b32.xlu0 %v277, 48
      %v910 = vpop.permute.xlu0 %909
      %v940 = vrot.slane %v277, 1
      %v941 = vsel %vm308, %v680, %v940
      %v942 = vrot.slane %v278, 1
      %v943 = vsel %vm308, %v940, %v942
      %944 = vrot.lane.b32.xlu0 %v319, 56
      %v945 = vpop.permute.xlu0 %944
      %946 = vrot.lane.b32.xlu0 %v321, 56
      %v947 = vpop.permute.xlu0 %946
      %948 = vrot.lane.b32.xlu0 %v323, 56
      %v949 = vpop.permute.xlu0 %948
      %950 = vrot.lane.b32.xlu0 %v325, 56
      %v951 = vpop.permute.xlu0 %950
      %952 = vrot.lane.b32.xlu0 %v327, 56
      %v953 = vpop.permute.xlu0 %952
      %954 = vrot.lane.b32.xlu0 %v329, 56
      %v955 = vpop.permute.xlu0 %954
      %956 = vrot.lane.b32.xlu0 %v331, 56
      %v957 = vpop.permute.xlu0 %956
      %958 = vrot.lane.b32.xlu0 %v333, 56
      %v959 = vpop.permute.xlu0 %958
      %960 = vrot.lane.b32.xlu0 %v335, 56
      %v961 = vpop.permute.xlu0 %960
      %962 = vrot.lane.b32.xlu0 %v337, 56
      %v963 = vpop.permute.xlu0 %962
      %964 = vrot.lane.b32.xlu0 %v339, 56
      %v965 = vpop.permute.xlu0 %964
      %966 = vrot.lane.b32.xlu0 %v341, 56
      %v967 = vpop.permute.xlu0 %966
      %968 = vrot.lane.b32.xlu0 %v343, 56
      %v969 = vpop.permute.xlu0 %968
      %970 = vrot.lane.b32.xlu0 %v345, 56
      %v971 = vpop.permute.xlu0 %970
      %972 = vrot.lane.b32.xlu0 %v347, 56
      %v973 = vpop.permute.xlu0 %972
      %974 = vrot.lane.b32.xlu0 %v349, 56
      %v975 = vpop.permute.xlu0 %974
      %976 = vrot.lane.b32.xlu0 %v351, 56
      %v977 = vpop.permute.xlu0 %976
      %978 = vrot.lane.b32.xlu0 %v353, 56
      %v979 = vpop.permute.xlu0 %978
      %980 = vrot.lane.b32.xlu0 %v355, 56
      %v981 = vpop.permute.xlu0 %980
      %982 = vrot.lane.b32.xlu0 %v357, 56
      %v983 = vpop.permute.xlu0 %982
      %984 = vrot.lane.b32.xlu0 %v359, 56
      %v985 = vpop.permute.xlu0 %984
      %986 = vrot.lane.b32.xlu0 %v361, 56
      %v987 = vpop.permute.xlu0 %986
      %988 = vrot.lane.b32.xlu0 %v363, 56
      %v989 = vpop.permute.xlu0 %988
      %990 = vrot.lane.b32.xlu0 %v365, 56
      %v991 = vpop.permute.xlu0 %990
      %992 = vrot.lane.b32.xlu0 %v679, 56
      %v993 = vpop.permute.xlu0 %992
      %994 = vrot.lane.b32.xlu0 %v681, 56
      %v995 = vpop.permute.xlu0 %994
      %996 = vrot.lane.b32.xlu0 %v941, 56
      %v997 = vpop.permute.xlu0 %996
      %998 = vrot.lane.b32.xlu0 %v943, 56
      %v999 = vpop.permute.xlu0 %998
      %v1028 = vrot.slane %v277, 2
      %v1029 = vsel %vm450, %v768, %v1028
      %v1030 = vrot.slane %v278, 2
      %v1031 = vsel %vm450, %v1028, %v1030
      %1032 = vrot.lane.b32.xlu0 %v461, 64
      %v1033 = vpop.permute.xlu0 %1032
      %1034 = vrot.lane.b32.xlu0 %v463, 64
      %v1035 = vpop.permute.xlu0 %1034
      %1036 = vrot.lane.b32.xlu0 %v465, 64
      %v1037 = vpop.permute.xlu0 %1036
      %1038 = vrot.lane.b32.xlu0 %v467, 64
      %v1039 = vpop.permute.xlu0 %1038
      %1040 = vrot.lane.b32.xlu0 %v469, 64
      %v1041 = vpop.permute.xlu0 %1040
      %1042 = vrot.lane.b32.xlu0 %v471, 64
      %v1043 = vpop.permute.xlu0 %1042
      %1044 = vrot.lane.b32.xlu0 %v473, 64
      %v1045 = vpop.permute.xlu0 %1044
      %1046 = vrot.lane.b32.xlu0 %v475, 64
      %v1047 = vpop.permute.xlu0 %1046
      %1048 = vrot.lane.b32.xlu0 %v477, 64
      %v1049 = vpop.permute.xlu0 %1048
      %1050 = vrot.lane.b32.xlu0 %v479, 64
      %v1051 = vpop.permute.xlu0 %1050
      %1052 = vrot.lane.b32.xlu0 %v481, 64
      %v1053 = vpop.permute.xlu0 %1052
      %1054 = vrot.lane.b32.xlu0 %v483, 64
      %v1055 = vpop.permute.xlu0 %1054
      %1056 = vrot.lane.b32.xlu0 %v485, 64
      %v1057 = vpop.permute.xlu0 %1056
      %1058 = vrot.lane.b32.xlu0 %v487, 64
      %v1059 = vpop.permute.xlu0 %1058
      %1060 = vrot.lane.b32.xlu0 %v489, 64
      %v1061 = vpop.permute.xlu0 %1060
      %1062 = vrot.lane.b32.xlu0 %v491, 64
      %v1063 = vpop.permute.xlu0 %1062
      %1064 = vrot.lane.b32.xlu0 %v493, 64
      %v1065 = vpop.permute.xlu0 %1064
      %1066 = vrot.lane.b32.xlu0 %v495, 64
      %v1067 = vpop.permute.xlu0 %1066
      %1068 = vrot.lane.b32.xlu0 %v497, 64
      %v1069 = vpop.permute.xlu0 %1068
      %1070 = vrot.lane.b32.xlu0 %v499, 64
      %v1071 = vpop.permute.xlu0 %1070
      %1072 = vrot.lane.b32.xlu0 %v501, 64
      %v1073 = vpop.permute.xlu0 %1072
      %1074 = vrot.lane.b32.xlu0 %v503, 64
      %v1075 = vpop.permute.xlu0 %1074
      %1076 = vrot.lane.b32.xlu0 %v505, 64
      %v1077 = vpop.permute.xlu0 %1076
      %1078 = vrot.lane.b32.xlu0 %v507, 64
      %v1079 = vpop.permute.xlu0 %1078
      %1080 = vrot.lane.b32.xlu0 %v767, 64
      %v1081 = vpop.permute.xlu0 %1080
      %1082 = vrot.lane.b32.xlu0 %v769, 64
      %v1083 = vpop.permute.xlu0 %1082
      %1084 = vrot.lane.b32.xlu0 %v1029, 64
      %v1085 = vpop.permute.xlu0 %1084
      %1086 = vrot.lane.b32.xlu0 %v1031, 64
      %v1087 = vpop.permute.xlu0 %1086
      %vm1116 = vcmask 64512
      %v1117 = vsel %vm1116, %v246, %v367
      %v1118 = vsel %vm1116, %v247, %v369
      %v1119 = vsel %vm1116, %v248, %v371
      %v1120 = vsel %vm1116, %v249, %v373
      %v1121 = vsel %vm1116, %v250, %v375
      %v1122 = vsel %vm1116, %v251, %v377
      %v1123 = vsel %vm1116, %v252, %v379
      %v1124 = vsel %vm1116, %v253, %v381
      %v1125 = vsel %vm1116, %v254, %v383
      %v1126 = vsel %vm1116, %v255, %v385
      %v1127 = vsel %vm1116, %v256, %v387
      %v1128 = vsel %vm1116, %v257, %v389
      %v1129 = vsel %vm1116, %v258, %v391
      %v1130 = vsel %vm1116, %v259, %v393
      %v1131 = vsel %vm1116, %v260, %v395
      %v1132 = vsel %vm1116, %v261, %v397
      %v1133 = vsel %vm1116, %v262, %v399
      %v1134 = vsel %vm1116, %v263, %v401
      %v1135 = vsel %vm1116, %v264, %v403
      %v1136 = vsel %vm1116, %v265, %v405
      %v1137 = vsel %vm1116, %v266, %v407
      %v1138 = vsel %vm1116, %v267, %v409
      %v1139 = vsel %vm1116, %v268, %v411
      %v1140 = vsel %vm1116, %v269, %v413
      %v1141 = vsel %vm1116, %v270, %v415
      %v1142 = vsel %vm1116, %v271, %v417
      %v1143 = vsel %vm1116, %v272, %v419
      %v1144 = vsel %vm1116, %v273, %v421
      %vm1145 = vcmask 130048
      %v1146 = vsel %vm1145, %v1117, %v509
      %v1147 = vsel %vm1145, %v1118, %v511
      %v1148 = vsel %vm1145, %v1119, %v513
      %v1149 = vsel %vm1145, %v1120, %v515
      %v1150 = vsel %vm1145, %v1121, %v517
      %v1151 = vsel %vm1145, %v1122, %v519
      %v1152 = vsel %vm1145, %v1123, %v521
      %v1153 = vsel %vm1145, %v1124, %v523
      %v1154 = vsel %vm1145, %v1125, %v525
      %v1155 = vsel %vm1145, %v1126, %v527
      %v1156 = vsel %vm1145, %v1127, %v529
      %v1157 = vsel %vm1145, %v1128, %v531
      %v1158 = vsel %vm1145, %v1129, %v533
      %v1159 = vsel %vm1145, %v1130, %v535
      %v1160 = vsel %vm1145, %v1131, %v537
      %v1161 = vsel %vm1145, %v1132, %v539
      %v1162 = vsel %vm1145, %v1133, %v541
      %v1163 = vsel %vm1145, %v1134, %v543
      %v1164 = vsel %vm1145, %v1135, %v545
      %v1165 = vsel %vm1145, %v1136, %v547
      %v1166 = vsel %vm1145, %v1137, %v549
      %v1167 = vsel %vm1145, %v1138, %v551
      %v1168 = vsel %vm1145, %v1139, %v553
      %v1169 = vsel %vm1145, %v1140, %v555
      %v1170 = vsel %vm1145, %v1141, %v557
      %v1171 = vsel %vm1145, %v1142, %v559
      %v1172 = vsel %vm1145, %v1143, %v561
      %v1173 = vsel %vm1145, %v1144, %v563
      %vm1174 = vcmask 195584
      %v1175 = vsel %vm1174, %v1146, %v594
      %v1176 = vsel %vm1174, %v1147, %v596
      %v1177 = vsel %vm1174, %v1148, %v598
      %v1178 = vsel %vm1174, %v1149, %v600
      %v1179 = vsel %vm1174, %v1150, %v602
      %v1180 = vsel %vm1174, %v1151, %v604
      %v1181 = vsel %vm1174, %v1152, %v606
      %v1182 = vsel %vm1174, %v1153, %v608
      %v1183 = vsel %vm1174, %v1154, %v610
      %v1184 = vsel %vm1174, %v1155, %v612
      %v1185 = vsel %vm1174, %v1156, %v614
      %v1186 = vsel %vm1174, %v1157, %v616
      %v1187 = vsel %vm1174, %v1158, %v618
      %v1188 = vsel %vm1174, %v1159, %v620
      %v1189 = vsel %vm1174, %v1160, %v622
      %v1190 = vsel %vm1174, %v1161, %v624
      %v1191 = vsel %vm1174, %v1162, %v626
      %v1192 = vsel %vm1174, %v1163, %v628
      %v1193 = vsel %vm1174, %v1164, %v630
      %v1194 = vsel %vm1174, %v1165, %v632
      %v1195 = vsel %vm1174, %v1166, %v634
      %v1196 = vsel %vm1174, %v1167, %v636
      %v1197 = vsel %vm1174, %v1168, %v638
      %v1198 = vsel %vm1174, %v1169, %v640
      %v1199 = vsel %vm1174, %v1170, %v642
      %v1200 = vsel %vm1174, %v1171, %v644
      %v1201 = vsel %vm1174, %v1172, %v646
      %v1202 = vsel %vm1174, %v1173, %v648
      %vm1203 = vcmask 261120
      %v1204 = vsel %vm1203, %v1175, %v683
      %v1205 = vsel %vm1203, %v1176, %v685
      %v1206 = vsel %vm1203, %v1177, %v687
      %v1207 = vsel %vm1203, %v1178, %v689
      %v1208 = vsel %vm1203, %v1179, %v691
      %v1209 = vsel %vm1203, %v1180, %v693
      %v1210 = vsel %vm1203, %v1181, %v695
      %v1211 = vsel %vm1203, %v1182, %v697
      %v1212 = vsel %vm1203, %v1183, %v699
      %v1213 = vsel %vm1203, %v1184, %v701
      %v1214 = vsel %vm1203, %v1185, %v703
      %v1215 = vsel %vm1203, %v1186, %v705
      %v1216 = vsel %vm1203, %v1187, %v707
      %v1217 = vsel %vm1203, %v1188, %v709
      %v1218 = vsel %vm1203, %v1189, %v711
      %v1219 = vsel %vm1203, %v1190, %v713
      %v1220 = vsel %vm1203, %v1191, %v715
      %v1221 = vsel %vm1203, %v1192, %v717
      %v1222 = vsel %vm1203, %v1193, %v719
      %v1223 = vsel %vm1203, %v1194, %v721
      %v1224 = vsel %vm1203, %v1195, %v723
      %v1225 = vsel %vm1203, %v1196, %v725
      %v1226 = vsel %vm1203, %v1197, %v727
      %v1227 = vsel %vm1203, %v1198, %v729
      %v1228 = vsel %vm1203, %v1199, %v731
      %v1229 = vsel %vm1203, %v1200, %v733
      %v1230 = vsel %vm1203, %v1201, %v735
      %v1231 = vsel %vm1203, %v1202, %v737
      %vm1232 = vcmask 326656
      %v1233 = vsel %vm1232, %v1204, %v771
      %v1234 = vsel %vm1232, %v1205, %v773
      %v1235 = vsel %vm1232, %v1206, %v775
      %v1236 = vsel %vm1232, %v1207, %v777
      %v1237 = vsel %vm1232, %v1208, %v779
      %v1238 = vsel %vm1232, %v1209, %v781
      %v1239 = vsel %vm1232, %v1210, %v783
      %v1240 = vsel %vm1232, %v1211, %v785
      %v1241 = vsel %vm1232, %v1212, %v787
      %v1242 = vsel %vm1232, %v1213, %v789
      %v1243 = vsel %vm1232, %v1214, %v791
      %v1244 = vsel %vm1232, %v1215, %v793
      %v1245 = vsel %vm1232, %v1216, %v795
      %v1246 = vsel %vm1232, %v1217, %v797
      %v1247 = vsel %vm1232, %v1218, %v799
      %v1248 = vsel %vm1232, %v1219, %v801
      %v1249 = vsel %vm1232, %v1220, %v803
      %v1250 = vsel %vm1232, %v1221, %v805
      %v1251 = vsel %vm1232, %v1222, %v807
      %v1252 = vsel %vm1232, %v1223, %v809
      %v1253 = vsel %vm1232, %v1224, %v811
      %v1254 = vsel %vm1232, %v1225, %v813
      %v1255 = vsel %vm1232, %v1226, %v815
      %v1256 = vsel %vm1232, %v1227, %v817
      %v1257 = vsel %vm1232, %v1228, %v819
      %v1258 = vsel %vm1232, %v1229, %v821
      %v1259 = vsel %vm1232, %v1230, %v823
      %v1260 = vsel %vm1232, %v1231, %v825
      %vm1261 = vcmask 392192
      %v1262 = vsel %vm1261, %v1233, %v856
      %v1263 = vsel %vm1261, %v1234, %v858
      %v1264 = vsel %vm1261, %v1235, %v860
      %v1265 = vsel %vm1261, %v1236, %v862
      %v1266 = vsel %vm1261, %v1237, %v864
      %v1267 = vsel %vm1261, %v1238, %v866
      %v1268 = vsel %vm1261, %v1239, %v868
      %v1269 = vsel %vm1261, %v1240, %v870
      %v1270 = vsel %vm1261, %v1241, %v872
      %v1271 = vsel %vm1261, %v1242, %v874
      %v1272 = vsel %vm1261, %v1243, %v876
      %v1273 = vsel %vm1261, %v1244, %v878
      %v1274 = vsel %vm1261, %v1245, %v880
      %v1275 = vsel %vm1261, %v1246, %v882
      %v1276 = vsel %vm1261, %v1247, %v884
      %v1277 = vsel %vm1261, %v1248, %v886
      %v1278 = vsel %vm1261, %v1249, %v888
      %v1279 = vsel %vm1261, %v1250, %v890
      %v1280 = vsel %vm1261, %v1251, %v892
      %v1281 = vsel %vm1261, %v1252, %v894
      %v1282 = vsel %vm1261, %v1253, %v896
      %v1283 = vsel %vm1261, %v1254, %v898
      %v1284 = vsel %vm1261, %v1255, %v900
      %v1285 = vsel %vm1261, %v1256, %v902
      %v1286 = vsel %vm1261, %v1257, %v904
      %v1287 = vsel %vm1261, %v1258, %v906
      %v1288 = vsel %vm1261, %v1259, %v908
      %v1289 = vsel %vm1261, %v1260, %v910
      %vm1290 = vcmask 457728
      %v1291 = vsel %vm1290, %v1262, %v945
      %v1292 = vsel %vm1290, %v1263, %v947
      %v1293 = vsel %vm1290, %v1264, %v949
      %v1294 = vsel %vm1290, %v1265, %v951
      %v1295 = vsel %vm1290, %v1266, %v953
      %v1296 = vsel %vm1290, %v1267, %v955
      %v1297 = vsel %vm1290, %v1268, %v957
      %v1298 = vsel %vm1290, %v1269, %v959
      %v1299 = vsel %vm1290, %v1270, %v961
      %v1300 = vsel %vm1290, %v1271, %v963
      %v1301 = vsel %vm1290, %v1272, %v965
      %v1302 = vsel %vm1290, %v1273, %v967
      %v1303 = vsel %vm1290, %v1274, %v969
      %v1304 = vsel %vm1290, %v1275, %v971
      %v1305 = vsel %vm1290, %v1276, %v973
      %v1306 = vsel %vm1290, %v1277, %v975
      %v1307 = vsel %vm1290, %v1278, %v977
      %v1308 = vsel %vm1290, %v1279, %v979
      %v1309 = vsel %vm1290, %v1280, %v981
      %v1310 = vsel %vm1290, %v1281, %v983
      %v1311 = vsel %vm1290, %v1282, %v985
      %v1312 = vsel %vm1290, %v1283, %v987
      %v1313 = vsel %vm1290, %v1284, %v989
      %v1314 = vsel %vm1290, %v1285, %v991
      %v1315 = vsel %vm1290, %v1286, %v993
      %v1316 = vsel %vm1290, %v1287, %v995
      %v1317 = vsel %vm1290, %v1288, %v997
      %v1318 = vsel %vm1290, %v1289, %v999
      %vm1319 = vcmask 523264
      %v1320 = vsel %vm1319, %v1291, %v1033
      %v1321 = vsel %vm1319, %v1292, %v1035
      %v1322 = vsel %vm1319, %v1293, %v1037
      %v1323 = vsel %vm1319, %v1294, %v1039
      %v1324 = vsel %vm1319, %v1295, %v1041
      %v1325 = vsel %vm1319, %v1296, %v1043
      %v1326 = vsel %vm1319, %v1297, %v1045
      %v1327 = vsel %vm1319, %v1298, %v1047
      %v1328 = vsel %vm1319, %v1299, %v1049
      %v1329 = vsel %vm1319, %v1300, %v1051
      %v1330 = vsel %vm1319, %v1301, %v1053
      %v1331 = vsel %vm1319, %v1302, %v1055
      %v1332 = vsel %vm1319, %v1303, %v1057
      %v1333 = vsel %vm1319, %v1304, %v1059
      %v1334 = vsel %vm1319, %v1305, %v1061
      %v1335 = vsel %vm1319, %v1306, %v1063
      %v1336 = vsel %vm1319, %v1307, %v1065
      %v1337 = vsel %vm1319, %v1308, %v1067
      %v1338 = vsel %vm1319, %v1309, %v1069
      %v1339 = vsel %vm1319, %v1310, %v1071
      %v1340 = vsel %vm1319, %v1311, %v1073
      %v1341 = vsel %vm1319, %v1312, %v1075
      %v1342 = vsel %vm1319, %v1313, %v1077
      %v1343 = vsel %vm1319, %v1314, %v1079
      %v1344 = vsel %vm1319, %v1315, %v1081
      %v1345 = vsel %vm1319, %v1316, %v1083
      %v1346 = vsel %vm1319, %v1317, %v1085
      %v1347 = vsel %vm1319, %v1318, %v1087
      %v1348 = vpack.c.bf16 %v1321, %v1320
      %v1349 = vpack.c.bf16 %v1323, %v1322
      %v1350 = vpack.c.bf16 %v1325, %v1324
      %v1351 = vpack.c.bf16 %v1327, %v1326
      %v1352 = vpack.c.bf16 %v1329, %v1328
      %v1353 = vpack.c.bf16 %v1331, %v1330
      %v1354 = vpack.c.bf16 %v1333, %v1332
      %v1355 = vpack.c.bf16 %v1335, %v1334
      %v1356 = vpack.c.bf16 %v1337, %v1336
      %v1357 = vpack.c.bf16 %v1339, %v1338
      %v1358 = vpack.c.bf16 %v1341, %v1340
      %v1359 = vpack.c.bf16 %v1343, %v1342
      %v1360 = vpack.c.bf16 %v1345, %v1344
      %v1361 = vpack.c.bf16 %v1347, %v1346
      %v1362 = vld [vmem:[%s1] sm:$0xf]
      %v1363 = vld [vmem:[%s1 + $0x4] sm:$0xf]
      %v1364 = vld [vmem:[%s1 + $0x8] sm:$0xf]
      %v1365 = vld [vmem:[%s1 + $0xc] sm:$0xf]
      %v1366 = vld [vmem:[%s1 + $0x10] sm:$0xf]
      %v1367 = vld [vmem:[%s1 + $0x14] sm:$0xf]
      %v1368 = vld [vmem:[%s1 + $0x18] sm:$0xf]
      %v1369 = vld [vmem:[%s1 + $0x1c] sm:$0xf]
      %v1370 = vld [vmem:[%s1 + $0x20] sm:$0xf]
      %v1380 = vunpack.c.l.b16 %v1362
      %v1381 = vunpack.c.l.b16 %v1363
      %v1382 = vunpack.c.l.b16 %v1364
      %v1383 = vunpack.c.l.b16 %v1365
      %v1384 = vunpack.c.l.b16 %v1366
      %v1385 = vunpack.c.l.b16 %v1367
      %v1386 = vunpack.c.l.b16 %v1368
      %v1387 = vunpack.c.l.b16 %v1369
      %v1388 = vunpack.c.l.b16 %v1370
      %v1389 = vpack.c.b16 %v1381, %v1380
      %v1390 = vpack.c.b16 %v1383, %v1382
      %v1391 = vpack.c.b16 %v1385, %v1384
      %v1392 = vpack.c.b16 %v1387, %v1386
      %v1393 = vpack.c.b16 %v1388, %v1388
      %vm1398 = vcmask 588800
      %v1400 = vsel %vm1398, %v1348, 0
      %v1403 = vsel %vm1398, %v1349, 0
      %v1406 = vsel %vm1398, %v1350, 0
      %v1409 = vsel %vm1398, %v1351, 0
      %v1412 = vsel %vm1398, %v1352, 0
      %v1415 = vsel %vm1398, %v1353, 0
      %v1418 = vsel %vm1398, %v1354, 0
      %v1421 = vsel %vm1398, %v1355, 0
      %v1424 = vsel %vm1398, %v1356, 0
      %v1427 = vsel %vm1398, %v1357, 0
      %v1430 = vsel %vm1398, %v1358, 0
      %v1433 = vsel %vm1398, %v1359, 0
      %v1436 = vsel %vm1398, %v1360, 0
      %v1439 = vsel %vm1398, %v1361, 0
      %vm1441 = vcmask 1043456
      %v1443 = vsel %vm1441, %v1393, 0
      %1445 = vmatprep.subr.bf16.mxu0 0
      %1446 = vmatpush1.bf16.msra.mxu0 %v1389
      %1447 = vmatprep.subr.bf16.mxu0 0
      %1448 = vmatpush1.bf16.msra.mxu0 %v1390
      %1449 = vmatprep.subr.bf16.mxu0 0
      %1450 = vmatpush1.bf16.msra.mxu0 %v1391
      %1451 = vmatprep.subr.bf16.mxu0 0
      %1452 = vmatpush1.bf16.msra.mxu0 %v1392
      %1453 = vmatprep.subr.bf16.mxu0 0
      %1454 = vmatpush1.bf16.msra.mxu0 %v1443
      %1455 = vmatprep.subr.bf16.mxu0 0
      %1456 = vmatpush1.bf16.msra.mxu0 0
      %1457 = vmatprep.subr.bf16.mxu0 0
      %1458 = vmatpush1.bf16.msra.mxu0 0
      %1459 = vmatprep.subr.bf16.mxu0 0
      %1460 = vmatpush1.bf16.msra.mxu0 0
      %1461 = vmatprep.subr.bf16.mxu0 0
      %1462 = vmatpush1.bf16.msra.mxu0 0
      %1463 = vmatprep.subr.bf16.mxu0 0
      %1464 = vmatpush1.bf16.msra.mxu0 0
      %1465 = vmatprep.subr.bf16.mxu0 0
      %1466 = vmatpush1.bf16.msra.mxu0 0
      %1467 = vmatprep.subr.bf16.mxu0 0
      %1468 = vmatpush1.bf16.msra.mxu0 0
      %1469 = vmatprep.subr.bf16.mxu0 0
      %1470 = vmatpush1.bf16.msra.mxu0 0
      %1471 = vmatprep.subr.bf16.mxu0 0
      %1472 = vmatpush1.bf16.msra.mxu0 0
      %1473 = vmatprep.subr.bf16.mxu0 0
      %1474 = vmatpush1.bf16.msra.mxu0 0
      %1475 = vmatprep.subr.bf16.mxu0 0
      %1476 = vmatpush1.bf16.msra.mxu0 0
      %1477 = vmatprep.mubr.bf16.mxu0 0
      %1478 = vmatmul.mubr.bf16.gmra.mrb[0].mxu0 %v1400
      %v1479 = vpop.f32.mrb[0].mxu0
      %v1480 = vadd.f32 0.0, %v1479
      %v1481 = vpop.f32.mrb[0].mxu0
      %v1482 = vpop.f32.mrb[0].mxu0
      %v1483 = vadd.f32 0.0, %v1482
      %v1484 = vpop.f32.mrb[0].mxu0
      %1485 = vmatprep.mubr.bf16.mxu0 0
      %1486 = vmatmul.mubr.bf16.gmra.mrb[0].mxu0 %v1403
      %v1487 = vpop.f32.mrb[0].mxu0
      %v1488 = vadd.f32 0.0, %v1487
      %v1489 = vpop.f32.mrb[0].mxu0
      %v1490 = vpop.f32.mrb[0].mxu0
      %v1491 = vadd.f32 0.0, %v1490
      %v1492 = vpop.f32.mrb[0].mxu0
      %1493 = vmatprep.mubr.bf16.mxu0 0
      %1494 = vmatmul.mubr.bf16.gmra.mrb[0].mxu0 %v1406
      %v1495 = vpop.f32.mrb[0].mxu0
      %v1496 = vadd.f32 0.0, %v1495
      %v1497 = vpop.f32.mrb[0].mxu0
      %v1498 = vpop.f32.mrb[0].mxu0
      %v1499 = vadd.f32 0.0, %v1498
      %v1500 = vpop.f32.mrb[0].mxu0
      %1501 = vmatprep.mubr.bf16.mxu0 0
      %1502 = vmatmul.mubr.bf16.gmra.mrb[0].mxu0 %v1409
      %v1503 = vpop.f32.mrb[0].mxu0
      %v1504 = vadd.f32 0.0, %v1503
      %v1505 = vpop.f32.mrb[0].mxu0
      %v1506 = vpop.f32.mrb[0].mxu0
      %v1507 = vadd.f32 0.0, %v1506
      %v1508 = vpop.f32.mrb[0].mxu0
      %1509 = vmatprep.mubr.bf16.mxu0 0
      %1510 = vmatmul.mubr.bf16.gmra.mrb[0].mxu0 %v1412
      %v1511 = vpop.f32.mrb[0].mxu0
      %v1512 = vadd.f32 0.0, %v1511
      %v1513 = vpop.f32.mrb[0].mxu0
      %v1514 = vpop.f32.mrb[0].mxu0
      %v1515 = vadd.f32 0.0, %v1514
      %v1516 = vpop.f32.mrb[0].mxu0
      %1517 = vmatprep.mubr.bf16.mxu0 0
      %1518 = vmatmul.mubr.bf16.gmra.mrb[0].mxu0 %v1415
      %v1519 = vpop.f32.mrb[0].mxu0
      %v1520 = vadd.f32 0.0, %v1519
      %v1521 = vpop.f32.mrb[0].mxu0
      %v1522 = vpop.f32.mrb[0].mxu0
      %v1523 = vadd.f32 0.0, %v1522
      %v1524 = vpop.f32.mrb[0].mxu0
      %1525 = vmatprep.mubr.bf16.mxu0 0
      %1526 = vmatmul.mubr.bf16.gmra.mrb[0].mxu0 %v1418
      %v1527 = vpop.f32.mrb[0].mxu0
      %v1528 = vadd.f32 0.0, %v1527
      %v1529 = vpop.f32.mrb[0].mxu0
      %v1530 = vpop.f32.mrb[0].mxu0
      %v1531 = vadd.f32 0.0, %v1530
      %v1532 = vpop.f32.mrb[0].mxu0
      %1533 = vmatprep.mubr.bf16.mxu0 0
      %1534 = vmatmul.mubr.bf16.gmra.mrb[0].mxu0 %v1421
      %v1535 = vpop.f32.mrb[0].mxu0
      %v1536 = vadd.f32 0.0, %v1535
      %v1537 = vpop.f32.mrb[0].mxu0
      %v1538 = vpop.f32.mrb[0].mxu0
      %v1539 = vadd.f32 0.0, %v1538
      %v1540 = vpop.f32.mrb[0].mxu0
      %1541 = vmatprep.mubr.bf16.mxu0 0
      %1542 = vmatmul.mubr.bf16.gmra.mrb[0].mxu0 %v1424
      %v1543 = vpop.f32.mrb[0].mxu0
      %v1544 = vadd.f32 0.0, %v1543
      %v1545 = vpop.f32.mrb[0].mxu0
      %v1546 = vpop.f32.mrb[0].mxu0
      %v1547 = vadd.f32 0.0, %v1546
      %v1548 = vpop.f32.mrb[0].mxu0
      %1549 = vmatprep.mubr.bf16.mxu0 0
      %1550 = vmatmul.mubr.bf16.gmra.mrb[0].mxu0 %v1427
      %v1551 = vpop.f32.mrb[0].mxu0
      %v1552 = vadd.f32 0.0, %v1551
      %v1553 = vpop.f32.mrb[0].mxu0
      %v1554 = vpop.f32.mrb[0].mxu0
      %v1555 = vadd.f32 0.0, %v1554
      %v1556 = vpop.f32.mrb[0].mxu0
      %1557 = vmatprep.mubr.bf16.mxu0 0
      %1558 = vmatmul.mubr.bf16.gmra.mrb[0].mxu0 %v1430
      %v1559 = vpop.f32.mrb[0].mxu0
      %v1560 = vadd.f32 0.0, %v1559
      %v1561 = vpop.f32.mrb[0].mxu0
      %v1562 = vpop.f32.mrb[0].mxu0
      %v1563 = vadd.f32 0.0, %v1562
      %v1564 = vpop.f32.mrb[0].mxu0
      %1565 = vmatprep.mubr.bf16.mxu0 0
      %1566 = vmatmul.mubr.bf16.gmra.mrb[0].mxu0 %v1433
      %v1567 = vpop.f32.mrb[0].mxu0
      %v1568 = vadd.f32 0.0, %v1567
      %v1569 = vpop.f32.mrb[0].mxu0
      %v1570 = vpop.f32.mrb[0].mxu0
      %v1571 = vadd.f32 0.0, %v1570
      %v1572 = vpop.f32.mrb[0].mxu0
      %1573 = vmatprep.mubr.bf16.mxu0 0
      %1574 = vmatmul.mubr.bf16.gmra.mrb[0].mxu0 %v1436
      %v1575 = vpop.f32.mrb[0].mxu0
      %v1576 = vadd.f32 0.0, %v1575
      %v1577 = vpop.f32.mrb[0].mxu0
      %v1578 = vpop.f32.mrb[0].mxu0
      %v1579 = vadd.f32 0.0, %v1578
      %v1580 = vpop.f32.mrb[0].mxu0
      %1581 = vmatprep.mubr.bf16.mxu0 0
      %1582 = vmatmul.mubr.bf16.gmra.mrb[0].mxu0 %v1439
      %v1583 = vpop.f32.mrb[0].mxu0
      %v1584 = vadd.f32 0.0, %v1583
      %v1585 = vpop.f32.mrb[0].mxu0
      %v1586 = vpop.f32.mrb[0].mxu0
      %v1587 = vadd.f32 0.0, %v1586
      %v1588 = vpop.f32.mrb[0].mxu0
      %1589 = vdwg.mxu0
      %v1590 = vld [vmem:[%s2] sm:$0x1]
      %v1592 = vlaneseq
      %v1593 = vshrl.u32 %v1592, 7
      %v1594 = vsub.s32 0, %v1593
      %v1595 = vrot.slane %v1590, %v1594
      %v1597 = vmul.f32 %v1480, %v1595
      %v1598 = vmul.f32 %v1483, %v1595
      %v1599 = vmul.f32 %v1488, %v1595
      %v1600 = vmul.f32 %v1491, %v1595
      %v1601 = vmul.f32 %v1496, %v1595
      %v1602 = vmul.f32 %v1499, %v1595
      %v1603 = vmul.f32 %v1504, %v1595
      %v1604 = vmul.f32 %v1507, %v1595
      %v1605 = vmul.f32 %v1512, %v1595
      %v1606 = vmul.f32 %v1515, %v1595
      %v1607 = vmul.f32 %v1520, %v1595
      %v1608 = vmul.f32 %v1523, %v1595
      %v1609 = vmul.f32 %v1528, %v1595
      %v1610 = vmul.f32 %v1531, %v1595
      %v1611 = vmul.f32 %v1536, %v1595
      %v1612 = vmul.f32 %v1539, %v1595
      %v1613 = vmul.f32 %v1544, %v1595
      %v1614 = vmul.f32 %v1547, %v1595
      %v1615 = vmul.f32 %v1552, %v1595
      %v1616 = vmul.f32 %v1555, %v1595
      %v1617 = vmul.f32 %v1560, %v1595
      %v1618 = vmul.f32 %v1563, %v1595
      %v1619 = vmul.f32 %v1568, %v1595
      %v1620 = vmul.f32 %v1571, %v1595
      %v1621 = vmul.f32 %v1576, %v1595
      %v1622 = vmul.f32 %v1579, %v1595
      %v1623 = vmul.f32 %v1584, %v1595
      %v1624 = vmul.f32 %v1587, %v1595
      %v1625 = vld [vmem:[%s3] sm:$0x1]
      %v1627 = vlaneseq
      %v1628 = vshrl.u32 %v1627, 7
      %v1629 = vsub.s32 0, %v1628
      %v1630 = vrot.slane %v1625, %v1629
      %v1632 = vadd.f32 %v1597, %v1630
      %v1633 = vadd.f32 %v1598, %v1630
      %v1634 = vadd.f32 %v1599, %v1630
      %v1635 = vadd.f32 %v1600, %v1630
      %v1636 = vadd.f32 %v1601, %v1630
      %v1637 = vadd.f32 %v1602, %v1630
      %v1638 = vadd.f32 %v1603, %v1630
      %v1639 = vadd.f32 %v1604, %v1630
      %v1640 = vadd.f32 %v1605, %v1630
      %v1641 = vadd.f32 %v1606, %v1630
      %v1642 = vadd.f32 %v1607, %v1630
      %v1643 = vadd.f32 %v1608, %v1630
      %v1644 = vadd.f32 %v1609, %v1630
      %v1645 = vadd.f32 %v1610, %v1630
      %v1646 = vadd.f32 %v1611, %v1630
      %v1647 = vadd.f32 %v1612, %v1630
      %v1648 = vadd.f32 %v1613, %v1630
      %v1649 = vadd.f32 %v1614, %v1630
      %v1650 = vadd.f32 %v1615, %v1630
      %v1651 = vadd.f32 %v1616, %v1630
      %v1652 = vadd.f32 %v1617, %v1630
      %v1653 = vadd.f32 %v1618, %v1630
      %v1654 = vadd.f32 %v1619, %v1630
      %v1655 = vadd.f32 %v1620, %v1630
      %v1656 = vadd.f32 %v1621, %v1630
      %v1657 = vadd.f32 %v1622, %v1630
      %v1658 = vadd.f32 %v1623, %v1630
      %v1659 = vadd.f32 %v1624, %v1630
      %v1660 = vxor.u32 %v1632, 2147483648
      %v1661 = vxor.u32 %v1633, 2147483648
      %v1662 = vxor.u32 %v1634, 2147483648
      %v1663 = vxor.u32 %v1635, 2147483648
      %v1664 = vxor.u32 %v1636, 2147483648
      %v1665 = vxor.u32 %v1637, 2147483648
      %v1666 = vxor.u32 %v1638, 2147483648
      %v1667 = vxor.u32 %v1639, 2147483648
      %v1668 = vxor.u32 %v1640, 2147483648
      %v1669 = vxor.u32 %v1641, 2147483648
      %v1670 = vxor.u32 %v1642, 2147483648
      %v1671 = vxor.u32 %v1643, 2147483648
      %v1672 = vxor.u32 %v1644, 2147483648
      %v1673 = vxor.u32 %v1645, 2147483648
      %v1674 = vxor.u32 %v1646, 2147483648
      %v1675 = vxor.u32 %v1647, 2147483648
      %v1676 = vxor.u32 %v1648, 2147483648
      %v1677 = vxor.u32 %v1649, 2147483648
      %v1678 = vxor.u32 %v1650, 2147483648
      %v1679 = vxor.u32 %v1651, 2147483648
      %v1680 = vxor.u32 %v1652, 2147483648
      %v1681 = vxor.u32 %v1653, 2147483648
      %v1682 = vxor.u32 %v1654, 2147483648
      %v1683 = vxor.u32 %v1655, 2147483648
      %v1684 = vxor.u32 %v1656, 2147483648
      %v1685 = vxor.u32 %v1657, 2147483648
      %v1686 = vxor.u32 %v1658, 2147483648
      %v1687 = vxor.u32 %v1659, 2147483648
      %v1688 = vmul.f32 %v1660, 1.442695
      %v1689 = vpow.pop %v1688
      %v1690 = vmul.f32 %v1661, 1.442695
      %v1691 = vpow.pop %v1690
      %v1692 = vmul.f32 %v1662, 1.442695
      %v1693 = vpow.pop %v1692
      %v1694 = vmul.f32 %v1663, 1.442695
      %v1695 = vpow.pop %v1694
      %v1696 = vmul.f32 %v1664, 1.442695
      %v1697 = vpow.pop %v1696
      %v1698 = vmul.f32 %v1665, 1.442695
      %v1699 = vpow.pop %v1698
      %v1700 = vmul.f32 %v1666, 1.442695
      %v1701 = vpow.pop %v1700
      %v1702 = vmul.f32 %v1667, 1.442695
      %v1703 = vpow.pop %v1702
      %v1704 = vmul.f32 %v1668, 1.442695
      %v1705 = vpow.pop %v1704
      %v1706 = vmul.f32 %v1669, 1.442695
      %v1707 = vpow.pop %v1706
      %v1708 = vmul.f32 %v1670, 1.442695
      %v1709 = vpow.pop %v1708
      %v1710 = vmul.f32 %v1671, 1.442695
      %v1711 = vpow.pop %v1710
      %v1712 = vmul.f32 %v1672, 1.442695
      %v1713 = vpow.pop %v1712
      %v1714 = vmul.f32 %v1673, 1.442695
      %v1715 = vpow.pop %v1714
      %v1716 = vmul.f32 %v1674, 1.442695
      %v1717 = vpow.pop %v1716
      %v1718 = vmul.f32 %v1675, 1.442695
      %v1719 = vpow.pop %v1718
      %v1720 = vmul.f32 %v1676, 1.442695
      %v1721 = vpow.pop %v1720
      %v1722 = vmul.f32 %v1677, 1.442695
      %v1723 = vpow.pop %v1722
      %v1724 = vmul.f32 %v1678, 1.442695
      %v1725 = vpow.pop %v1724
      %v1726 = vmul.f32 %v1679, 1.442695
      %v1727 = vpow.pop %v1726
      %v1728 = vmul.f32 %v1680, 1.442695
      %v1729 = vpow.pop %v1728
      %v1730 = vmul.f32 %v1681, 1.442695
      %v1731 = vpow.pop %v1730
      %v1732 = vmul.f32 %v1682, 1.442695
      %v1733 = vpow.pop %v1732
      %v1734 = vmul.f32 %v1683, 1.442695
      %v1735 = vpow.pop %v1734
      %v1736 = vmul.f32 %v1684, 1.442695
      %v1737 = vpow.pop %v1736
      %v1738 = vmul.f32 %v1685, 1.442695
      %v1739 = vpow.pop %v1738
      %v1740 = vmul.f32 %v1686, 1.442695
      %v1741 = vpow.pop %v1740
      %v1742 = vmul.f32 %v1687, 1.442695
      %v1743 = vpow.pop %v1742
      %v1744 = vadd.f32 %v1689, 1.0
      %v1745 = vadd.f32 %v1691, 1.0
      %v1746 = vadd.f32 %v1693, 1.0
      %v1747 = vadd.f32 %v1695, 1.0
      %v1748 = vadd.f32 %v1697, 1.0
      %v1749 = vadd.f32 %v1699, 1.0
      %v1750 = vadd.f32 %v1701, 1.0
      %v1751 = vadd.f32 %v1703, 1.0
      %v1752 = vadd.f32 %v1705, 1.0
      %v1753 = vadd.f32 %v1707, 1.0
      %v1754 = vadd.f32 %v1709, 1.0
      %v1755 = vadd.f32 %v1711, 1.0
      %v1756 = vadd.f32 %v1713, 1.0
      %v1757 = vadd.f32 %v1715, 1.0
      %v1758 = vadd.f32 %v1717, 1.0
      %v1759 = vadd.f32 %v1719, 1.0
      %v1760 = vadd.f32 %v1721, 1.0
      %v1761 = vadd.f32 %v1723, 1.0
      %v1762 = vadd.f32 %v1725, 1.0
      %v1763 = vadd.f32 %v1727, 1.0
      %v1764 = vadd.f32 %v1729, 1.0
      %v1765 = vadd.f32 %v1731, 1.0
      %v1766 = vadd.f32 %v1733, 1.0
      %v1767 = vadd.f32 %v1735, 1.0
      %v1768 = vadd.f32 %v1737, 1.0
      %v1769 = vadd.f32 %v1739, 1.0
      %v1770 = vadd.f32 %v1741, 1.0
      %v1771 = vadd.f32 %v1743, 1.0
      %v1772 = vrcp.pop %v1744
      %v1773 = vmul.f32 1.0, %v1772
      %v1774 = vrcp.pop %v1745
      %v1775 = vmul.f32 1.0, %v1774
      %v1776 = vrcp.pop %v1746
      %v1777 = vmul.f32 1.0, %v1776
      %v1778 = vrcp.pop %v1747
      %v1779 = vmul.f32 1.0, %v1778
      %v1780 = vrcp.pop %v1748
      %v1781 = vmul.f32 1.0, %v1780
      %v1782 = vrcp.pop %v1749
      %v1783 = vmul.f32 1.0, %v1782
      %v1784 = vrcp.pop %v1750
      %v1785 = vmul.f32 1.0, %v1784
      %v1786 = vrcp.pop %v1751
      %v1787 = vmul.f32 1.0, %v1786
      %v1788 = vrcp.pop %v1752
      %v1789 = vmul.f32 1.0, %v1788
      %v1790 = vrcp.pop %v1753
      %v1791 = vmul.f32 1.0, %v1790
      %v1792 = vrcp.pop %v1754
      %v1793 = vmul.f32 1.0, %v1792
      %v1794 = vrcp.pop %v1755
      %v1795 = vmul.f32 1.0, %v1794
      %v1796 = vrcp.pop %v1756
      %v1797 = vmul.f32 1.0, %v1796
      %v1798 = vrcp.pop %v1757
      %v1799 = vmul.f32 1.0, %v1798
      %v1800 = vrcp.pop %v1758
      %v1801 = vmul.f32 1.0, %v1800
      %v1802 = vrcp.pop %v1759
      %v1803 = vmul.f32 1.0, %v1802
      %v1804 = vrcp.pop %v1760
      %v1805 = vmul.f32 1.0, %v1804
      %v1806 = vrcp.pop %v1761
      %v1807 = vmul.f32 1.0, %v1806
      %v1808 = vrcp.pop %v1762
      %v1809 = vmul.f32 1.0, %v1808
      %v1810 = vrcp.pop %v1763
      %v1811 = vmul.f32 1.0, %v1810
      %v1812 = vrcp.pop %v1764
      %v1813 = vmul.f32 1.0, %v1812
      %v1814 = vrcp.pop %v1765
      %v1815 = vmul.f32 1.0, %v1814
      %v1816 = vrcp.pop %v1766
      %v1817 = vmul.f32 1.0, %v1816
      %v1818 = vrcp.pop %v1767
      %v1819 = vmul.f32 1.0, %v1818
      %v1820 = vrcp.pop %v1768
      %v1821 = vmul.f32 1.0, %v1820
      %v1822 = vrcp.pop %v1769
      %v1823 = vmul.f32 1.0, %v1822
      %v1824 = vrcp.pop %v1770
      %v1825 = vmul.f32 1.0, %v1824
      %v1826 = vrcp.pop %v1771
      %v1827 = vmul.f32 1.0, %v1826
      %v1828 = vmul.f32 %v1632, %v1773
      %v1829 = vmul.f32 %v1633, %v1775
      %v1830 = vmul.f32 %v1634, %v1777
      %v1831 = vmul.f32 %v1635, %v1779
      %v1832 = vmul.f32 %v1636, %v1781
      %v1833 = vmul.f32 %v1637, %v1783
      %v1834 = vmul.f32 %v1638, %v1785
      %v1835 = vmul.f32 %v1639, %v1787
      %v1836 = vmul.f32 %v1640, %v1789
      %v1837 = vmul.f32 %v1641, %v1791
      %v1838 = vmul.f32 %v1642, %v1793
      %v1839 = vmul.f32 %v1643, %v1795
      %v1840 = vmul.f32 %v1644, %v1797
      %v1841 = vmul.f32 %v1645, %v1799
      %v1842 = vmul.f32 %v1646, %v1801
      %v1843 = vmul.f32 %v1647, %v1803
      %v1844 = vmul.f32 %v1648, %v1805
      %v1845 = vmul.f32 %v1649, %v1807
      %v1846 = vmul.f32 %v1650, %v1809
      %v1847 = vmul.f32 %v1651, %v1811
      %v1848 = vmul.f32 %v1652, %v1813
      %v1849 = vmul.f32 %v1653, %v1815
      %v1850 = vmul.f32 %v1654, %v1817
      %v1851 = vmul.f32 %v1655, %v1819
      %v1852 = vmul.f32 %v1656, %v1821
      %v1853 = vmul.f32 %v1657, %v1823
      %v1854 = vmul.f32 %v1658, %v1825
      %v1855 = vmul.f32 %v1659, %v1827
      %v1856 = vlaneseq
      %v1857 = vshrl.u32 %v1856, 7
      %v1858 = vadd.s32 %v1857, 8
      %v1859 = vadd.s32 %v1857, 16
      %v1860 = vadd.s32 %v1857, 24
      %v1861 = vadd.s32 %v1857, 32
      %v1862 = vadd.s32 %v1857, 40
      %v1863 = vadd.s32 %v1857, 48
      %v1864 = vadd.s32 %v1857, 56
      %v1865 = vadd.s32 %v1857, 64
      %v1866 = vadd.s32 %v1857, 72
      %v1867 = vadd.s32 %v1857, 80
      %v1868 = vadd.s32 %v1857, 88
      %v1869 = vadd.s32 %v1857, 96
      %v1870 = vadd.s32 %v1857, 104
      %v1871 = vadd.s32 %v1857, 112
      %v1872 = vadd.s32 %v1857, 120
      %v1873 = vadd.s32 %v1857, 128
      %v1874 = vadd.s32 %v1857, 136
      %v1875 = vadd.s32 %v1857, 144
      %v1876 = vadd.s32 %v1857, 152
      %v1877 = vadd.s32 %v1857, 160
      %v1878 = vadd.s32 %v1857, 168
      %v1879 = vadd.s32 %v1857, 176
      %v1880 = vadd.s32 %v1857, 184
      %v1881 = vadd.s32 %v1857, 192
      %v1882 = vadd.s32 %v1857, 200
      %v1883 = vadd.s32 %v1857, 208
      %v1884 = vadd.s32 %v1857, 216
      %vm1885 = vcmp.lt.s32.totalorder %v1857, 0
      %v1886 = vsub.s32 0, %v1857
      %v1887 = vsel %vm1885, %v1886, %v1857
      %v1888 = vshrl.u32 %v1887, 4
      %v1889 = vand.u32 %v1887, 15
      %v1890 = vsub.s32 0, %v1889
      %v1891 = vsel %vm1885, %v1890, %v1889
      %vm1892 = vcmp.lt.s32.totalorder %v1858, 0
      %v1893 = vsub.s32 0, %v1858
      %v1894 = vsel %vm1892, %v1893, %v1858
      %v1895 = vshrl.u32 %v1894, 4
      %v1896 = vand.u32 %v1894, 15
      %v1897 = vsub.s32 0, %v1896
      %v1898 = vsel %vm1892, %v1897, %v1896
      %vm1899 = vcmp.lt.s32.totalorder %v1859, 0
      %v1900 = vsub.s32 0, %v1859
      %v1901 = vsel %vm1899, %v1900, %v1859
      %v1902 = vshrl.u32 %v1901, 4
      %v1903 = vand.u32 %v1901, 15
      %v1904 = vsub.s32 0, %v1903
      %v1905 = vsel %vm1899, %v1904, %v1903
      %vm1906 = vcmp.lt.s32.totalorder %v1860, 0
      %v1907 = vsub.s32 0, %v1860
      %v1908 = vsel %vm1906, %v1907, %v1860
      %v1909 = vshrl.u32 %v1908, 4
      %v1910 = vand.u32 %v1908, 15
      %v1911 = vsub.s32 0, %v1910
      %v1912 = vsel %vm1906, %v1911, %v1910
      %vm1913 = vcmp.lt.s32.totalorder %v1861, 0
      %v1914 = vsub.s32 0, %v1861
      %v1915 = vsel %vm1913, %v1914, %v1861
      %v1916 = vshrl.u32 %v1915, 4
      %v1917 = vand.u32 %v1915, 15
      %v1918 = vsub.s32 0, %v1917
      %v1919 = vsel %vm1913, %v1918, %v1917
      %vm1920 = vcmp.lt.s32.totalorder %v1862, 0
      %v1921 = vsub.s32 0, %v1862
      %v1922 = vsel %vm1920, %v1921, %v1862
      %v1923 = vshrl.u32 %v1922, 4
      %v1924 = vand.u32 %v1922, 15
      %v1925 = vsub.s32 0, %v1924
      %v1926 = vsel %vm1920, %v1925, %v1924
      %vm1927 = vcmp.lt.s32.totalorder %v1863, 0
      %v1928 = vsub.s32 0, %v1863
      %v1929 = vsel %vm1927, %v1928, %v1863
      %v1930 = vshrl.u32 %v1929, 4
      %v1931 = vand.u32 %v1929, 15
      %v1932 = vsub.s32 0, %v1931
      %v1933 = vsel %vm1927, %v1932, %v1931
      %vm1934 = vcmp.lt.s32.totalorder %v1864, 0
      %v1935 = vsub.s32 0, %v1864
      %v1936 = vsel %vm1934, %v1935, %v1864
      %v1937 = vshrl.u32 %v1936, 4
      %v1938 = vand.u32 %v1936, 15
      %v1939 = vsub.s32 0, %v1938
      %v1940 = vsel %vm1934, %v1939, %v1938
      %vm1941 = vcmp.lt.s32.totalorder %v1865, 0
      %v1942 = vsub.s32 0, %v1865
      %v1943 = vsel %vm1941, %v1942, %v1865
      %v1944 = vshrl.u32 %v1943, 4
      %v1945 = vand.u32 %v1943, 15
      %v1946 = vsub.s32 0, %v1945
      %v1947 = vsel %vm1941, %v1946, %v1945
      %vm1948 = vcmp.lt.s32.totalorder %v1866, 0
      %v1949 = vsub.s32 0, %v1866
      %v1950 = vsel %vm1948, %v1949, %v1866
      %v1951 = vshrl.u32 %v1950, 4
      %v1952 = vand.u32 %v1950, 15
      %v1953 = vsub.s32 0, %v1952
      %v1954 = vsel %vm1948, %v1953, %v1952
      %vm1955 = vcmp.lt.s32.totalorder %v1867, 0
      %v1956 = vsub.s32 0, %v1867
      %v1957 = vsel %vm1955, %v1956, %v1867
      %v1958 = vshrl.u32 %v1957, 4
      %v1959 = vand.u32 %v1957, 15
      %v1960 = vsub.s32 0, %v1959
      %v1961 = vsel %vm1955, %v1960, %v1959
      %vm1962 = vcmp.lt.s32.totalorder %v1868, 0
      %v1963 = vsub.s32 0, %v1868
      %v1964 = vsel %vm1962, %v1963, %v1868
      %v1965 = vshrl.u32 %v1964, 4
      %v1966 = vand.u32 %v1964, 15
      %v1967 = vsub.s32 0, %v1966
      %v1968 = vsel %vm1962, %v1967, %v1966
      %vm1969 = vcmp.lt.s32.totalorder %v1869, 0
      %v1970 = vsub.s32 0, %v1869
      %v1971 = vsel %vm1969, %v1970, %v1869
      %v1972 = vshrl.u32 %v1971, 4
      %v1973 = vand.u32 %v1971, 15
      %v1974 = vsub.s32 0, %v1973
      %v1975 = vsel %vm1969, %v1974, %v1973
      %vm1976 = vcmp.lt.s32.totalorder %v1870, 0
      %v1977 = vsub.s32 0, %v1870
      %v1978 = vsel %vm1976, %v1977, %v1870
      %v1979 = vshrl.u32 %v1978, 4
      %v1980 = vand.u32 %v1978, 15
      %v1981 = vsub.s32 0, %v1980
      %v1982 = vsel %vm1976, %v1981, %v1980
      %vm1983 = vcmp.lt.s32.totalorder %v1871, 0
      %v1984 = vsub.s32 0, %v1871
      %v1985 = vsel %vm1983, %v1984, %v1871
      %v1986 = vshrl.u32 %v1985, 4
      %v1987 = vand.u32 %v1985, 15
      %v1988 = vsub.s32 0, %v1987
      %v1989 = vsel %vm1983, %v1988, %v1987
      %vm1990 = vcmp.lt.s32.totalorder %v1872, 0
      %v1991 = vsub.s32 0, %v1872
      %v1992 = vsel %vm1990, %v1991, %v1872
      %v1993 = vshrl.u32 %v1992, 4
      %v1994 = vand.u32 %v1992, 15
      %v1995 = vsub.s32 0, %v1994
      %v1996 = vsel %vm1990, %v1995, %v1994
      %vm1997 = vcmp.lt.s32.totalorder %v1873, 0
      %v1998 = vsub.s32 0, %v1873
      %v1999 = vsel %vm1997, %v1998, %v1873
      %v2000 = vshrl.u32 %v1999, 4
      %v2001 = vand.u32 %v1999, 15
      %v2002 = vsub.s32 0, %v2001
      %v2003 = vsel %vm1997, %v2002, %v2001
      %vm2004 = vcmp.lt.s32.totalorder %v1874, 0
      %v2005 = vsub.s32 0, %v1874
      %v2006 = vsel %vm2004, %v2005, %v1874
      %v2007 = vshrl.u32 %v2006, 4
      %v2008 = vand.u32 %v2006, 15
      %v2009 = vsub.s32 0, %v2008
      %v2010 = vsel %vm2004, %v2009, %v2008
      %vm2011 = vcmp.lt.s32.totalorder %v1875, 0
      %v2012 = vsub.s32 0, %v1875
      %v2013 = vsel %vm2011, %v2012, %v1875
      %v2014 = vshrl.u32 %v2013, 4
      %v2015 = vand.u32 %v2013, 15
      %v2016 = vsub.s32 0, %v2015
      %v2017 = vsel %vm2011, %v2016, %v2015
      %vm2018 = vcmp.lt.s32.totalorder %v1876, 0
      %v2019 = vsub.s32 0, %v1876
      %v2020 = vsel %vm2018, %v2019, %v1876
      %v2021 = vshrl.u32 %v2020, 4
      %v2022 = vand.u32 %v2020, 15
      %v2023 = vsub.s32 0, %v2022
      %v2024 = vsel %vm2018, %v2023, %v2022
      %vm2025 = vcmp.lt.s32.totalorder %v1877, 0
      %v2026 = vsub.s32 0, %v1877
      %v2027 = vsel %vm2025, %v2026, %v1877
      %v2028 = vshrl.u32 %v2027, 4
      %v2029 = vand.u32 %v2027, 15
      %v2030 = vsub.s32 0, %v2029
      %v2031 = vsel %vm2025, %v2030, %v2029
      %vm2032 = vcmp.lt.s32.totalorder %v1878, 0
      %v2033 = vsub.s32 0, %v1878
      %v2034 = vsel %vm2032, %v2033, %v1878
      %v2035 = vshrl.u32 %v2034, 4
      %v2036 = vand.u32 %v2034, 15
      %v2037 = vsub.s32 0, %v2036
      %v2038 = vsel %vm2032, %v2037, %v2036
      %vm2039 = vcmp.lt.s32.totalorder %v1879, 0
      %v2040 = vsub.s32 0, %v1879
      %v2041 = vsel %vm2039, %v2040, %v1879
      %v2042 = vshrl.u32 %v2041, 4
      %v2043 = vand.u32 %v2041, 15
      %v2044 = vsub.s32 0, %v2043
      %v2045 = vsel %vm2039, %v2044, %v2043
      %vm2046 = vcmp.lt.s32.totalorder %v1880, 0
      %v2047 = vsub.s32 0, %v1880
      %v2048 = vsel %vm2046, %v2047, %v1880
      %v2049 = vshrl.u32 %v2048, 4
      %v2050 = vand.u32 %v2048, 15
      %v2051 = vsub.s32 0, %v2050
      %v2052 = vsel %vm2046, %v2051, %v2050
      %vm2053 = vcmp.lt.s32.totalorder %v1881, 0
      %v2054 = vsub.s32 0, %v1881
      %v2055 = vsel %vm2053, %v2054, %v1881
      %v2056 = vshrl.u32 %v2055, 4
      %v2057 = vand.u32 %v2055, 15
      %v2058 = vsub.s32 0, %v2057
      %v2059 = vsel %vm2053, %v2058, %v2057
      %vm2060 = vcmp.lt.s32.totalorder %v1882, 0
      %v2061 = vsub.s32 0, %v1882
      %v2062 = vsel %vm2060, %v2061, %v1882
      %v2063 = vshrl.u32 %v2062, 4
      %v2064 = vand.u32 %v2062, 15
      %v2065 = vsub.s32 0, %v2064
      %v2066 = vsel %vm2060, %v2065, %v2064
      %vm2067 = vcmp.lt.s32.totalorder %v1883, 0
      %v2068 = vsub.s32 0, %v1883
      %v2069 = vsel %vm2067, %v2068, %v1883
      %v2070 = vshrl.u32 %v2069, 4
      %v2071 = vand.u32 %v2069, 15
      %v2072 = vsub.s32 0, %v2071
      %v2073 = vsel %vm2067, %v2072, %v2071
      %vm2074 = vcmp.lt.s32.totalorder %v1884, 0
      %v2075 = vsub.s32 0, %v1884
      %v2076 = vsel %vm2074, %v2075, %v1884
      %v2077 = vshrl.u32 %v2076, 4
      %v2078 = vand.u32 %v2076, 15
      %v2079 = vsub.s32 0, %v2078
      %v2080 = vsel %vm2074, %v2079, %v2078
      %vm2081 = vcmp.ne.s32.totalorder %v1891, 0
      %vm2082 = vcmp.ne.s32.totalorder %v1898, 0
      %vm2083 = vcmp.ne.s32.totalorder %v1905, 0
      %vm2084 = vcmp.ne.s32.totalorder %v1912, 0
      %vm2085 = vcmp.ne.s32.totalorder %v1919, 0
      %vm2086 = vcmp.ne.s32.totalorder %v1926, 0
      %vm2087 = vcmp.ne.s32.totalorder %v1933, 0
      %vm2088 = vcmp.ne.s32.totalorder %v1940, 0
      %vm2089 = vcmp.ne.s32.totalorder %v1947, 0
      %vm2090 = vcmp.ne.s32.totalorder %v1954, 0
      %vm2091 = vcmp.ne.s32.totalorder %v1961, 0
      %vm2092 = vcmp.ne.s32.totalorder %v1968, 0
      %vm2093 = vcmp.ne.s32.totalorder %v1975, 0
      %vm2094 = vcmp.ne.s32.totalorder %v1982, 0
      %vm2095 = vcmp.ne.s32.totalorder %v1989, 0
      %vm2096 = vcmp.ne.s32.totalorder %v1996, 0
      %vm2097 = vcmp.ne.s32.totalorder %v2003, 0
      %vm2098 = vcmp.ne.s32.totalorder %v2010, 0
      %vm2099 = vcmp.ne.s32.totalorder %v2017, 0
      %vm2100 = vcmp.ne.s32.totalorder %v2024, 0
      %vm2101 = vcmp.ne.s32.totalorder %v2031, 0
      %vm2102 = vcmp.ne.s32.totalorder %v2038, 0
      %vm2103 = vcmp.ne.s32.totalorder %v2045, 0
      %vm2104 = vcmp.ne.s32.totalorder %v2052, 0
      %vm2105 = vcmp.ne.s32.totalorder %v2059, 0
      %vm2106 = vcmp.ne.s32.totalorder %v2066, 0
      %vm2107 = vcmp.ne.s32.totalorder %v2073, 0
      %vm2108 = vcmp.ne.s32.totalorder %v2080, 0
      %vm2109 = vcmp.lt.s32.totalorder %v1891, 0
      %vm2110 = vcmp.lt.s32.totalorder %v1898, 0
      %vm2111 = vcmp.lt.s32.totalorder %v1905, 0
      %vm2112 = vcmp.lt.s32.totalorder %v1912, 0
      %vm2113 = vcmp.lt.s32.totalorder %v1919, 0
      %vm2114 = vcmp.lt.s32.totalorder %v1926, 0
      %vm2115 = vcmp.lt.s32.totalorder %v1933, 0
      %vm2116 = vcmp.lt.s32.totalorder %v1940, 0
      %vm2117 = vcmp.lt.s32.totalorder %v1947, 0
      %vm2118 = vcmp.lt.s32.totalorder %v1954, 0
      %vm2119 = vcmp.lt.s32.totalorder %v1961, 0
      %vm2120 = vcmp.lt.s32.totalorder %v1968, 0
      %vm2121 = vcmp.lt.s32.totalorder %v1975, 0
      %vm2122 = vcmp.lt.s32.totalorder %v1982, 0
      %vm2123 = vcmp.lt.s32.totalorder %v1989, 0
      %vm2124 = vcmp.lt.s32.totalorder %v1996, 0
      %vm2125 = vcmp.lt.s32.totalorder %v2003, 0
      %vm2126 = vcmp.lt.s32.totalorder %v2010, 0
      %vm2127 = vcmp.lt.s32.totalorder %v2017, 0
      %vm2128 = vcmp.lt.s32.totalorder %v2024, 0
      %vm2129 = vcmp.lt.s32.totalorder %v2031, 0
      %vm2130 = vcmp.lt.s32.totalorder %v2038, 0
      %vm2131 = vcmp.lt.s32.totalorder %v2045, 0
      %vm2132 = vcmp.lt.s32.totalorder %v2052, 0
      %vm2133 = vcmp.lt.s32.totalorder %v2059, 0
      %vm2134 = vcmp.lt.s32.totalorder %v2066, 0
      %vm2135 = vcmp.lt.s32.totalorder %v2073, 0
      %vm2136 = vcmp.lt.s32.totalorder %v2080, 0
      %vm2137 = vmand %vm2109, %vm2081
      %vm2138 = vmand %vm2110, %vm2082
      %vm2139 = vmand %vm2111, %vm2083
      %vm2140 = vmand %vm2112, %vm2084
      %vm2141 = vmand %vm2113, %vm2085
      %vm2142 = vmand %vm2114, %vm2086
      %vm2143 = vmand %vm2115, %vm2087
      %vm2144 = vmand %vm2116, %vm2088
      %vm2145 = vmand %vm2117, %vm2089
      %vm2146 = vmand %vm2118, %vm2090
      %vm2147 = vmand %vm2119, %vm2091
      %vm2148 = vmand %vm2120, %vm2092
      %vm2149 = vmand %vm2121, %vm2093
      %vm2150 = vmand %vm2122, %vm2094
      %vm2151 = vmand %vm2123, %vm2095
      %vm2152 = vmand %vm2124, %vm2096
      %vm2153 = vmand %vm2125, %vm2097
      %vm2154 = vmand %vm2126, %vm2098
      %vm2155 = vmand %vm2127, %vm2099
      %vm2156 = vmand %vm2128, %vm2100
      %vm2157 = vmand %vm2129, %vm2101
      %vm2158 = vmand %vm2130, %vm2102
      %vm2159 = vmand %vm2131, %vm2103
      %vm2160 = vmand %vm2132, %vm2104
      %vm2161 = vmand %vm2133, %vm2105
      %vm2162 = vmand %vm2134, %vm2106
      %vm2163 = vmand %vm2135, %vm2107
      %vm2164 = vmand %vm2136, %vm2108
      %v2165 = vadd.s32 %v1891, 16
      %v2166 = vadd.s32 %v1898, 16
      %v2167 = vadd.s32 %v1905, 16
      %v2168 = vadd.s32 %v1912, 16
      %v2169 = vadd.s32 %v1919, 16
      %v2170 = vadd.s32 %v1926, 16
      %v2171 = vadd.s32 %v1933, 16
      %v2172 = vadd.s32 %v1940, 16
      %v2173 = vadd.s32 %v1947, 16
      %v2174 = vadd.s32 %v1954, 16
      %v2175 = vadd.s32 %v1961, 16
      %v2176 = vadd.s32 %v1968, 16
      %v2177 = vadd.s32 %v1975, 16
      %v2178 = vadd.s32 %v1982, 16
      %v2179 = vadd.s32 %v1989, 16
      %v2180 = vadd.s32 %v1996, 16
      %v2181 = vadd.s32 %v2003, 16
      %v2182 = vadd.s32 %v2010, 16
      %v2183 = vadd.s32 %v2017, 16
      %v2184 = vadd.s32 %v2024, 16
      %v2185 = vadd.s32 %v2031, 16
      %v2186 = vadd.s32 %v2038, 16
      %v2187 = vadd.s32 %v2045, 16
      %v2188 = vadd.s32 %v2052, 16
      %v2189 = vadd.s32 %v2059, 16
      %v2190 = vadd.s32 %v2066, 16
      %v2191 = vadd.s32 %v2073, 16
      %v2192 = vadd.s32 %v2080, 16
      %v2193 = vsel %vm2137, %v2165, %v1891
      %v2194 = vsel %vm2138, %v2166, %v1898
      %v2195 = vsel %vm2139, %v2167, %v1905
      %v2196 = vsel %vm2140, %v2168, %v1912
      %v2197 = vsel %vm2141, %v2169, %v1919
      %v2198 = vsel %vm2142, %v2170, %v1926
      %v2199 = vsel %vm2143, %v2171, %v1933
      %v2200 = vsel %vm2144, %v2172, %v1940
      %v2201 = vsel %vm2145, %v2173, %v1947
      %v2202 = vsel %vm2146, %v2174, %v1954
      %v2203 = vsel %vm2147, %v2175, %v1961
      %v2204 = vsel %vm2148, %v2176, %v1968
      %v2205 = vsel %vm2149, %v2177, %v1975
      %v2206 = vsel %vm2150, %v2178, %v1982
      %v2207 = vsel %vm2151, %v2179, %v1989
      %v2208 = vsel %vm2152, %v2180, %v1996
      %v2209 = vsel %vm2153, %v2181, %v2003
      %v2210 = vsel %vm2154, %v2182, %v2010
      %v2211 = vsel %vm2155, %v2183, %v2017
      %v2212 = vsel %vm2156, %v2184, %v2024
      %v2213 = vsel %vm2157, %v2185, %v2031
      %v2214 = vsel %vm2158, %v2186, %v2038
      %v2215 = vsel %vm2159, %v2187, %v2045
      %v2216 = vsel %vm2160, %v2188, %v2052
      %v2217 = vsel %vm2161, %v2189, %v2059
      %v2218 = vsel %vm2162, %v2190, %v2066
      %v2219 = vsel %vm2163, %v2191, %v2073
      %v2220 = vsel %vm2164, %v2192, %v2080
      %vm2221 = vcmp.lt.s32.totalorder %v2193, 14
      %vm2222 = vcmp.lt.s32.totalorder %v2194, 14
      %vm2223 = vcmp.lt.s32.totalorder %v2195, 14
      %vm2224 = vcmp.lt.s32.totalorder %v2196, 14
      %vm2225 = vcmp.lt.s32.totalorder %v2197, 14
      %vm2226 = vcmp.lt.s32.totalorder %v2198, 14
      %vm2227 = vcmp.lt.s32.totalorder %v2199, 14
      %vm2228 = vcmp.lt.s32.totalorder %v2200, 14
      %vm2229 = vcmp.lt.s32.totalorder %v2201, 14
      %vm2230 = vcmp.lt.s32.totalorder %v2202, 14
      %vm2231 = vcmp.lt.s32.totalorder %v2203, 14
      %vm2232 = vcmp.lt.s32.totalorder %v2204, 14
      %vm2233 = vcmp.lt.s32.totalorder %v2205, 14
      %vm2234 = vcmp.lt.s32.totalorder %v2206, 14
      %vm2235 = vcmp.lt.s32.totalorder %v2207, 14
      %vm2236 = vcmp.lt.s32.totalorder %v2208, 14
      %vm2237 = vcmp.lt.s32.totalorder %v2209, 14
      %vm2238 = vcmp.lt.s32.totalorder %v2210, 14
      %vm2239 = vcmp.lt.s32.totalorder %v2211, 14
      %vm2240 = vcmp.lt.s32.totalorder %v2212, 14
      %vm2241 = vcmp.lt.s32.totalorder %v2213, 14
      %vm2242 = vcmp.lt.s32.totalorder %v2214, 14
      %vm2243 = vcmp.lt.s32.totalorder %v2215, 14
      %vm2244 = vcmp.lt.s32.totalorder %v2216, 14
      %vm2245 = vcmp.lt.s32.totalorder %v2217, 14
      %vm2246 = vcmp.lt.s32.totalorder %v2218, 14
      %vm2247 = vcmp.lt.s32.totalorder %v2219, 14
      %vm2248 = vcmp.lt.s32.totalorder %v2220, 14
      %v2249 = vsel %vm2221, %v1828, 0.0
      %v2250 = vsel %vm2222, %v1829, 0.0
      %v2251 = vsel %vm2223, %v1830, 0.0
      %v2252 = vsel %vm2224, %v1831, 0.0
      %v2253 = vsel %vm2225, %v1832, 0.0
      %v2254 = vsel %vm2226, %v1833, 0.0
      %v2255 = vsel %vm2227, %v1834, 0.0
      %v2256 = vsel %vm2228, %v1835, 0.0
      %v2257 = vsel %vm2229, %v1836, 0.0
      %v2258 = vsel %vm2230, %v1837, 0.0
      %v2259 = vsel %vm2231, %v1838, 0.0
      %v2260 = vsel %vm2232, %v1839, 0.0
      %v2261 = vsel %vm2233, %v1840, 0.0
      %v2262 = vsel %vm2234, %v1841, 0.0
      %v2263 = vsel %vm2235, %v1842, 0.0
      %v2264 = vsel %vm2236, %v1843, 0.0
      %v2265 = vsel %vm2237, %v1844, 0.0
      %v2266 = vsel %vm2238, %v1845, 0.0
      %v2267 = vsel %vm2239, %v1846, 0.0
      %v2268 = vsel %vm2240, %v1847, 0.0
      %v2269 = vsel %vm2241, %v1848, 0.0
      %v2270 = vsel %vm2242, %v1849, 0.0
      %v2271 = vsel %vm2243, %v1850, 0.0
      %v2272 = vsel %vm2244, %v1851, 0.0
      %v2273 = vsel %vm2245, %v1852, 0.0
      %v2274 = vsel %vm2246, %v1853, 0.0
      %v2275 = vsel %vm2247, %v1854, 0.0
      %v2276 = vsel %vm2248, %v1855, 0.0
      %v2277 = vld [vmem:[%s239] sm:$0xff]
      %v2278 = vld [vmem:[%s239 + $0x8] sm:$0xff]
      %v2279 = vld [vmem:[%s239 + $0x10] sm:$0xff]
      %v2280 = vld [vmem:[%s239 + $0x18] sm:$0xff]
      %v2281 = vld [vmem:[%s239 + $0x20] sm:$0xff]
      %v2282 = vld [vmem:[%s239 + $0x28] sm:$0xff]
      %v2283 = vld [vmem:[%s239 + $0x30] sm:$0xff]
      %v2284 = vld [vmem:[%s239 + $0x38] sm:$0xff]
      %v2285 = vld [vmem:[%s239 + $0x40] sm:$0xff]
      %v2286 = vld [vmem:[%s239 + $0x48] sm:$0xff]
      %v2287 = vld [vmem:[%s239 + $0x50] sm:$0xff]
      %v2288 = vld [vmem:[%s239 + $0x58] sm:$0xff]
      %v2289 = vld [vmem:[%s239 + $0x60] sm:$0xff]
      %v2290 = vld [vmem:[%s239 + $0x68] sm:$0xff]
      %v2291 = vld [vmem:[%s239 + $0x70] sm:$0xff]
      %v2292 = vld [vmem:[%s239 + $0x78] sm:$0xff]
      %v2293 = vld [vmem:[%s239 + $0x80] sm:$0xff]
      %v2294 = vld [vmem:[%s239 + $0x88] sm:$0xff]
      %v2295 = vld [vmem:[%s239 + $0x90] sm:$0xff]
      %v2296 = vld [vmem:[%s239 + $0x98] sm:$0xff]
      %v2297 = vld [vmem:[%s239 + $0xa0] sm:$0xff]
      %v2298 = vld [vmem:[%s239 + $0xa8] sm:$0xff]
      %v2299 = vld [vmem:[%s239 + $0xb0] sm:$0xff]
      %v2300 = vld [vmem:[%s239 + $0xb8] sm:$0xff]
      %v2301 = vld [vmem:[%s239 + $0xc0] sm:$0xff]
      %v2302 = vld [vmem:[%s239 + $0xc8] sm:$0xff]
      %v2303 = vld [vmem:[%s239 + $0xd0] sm:$0xff]
      %v2304 = vld [vmem:[%s239 + $0xd8] sm:$0xff]
      %v2305 = vadd.f32 %v2249, %v2277
      %v2306 = vadd.f32 %v2250, %v2278
      %v2307 = vadd.f32 %v2251, %v2279
      %v2308 = vadd.f32 %v2252, %v2280
      %v2309 = vadd.f32 %v2253, %v2281
      %v2310 = vadd.f32 %v2254, %v2282
      %v2311 = vadd.f32 %v2255, %v2283
      %v2312 = vadd.f32 %v2256, %v2284
      %v2313 = vadd.f32 %v2257, %v2285
      %v2314 = vadd.f32 %v2258, %v2286
      %v2315 = vadd.f32 %v2259, %v2287
      %v2316 = vadd.f32 %v2260, %v2288
      %v2317 = vadd.f32 %v2261, %v2289
      %v2318 = vadd.f32 %v2262, %v2290
      %v2319 = vadd.f32 %v2263, %v2291
      %v2320 = vadd.f32 %v2264, %v2292
      %v2321 = vadd.f32 %v2265, %v2293
      %v2322 = vadd.f32 %v2266, %v2294
      %v2323 = vadd.f32 %v2267, %v2295
      %v2324 = vadd.f32 %v2268, %v2296
      %v2325 = vadd.f32 %v2269, %v2297
      %v2326 = vadd.f32 %v2270, %v2298
      %v2327 = vadd.f32 %v2271, %v2299
      %v2328 = vadd.f32 %v2272, %v2300
      %v2329 = vadd.f32 %v2273, %v2301
      %v2330 = vadd.f32 %v2274, %v2302
      %v2331 = vadd.f32 %v2275, %v2303
      %v2332 = vadd.f32 %v2276, %v2304
      %2333 = vst.msk [vmem:[%s244] sm:$0xff] %vm1145, %v2305
      %2334 = vst.msk [vmem:[%s244 + $0x8] sm:$0xff] %vm1145, %v2306
      %2335 = vst.msk [vmem:[%s244 + $0x10] sm:$0xff] %vm1145, %v2307
      %2336 = vst.msk [vmem:[%s244 + $0x18] sm:$0xff] %vm1145, %v2308
      %2337 = vst.msk [vmem:[%s244 + $0x20] sm:$0xff] %vm1145, %v2309
      %2338 = vst.msk [vmem:[%s244 + $0x28] sm:$0xff] %vm1145, %v2310
      %2339 = vst.msk [vmem:[%s244 + $0x30] sm:$0xff] %vm1145, %v2311
      %2340 = vst.msk [vmem:[%s244 + $0x38] sm:$0xff] %vm1145, %v2312
      %2341 = vst.msk [vmem:[%s244 + $0x40] sm:$0xff] %vm1145, %v2313
      %2342 = vst.msk [vmem:[%s244 + $0x48] sm:$0xff] %vm1145, %v2314
      %2343 = vst.msk [vmem:[%s244 + $0x50] sm:$0xff] %vm1145, %v2315
      %2344 = vst.msk [vmem:[%s244 + $0x58] sm:$0xff] %vm1145, %v2316
      %2345 = vst.msk [vmem:[%s244 + $0x60] sm:$0xff] %vm1145, %v2317
      %2346 = vst.msk [vmem:[%s244 + $0x68] sm:$0xff] %vm1145, %v2318
      %2347 = vst.msk [vmem:[%s244 + $0x70] sm:$0xff] %vm1145, %v2319
      %2348 = vst.msk [vmem:[%s244 + $0x78] sm:$0xff] %vm1145, %v2320
      %2349 = vst.msk [vmem:[%s244 + $0x80] sm:$0xff] %vm1145, %v2321
      %2350 = vst.msk [vmem:[%s244 + $0x88] sm:$0xff] %vm1145, %v2322
      %2351 = vst.msk [vmem:[%s244 + $0x90] sm:$0xff] %vm1145, %v2323
      %2352 = vst.msk [vmem:[%s244 + $0x98] sm:$0xff] %vm1145, %v2324
      %2353 = vst.msk [vmem:[%s244 + $0xa0] sm:$0xff] %vm1145, %v2325
      %2354 = vst.msk [vmem:[%s244 + $0xa8] sm:$0xff] %vm1145, %v2326
      %2355 = vst.msk [vmem:[%s244 + $0xb0] sm:$0xff] %vm1145, %v2327
      %2356 = vst.msk [vmem:[%s244 + $0xb8] sm:$0xff] %vm1145, %v2328
      %2357 = vst.msk [vmem:[%s244 + $0xc0] sm:$0xff] %vm1145, %v2329
      %2358 = vst.msk [vmem:[%s244 + $0xc8] sm:$0xff] %vm1145, %v2330
      %2359 = vst.msk [vmem:[%s244 + $0xd0] sm:$0xff] %vm1145, %v2331
      %2360 = vst.msk [vmem:[%s244 + $0xd8] sm:$0xff] %vm1145, %v2332
      %p2361 = scmp.lt.s32.totalorder %s16, 1
      %s2362 = scalar_select %p2361, %s16, 1
      %s2363 = smul.addr %s2362, 28
      %s2364 = smul.addr %s2363, 8
      %s2365 = scalar_lea.vmem %s5, %s2364
      // Predicated region
      $region41: #{bottleneck2_forward.5} parent=39 // pred_check
        %p2366 = pneg %p149
      $region42: #{bottleneck2_forward.5} parent=39 // pred_check_branch
        %2368 = sbr.rel (%p2366) target = $region44
      $region43: #{bottleneck2_forward.5} parent=39 // pred_region
        _
      $region44: #{bottleneck2_forward.5} parent=39 // pred_fallthru
        _
    $region40: #{bottleneck2_forward.5} parent=5 // pred_fallthru
      _
    %p2369 = scmp.le.s32.totalorder 2, %s11
    // Predicated region
    $region45: #{bottleneck2_forward.5} parent=5 // pred_check
      %p2370 = pneg %p2369
    $region46: #{bottleneck2_forward.5} parent=5 // pred_check_branch
      %2372 = sbr.rel (%p2370) target = $region48
    $region47: #{bottleneck2_forward.5} parent=5 // pred_region
      %s2373 = ssub.s32 %s11, 2
      // Predicated region
      $region49: #{bottleneck2_forward.5} parent=47 // pred_check
        %p2374 = pneg %p155
      $region50: #{bottleneck2_forward.5} parent=47 // pred_check_branch
        %2376 = sbr.rel (%p2374) target = $region52
      $region51: #{bottleneck2_forward.5} parent=47 // pred_region
        %p2377 = scmp.lt.s32.totalorder %s17, 1
        %s2378 = scalar_select %p2377, %s17, 1
        %s2379 = smul.addr %s2378, 28
        %s2380 = smul.addr %s2379, 8
        %s2381 = scalar_lea.vmem %s5, %s2380
      $region52: #{bottleneck2_forward.5} parent=47 // pred_fallthru
        _
    $region48: #{bottleneck2_forward.5} parent=5 // pred_fallthru
      _
  $region6: #{bottleneck2_forward.5} parent=0 // loop_footer
    %s15 = sadd.s32 1, %s11
  $region7: #{bottleneck2_forward.5} parent=0 // loop_footer_branch
    %10 = sbr.rel target = $region3
  $region8: #{bottleneck2_forward.5} parent=0 // loop_exit
    _

</llo_original>
